<compile_context>
chip_gen: v7x
topology: tpu7x:2x2x1
jax: 0.10.0
libtpu: 0.0.40
codegen_flags: <defaults>
</compile_context>

<pallas_src>
import math

import numpy as np
import jax
import jax.numpy as jnp
from jax.experimental import pallas as pl
from jax.experimental.pallas import tpu as pltpu


# ----------------------------------------------------------------------------
# Config (small MobileNetV3-style network).  Per block:
#   [kernel, num_in, num_mid, num_out, use_se, act, stride]
# ----------------------------------------------------------------------------
CFG_STAGES = {
    "stage1": [[3, 8, 8, 8, True, "relu", 2]],
    "stage2": [[3, 8, 24, 16, False, "hard_swish", 2],
               [5, 16, 32, 16, True, "hard_swish", 1]],
}
FIRST_CHANNELS = 8
CLS_CH_SQUEEZE = 64
CLS_CH_EXPAND = 128
CLASSES = 10
PADDED_CLASSES = 128          # lane-dense classifier output; sliced on host

BF16 = jnp.bfloat16


def make_divisible(x, divisible_by=8):
    return int(math.ceil(x * 1.0 / divisible_by) * divisible_by)


def _out_dim(n, k, s, p):
    return (n + 2 * p - k) // s + 1


# ----------------------------------------------------------------------------
# Host-side (one-time) weight preprocessing: fold conv taps / stride / zero
# padding / BN into dense constant matrices acting on the (H, W*C) layout.
# ----------------------------------------------------------------------------
def _rowsel_stack(k, h_in, h_out, stride, pad):
    """Stacked row-selection: R[kh*h_out + ho, hi] = 1 iff hi == s*ho + kh - pad."""
    r = np.zeros((k * h_out, h_in), np.float32)
    for kh in range(k):
        for ho in range(h_out):
            hi = stride * ho + kh - pad
            if 0 <= hi < h_in:
                r[kh * h_out + ho, hi] = 1.0
    return r


def _dw_col_stack(w, w_in, w_out, stride, pad):
    """Depthwise weights (k,k,C) -> banded (k, W_in*C, W_out*C) per-kh matrices."""
    k, _, c = w.shape
    d = np.zeros((k, w_in * c, w_out * c), np.float32)
    ci = np.arange(c)
    for kh in range(k):
        for wo in range(w_out):
            for kw in range(k):
                wi = stride * wo + kw - pad
                if 0 <= wi < w_in:
                    d[kh, wi * c + ci, wo * c + ci] = w[kh, kw, :]
    return d


def _conv_col_stack(w, w_in, w_out, stride, pad):
    """Full conv weights (k,k,Cin,Cout) -> banded (k, W_in*Cin, W_out*Cout) matrices."""
    k, _, cin, cout = w.shape
    m = np.zeros((k, w_in * cin, w_out * cout), np.float32)
    for kh in range(k):
        for wo in range(w_out):
            for kw in range(k):
                wi = stride * wo + kw - pad
                if 0 <= wi < w_in:
                    m[kh, wi * cin:(wi + 1) * cin, wo * cout:(wo + 1) * cout] = w[kh, kw]
    return m


def _block_diag(w, reps):
    """1x1 conv (C,D) -> (reps*C, reps*D) block-diagonal matrix."""
    c, d = w.shape
    b = np.zeros((reps * c, reps * d), np.float32)
    for r in range(reps):
        b[r * c:(r + 1) * c, r * d:(r + 1) * d] = w
    return b


def _pool_mat(reps, c):
    """T[w*C + c, c] = 1 : sums the W copies of each channel (for GAP)."""
    t = np.zeros((reps * c, c), np.float32)
    ci = np.arange(c)
    for r in range(reps):
        t[r * c + ci, ci] = 1.0
    return t


def _tile_bias(b, reps):
    return np.tile(np.asarray(b, np.float32).reshape(-1), reps).reshape(1, -1)


def build_model(key, in_hw=56):
    """Synthetic deterministic parameters (BN folded), preprocessed for the kernel."""
    rng = iter(jax.random.split(key, 64))

    def nrm(shape, fan_in):
        return np.asarray(jax.random.normal(next(rng), shape, jnp.float32)) * math.sqrt(2.0 / fan_in)

    def bias(c):
        return np.asarray(jax.random.normal(next(rng), (c,), jnp.float32)) * 0.01

    def W16(a):   # MXU operands: bf16 storage, f32 accumulation in-kernel
        return jnp.asarray(a, BF16)

    def F32(a):   # biases stay f32 (added post-accumulation, VPU math in f32)
        return jnp.asarray(a, jnp.float32)

    h = w = in_hw
    consts = {"blocks": []}
    plan = {"blocks": []}

    # conv1: 3x3, stride 2, pad 1, 3 -> FIRST_CHANNELS, folded BN, hard_swish
    k, s, p = 3, 2, 1
    ho, wo = _out_dim(h, k, s, p), _out_dim(w, k, s, p)
    consts["conv1"] = {
        "R": W16(_rowsel_stack(k, h, ho, s, p)),
        "D": W16(_conv_col_stack(nrm((k, k, 3, FIRST_CHANNELS), k * k * 3), w, wo, s, p)),
        "b": F32(_tile_bias(bias(FIRST_CHANNELS), wo)),
    }
    h, w, c = ho, wo, FIRST_CHANNELS

    for _, blocks in CFG_STAGES.items():
        for k, ic, mc, oc, use_se, act, s in blocks:
            p = (k - 1) // 2
            ho, wo = _out_dim(h, k, s, p), _out_dim(w, k, s, p)
            bc = {}
            if ic != mc:
                bc["expand"] = {"B": W16(_block_diag(nrm((ic, mc), ic), w)),
                                "b": F32(_tile_bias(bias(mc), w))}
            else:
                bc["expand"] = None
            bc["dw"] = {"R": W16(_rowsel_stack(k, h, ho, s, p)),
                        "D": W16(_dw_col_stack(nrm((k, k, mc), k * k), w, wo, s, p)),
                        "b": F32(_tile_bias(bias(mc), wo))}
            if use_se:
                cm = make_divisible(mc // 4)
                t = _pool_mat(wo, mc)
                bc["se"] = {"T": W16(t), "E": W16(np.ascontiguousarray(t.T)),
                            "w1": W16(nrm((mc, cm), mc)), "b1": F32(bias(cm).reshape(1, -1)),
                            "w2": W16(nrm((cm, mc), cm)), "b2": F32(bias(mc).reshape(1, -1))}
            else:
                bc["se"] = None
            bc["proj"] = {"B": W16(_block_diag(nrm((mc, oc), mc), wo)),
                          "b": F32(_tile_bias(bias(oc), wo))}
            consts["blocks"].append(bc)
            plan["blocks"].append({
                "act": act,
                "use_se": use_se,
                "expand": ic != mc,
                "residual": (ic == oc and s == 1),
                "inv_hw": 1.0 / float(ho * wo),
            })
            h, w, c = ho, wo, oc

    # classifier head; fc padded to 128 lanes (lane-dense output store)
    fc_w = np.zeros((CLS_CH_EXPAND, PADDED_CLASSES), np.float32)
    fc_w[:, :CLASSES] = nrm((CLS_CH_EXPAND, CLASSES), CLS_CH_EXPAND)
    fc_b = np.zeros((1, PADDED_CLASSES), np.float32)
    fc_b[0, :CLASSES] = bias(CLASSES)
    consts["head"] = {
        "last1_B": W16(_block_diag(nrm((c, CLS_CH_SQUEEZE), c), w)),
        "last1_b": F32(_tile_bias(bias(CLS_CH_SQUEEZE), w)),
        "pool_T": W16(_pool_mat(w, CLS_CH_SQUEEZE)),
        "last2_w": W16(nrm((CLS_CH_SQUEEZE, CLS_CH_EXPAND), CLS_CH_SQUEEZE)),
        "last2_b": F32(bias(CLS_CH_EXPAND).reshape(1, -1)),
        "fc_w": W16(fc_w),
        "fc_b": F32(fc_b),
    }
    plan["head_inv_hw"] = 1.0 / float(h * w)
    return consts, plan


# ----------------------------------------------------------------------------
# In-kernel building blocks (per-sample 2-D activations: plain MXU matmuls
# with bf16 inputs / f32 accumulation, VPU elementwise math in f32).
# ----------------------------------------------------------------------------
def _act(y, act):
    if act == "relu":
        return jnp.maximum(y, 0.0)
    if act == "hard_swish":
        return y * (jnp.clip(y + 3.0, 0.0, 6.0) * (1.0 / 6.0))
    if act == "hard_sigmoid":
        return jnp.clip(y + 3.0, 0.0, 6.0) * (1.0 / 6.0)
    return y


def _mm(a, b):
    """2-D MXU matmul, bf16 operands, f32 accumulation."""
    return jnp.dot(a.astype(BF16), b.astype(BF16), preferred_element_type=jnp.float32)


def _spatial_conv(x, r_ref, d_ref, b_ref, act):
    """k x k conv (full or depthwise), stride & zero-pad folded host-side.

    Row selection first (strided output height), then per-tap banded column
    matmuls at the reduced row count:
        y   = R_all @ x                      # one matmul, (k*Ho, Win*Cin)
        out = act( sum_kh y[kh] @ D[kh] + b )
    """
    k = d_ref.shape[0]
    ho = r_ref.shape[0] // k
    y_all = _mm(r_ref[...], x)                              # (k*Ho, Win*Cin)
    acc = None
    for kh in range(k):
        z = _mm(y_all[kh * ho:(kh + 1) * ho, :], d_ref[kh])  # (Ho, Wout*Cout)
        acc = z if acc is None else acc + z
    return _act(acc + b_ref[...], act)


def _pointwise(x, w_ref, b_ref, act):
    return _act(_mm(x, w_ref[...]) + b_ref[...], act)


def _se(x, se, inv_hw):
    """Squeeze-excite, fused: GAP -> 1x1 relu -> 1x1 hard_sigmoid -> scale."""
    pooled = _mm(jnp.sum(x, axis=0, keepdims=True), se["T"][...]) * inv_hw    # (1, C)
    hid = jnp.maximum(_mm(pooled, se["w1"][...]) + se["b1"][...], 0.0)
    s = _mm(hid, se["w2"][...]) + se["b2"][...]
    s = jnp.clip(s + 3.0, 0.0, 6.0) * (1.0 / 6.0)                             # hard_sigmoid
    return x * _mm(s, se["E"][...])                                           # (H,W*C)*(1,W*C)


def _head(x, hd, inv_hw):
    """AvgPool2d(7) -> 1x1 hard_swish -> flatten -> Linear (padded to 128)."""
    pooled = _mm(jnp.sum(x, axis=0, keepdims=True), hd["pool_T"][...]) * inv_hw   # (1, Cs)
    h = _mm(pooled, hd["last2_w"][...]) + hd["last2_b"][...]
    h = h * (jnp.clip(h + 3.0, 0.0, 6.0) * (1.0 / 6.0))                           # hard_swish
    return _mm(h, hd["fc_w"][...]) + hd["fc_b"][...]                              # (1, 128)


def _make_kernel(treedef, plan):
    def kernel(*refs):
        x_ref, o_ref = refs[0], refs[-1]
        kp = jax.tree_util.tree_unflatten(treedef, list(refs[1:-1]))

        x = x_ref[...]                                                # (H, W*3) f32

        # conv1: 3x3 s2 p1 + folded BN + hard_swish
        c1 = kp["conv1"]
        x = _spatial_conv(x, c1["R"], c1["D"], c1["b"], "hard_swish")

        # bottleneck stages (expand -> depthwise -> SE -> project -> residual)
        for meta, bc in zip(plan["blocks"], kp["blocks"]):
            inp = x
            out = x
            if meta["expand"]:
                out = _pointwise(out, bc["expand"]["B"], bc["expand"]["b"], meta["act"])
            out = _spatial_conv(out, bc["dw"]["R"], bc["dw"]["D"], bc["dw"]["b"], meta["act"])
            if meta["use_se"]:
                out = _se(out, bc["se"], meta["inv_hw"])
            out = _pointwise(out, bc["proj"]["B"], bc["proj"]["b"], "")
            if meta["residual"]:
                out = out + inp
            x = out

        # last_conv1 + classifier head
        hd = kp["head"]
        x = _pointwise(x, hd["last1_B"], hd["last1_b"], "hard_swish")
        o_ref[...] = _head(x, hd, plan["head_inv_hw"])                # (1, 128)

    return kernel


def mobilenetv3_forward(x_nchw, consts, plan):
    n, _, h, w = x_nchw.shape
    flat, treedef = jax.tree_util.tree_flatten(consts)

    # one-time layout change: NCHW -> lane-dense per-sample (H, W*C)
    x = jnp.transpose(x_nchw, (0, 2, 3, 1)).astype(jnp.float32).reshape(n, h, w * 3)

    # Weights: full-shape blocks with constant index_maps -> VMEM-resident
    # across grid steps.  Input/output blocks indexed by the batch program id.
    weight_specs = [pl.BlockSpec(a.shape, (lambda b, nd=a.ndim: (0,) * nd))
                    for a in flat]
    in_specs = [pl.BlockSpec((None, h, w * 3), lambda b: (b, 0, 0))] + weight_specs
    out_specs = pl.BlockSpec((None, 1, PADDED_CLASSES), lambda b: (b, 0, 0))

    out = pl.pallas_call(
        _make_kernel(treedef, plan),
        grid=(n,),
        in_specs=in_specs,
        out_specs=out_specs,
        out_shape=jax.ShapeDtypeStruct((n, 1, PADDED_CLASSES), jnp.float32),
        compiler_params=pltpu.CompilerParams(
            dimension_semantics=("parallel",),        # shards batch over v7x's 2 TCs
            vmem_limit_bytes=32 * 1024 * 1024),
        cost_estimate=pl.CostEstimate(flops=60_000_000, transcendentals=0,
                                      bytes_accessed=3_000_000),
    )(x, *flat)
    return out[:, 0, :CLASSES]


# ----------------------------------------------------------------------------
if __name__ == "__main__":
    key = jax.random.PRNGKey(0)
    k_x, k_p = jax.random.split(key)

    # 56 -> conv1 s2 -> 28 -> stage1 s2 -> 14 -> stage2 s2 -> 7 -> AvgPool2d(7) -> 1
    x = jax.random.normal(k_x, (2, 3, 56, 56), jnp.float32)
    consts, plan = build_model(k_p, in_hw=56)

    run = jax.jit(lambda xx, cc: mobilenetv3_forward(xx, cc, plan))
    logits = jax.block_until_ready(run(x, consts))

    assert logits.shape == (2, CLASSES)
    assert bool(jnp.all(jnp.isfinite(logits)))
    print("KERNEL_OK")
</pallas_src>

<mosaic_0001>
module attributes {stable_mosaic.version = 11 : i64} {
  func.func @kernel(%arg0: i32, %arg1: memref<1x56x168xf32, #tpu.memory_space<vmem>>, %arg2: memref<3x224x112xbf16, #tpu.memory_space<vmem>>, %arg3: memref<42x28xbf16, #tpu.memory_space<vmem>>, %arg4: memref<1x112xf32, #tpu.memory_space<vmem>>, %arg5: memref<112x112xbf16, #tpu.memory_space<vmem>>, %arg6: memref<1x112xf32, #tpu.memory_space<vmem>>, %arg7: memref<8x112xbf16, #tpu.memory_space<vmem>>, %arg8: memref<112x8xbf16, #tpu.memory_space<vmem>>, %arg9: memref<1x8xf32, #tpu.memory_space<vmem>>, %arg10: memref<1x8xf32, #tpu.memory_space<vmem>>, %arg11: memref<8x8xbf16, #tpu.memory_space<vmem>>, %arg12: memref<8x8xbf16, #tpu.memory_space<vmem>>, %arg13: memref<3x336x168xbf16, #tpu.memory_space<vmem>>, %arg14: memref<21x14xbf16, #tpu.memory_space<vmem>>, %arg15: memref<1x168xf32, #tpu.memory_space<vmem>>, %arg16: memref<112x336xbf16, #tpu.memory_space<vmem>>, %arg17: memref<1x336xf32, #tpu.memory_space<vmem>>, %arg18: memref<168x112xbf16, #tpu.memory_space<vmem>>, %arg19: memref<1x112xf32, #tpu.memory_space<vmem>>, %arg20: memref<5x224x224xbf16, #tpu.memory_space<vmem>>, %arg21: memref<35x7xbf16, #tpu.memory_space<vmem>>, %arg22: memref<1x224xf32, #tpu.memory_space<vmem>>, %arg23: memref<112x224xbf16, #tpu.memory_space<vmem>>, %arg24: memref<1x224xf32, #tpu.memory_space<vmem>>, %arg25: memref<224x112xbf16, #tpu.memory_space<vmem>>, %arg26: memref<1x112xf32, #tpu.memory_space<vmem>>, %arg27: memref<32x224xbf16, #tpu.memory_space<vmem>>, %arg28: memref<224x32xbf16, #tpu.memory_space<vmem>>, %arg29: memref<1x8xf32, #tpu.memory_space<vmem>>, %arg30: memref<1x32xf32, #tpu.memory_space<vmem>>, %arg31: memref<32x8xbf16, #tpu.memory_space<vmem>>, %arg32: memref<8x32xbf16, #tpu.memory_space<vmem>>, %arg33: memref<3x168x224xbf16, #tpu.memory_space<vmem>>, %arg34: memref<84x56xbf16, #tpu.memory_space<vmem>>, %arg35: memref<1x224xf32, #tpu.memory_space<vmem>>, %arg36: memref<1x128xf32, #tpu.memory_space<vmem>>, %arg37: memref<128x128xbf16, #tpu.memory_space<vmem>>, %arg38: memref<112x448xbf16, #tpu.memory_space<vmem>>, %arg39: memref<1x448xf32, #tpu.memory_space<vmem>>, %arg40: memref<1x128xf32, #tpu.memory_space<vmem>>, %arg41: memref<64x128xbf16, #tpu.memory_space<vmem>>, %arg42: memref<448x64xbf16, #tpu.memory_space<vmem>>, %arg43: memref<1x1x128xf32, #tpu.memory_space<vmem>>) attributes {dimension_semantics = [#tpu.dimension_semantics<parallel>], iteration_bounds = array<i64: 2>, scalar_prefetch = 0 : i64, scratch_operands = 0 : i64, tpu.core_type = #tpu.core_type<tc>, window_params = [{transform_indices = @transform_0, window_bounds = array<i64: 1, 56, 168>}, {pipeline_mode = #tpu.pipeline_mode<synchronous>, transform_indices = @transform_1, window_bounds = array<i64: 3, 224, 112>}, {pipeline_mode = #tpu.pipeline_mode<synchronous>, transform_indices = @transform_2, window_bounds = array<i64: 42, 28>}, {pipeline_mode = #tpu.pipeline_mode<synchronous>, transform_indices = @transform_3, window_bounds = array<i64: 1, 112>}, {pipeline_mode = #tpu.pipeline_mode<synchronous>, transform_indices = @transform_4, window_bounds = array<i64: 112, 112>}, {pipeline_mode = #tpu.pipeline_mode<synchronous>, transform_indices = @transform_5, window_bounds = array<i64: 1, 112>}, {pipeline_mode = #tpu.pipeline_mode<synchronous>, transform_indices = @transform_6, window_bounds = array<i64: 8, 112>}, {pipeline_mode = #tpu.pipeline_mode<synchronous>, transform_indices = @transform_7, window_bounds = array<i64: 112, 8>}, {pipeline_mode = #tpu.pipeline_mode<synchronous>, transform_indices = @transform_8, window_bounds = array<i64: 1, 8>}, {pipeline_mode = #tpu.pipeline_mode<synchronous>, transform_indices = @transform_9, window_bounds = array<i64: 1, 8>}, {pipeline_mode = #tpu.pipeline_mode<synchronous>, transform_indices = @transform_10, window_bounds = array<i64: 8, 8>}, {pipeline_mode = #tpu.pipeline_mode<synchronous>, transform_indices = @transform_11, window_bounds = array<i64: 8, 8>}, {pipeline_mode = #tpu.pipeline_mode<synchronous>, transform_indices = @transform_12, window_bounds = array<i64: 3, 336, 168>}, {pipeline_mode = #tpu.pipeline_mode<synchronous>, transform_indices = @transform_13, window_bounds = array<i64: 21, 14>}, {pipeline_mode = #tpu.pipeline_mode<synchronous>, transform_indices = @transform_14, window_bounds = array<i64: 1, 168>}, {pipeline_mode = #tpu.pipeline_mode<synchronous>, transform_indices = @transform_15, window_bounds = array<i64: 112, 336>}, {pipeline_mode = #tpu.pipeline_mode<synchronous>, transform_indices = @transform_16, window_bounds = array<i64: 1, 336>}, {pipeline_mode = #tpu.pipeline_mode<synchronous>, transform_indices = @transform_17, window_bounds = array<i64: 168, 112>}, {pipeline_mode = #tpu.pipeline_mode<synchronous>, transform_indices = @transform_18, window_bounds = array<i64: 1, 112>}, {pipeline_mode = #tpu.pipeline_mode<synchronous>, transform_indices = @transform_19, window_bounds = array<i64: 5, 224, 224>}, {pipeline_mode = #tpu.pipeline_mode<synchronous>, transform_indices = @transform_20, window_bounds = array<i64: 35, 7>}, {pipeline_mode = #tpu.pipeline_mode<synchronous>, transform_indices = @transform_21, window_bounds = array<i64: 1, 224>}, {pipeline_mode = #tpu.pipeline_mode<synchronous>, transform_indices = @transform_22, window_bounds = array<i64: 112, 224>}, {pipeline_mode = #tpu.pipeline_mode<synchronous>, transform_indices = @transform_23, window_bounds = array<i64: 1, 224>}, {pipeline_mode = #tpu.pipeline_mode<synchronous>, transform_indices = @transform_24, window_bounds = array<i64: 224, 112>}, {pipeline_mode = #tpu.pipeline_mode<synchronous>, transform_indices = @transform_25, window_bounds = array<i64: 1, 112>}, {pipeline_mode = #tpu.pipeline_mode<synchronous>, transform_indices = @transform_26, window_bounds = array<i64: 32, 224>}, {pipeline_mode = #tpu.pipeline_mode<synchronous>, transform_indices = @transform_27, window_bounds = array<i64: 224, 32>}, {pipeline_mode = #tpu.pipeline_mode<synchronous>, transform_indices = @transform_28, window_bounds = array<i64: 1, 8>}, {pipeline_mode = #tpu.pipeline_mode<synchronous>, transform_indices = @transform_29, window_bounds = array<i64: 1, 32>}, {pipeline_mode = #tpu.pipeline_mode<synchronous>, transform_indices = @transform_30, window_bounds = array<i64: 32, 8>}, {pipeline_mode = #tpu.pipeline_mode<synchronous>, transform_indices = @transform_31, window_bounds = array<i64: 8, 32>}, {pipeline_mode = #tpu.pipeline_mode<synchronous>, transform_indices = @transform_32, window_bounds = array<i64: 3, 168, 224>}, {pipeline_mode = #tpu.pipeline_mode<synchronous>, transform_indices = @transform_33, window_bounds = array<i64: 84, 56>}, {pipeline_mode = #tpu.pipeline_mode<synchronous>, transform_indices = @transform_34, window_bounds = array<i64: 1, 224>}, {pipeline_mode = #tpu.pipeline_mode<synchronous>, transform_indices = @transform_35, window_bounds = array<i64: 1, 128>}, {pipeline_mode = #tpu.pipeline_mode<synchronous>, transform_indices = @transform_36, window_bounds = array<i64: 128, 128>}, {pipeline_mode = #tpu.pipeline_mode<synchronous>, transform_indices = @transform_37, window_bounds = array<i64: 112, 448>}, {pipeline_mode = #tpu.pipeline_mode<synchronous>, transform_indices = @transform_38, window_bounds = array<i64: 1, 448>}, {pipeline_mode = #tpu.pipeline_mode<synchronous>, transform_indices = @transform_39, window_bounds = array<i64: 1, 128>}, {pipeline_mode = #tpu.pipeline_mode<synchronous>, transform_indices = @transform_40, window_bounds = array<i64: 64, 128>}, {pipeline_mode = #tpu.pipeline_mode<synchronous>, transform_indices = @transform_41, window_bounds = array<i64: 448, 64>}, {transform_indices = @transform_42, window_bounds = array<i64: 1, 1, 128>}]} {
    %c0 = arith.constant 0 : index
    %c0_0 = arith.constant 0 : index
    %c0_1 = arith.constant 0 : index
    %0 = vector.load %arg1[%c0, %c0_0, %c0_1] : memref<1x56x168xf32, #tpu.memory_space<vmem>>, vector<1x56x168xf32>
    %1 = vector.shape_cast %0 : vector<1x56x168xf32> to vector<56x168xf32>
    %c0_2 = arith.constant 0 : index
    %c0_3 = arith.constant 0 : index
    %2 = vector.load %arg34[%c0_2, %c0_3] : memref<84x56xbf16, #tpu.memory_space<vmem>>, vector<84x56xbf16>
    %3 = arith.truncf %1 : vector<56x168xf32> to vector<56x168xbf16>
    %cst = arith.constant dense<0.000000e+00> : vector<84x168xf32>
    %4 = tpu.matmul %2, %3, %cst {dimension_numbers = #tpu.dot_dimension_numbers<[1], [0], [0], [1], [0, 0, 1, 1], [], []>} : vector<84x56xbf16>, vector<56x168xbf16>, vector<84x168xf32> -> vector<84x168xf32>
    %5 = vector.extract_strided_slice %4 {offsets = [0, 0], sizes = [28, 168], strides = [1, 1]} : vector<84x168xf32> to vector<28x168xf32>
    %c0_4 = arith.constant 0 : index
    %c0_5 = arith.constant 0 : index
    %c0_6 = arith.constant 0 : index
    %6 = vector.load %arg33[%c0_4, %c0_5, %c0_6] : memref<3x168x224xbf16, #tpu.memory_space<vmem>>, vector<1x168x224xbf16>
    %7 = vector.shape_cast %6 : vector<1x168x224xbf16> to vector<168x224xbf16>
    %8 = arith.truncf %5 : vector<28x168xf32> to vector<28x168xbf16>
    %cst_7 = arith.constant dense<0.000000e+00> : vector<28x224xf32>
    %9 = tpu.matmul %8, %7, %cst_7 {dimension_numbers = #tpu.dot_dimension_numbers<[1], [0], [0], [1], [0, 0, 1, 1], [], []>} : vector<28x168xbf16>, vector<168x224xbf16>, vector<28x224xf32> -> vector<28x224xf32>
    %10 = vector.extract_strided_slice %4 {offsets = [28, 0], sizes = [28, 168], strides = [1, 1]} : vector<84x168xf32> to vector<28x168xf32>
    %c1 = arith.constant 1 : index
    %c0_8 = arith.constant 0 : index
    %c0_9 = arith.constant 0 : index
    %11 = vector.load %arg33[%c1, %c0_8, %c0_9] : memref<3x168x224xbf16, #tpu.memory_space<vmem>>, vector<1x168x224xbf16>
    %12 = vector.shape_cast %11 : vector<1x168x224xbf16> to vector<168x224xbf16>
    %13 = arith.truncf %10 : vector<28x168xf32> to vector<28x168xbf16>
    %cst_10 = arith.constant dense<0.000000e+00> : vector<28x224xf32>
    %14 = tpu.matmul %13, %12, %cst_10 {dimension_numbers = #tpu.dot_dimension_numbers<[1], [0], [0], [1], [0, 0, 1, 1], [], []>} : vector<28x168xbf16>, vector<168x224xbf16>, vector<28x224xf32> -> vector<28x224xf32>
    %15 = arith.addf %9, %14 : vector<28x224xf32>
    %16 = vector.extract_strided_slice %4 {offsets = [56, 0], sizes = [28, 168], strides = [1, 1]} : vector<84x168xf32> to vector<28x168xf32>
    %c2 = arith.constant 2 : index
    %c0_11 = arith.constant 0 : index
    %c0_12 = arith.constant 0 : index
    %17 = vector.load %arg33[%c2, %c0_11, %c0_12] : memref<3x168x224xbf16, #tpu.memory_space<vmem>>, vector<1x168x224xbf16>
    %18 = vector.shape_cast %17 : vector<1x168x224xbf16> to vector<168x224xbf16>
    %19 = arith.truncf %16 : vector<28x168xf32> to vector<28x168xbf16>
    %cst_13 = arith.constant dense<0.000000e+00> : vector<28x224xf32>
    %20 = tpu.matmul %19, %18, %cst_13 {dimension_numbers = #tpu.dot_dimension_numbers<[1], [0], [0], [1], [0, 0, 1, 1], [], []>} : vector<28x168xbf16>, vector<168x224xbf16>, vector<28x224xf32> -> vector<28x224xf32>
    %21 = arith.addf %15, %20 : vector<28x224xf32>
    %c0_14 = arith.constant 0 : index
    %c0_15 = arith.constant 0 : index
    %22 = vector.load %arg35[%c0_14, %c0_15] : memref<1x224xf32, #tpu.memory_space<vmem>>, vector<1x224xf32>
    %23 = vector.broadcast %22 : vector<1x224xf32> to vector<28x224xf32>
    %24 = arith.addf %21, %23 : vector<28x224xf32>
    %cst_16 = arith.constant 3.000000e+00 : f32
    %25 = vector.broadcast %cst_16 : f32 to vector<28x224xf32>
    %26 = arith.addf %24, %25 : vector<28x224xf32>
    %cst_17 = arith.constant 0.000000e+00 : f32
    %cst_18 = arith.constant 6.000000e+00 : f32
    %27 = vector.broadcast %cst_17 : f32 to vector<28x224xf32>
    %28 = arith.maximumf %27, %26 : vector<28x224xf32>
    %29 = vector.broadcast %cst_18 : f32 to vector<28x224xf32>
    %30 = arith.minimumf %29, %28 : vector<28x224xf32>
    %cst_19 = arith.constant 0.166666672 : f32
    %31 = vector.broadcast %cst_19 : f32 to vector<28x224xf32>
    %32 = arith.mulf %30, %31 : vector<28x224xf32>
    %33 = arith.mulf %24, %32 : vector<28x224xf32>
    %c0_20 = arith.constant 0 : index
    %c0_21 = arith.constant 0 : index
    %34 = vector.load %arg3[%c0_20, %c0_21] : memref<42x28xbf16, #tpu.memory_space<vmem>>, vector<42x28xbf16>
    %35 = arith.truncf %33 : vector<28x224xf32> to vector<28x224xbf16>
    %cst_22 = arith.constant dense<0.000000e+00> : vector<42x224xf32>
    %36 = tpu.matmul %34, %35, %cst_22 {dimension_numbers = #tpu.dot_dimension_numbers<[1], [0], [0], [1], [0, 0, 1, 1], [], []>} : vector<42x28xbf16>, vector<28x224xbf16>, vector<42x224xf32> -> vector<42x224xf32>
    %37 = vector.extract_strided_slice %36 {offsets = [0, 0], sizes = [14, 224], strides = [1, 1]} : vector<42x224xf32> to vector<14x224xf32>
    %c0_23 = arith.constant 0 : index
    %c0_24 = arith.constant 0 : index
    %c0_25 = arith.constant 0 : index
    %38 = vector.load %arg2[%c0_23, %c0_24, %c0_25] : memref<3x224x112xbf16, #tpu.memory_space<vmem>>, vector<1x224x112xbf16>
    %39 = vector.shape_cast %38 : vector<1x224x112xbf16> to vector<224x112xbf16>
    %40 = arith.truncf %37 : vector<14x224xf32> to vector<14x224xbf16>
    %cst_26 = arith.constant dense<0.000000e+00> : vector<14x112xf32>
    %41 = tpu.matmul %40, %39, %cst_26 {dimension_numbers = #tpu.dot_dimension_numbers<[1], [0], [0], [1], [0, 0, 1, 1], [], []>} : vector<14x224xbf16>, vector<224x112xbf16>, vector<14x112xf32> -> vector<14x112xf32>
    %42 = vector.extract_strided_slice %36 {offsets = [14, 0], sizes = [14, 224], strides = [1, 1]} : vector<42x224xf32> to vector<14x224xf32>
    %c1_27 = arith.constant 1 : index
    %c0_28 = arith.constant 0 : index
    %c0_29 = arith.constant 0 : index
    %43 = vector.load %arg2[%c1_27, %c0_28, %c0_29] : memref<3x224x112xbf16, #tpu.memory_space<vmem>>, vector<1x224x112xbf16>
    %44 = vector.shape_cast %43 : vector<1x224x112xbf16> to vector<224x112xbf16>
    %45 = arith.truncf %42 : vector<14x224xf32> to vector<14x224xbf16>
    %cst_30 = arith.constant dense<0.000000e+00> : vector<14x112xf32>
    %46 = tpu.matmul %45, %44, %cst_30 {dimension_numbers = #tpu.dot_dimension_numbers<[1], [0], [0], [1], [0, 0, 1, 1], [], []>} : vector<14x224xbf16>, vector<224x112xbf16>, vector<14x112xf32> -> vector<14x112xf32>
    %47 = arith.addf %41, %46 : vector<14x112xf32>
    %48 = vector.extract_strided_slice %36 {offsets = [28, 0], sizes = [14, 224], strides = [1, 1]} : vector<42x224xf32> to vector<14x224xf32>
    %c2_31 = arith.constant 2 : index
    %c0_32 = arith.constant 0 : index
    %c0_33 = arith.constant 0 : index
    %49 = vector.load %arg2[%c2_31, %c0_32, %c0_33] : memref<3x224x112xbf16, #tpu.memory_space<vmem>>, vector<1x224x112xbf16>
    %50 = vector.shape_cast %49 : vector<1x224x112xbf16> to vector<224x112xbf16>
    %51 = arith.truncf %48 : vector<14x224xf32> to vector<14x224xbf16>
    %cst_34 = arith.constant dense<0.000000e+00> : vector<14x112xf32>
    %52 = tpu.matmul %51, %50, %cst_34 {dimension_numbers = #tpu.dot_dimension_numbers<[1], [0], [0], [1], [0, 0, 1, 1], [], []>} : vector<14x224xbf16>, vector<224x112xbf16>, vector<14x112xf32> -> vector<14x112xf32>
    %53 = arith.addf %47, %52 : vector<14x112xf32>
    %c0_35 = arith.constant 0 : index
    %c0_36 = arith.constant 0 : index
    %54 = vector.load %arg4[%c0_35, %c0_36] : memref<1x112xf32, #tpu.memory_space<vmem>>, vector<1x112xf32>
    %55 = vector.broadcast %54 : vector<1x112xf32> to vector<14x112xf32>
    %56 = arith.addf %53, %55 : vector<14x112xf32>
    %cst_37 = arith.constant 0.000000e+00 : f32
    %57 = vector.broadcast %cst_37 : f32 to vector<14x112xf32>
    %58 = arith.maximumf %56, %57 : vector<14x112xf32>
    %cst_38 = arith.constant dense<0.000000e+00> : vector<112xf32>
    %59 = vector.multi_reduction <add>, %58, %cst_38 [0] : vector<14x112xf32> to vector<112xf32>
    %60 = vector.shape_cast %59 : vector<112xf32> to vector<1x112xf32>
    %c0_39 = arith.constant 0 : index
    %c0_40 = arith.constant 0 : index
    %61 = vector.load %arg8[%c0_39, %c0_40] : memref<112x8xbf16, #tpu.memory_space<vmem>>, vector<112x8xbf16>
    %62 = arith.truncf %60 : vector<1x112xf32> to vector<1x112xbf16>
    %cst_41 = arith.constant dense<0.000000e+00> : vector<1x8xf32>
    %63 = tpu.matmul %62, %61, %cst_41 {dimension_numbers = #tpu.dot_dimension_numbers<[1], [0], [0], [1], [0, 0, 1, 1], [], []>} : vector<1x112xbf16>, vector<112x8xbf16>, vector<1x8xf32> -> vector<1x8xf32>
    %cst_42 = arith.constant 0.00510204071 : f32
    %64 = vector.broadcast %cst_42 : f32 to vector<1x8xf32>
    %65 = arith.mulf %63, %64 : vector<1x8xf32>
    %c0_43 = arith.constant 0 : index
    %c0_44 = arith.constant 0 : index
    %66 = vector.load %arg11[%c0_43, %c0_44] : memref<8x8xbf16, #tpu.memory_space<vmem>>, vector<8x8xbf16>
    %67 = arith.truncf %65 : vector<1x8xf32> to vector<1x8xbf16>
    %cst_45 = arith.constant dense<0.000000e+00> : vector<1x8xf32>
    %68 = tpu.matmul %67, %66, %cst_45 {dimension_numbers = #tpu.dot_dimension_numbers<[1], [0], [0], [1], [0, 0, 1, 1], [], []>} : vector<1x8xbf16>, vector<8x8xbf16>, vector<1x8xf32> -> vector<1x8xf32>
    %c0_46 = arith.constant 0 : index
    %c0_47 = arith.constant 0 : index
    %69 = vector.load %arg9[%c0_46, %c0_47] : memref<1x8xf32, #tpu.memory_space<vmem>>, vector<1x8xf32>
    %70 = arith.addf %68, %69 : vector<1x8xf32>
    %cst_48 = arith.constant 0.000000e+00 : f32
    %71 = vector.broadcast %cst_48 : f32 to vector<1x8xf32>
    %72 = arith.maximumf %70, %71 : vector<1x8xf32>
    %c0_49 = arith.constant 0 : index
    %c0_50 = arith.constant 0 : index
    %73 = vector.load %arg12[%c0_49, %c0_50] : memref<8x8xbf16, #tpu.memory_space<vmem>>, vector<8x8xbf16>
    %74 = arith.truncf %72 : vector<1x8xf32> to vector<1x8xbf16>
    %cst_51 = arith.constant dense<0.000000e+00> : vector<1x8xf32>
    %75 = tpu.matmul %74, %73, %cst_51 {dimension_numbers = #tpu.dot_dimension_numbers<[1], [0], [0], [1], [0, 0, 1, 1], [], []>} : vector<1x8xbf16>, vector<8x8xbf16>, vector<1x8xf32> -> vector<1x8xf32>
    %c0_52 = arith.constant 0 : index
    %c0_53 = arith.constant 0 : index
    %76 = vector.load %arg10[%c0_52, %c0_53] : memref<1x8xf32, #tpu.memory_space<vmem>>, vector<1x8xf32>
    %77 = arith.addf %75, %76 : vector<1x8xf32>
    %cst_54 = arith.constant 3.000000e+00 : f32
    %78 = vector.broadcast %cst_54 : f32 to vector<1x8xf32>
    %79 = arith.addf %77, %78 : vector<1x8xf32>
    %cst_55 = arith.constant 0.000000e+00 : f32
    %cst_56 = arith.constant 6.000000e+00 : f32
    %80 = vector.broadcast %cst_55 : f32 to vector<1x8xf32>
    %81 = arith.maximumf %80, %79 : vector<1x8xf32>
    %82 = vector.broadcast %cst_56 : f32 to vector<1x8xf32>
    %83 = arith.minimumf %82, %81 : vector<1x8xf32>
    %cst_57 = arith.constant 0.166666672 : f32
    %84 = vector.broadcast %cst_57 : f32 to vector<1x8xf32>
    %85 = arith.mulf %83, %84 : vector<1x8xf32>
    %c0_58 = arith.constant 0 : index
    %c0_59 = arith.constant 0 : index
    %86 = vector.load %arg7[%c0_58, %c0_59] : memref<8x112xbf16, #tpu.memory_space<vmem>>, vector<8x112xbf16>
    %87 = arith.truncf %85 : vector<1x8xf32> to vector<1x8xbf16>
    %cst_60 = arith.constant dense<0.000000e+00> : vector<1x112xf32>
    %88 = tpu.matmul %87, %86, %cst_60 {dimension_numbers = #tpu.dot_dimension_numbers<[1], [0], [0], [1], [0, 0, 1, 1], [], []>} : vector<1x8xbf16>, vector<8x112xbf16>, vector<1x112xf32> -> vector<1x112xf32>
    %89 = vector.broadcast %88 : vector<1x112xf32> to vector<14x112xf32>
    %90 = arith.mulf %58, %89 : vector<14x112xf32>
    %c0_61 = arith.constant 0 : index
    %c0_62 = arith.constant 0 : index
    %91 = vector.load %arg5[%c0_61, %c0_62] : memref<112x112xbf16, #tpu.memory_space<vmem>>, vector<112x112xbf16>
    %92 = arith.truncf %90 : vector<14x112xf32> to vector<14x112xbf16>
    %cst_63 = arith.constant dense<0.000000e+00> : vector<14x112xf32>
    %93 = tpu.matmul %92, %91, %cst_63 {dimension_numbers = #tpu.dot_dimension_numbers<[1], [0], [0], [1], [0, 0, 1, 1], [], []>} : vector<14x112xbf16>, vector<112x112xbf16>, vector<14x112xf32> -> vector<14x112xf32>
    %c0_64 = arith.constant 0 : index
    %c0_65 = arith.constant 0 : index
    %94 = vector.load %arg6[%c0_64, %c0_65] : memref<1x112xf32, #tpu.memory_space<vmem>>, vector<1x112xf32>
    %95 = vector.broadcast %94 : vector<1x112xf32> to vector<14x112xf32>
    %96 = arith.addf %93, %95 : vector<14x112xf32>
    %c0_66 = arith.constant 0 : index
    %c0_67 = arith.constant 0 : index
    %97 = vector.load %arg16[%c0_66, %c0_67] : memref<112x336xbf16, #tpu.memory_space<vmem>>, vector<112x336xbf16>
    %98 = arith.truncf %96 : vector<14x112xf32> to vector<14x112xbf16>
    %cst_68 = arith.constant dense<0.000000e+00> : vector<14x336xf32>
    %99 = tpu.matmul %98, %97, %cst_68 {dimension_numbers = #tpu.dot_dimension_numbers<[1], [0], [0], [1], [0, 0, 1, 1], [], []>} : vector<14x112xbf16>, vector<112x336xbf16>, vector<14x336xf32> -> vector<14x336xf32>
    %c0_69 = arith.constant 0 : index
    %c0_70 = arith.constant 0 : index
    %100 = vector.load %arg17[%c0_69, %c0_70] : memref<1x336xf32, #tpu.memory_space<vmem>>, vector<1x336xf32>
    %101 = vector.broadcast %100 : vector<1x336xf32> to vector<14x336xf32>
    %102 = arith.addf %99, %101 : vector<14x336xf32>
    %cst_71 = arith.constant 3.000000e+00 : f32
    %103 = vector.broadcast %cst_71 : f32 to vector<14x336xf32>
    %104 = arith.addf %102, %103 : vector<14x336xf32>
    %cst_72 = arith.constant 0.000000e+00 : f32
    %cst_73 = arith.constant 6.000000e+00 : f32
    %105 = vector.broadcast %cst_72 : f32 to vector<14x336xf32>
    %106 = arith.maximumf %105, %104 : vector<14x336xf32>
    %107 = vector.broadcast %cst_73 : f32 to vector<14x336xf32>
    %108 = arith.minimumf %107, %106 : vector<14x336xf32>
    %cst_74 = arith.constant 0.166666672 : f32
    %109 = vector.broadcast %cst_74 : f32 to vector<14x336xf32>
    %110 = arith.mulf %108, %109 : vector<14x336xf32>
    %111 = arith.mulf %102, %110 : vector<14x336xf32>
    %c0_75 = arith.constant 0 : index
    %c0_76 = arith.constant 0 : index
    %112 = vector.load %arg14[%c0_75, %c0_76] : memref<21x14xbf16, #tpu.memory_space<vmem>>, vector<21x14xbf16>
    %113 = arith.truncf %111 : vector<14x336xf32> to vector<14x336xbf16>
    %cst_77 = arith.constant dense<0.000000e+00> : vector<21x336xf32>
    %114 = tpu.matmul %112, %113, %cst_77 {dimension_numbers = #tpu.dot_dimension_numbers<[1], [0], [0], [1], [0, 0, 1, 1], [], []>} : vector<21x14xbf16>, vector<14x336xbf16>, vector<21x336xf32> -> vector<21x336xf32>
    %115 = vector.extract_strided_slice %114 {offsets = [0, 0], sizes = [7, 336], strides = [1, 1]} : vector<21x336xf32> to vector<7x336xf32>
    %c0_78 = arith.constant 0 : index
    %c0_79 = arith.constant 0 : index
    %c0_80 = arith.constant 0 : index
    %116 = vector.load %arg13[%c0_78, %c0_79, %c0_80] : memref<3x336x168xbf16, #tpu.memory_space<vmem>>, vector<1x336x168xbf16>
    %117 = vector.shape_cast %116 : vector<1x336x168xbf16> to vector<336x168xbf16>
    %118 = arith.truncf %115 : vector<7x336xf32> to vector<7x336xbf16>
    %cst_81 = arith.constant dense<0.000000e+00> : vector<7x168xf32>
    %119 = tpu.matmul %118, %117, %cst_81 {dimension_numbers = #tpu.dot_dimension_numbers<[1], [0], [0], [1], [0, 0, 1, 1], [], []>} : vector<7x336xbf16>, vector<336x168xbf16>, vector<7x168xf32> -> vector<7x168xf32>
    %120 = vector.extract_strided_slice %114 {offsets = [7, 0], sizes = [7, 336], strides = [1, 1]} : vector<21x336xf32> to vector<7x336xf32>
    %c1_82 = arith.constant 1 : index
    %c0_83 = arith.constant 0 : index
    %c0_84 = arith.constant 0 : index
    %121 = vector.load %arg13[%c1_82, %c0_83, %c0_84] : memref<3x336x168xbf16, #tpu.memory_space<vmem>>, vector<1x336x168xbf16>
    %122 = vector.shape_cast %121 : vector<1x336x168xbf16> to vector<336x168xbf16>
    %123 = arith.truncf %120 : vector<7x336xf32> to vector<7x336xbf16>
    %cst_85 = arith.constant dense<0.000000e+00> : vector<7x168xf32>
    %124 = tpu.matmul %123, %122, %cst_85 {dimension_numbers = #tpu.dot_dimension_numbers<[1], [0], [0], [1], [0, 0, 1, 1], [], []>} : vector<7x336xbf16>, vector<336x168xbf16>, vector<7x168xf32> -> vector<7x168xf32>
    %125 = arith.addf %119, %124 : vector<7x168xf32>
    %126 = vector.extract_strided_slice %114 {offsets = [14, 0], sizes = [7, 336], strides = [1, 1]} : vector<21x336xf32> to vector<7x336xf32>
    %c2_86 = arith.constant 2 : index
    %c0_87 = arith.constant 0 : index
    %c0_88 = arith.constant 0 : index
    %127 = vector.load %arg13[%c2_86, %c0_87, %c0_88] : memref<3x336x168xbf16, #tpu.memory_space<vmem>>, vector<1x336x168xbf16>
    %128 = vector.shape_cast %127 : vector<1x336x168xbf16> to vector<336x168xbf16>
    %129 = arith.truncf %126 : vector<7x336xf32> to vector<7x336xbf16>
    %cst_89 = arith.constant dense<0.000000e+00> : vector<7x168xf32>
    %130 = tpu.matmul %129, %128, %cst_89 {dimension_numbers = #tpu.dot_dimension_numbers<[1], [0], [0], [1], [0, 0, 1, 1], [], []>} : vector<7x336xbf16>, vector<336x168xbf16>, vector<7x168xf32> -> vector<7x168xf32>
    %131 = arith.addf %125, %130 : vector<7x168xf32>
    %c0_90 = arith.constant 0 : index
    %c0_91 = arith.constant 0 : index
    %132 = vector.load %arg15[%c0_90, %c0_91] : memref<1x168xf32, #tpu.memory_space<vmem>>, vector<1x168xf32>
    %133 = vector.broadcast %132 : vector<1x168xf32> to vector<7x168xf32>
    %134 = arith.addf %131, %133 : vector<7x168xf32>
    %cst_92 = arith.constant 3.000000e+00 : f32
    %135 = vector.broadcast %cst_92 : f32 to vector<7x168xf32>
    %136 = arith.addf %134, %135 : vector<7x168xf32>
    %cst_93 = arith.constant 0.000000e+00 : f32
    %cst_94 = arith.constant 6.000000e+00 : f32
    %137 = vector.broadcast %cst_93 : f32 to vector<7x168xf32>
    %138 = arith.maximumf %137, %136 : vector<7x168xf32>
    %139 = vector.broadcast %cst_94 : f32 to vector<7x168xf32>
    %140 = arith.minimumf %139, %138 : vector<7x168xf32>
    %cst_95 = arith.constant 0.166666672 : f32
    %141 = vector.broadcast %cst_95 : f32 to vector<7x168xf32>
    %142 = arith.mulf %140, %141 : vector<7x168xf32>
    %143 = arith.mulf %134, %142 : vector<7x168xf32>
    %c0_96 = arith.constant 0 : index
    %c0_97 = arith.constant 0 : index
    %144 = vector.load %arg18[%c0_96, %c0_97] : memref<168x112xbf16, #tpu.memory_space<vmem>>, vector<168x112xbf16>
    %145 = arith.truncf %143 : vector<7x168xf32> to vector<7x168xbf16>
    %cst_98 = arith.constant dense<0.000000e+00> : vector<7x112xf32>
    %146 = tpu.matmul %145, %144, %cst_98 {dimension_numbers = #tpu.dot_dimension_numbers<[1], [0], [0], [1], [0, 0, 1, 1], [], []>} : vector<7x168xbf16>, vector<168x112xbf16>, vector<7x112xf32> -> vector<7x112xf32>
    %c0_99 = arith.constant 0 : index
    %c0_100 = arith.constant 0 : index
    %147 = vector.load %arg19[%c0_99, %c0_100] : memref<1x112xf32, #tpu.memory_space<vmem>>, vector<1x112xf32>
    %148 = vector.broadcast %147 : vector<1x112xf32> to vector<7x112xf32>
    %149 = arith.addf %146, %148 : vector<7x112xf32>
    %c0_101 = arith.constant 0 : index
    %c0_102 = arith.constant 0 : index
    %150 = vector.load %arg23[%c0_101, %c0_102] : memref<112x224xbf16, #tpu.memory_space<vmem>>, vector<112x224xbf16>
    %151 = arith.truncf %149 : vector<7x112xf32> to vector<7x112xbf16>
    %cst_103 = arith.constant dense<0.000000e+00> : vector<7x224xf32>
    %152 = tpu.matmul %151, %150, %cst_103 {dimension_numbers = #tpu.dot_dimension_numbers<[1], [0], [0], [1], [0, 0, 1, 1], [], []>} : vector<7x112xbf16>, vector<112x224xbf16>, vector<7x224xf32> -> vector<7x224xf32>
    %c0_104 = arith.constant 0 : index
    %c0_105 = arith.constant 0 : index
    %153 = vector.load %arg24[%c0_104, %c0_105] : memref<1x224xf32, #tpu.memory_space<vmem>>, vector<1x224xf32>
    %154 = vector.broadcast %153 : vector<1x224xf32> to vector<7x224xf32>
    %155 = arith.addf %152, %154 : vector<7x224xf32>
    %cst_106 = arith.constant 3.000000e+00 : f32
    %156 = vector.broadcast %cst_106 : f32 to vector<7x224xf32>
    %157 = arith.addf %155, %156 : vector<7x224xf32>
    %cst_107 = arith.constant 0.000000e+00 : f32
    %cst_108 = arith.constant 6.000000e+00 : f32
    %158 = vector.broadcast %cst_107 : f32 to vector<7x224xf32>
    %159 = arith.maximumf %158, %157 : vector<7x224xf32>
    %160 = vector.broadcast %cst_108 : f32 to vector<7x224xf32>
    %161 = arith.minimumf %160, %159 : vector<7x224xf32>
    %cst_109 = arith.constant 0.166666672 : f32
    %162 = vector.broadcast %cst_109 : f32 to vector<7x224xf32>
    %163 = arith.mulf %161, %162 : vector<7x224xf32>
    %164 = arith.mulf %155, %163 : vector<7x224xf32>
    %c0_110 = arith.constant 0 : index
    %c0_111 = arith.constant 0 : index
    %165 = vector.load %arg21[%c0_110, %c0_111] : memref<35x7xbf16, #tpu.memory_space<vmem>>, vector<35x7xbf16>
    %166 = arith.truncf %164 : vector<7x224xf32> to vector<7x224xbf16>
    %cst_112 = arith.constant dense<0.000000e+00> : vector<35x224xf32>
    %167 = tpu.matmul %165, %166, %cst_112 {dimension_numbers = #tpu.dot_dimension_numbers<[1], [0], [0], [1], [0, 0, 1, 1], [], []>} : vector<35x7xbf16>, vector<7x224xbf16>, vector<35x224xf32> -> vector<35x224xf32>
    %168 = vector.extract_strided_slice %167 {offsets = [0, 0], sizes = [7, 224], strides = [1, 1]} : vector<35x224xf32> to vector<7x224xf32>
    %c0_113 = arith.constant 0 : index
    %c0_114 = arith.constant 0 : index
    %c0_115 = arith.constant 0 : index
    %169 = vector.load %arg20[%c0_113, %c0_114, %c0_115] : memref<5x224x224xbf16, #tpu.memory_space<vmem>>, vector<1x224x224xbf16>
    %170 = vector.shape_cast %169 : vector<1x224x224xbf16> to vector<224x224xbf16>
    %171 = arith.truncf %168 : vector<7x224xf32> to vector<7x224xbf16>
    %cst_116 = arith.constant dense<0.000000e+00> : vector<7x224xf32>
    %172 = tpu.matmul %171, %170, %cst_116 {dimension_numbers = #tpu.dot_dimension_numbers<[1], [0], [0], [1], [0, 0, 1, 1], [], []>} : vector<7x224xbf16>, vector<224x224xbf16>, vector<7x224xf32> -> vector<7x224xf32>
    %173 = vector.extract_strided_slice %167 {offsets = [7, 0], sizes = [7, 224], strides = [1, 1]} : vector<35x224xf32> to vector<7x224xf32>
    %c1_117 = arith.constant 1 : index
    %c0_118 = arith.constant 0 : index
    %c0_119 = arith.constant 0 : index
    %174 = vector.load %arg20[%c1_117, %c0_118, %c0_119] : memref<5x224x224xbf16, #tpu.memory_space<vmem>>, vector<1x224x224xbf16>
    %175 = vector.shape_cast %174 : vector<1x224x224xbf16> to vector<224x224xbf16>
    %176 = arith.truncf %173 : vector<7x224xf32> to vector<7x224xbf16>
    %cst_120 = arith.constant dense<0.000000e+00> : vector<7x224xf32>
    %177 = tpu.matmul %176, %175, %cst_120 {dimension_numbers = #tpu.dot_dimension_numbers<[1], [0], [0], [1], [0, 0, 1, 1], [], []>} : vector<7x224xbf16>, vector<224x224xbf16>, vector<7x224xf32> -> vector<7x224xf32>
    %178 = arith.addf %172, %177 : vector<7x224xf32>
    %179 = vector.extract_strided_slice %167 {offsets = [14, 0], sizes = [7, 224], strides = [1, 1]} : vector<35x224xf32> to vector<7x224xf32>
    %c2_121 = arith.constant 2 : index
    %c0_122 = arith.constant 0 : index
    %c0_123 = arith.constant 0 : index
    %180 = vector.load %arg20[%c2_121, %c0_122, %c0_123] : memref<5x224x224xbf16, #tpu.memory_space<vmem>>, vector<1x224x224xbf16>
    %181 = vector.shape_cast %180 : vector<1x224x224xbf16> to vector<224x224xbf16>
    %182 = arith.truncf %179 : vector<7x224xf32> to vector<7x224xbf16>
    %cst_124 = arith.constant dense<0.000000e+00> : vector<7x224xf32>
    %183 = tpu.matmul %182, %181, %cst_124 {dimension_numbers = #tpu.dot_dimension_numbers<[1], [0], [0], [1], [0, 0, 1, 1], [], []>} : vector<7x224xbf16>, vector<224x224xbf16>, vector<7x224xf32> -> vector<7x224xf32>
    %184 = arith.addf %178, %183 : vector<7x224xf32>
    %185 = vector.extract_strided_slice %167 {offsets = [21, 0], sizes = [7, 224], strides = [1, 1]} : vector<35x224xf32> to vector<7x224xf32>
    %c3 = arith.constant 3 : index
    %c0_125 = arith.constant 0 : index
    %c0_126 = arith.constant 0 : index
    %186 = vector.load %arg20[%c3, %c0_125, %c0_126] : memref<5x224x224xbf16, #tpu.memory_space<vmem>>, vector<1x224x224xbf16>
    %187 = vector.shape_cast %186 : vector<1x224x224xbf16> to vector<224x224xbf16>
    %188 = arith.truncf %185 : vector<7x224xf32> to vector<7x224xbf16>
    %cst_127 = arith.constant dense<0.000000e+00> : vector<7x224xf32>
    %189 = tpu.matmul %188, %187, %cst_127 {dimension_numbers = #tpu.dot_dimension_numbers<[1], [0], [0], [1], [0, 0, 1, 1], [], []>} : vector<7x224xbf16>, vector<224x224xbf16>, vector<7x224xf32> -> vector<7x224xf32>
    %190 = arith.addf %184, %189 : vector<7x224xf32>
    %191 = vector.extract_strided_slice %167 {offsets = [28, 0], sizes = [7, 224], strides = [1, 1]} : vector<35x224xf32> to vector<7x224xf32>
    %c4 = arith.constant 4 : index
    %c0_128 = arith.constant 0 : index
    %c0_129 = arith.constant 0 : index
    %192 = vector.load %arg20[%c4, %c0_128, %c0_129] : memref<5x224x224xbf16, #tpu.memory_space<vmem>>, vector<1x224x224xbf16>
    %193 = vector.shape_cast %192 : vector<1x224x224xbf16> to vector<224x224xbf16>
    %194 = arith.truncf %191 : vector<7x224xf32> to vector<7x224xbf16>
    %cst_130 = arith.constant dense<0.000000e+00> : vector<7x224xf32>
    %195 = tpu.matmul %194, %193, %cst_130 {dimension_numbers = #tpu.dot_dimension_numbers<[1], [0], [0], [1], [0, 0, 1, 1], [], []>} : vector<7x224xbf16>, vector<224x224xbf16>, vector<7x224xf32> -> vector<7x224xf32>
    %196 = arith.addf %190, %195 : vector<7x224xf32>
    %c0_131 = arith.constant 0 : index
    %c0_132 = arith.constant 0 : index
    %197 = vector.load %arg22[%c0_131, %c0_132] : memref<1x224xf32, #tpu.memory_space<vmem>>, vector<1x224xf32>
    %198 = vector.broadcast %197 : vector<1x224xf32> to vector<7x224xf32>
    %199 = arith.addf %196, %198 : vector<7x224xf32>
    %cst_133 = arith.constant 3.000000e+00 : f32
    %200 = vector.broadcast %cst_133 : f32 to vector<7x224xf32>
    %201 = arith.addf %199, %200 : vector<7x224xf32>
    %cst_134 = arith.constant 0.000000e+00 : f32
    %cst_135 = arith.constant 6.000000e+00 : f32
    %202 = vector.broadcast %cst_134 : f32 to vector<7x224xf32>
    %203 = arith.maximumf %202, %201 : vector<7x224xf32>
    %204 = vector.broadcast %cst_135 : f32 to vector<7x224xf32>
    %205 = arith.minimumf %204, %203 : vector<7x224xf32>
    %cst_136 = arith.constant 0.166666672 : f32
    %206 = vector.broadcast %cst_136 : f32 to vector<7x224xf32>
    %207 = arith.mulf %205, %206 : vector<7x224xf32>
    %208 = arith.mulf %199, %207 : vector<7x224xf32>
    %cst_137 = arith.constant dense<0.000000e+00> : vector<224xf32>
    %209 = vector.multi_reduction <add>, %208, %cst_137 [0] : vector<7x224xf32> to vector<224xf32>
    %210 = vector.shape_cast %209 : vector<224xf32> to vector<1x224xf32>
    %c0_138 = arith.constant 0 : index
    %c0_139 = arith.constant 0 : index
    %211 = vector.load %arg28[%c0_138, %c0_139] : memref<224x32xbf16, #tpu.memory_space<vmem>>, vector<224x32xbf16>
    %212 = arith.truncf %210 : vector<1x224xf32> to vector<1x224xbf16>
    %cst_140 = arith.constant dense<0.000000e+00> : vector<1x32xf32>
    %213 = tpu.matmul %212, %211, %cst_140 {dimension_numbers = #tpu.dot_dimension_numbers<[1], [0], [0], [1], [0, 0, 1, 1], [], []>} : vector<1x224xbf16>, vector<224x32xbf16>, vector<1x32xf32> -> vector<1x32xf32>
    %cst_141 = arith.constant 0.0204081628 : f32
    %214 = vector.broadcast %cst_141 : f32 to vector<1x32xf32>
    %215 = arith.mulf %213, %214 : vector<1x32xf32>
    %c0_142 = arith.constant 0 : index
    %c0_143 = arith.constant 0 : index
    %216 = vector.load %arg31[%c0_142, %c0_143] : memref<32x8xbf16, #tpu.memory_space<vmem>>, vector<32x8xbf16>
    %217 = arith.truncf %215 : vector<1x32xf32> to vector<1x32xbf16>
    %cst_144 = arith.constant dense<0.000000e+00> : vector<1x8xf32>
    %218 = tpu.matmul %217, %216, %cst_144 {dimension_numbers = #tpu.dot_dimension_numbers<[1], [0], [0], [1], [0, 0, 1, 1], [], []>} : vector<1x32xbf16>, vector<32x8xbf16>, vector<1x8xf32> -> vector<1x8xf32>
    %c0_145 = arith.constant 0 : index
    %c0_146 = arith.constant 0 : index
    %219 = vector.load %arg29[%c0_145, %c0_146] : memref<1x8xf32, #tpu.memory_space<vmem>>, vector<1x8xf32>
    %220 = arith.addf %218, %219 : vector<1x8xf32>
    %cst_147 = arith.constant 0.000000e+00 : f32
    %221 = vector.broadcast %cst_147 : f32 to vector<1x8xf32>
    %222 = arith.maximumf %220, %221 : vector<1x8xf32>
    %c0_148 = arith.constant 0 : index
    %c0_149 = arith.constant 0 : index
    %223 = vector.load %arg32[%c0_148, %c0_149] : memref<8x32xbf16, #tpu.memory_space<vmem>>, vector<8x32xbf16>
    %224 = arith.truncf %222 : vector<1x8xf32> to vector<1x8xbf16>
    %cst_150 = arith.constant dense<0.000000e+00> : vector<1x32xf32>
    %225 = tpu.matmul %224, %223, %cst_150 {dimension_numbers = #tpu.dot_dimension_numbers<[1], [0], [0], [1], [0, 0, 1, 1], [], []>} : vector<1x8xbf16>, vector<8x32xbf16>, vector<1x32xf32> -> vector<1x32xf32>
    %c0_151 = arith.constant 0 : index
    %c0_152 = arith.constant 0 : index
    %226 = vector.load %arg30[%c0_151, %c0_152] : memref<1x32xf32, #tpu.memory_space<vmem>>, vector<1x32xf32>
    %227 = arith.addf %225, %226 : vector<1x32xf32>
    %cst_153 = arith.constant 3.000000e+00 : f32
    %228 = vector.broadcast %cst_153 : f32 to vector<1x32xf32>
    %229 = arith.addf %227, %228 : vector<1x32xf32>
    %cst_154 = arith.constant 0.000000e+00 : f32
    %cst_155 = arith.constant 6.000000e+00 : f32
    %230 = vector.broadcast %cst_154 : f32 to vector<1x32xf32>
    %231 = arith.maximumf %230, %229 : vector<1x32xf32>
    %232 = vector.broadcast %cst_155 : f32 to vector<1x32xf32>
    %233 = arith.minimumf %232, %231 : vector<1x32xf32>
    %cst_156 = arith.constant 0.166666672 : f32
    %234 = vector.broadcast %cst_156 : f32 to vector<1x32xf32>
    %235 = arith.mulf %233, %234 : vector<1x32xf32>
    %c0_157 = arith.constant 0 : index
    %c0_158 = arith.constant 0 : index
    %236 = vector.load %arg27[%c0_157, %c0_158] : memref<32x224xbf16, #tpu.memory_space<vmem>>, vector<32x224xbf16>
    %237 = arith.truncf %235 : vector<1x32xf32> to vector<1x32xbf16>
    %cst_159 = arith.constant dense<0.000000e+00> : vector<1x224xf32>
    %238 = tpu.matmul %237, %236, %cst_159 {dimension_numbers = #tpu.dot_dimension_numbers<[1], [0], [0], [1], [0, 0, 1, 1], [], []>} : vector<1x32xbf16>, vector<32x224xbf16>, vector<1x224xf32> -> vector<1x224xf32>
    %239 = vector.broadcast %238 : vector<1x224xf32> to vector<7x224xf32>
    %240 = arith.mulf %208, %239 : vector<7x224xf32>
    %c0_160 = arith.constant 0 : index
    %c0_161 = arith.constant 0 : index
    %241 = vector.load %arg25[%c0_160, %c0_161] : memref<224x112xbf16, #tpu.memory_space<vmem>>, vector<224x112xbf16>
    %242 = arith.truncf %240 : vector<7x224xf32> to vector<7x224xbf16>
    %cst_162 = arith.constant dense<0.000000e+00> : vector<7x112xf32>
    %243 = tpu.matmul %242, %241, %cst_162 {dimension_numbers = #tpu.dot_dimension_numbers<[1], [0], [0], [1], [0, 0, 1, 1], [], []>} : vector<7x224xbf16>, vector<224x112xbf16>, vector<7x112xf32> -> vector<7x112xf32>
    %c0_163 = arith.constant 0 : index
    %c0_164 = arith.constant 0 : index
    %244 = vector.load %arg26[%c0_163, %c0_164] : memref<1x112xf32, #tpu.memory_space<vmem>>, vector<1x112xf32>
    %245 = vector.broadcast %244 : vector<1x112xf32> to vector<7x112xf32>
    %246 = arith.addf %243, %245 : vector<7x112xf32>
    %247 = arith.addf %246, %149 : vector<7x112xf32>
    %c0_165 = arith.constant 0 : index
    %c0_166 = arith.constant 0 : index
    %248 = vector.load %arg38[%c0_165, %c0_166] : memref<112x448xbf16, #tpu.memory_space<vmem>>, vector<112x448xbf16>
    %249 = arith.truncf %247 : vector<7x112xf32> to vector<7x112xbf16>
    %cst_167 = arith.constant dense<0.000000e+00> : vector<7x448xf32>
    %250 = tpu.matmul %249, %248, %cst_167 {dimension_numbers = #tpu.dot_dimension_numbers<[1], [0], [0], [1], [0, 0, 1, 1], [], []>} : vector<7x112xbf16>, vector<112x448xbf16>, vector<7x448xf32> -> vector<7x448xf32>
    %c0_168 = arith.constant 0 : index
    %c0_169 = arith.constant 0 : index
    %251 = vector.load %arg39[%c0_168, %c0_169] : memref<1x448xf32, #tpu.memory_space<vmem>>, vector<1x448xf32>
    %252 = vector.broadcast %251 : vector<1x448xf32> to vector<7x448xf32>
    %253 = arith.addf %250, %252 : vector<7x448xf32>
    %cst_170 = arith.constant 3.000000e+00 : f32
    %254 = vector.broadcast %cst_170 : f32 to vector<7x448xf32>
    %255 = arith.addf %253, %254 : vector<7x448xf32>
    %cst_171 = arith.constant 0.000000e+00 : f32
    %cst_172 = arith.constant 6.000000e+00 : f32
    %256 = vector.broadcast %cst_171 : f32 to vector<7x448xf32>
    %257 = arith.maximumf %256, %255 : vector<7x448xf32>
    %258 = vector.broadcast %cst_172 : f32 to vector<7x448xf32>
    %259 = arith.minimumf %258, %257 : vector<7x448xf32>
    %cst_173 = arith.constant 0.166666672 : f32
    %260 = vector.broadcast %cst_173 : f32 to vector<7x448xf32>
    %261 = arith.mulf %259, %260 : vector<7x448xf32>
    %262 = arith.mulf %253, %261 : vector<7x448xf32>
    %cst_174 = arith.constant dense<0.000000e+00> : vector<448xf32>
    %263 = vector.multi_reduction <add>, %262, %cst_174 [0] : vector<7x448xf32> to vector<448xf32>
    %264 = vector.shape_cast %263 : vector<448xf32> to vector<1x448xf32>
    %c0_175 = arith.constant 0 : index
    %c0_176 = arith.constant 0 : index
    %265 = vector.load %arg42[%c0_175, %c0_176] : memref<448x64xbf16, #tpu.memory_space<vmem>>, vector<448x64xbf16>
    %266 = arith.truncf %264 : vector<1x448xf32> to vector<1x448xbf16>
    %cst_177 = arith.constant dense<0.000000e+00> : vector<1x64xf32>
    %267 = tpu.matmul %266, %265, %cst_177 {dimension_numbers = #tpu.dot_dimension_numbers<[1], [0], [0], [1], [0, 0, 1, 1], [], []>} : vector<1x448xbf16>, vector<448x64xbf16>, vector<1x64xf32> -> vector<1x64xf32>
    %cst_178 = arith.constant 0.0204081628 : f32
    %268 = vector.broadcast %cst_178 : f32 to vector<1x64xf32>
    %269 = arith.mulf %267, %268 : vector<1x64xf32>
    %c0_179 = arith.constant 0 : index
    %c0_180 = arith.constant 0 : index
    %270 = vector.load %arg41[%c0_179, %c0_180] : memref<64x128xbf16, #tpu.memory_space<vmem>>, vector<64x128xbf16>
    %271 = arith.truncf %269 : vector<1x64xf32> to vector<1x64xbf16>
    %cst_181 = arith.constant dense<0.000000e+00> : vector<1x128xf32>
    %272 = tpu.matmul %271, %270, %cst_181 {dimension_numbers = #tpu.dot_dimension_numbers<[1], [0], [0], [1], [0, 0, 1, 1], [], []>} : vector<1x64xbf16>, vector<64x128xbf16>, vector<1x128xf32> -> vector<1x128xf32>
    %c0_182 = arith.constant 0 : index
    %c0_183 = arith.constant 0 : index
    %273 = vector.load %arg40[%c0_182, %c0_183] : memref<1x128xf32, #tpu.memory_space<vmem>>, vector<1x128xf32>
    %274 = arith.addf %272, %273 : vector<1x128xf32>
    %cst_184 = arith.constant 3.000000e+00 : f32
    %275 = vector.broadcast %cst_184 : f32 to vector<1x128xf32>
    %276 = arith.addf %274, %275 : vector<1x128xf32>
    %cst_185 = arith.constant 0.000000e+00 : f32
    %cst_186 = arith.constant 6.000000e+00 : f32
    %277 = vector.broadcast %cst_185 : f32 to vector<1x128xf32>
    %278 = arith.maximumf %277, %276 : vector<1x128xf32>
    %279 = vector.broadcast %cst_186 : f32 to vector<1x128xf32>
    %280 = arith.minimumf %279, %278 : vector<1x128xf32>
    %cst_187 = arith.constant 0.166666672 : f32
    %281 = vector.broadcast %cst_187 : f32 to vector<1x128xf32>
    %282 = arith.mulf %280, %281 : vector<1x128xf32>
    %283 = arith.mulf %274, %282 : vector<1x128xf32>
    %c0_188 = arith.constant 0 : index
    %c0_189 = arith.constant 0 : index
    %284 = vector.load %arg37[%c0_188, %c0_189] : memref<128x128xbf16, #tpu.memory_space<vmem>>, vector<128x128xbf16>
    %285 = arith.truncf %283 : vector<1x128xf32> to vector<1x128xbf16>
    %cst_190 = arith.constant dense<0.000000e+00> : vector<1x128xf32>
    %286 = tpu.matmul %285, %284, %cst_190 {dimension_numbers = #tpu.dot_dimension_numbers<[1], [0], [0], [1], [0, 0, 1, 1], [], []>} : vector<1x128xbf16>, vector<128x128xbf16>, vector<1x128xf32> -> vector<1x128xf32>
    %c0_191 = arith.constant 0 : index
    %c0_192 = arith.constant 0 : index
    %287 = vector.load %arg36[%c0_191, %c0_192] : memref<1x128xf32, #tpu.memory_space<vmem>>, vector<1x128xf32>
    %288 = arith.addf %286, %287 : vector<1x128xf32>
    %c0_193 = arith.constant 0 : index
    %c0_194 = arith.constant 0 : index
    %c0_195 = arith.constant 0 : index
    %289 = vector.load %arg43[%c0_193, %c0_194, %c0_195] : memref<1x1x128xf32, #tpu.memory_space<vmem>>, vector<1x1x128xf32>
    %290 = vector.shape_cast %289 : vector<1x1x128xf32> to vector<1x128xf32>
    %291 = vector.shape_cast %288 : vector<1x128xf32> to vector<1x1x128xf32>
    tpu.vector_store %arg43[%c0_193, %c0_194, %c0_195], %291 {strides = array<i32>} : memref<1x1x128xf32, #tpu.memory_space<vmem>>, vector<1x1x128xf32>,
    return
  }
  func.func @transform_0(%arg0: i32) -> (i32, i32, i32) {
    %c0_i32 = arith.constant 0 : i32
    %c0_i32_0 = arith.constant 0 : i32
    %c0_i32_1 = arith.constant 0 : i32
    return %arg0, %c0_i32, %c0_i32_0 : i32, i32, i32
  }
  func.func @transform_1(%arg0: i32) -> (i32, i32, i32) {
    %c0_i32 = arith.constant 0 : i32
    %c0_i32_0 = arith.constant 0 : i32
    %c0_i32_1 = arith.constant 0 : i32
    %c0_i32_2 = arith.constant 0 : i32
    return %c0_i32, %c0_i32_0, %c0_i32_1 : i32, i32, i32
  }
  func.func @transform_2(%arg0: i32) -> (i32, i32) {
    %c0_i32 = arith.constant 0 : i32
    %c0_i32_0 = arith.constant 0 : i32
    %c0_i32_1 = arith.constant 0 : i32
    return %c0_i32, %c0_i32_0 : i32, i32
  }
  func.func @transform_3(%arg0: i32) -> (i32, i32) {
    %c0_i32 = arith.constant 0 : i32
    %c0_i32_0 = arith.constant 0 : i32
    %c0_i32_1 = arith.constant 0 : i32
    return %c0_i32, %c0_i32_0 : i32, i32
  }
  func.func @transform_4(%arg0: i32) -> (i32, i32) {
    %c0_i32 = arith.constant 0 : i32
    %c0_i32_0 = arith.constant 0 : i32
    %c0_i32_1 = arith.constant 0 : i32
    return %c0_i32, %c0_i32_0 : i32, i32
  }
  func.func @transform_5(%arg0: i32) -> (i32, i32) {
    %c0_i32 = arith.constant 0 : i32
    %c0_i32_0 = arith.constant 0 : i32
    %c0_i32_1 = arith.constant 0 : i32
    return %c0_i32, %c0_i32_0 : i32, i32
  }
  func.func @transform_6(%arg0: i32) -> (i32, i32) {
    %c0_i32 = arith.constant 0 : i32
    %c0_i32_0 = arith.constant 0 : i32
    %c0_i32_1 = arith.constant 0 : i32
    return %c0_i32, %c0_i32_0 : i32, i32
  }
  func.func @transform_7(%arg0: i32) -> (i32, i32) {
    %c0_i32 = arith.constant 0 : i32
    %c0_i32_0 = arith.constant 0 : i32
    %c0_i32_1 = arith.constant 0 : i32
    return %c0_i32, %c0_i32_0 : i32, i32
  }
  func.func @transform_8(%arg0: i32) -> (i32, i32) {
    %c0_i32 = arith.constant 0 : i32
    %c0_i32_0 = arith.constant 0 : i32
    %c0_i32_1 = arith.constant 0 : i32
    return %c0_i32, %c0_i32_0 : i32, i32
  }
  func.func @transform_9(%arg0: i32) -> (i32, i32) {
    %c0_i32 = arith.constant 0 : i32
    %c0_i32_0 = arith.constant 0 : i32
    %c0_i32_1 = arith.constant 0 : i32
    return %c0_i32, %c0_i32_0 : i32, i32
  }
  func.func @transform_10(%arg0: i32) -> (i32, i32) {
    %c0_i32 = arith.constant 0 : i32
    %c0_i32_0 = arith.constant 0 : i32
    %c0_i32_1 = arith.constant 0 : i32
    return %c0_i32, %c0_i32_0 : i32, i32
  }
  func.func @transform_11(%arg0: i32) -> (i32, i32) {
    %c0_i32 = arith.constant 0 : i32
    %c0_i32_0 = arith.constant 0 : i32
    %c0_i32_1 = arith.constant 0 : i32
    return %c0_i32, %c0_i32_0 : i32, i32
  }
  func.func @transform_12(%arg0: i32) -> (i32, i32, i32) {
    %c0_i32 = arith.constant 0 : i32
    %c0_i32_0 = arith.constant 0 : i32
    %c0_i32_1 = arith.constant 0 : i32
    %c0_i32_2 = arith.constant 0 : i32
    return %c0_i32, %c0_i32_0, %c0_i32_1 : i32, i32, i32
  }
  func.func @transform_13(%arg0: i32) -> (i32, i32) {
    %c0_i32 = arith.constant 0 : i32
    %c0_i32_0 = arith.constant 0 : i32
    %c0_i32_1 = arith.constant 0 : i32
    return %c0_i32, %c0_i32_0 : i32, i32
  }
  func.func @transform_14(%arg0: i32) -> (i32, i32) {
    %c0_i32 = arith.constant 0 : i32
    %c0_i32_0 = arith.constant 0 : i32
    %c0_i32_1 = arith.constant 0 : i32
    return %c0_i32, %c0_i32_0 : i32, i32
  }
  func.func @transform_15(%arg0: i32) -> (i32, i32) {
    %c0_i32 = arith.constant 0 : i32
    %c0_i32_0 = arith.constant 0 : i32
    %c0_i32_1 = arith.constant 0 : i32
    return %c0_i32, %c0_i32_0 : i32, i32
  }
  func.func @transform_16(%arg0: i32) -> (i32, i32) {
    %c0_i32 = arith.constant 0 : i32
    %c0_i32_0 = arith.constant 0 : i32
    %c0_i32_1 = arith.constant 0 : i32
    return %c0_i32, %c0_i32_0 : i32, i32
  }
  func.func @transform_17(%arg0: i32) -> (i32, i32) {
    %c0_i32 = arith.constant 0 : i32
    %c0_i32_0 = arith.constant 0 : i32
    %c0_i32_1 = arith.constant 0 : i32
    return %c0_i32, %c0_i32_0 : i32, i32
  }
  func.func @transform_18(%arg0: i32) -> (i32, i32) {
    %c0_i32 = arith.constant 0 : i32
    %c0_i32_0 = arith.constant 0 : i32
    %c0_i32_1 = arith.constant 0 : i32
    return %c0_i32, %c0_i32_0 : i32, i32
  }
  func.func @transform_19(%arg0: i32) -> (i32, i32, i32) {
    %c0_i32 = arith.constant 0 : i32
    %c0_i32_0 = arith.constant 0 : i32
    %c0_i32_1 = arith.constant 0 : i32
    %c0_i32_2 = arith.constant 0 : i32
    return %c0_i32, %c0_i32_0, %c0_i32_1 : i32, i32, i32
  }
  func.func @transform_20(%arg0: i32) -> (i32, i32) {
    %c0_i32 = arith.constant 0 : i32
    %c0_i32_0 = arith.constant 0 : i32
    %c0_i32_1 = arith.constant 0 : i32
    return %c0_i32, %c0_i32_0 : i32, i32
  }
  func.func @transform_21(%arg0: i32) -> (i32, i32) {
    %c0_i32 = arith.constant 0 : i32
    %c0_i32_0 = arith.constant 0 : i32
    %c0_i32_1 = arith.constant 0 : i32
    return %c0_i32, %c0_i32_0 : i32, i32
  }
  func.func @transform_22(%arg0: i32) -> (i32, i32) {
    %c0_i32 = arith.constant 0 : i32
    %c0_i32_0 = arith.constant 0 : i32
    %c0_i32_1 = arith.constant 0 : i32
    return %c0_i32, %c0_i32_0 : i32, i32
  }
  func.func @transform_23(%arg0: i32) -> (i32, i32) {
    %c0_i32 = arith.constant 0 : i32
    %c0_i32_0 = arith.constant 0 : i32
    %c0_i32_1 = arith.constant 0 : i32
    return %c0_i32, %c0_i32_0 : i32, i32
  }
  func.func @transform_24(%arg0: i32) -> (i32, i32) {
    %c0_i32 = arith.constant 0 : i32
    %c0_i32_0 = arith.constant 0 : i32
    %c0_i32_1 = arith.constant 0 : i32
    return %c0_i32, %c0_i32_0 : i32, i32
  }
  func.func @transform_25(%arg0: i32) -> (i32, i32) {
    %c0_i32 = arith.constant 0 : i32
    %c0_i32_0 = arith.constant 0 : i32
    %c0_i32_1 = arith.constant 0 : i32
    return %c0_i32, %c0_i32_0 : i32, i32
  }
  func.func @transform_26(%arg0: i32) -> (i32, i32) {
    %c0_i32 = arith.constant 0 : i32
    %c0_i32_0 = arith.constant 0 : i32
    %c0_i32_1 = arith.constant 0 : i32
    return %c0_i32, %c0_i32_0 : i32, i32
  }
  func.func @transform_27(%arg0: i32) -> (i32, i32) {
    %c0_i32 = arith.constant 0 : i32
    %c0_i32_0 = arith.constant 0 : i32
    %c0_i32_1 = arith.constant 0 : i32
    return %c0_i32, %c0_i32_0 : i32, i32
  }
  func.func @transform_28(%arg0: i32) -> (i32, i32) {
    %c0_i32 = arith.constant 0 : i32
    %c0_i32_0 = arith.constant 0 : i32
    %c0_i32_1 = arith.constant 0 : i32
    return %c0_i32, %c0_i32_0 : i32, i32
  }
  func.func @transform_29(%arg0: i32) -> (i32, i32) {
    %c0_i32 = arith.constant 0 : i32
    %c0_i32_0 = arith.constant 0 : i32
    %c0_i32_1 = arith.constant 0 : i32
    return %c0_i32, %c0_i32_0 : i32, i32
  }
  func.func @transform_30(%arg0: i32) -> (i32, i32) {
    %c0_i32 = arith.constant 0 : i32
    %c0_i32_0 = arith.constant 0 : i32
    %c0_i32_1 = arith.constant 0 : i32
    return %c0_i32, %c0_i32_0 : i32, i32
  }
  func.func @transform_31(%arg0: i32) -> (i32, i32) {
    %c0_i32 = arith.constant 0 : i32
    %c0_i32_0 = arith.constant 0 : i32
    %c0_i32_1 = arith.constant 0 : i32
    return %c0_i32, %c0_i32_0 : i32, i32
  }
  func.func @transform_32(%arg0: i32) -> (i32, i32, i32) {
    %c0_i32 = arith.constant 0 : i32
    %c0_i32_0 = arith.constant 0 : i32
    %c0_i32_1 = arith.constant 0 : i32
    %c0_i32_2 = arith.constant 0 : i32
    return %c0_i32, %c0_i32_0, %c0_i32_1 : i32, i32, i32
  }
  func.func @transform_33(%arg0: i32) -> (i32, i32) {
    %c0_i32 = arith.constant 0 : i32
    %c0_i32_0 = arith.constant 0 : i32
    %c0_i32_1 = arith.constant 0 : i32
    return %c0_i32, %c0_i32_0 : i32, i32
  }
  func.func @transform_34(%arg0: i32) -> (i32, i32) {
    %c0_i32 = arith.constant 0 : i32
    %c0_i32_0 = arith.constant 0 : i32
    %c0_i32_1 = arith.constant 0 : i32
    return %c0_i32, %c0_i32_0 : i32, i32
  }
  func.func @transform_35(%arg0: i32) -> (i32, i32) {
    %c0_i32 = arith.constant 0 : i32
    %c0_i32_0 = arith.constant 0 : i32
    %c0_i32_1 = arith.constant 0 : i32
    return %c0_i32, %c0_i32_0 : i32, i32
  }
  func.func @transform_36(%arg0: i32) -> (i32, i32) {
    %c0_i32 = arith.constant 0 : i32
    %c0_i32_0 = arith.constant 0 : i32
    %c0_i32_1 = arith.constant 0 : i32
    return %c0_i32, %c0_i32_0 : i32, i32
  }
  func.func @transform_37(%arg0: i32) -> (i32, i32) {
    %c0_i32 = arith.constant 0 : i32
    %c0_i32_0 = arith.constant 0 : i32
    %c0_i32_1 = arith.constant 0 : i32
    return %c0_i32, %c0_i32_0 : i32, i32
  }
  func.func @transform_38(%arg0: i32) -> (i32, i32) {
    %c0_i32 = arith.constant 0 : i32
    %c0_i32_0 = arith.constant 0 : i32
    %c0_i32_1 = arith.constant 0 : i32
    return %c0_i32, %c0_i32_0 : i32, i32
  }
  func.func @transform_39(%arg0: i32) -> (i32, i32) {
    %c0_i32 = arith.constant 0 : i32
    %c0_i32_0 = arith.constant 0 : i32
    %c0_i32_1 = arith.constant 0 : i32
    return %c0_i32, %c0_i32_0 : i32, i32
  }
  func.func @transform_40(%arg0: i32) -> (i32, i32) {
    %c0_i32 = arith.constant 0 : i32
    %c0_i32_0 = arith.constant 0 : i32
    %c0_i32_1 = arith.constant 0 : i32
    return %c0_i32, %c0_i32_0 : i32, i32
  }
  func.func @transform_41(%arg0: i32) -> (i32, i32) {
    %c0_i32 = arith.constant 0 : i32
    %c0_i32_0 = arith.constant 0 : i32
    %c0_i32_1 = arith.constant 0 : i32
    return %c0_i32, %c0_i32_0 : i32, i32
  }
  func.func @transform_42(%arg0: i32) -> (i32, i32, i32) {
    %c0_i32 = arith.constant 0 : i32
    %c0_i32_0 = arith.constant 0 : i32
    %c0_i32_1 = arith.constant 0 : i32
    return %arg0, %c0_i32, %c0_i32_0 : i32, i32, i32
  }
}

</mosaic_0001>

<llo_original>
// kernel: _lambda_.1
$region0: #{_lambda_.1}
  #allocation0 [shape = 'u32[]', space=smem, size = 0x4, offset = 0x4, fixed_abs, tag = 'smem constant byte address 0x4 - core index']
  #allocation1 [shape = 'u32[144,128]{1,0:T(1,128)}', space=vmem, size = 0x12000, scoped, tag = 'internal scratch']
  %s0 = inlined_call_operand.smem [shape: u32[43], index: -1, kind: input, shape index: {}]
  %s1 = sld [smem:[%s0]]
  %s2 = scalar_lea.smem %s0, 1
  %s3 = sld [smem:[%s2]]
  %s4 = scalar_lea.smem %s0, 2
  %s5 = sld [smem:[%s4]]
  %s6 = scalar_lea.smem %s0, 3
  %s7 = sld [smem:[%s6]]
  %s8 = scalar_lea.smem %s0, 4
  %s9 = sld [smem:[%s8]]
  %s10 = scalar_lea.smem %s0, 5
  %s11 = sld [smem:[%s10]]
  %s12 = scalar_lea.smem %s0, 6
  %s13 = sld [smem:[%s12]]
  %s14 = scalar_lea.smem %s0, 7
  %s15 = sld [smem:[%s14]]
  %s16 = scalar_lea.smem %s0, 8
  %s17 = sld [smem:[%s16]]
  %s18 = scalar_lea.smem %s0, 9
  %s19 = sld [smem:[%s18]]
  %s20 = scalar_lea.smem %s0, 10
  %s21 = sld [smem:[%s20]]
  %s22 = scalar_lea.smem %s0, 11
  %s23 = sld [smem:[%s22]]
  %s24 = scalar_lea.smem %s0, 12
  %s25 = sld [smem:[%s24]]
  %s26 = scalar_lea.smem %s0, 13
  %s27 = sld [smem:[%s26]]
  %s28 = scalar_lea.smem %s0, 14
  %s29 = sld [smem:[%s28]]
  %s30 = scalar_lea.smem %s0, 15
  %s31 = sld [smem:[%s30]]
  %s32 = scalar_lea.smem %s0, 16
  %s33 = sld [smem:[%s32]]
  %s34 = scalar_lea.smem %s0, 17
  %s35 = sld [smem:[%s34]]
  %s36 = scalar_lea.smem %s0, 18
  %s37 = sld [smem:[%s36]]
  %s38 = scalar_lea.smem %s0, 19
  %s39 = sld [smem:[%s38]]
  %s40 = scalar_lea.smem %s0, 20
  %s41 = sld [smem:[%s40]]
  %s42 = scalar_lea.smem %s0, 21
  %s43 = sld [smem:[%s42]]
  %s44 = scalar_lea.smem %s0, 22
  %s45 = sld [smem:[%s44]]
  %s46 = scalar_lea.smem %s0, 23
  %s47 = sld [smem:[%s46]]
  %s48 = scalar_lea.smem %s0, 24
  %s49 = sld [smem:[%s48]]
  %s50 = scalar_lea.smem %s0, 25
  %s51 = sld [smem:[%s50]]
  %s52 = scalar_lea.smem %s0, 26
  %s53 = sld [smem:[%s52]]
  %s54 = scalar_lea.smem %s0, 27
  %s55 = sld [smem:[%s54]]
  %s56 = scalar_lea.smem %s0, 28
  %s57 = sld [smem:[%s56]]
  %s58 = scalar_lea.smem %s0, 29
  %s59 = sld [smem:[%s58]]
  %s60 = scalar_lea.smem %s0, 30
  %s61 = sld [smem:[%s60]]
  %s62 = scalar_lea.smem %s0, 31
  %s63 = sld [smem:[%s62]]
  %s64 = scalar_lea.smem %s0, 32
  %s65 = sld [smem:[%s64]]
  %s66 = scalar_lea.smem %s0, 33
  %s67 = sld [smem:[%s66]]
  %s68 = scalar_lea.smem %s0, 34
  %s69 = sld [smem:[%s68]]
  %s70 = scalar_lea.smem %s0, 35
  %s71 = sld [smem:[%s70]]
  %s72 = scalar_lea.smem %s0, 36
  %s73 = sld [smem:[%s72]]
  %s74 = scalar_lea.smem %s0, 37
  %s75 = sld [smem:[%s74]]
  %s76 = scalar_lea.smem %s0, 38
  %s77 = sld [smem:[%s76]]
  %s78 = scalar_lea.smem %s0, 39
  %s79 = sld [smem:[%s78]]
  %s80 = scalar_lea.smem %s0, 40
  %s81 = sld [smem:[%s80]]
  %s82 = scalar_lea.smem %s0, 41
  %s83 = sld [smem:[%s82]]
  %s84 = scalar_lea.smem %s0, 42
  %s85 = sld [smem:[%s84]]
  %s86 = sld [smem:[#allocation0]]
  $region281: #{_lambda_.1} parent=0
    _
  %s88 = ssub.s32 1, %s86
  %s89 = scalar_select 0, %s88, %s86
  $region1: #{_lambda_.1} parent=0
    #allocation2 [shape = 'u8[28672]{0}', space=vmem, size = 0x7000, scoped, tag = 'input window, operand 4, single buffered']
    #allocation3 [shape = 's32[2]{0}', space=sflag, size = 0x8, scoped, tag = 'scoped memory for _lambda_.1']
    #allocation4 [shape = 's32[2]{0}', space=sflag, size = 0x8, scoped, tag = 'scoped memory for _lambda_.1']
    #allocation5 [shape = 'u8[512]{0}', space=vmem, size = 0x400, scoped, tag = 'input window, operand 5, single buffered']
    #allocation6 [shape = 's32[1]{0}', space=sflag, size = 0x4, scoped, tag = 'scoped memory for _lambda_.1']
    #allocation7 [shape = 'u8[2048]{0}', space=vmem, size = 0x800, scoped, tag = 'input window, operand 6, single buffered']
    #allocation8 [shape = 'u8[512]{0}', space=vmem, size = 0x400, scoped, tag = 'input window, operand 8, single buffered']
    #allocation9 [shape = 's32[1]{0}', space=sflag, size = 0x4, scoped, tag = 'scoped memory for _lambda_.1']
    #allocation10 [shape = 'u8[512]{0}', space=vmem, size = 0x400, scoped, tag = 'input window, operand 9, single buffered']
    #allocation11 [shape = 'u8[2048]{0}', space=vmem, size = 0x800, scoped, tag = 'input window, operand 10, single buffered']
    #allocation12 [shape = 's32[1]{0}', space=sflag, size = 0x4, scoped, tag = 'scoped memory for _lambda_.1']
    #allocation13 [shape = 'u8[2048]{0}', space=vmem, size = 0x800, scoped, tag = 'input window, operand 11, single buffered']
    #allocation14 [shape = 'u8[1024]{0}', space=vmem, size = 0x400, scoped, tag = 'input window, operand 14, single buffered']
    #allocation15 [shape = 's32[1]{0}', space=sflag, size = 0x4, scoped, tag = 'scoped memory for _lambda_.1']
    #allocation16 [shape = 'u8[1536]{0}', space=vmem, size = 0x800, scoped, tag = 'input window, operand 16, single buffered']
    #allocation17 [shape = 'u8[512]{0}', space=vmem, size = 0x400, scoped, tag = 'input window, operand 18, single buffered']
    #allocation18 [shape = 's32[1]{0}', space=sflag, size = 0x4, scoped, tag = 'scoped memory for _lambda_.1']
    #allocation19 [shape = 'u8[1024]{0}', space=vmem, size = 0x400, scoped, tag = 'input window, operand 21, single buffered']
    #allocation20 [shape = 'u8[1024]{0}', space=vmem, size = 0x400, scoped, tag = 'input window, operand 23, single buffered']
    #allocation21 [shape = 's32[1]{0}', space=sflag, size = 0x4, scoped, tag = 'scoped memory for _lambda_.1']
    #allocation22 [shape = 'u8[57344]{0}', space=vmem, size = 0xe000, scoped, tag = 'input window, operand 24, single buffered']
    #allocation23 [shape = 'u8[512]{0}', space=vmem, size = 0x400, scoped, tag = 'input window, operand 25, single buffered']
    #allocation24 [shape = 's32[1]{0}', space=sflag, size = 0x4, scoped, tag = 'scoped memory for _lambda_.1']
    #allocation25 [shape = 'u8[16384]{0}', space=vmem, size = 0x4000, scoped, tag = 'input window, operand 26, single buffered']
    #allocation26 [shape = 'u8[512]{0}', space=vmem, size = 0x400, scoped, tag = 'input window, operand 28, single buffered']
    #allocation27 [shape = 's32[1]{0}', space=sflag, size = 0x4, scoped, tag = 'scoped memory for _lambda_.1']
    #allocation28 [shape = 'u8[512]{0}', space=vmem, size = 0x400, scoped, tag = 'input window, operand 29, single buffered']
    #allocation29 [shape = 'u8[2048]{0}', space=vmem, size = 0x800, scoped, tag = 'input window, operand 31, single buffered']
    #allocation30 [shape = 's32[1]{0}', space=sflag, size = 0x4, scoped, tag = 'scoped memory for _lambda_.1']
    #allocation31 [shape = 'u8[1024]{0}', space=vmem, size = 0x400, scoped, tag = 'input window, operand 34, single buffered']
    #allocation32 [shape = 'u8[512]{0}', space=vmem, size = 0x400, scoped, tag = 'input window, operand 35, single buffered']
    #allocation33 [shape = 's32[1]{0}', space=sflag, size = 0x4, scoped, tag = 'scoped memory for _lambda_.1']
    #allocation34 [shape = 'u8[1024]{0}', space=vmem, size = 0x400, scoped, tag = 'output window, operand 0']
    %90 = vsyncpa [#allocation3], 0
    %91 = vsyncpa [#allocation6], 0
    %92 = vsyncpa [#allocation9], 0
    %93 = vsyncpa [#allocation12], 0
    %94 = vsyncpa [#allocation15], 0
    %95 = vsyncpa [#allocation18], 0
    %96 = vsyncpa [#allocation21], 0
    %97 = vsyncpa [#allocation24], 0
    %98 = vsyncpa [#allocation27], 0
    %99 = vsyncpa [#allocation30], 0
    %100 = vsyncpa [#allocation33], 0
    %101 = vsyncpa [#allocation4], 0
    %s102 = scalar_lea.sflag [#allocation4], 1
    %103 = vsyncpa %s102, 0
    loop: start=0, step=1, limit=4
    $region2: #{_lambda_.1} parent=1 // loop_pre_header
      _
    $region3: #{_lambda_.1} parent=1 // loop_header
      %s105 = sphi 0, %s109
      %p106 = scmp.ge.s32.totalorder %s105, 4
      %s115 = sphi 0, %s117
      %s118 = sphi 0, %s115
      %s119 = sphi 0, %s118
      %s135 = sphi 0, %s119
      %s139 = sphi 0, %s139
      %s141 = sphi 0, %s139
      %s142 = sphi 0, %s141
      %s156 = sphi 0, %s142
      %s160 = sphi 0, %s160
      %s162 = sphi 0, %s160
      %s163 = sphi 0, %s162
      %s177 = sphi 0, %s163
      %s181 = sphi 0, %s181
      %s183 = sphi 0, %s181
      %s184 = sphi 0, %s183
      %s198 = sphi 0, %s184
      %s202 = sphi 0, %s202
      %s204 = sphi 0, %s202
      %s205 = sphi 0, %s204
      %s219 = sphi 0, %s205
      %s223 = sphi 0, %s223
      %s225 = sphi 0, %s223
      %s226 = sphi 0, %s225
      %s240 = sphi 0, %s226
      %s244 = sphi 0, %s244
      %s246 = sphi 0, %s244
      %s247 = sphi 0, %s246
      %s261 = sphi 0, %s247
      %s265 = sphi 0, %s265
      %s267 = sphi 0, %s265
      %s268 = sphi 0, %s267
      %s282 = sphi 0, %s268
      %s286 = sphi 0, %s286
      %s288 = sphi 0, %s286
      %s289 = sphi 0, %s288
      %s303 = sphi 0, %s289
      %s307 = sphi 0, %s307
      %s309 = sphi 0, %s307
      %s310 = sphi 0, %s309
      %s324 = sphi 0, %s310
      %s328 = sphi 0, %s328
      %s330 = sphi 0, %s328
      %s331 = sphi 0, %s330
      %s345 = sphi 0, %s331
      %s349 = sphi 0, %s349
      %s351 = sphi 0, %s349
      %s352 = sphi 0, %s351
      %s366 = sphi 0, %s352
      %s370 = sphi 0, %s370
      %s372 = sphi 0, %s370
      %s373 = sphi 0, %s372
      %s387 = sphi 0, %s373
      %s391 = sphi 0, %s391
      %s393 = sphi 0, %s391
      %s394 = sphi 0, %s393
      %s408 = sphi 0, %s394
      %s412 = sphi 0, %s412
      %s414 = sphi 0, %s412
      %s415 = sphi 0, %s414
      %s429 = sphi 0, %s415
      %s433 = sphi 0, %s433
      %s435 = sphi 0, %s433
      %s436 = sphi 0, %s435
      %s450 = sphi 0, %s436
      %s454 = sphi 0, %s454
      %s456 = sphi 0, %s454
      %s457 = sphi 0, %s456
      %s471 = sphi 0, %s457
      %s475 = sphi 0, %s475
      %s477 = sphi 0, %s475
      %s478 = sphi 0, %s477
      %s492 = sphi 0, %s478
      %s496 = sphi 0, %s496
      %s498 = sphi 0, %s496
      %s499 = sphi 0, %s498
      %s513 = sphi 0, %s499
      %s517 = sphi 0, %s517
      %s519 = sphi 0, %s517
      %s520 = sphi 0, %s519
      %s534 = sphi 0, %s520
      %s538 = sphi 0, %s538
      %s540 = sphi 0, %s538
      %s541 = sphi 0, %s540
      %s555 = sphi 0, %s541
      %s559 = sphi 0, %s559
      %s561 = sphi 0, %s559
      %s562 = sphi 0, %s561
      %s576 = sphi 0, %s562
      %s580 = sphi 0, %s580
      %s582 = sphi 0, %s580
      %s583 = sphi 0, %s582
      %s597 = sphi 0, %s583
      %s601 = sphi 0, %s601
      %s603 = sphi 0, %s601
      %s604 = sphi 0, %s603
      %s618 = sphi 0, %s604
      %s622 = sphi 0, %s622
      %s624 = sphi 0, %s622
      %s625 = sphi 0, %s624
      %s639 = sphi 0, %s625
      %s643 = sphi 0, %s643
      %s645 = sphi 0, %s643
      %s646 = sphi 0, %s645
      %s660 = sphi 0, %s646
      %s664 = sphi 0, %s664
      %s666 = sphi 0, %s664
      %s667 = sphi 0, %s666
      %s681 = sphi 0, %s667
      %s685 = sphi 0, %s685
      %s687 = sphi 0, %s685
      %s688 = sphi 0, %s687
      %s702 = sphi 0, %s688
      %s706 = sphi 0, %s706
      %s708 = sphi 0, %s706
      %s709 = sphi 0, %s708
      %s723 = sphi 0, %s709
      %s727 = sphi 0, %s727
      %s729 = sphi 0, %s727
      %s730 = sphi 0, %s729
      %s744 = sphi 0, %s730
      %s748 = sphi 0, %s748
      %s750 = sphi 0, %s748
      %s751 = sphi 0, %s750
      %s765 = sphi 0, %s751
      %s769 = sphi 0, %s769
      %s771 = sphi 0, %s769
      %s772 = sphi 0, %s771
      %s786 = sphi 0, %s772
      %s790 = sphi 0, %s790
      %s792 = sphi 0, %s790
      %s793 = sphi 0, %s792
      %s807 = sphi 0, %s793
      %s811 = sphi 0, %s811
      %s813 = sphi 0, %s811
      %s814 = sphi 0, %s813
      %s828 = sphi 0, %s814
      %s832 = sphi 0, %s832
      %s834 = sphi 0, %s832
      %s835 = sphi 0, %s834
      %s849 = sphi 0, %s835
      %s853 = sphi 0, %s853
      %s855 = sphi 0, %s853
      %s856 = sphi 0, %s855
      %s870 = sphi 0, %s856
      %s874 = sphi 0, %s874
      %s876 = sphi 0, %s874
      %s877 = sphi 0, %s876
      %s891 = sphi 0, %s877
      %s895 = sphi 0, %s895
      %s897 = sphi 0, %s895
      %s898 = sphi 0, %s897
      %s912 = sphi 0, %s898
      %s916 = sphi 0, %s916
      %s918 = sphi 0, %s916
      %s919 = sphi 0, %s918
      %s933 = sphi 0, %s919
      %s937 = sphi 0, %s937
      %s939 = sphi 0, %s937
      %s940 = sphi 0, %s939
      %s954 = sphi 0, %s940
      %s958 = sphi 0, %s958
      %s960 = sphi 0, %s958
      %s961 = sphi 0, %s960
      %s975 = sphi 0, %s961
      %s979 = sphi 0, %s979
      %s981 = sphi 0, %s979
      %s982 = sphi 0, %s981
      %s996 = sphi 0, %s982
      %s1002 = sphi 0, %s1004
      %s1005 = sphi 0, %s1002
      %s1006 = sphi 0, %s1005
      %s1022 = sphi 0, %s1006
    $region4: #{_lambda_.1} parent=1 // loop_header_branch
      %108 = sbr.rel (%p106) target = $region8
    $region5: #{_lambda_.1} parent=1 // loop_body
      %s110 = ssub.s32 %s105, 1
      %s111 = ssub.s32 %s105, 2
      %s112 = sadd.s32 %s105, 1
      %s113 = ssub.s32 %s105, %s112
      %p114 = scmp.eq.s32.totalorder %s113, 0
      %s116 = sadd.s32 %s115, 1
      %s117 = scalar_select %p114, %s115, %s116
      %p120 = pneg %p114
      %p121 = scmp.eq.s32.totalorder %s105, 1
      %p122 = por %p120, %p121
      %p123 = scmp.ne.s32.totalorder %s115, %s118
      %p124 = scmp.eq.s32.totalorder %s105, 0
      %p125 = por %p123, %p124
      %p126 = scmp.ne.s32.totalorder %s115, %s118
      %p127 = scmp.eq.s32.totalorder %s110, 1
      %p128 = por %p126, %p127
      %p129 = scmp.ne.s32.totalorder %s118, %s119
      %p130 = scmp.eq.s32.totalorder %s110, 0
      %p131 = por %p129, %p130
      %p132 = scmp.ne.s32.totalorder %s118, %s119
      %p133 = scmp.eq.s32.totalorder %s111, 1
      %p134 = por %p132, %p133
      %p136 = scmp.ne.s32.totalorder %s119, %s135
      %p137 = scmp.eq.s32.totalorder %s111, 0
      %p138 = por %p136, %p137
      %s140 = sadd.s32 %s139, 1
      %p143 = scmp.eq.s32.totalorder %s105, 1
      %p144 = scmp.ne.s32.totalorder %s139, %s141
      %p145 = scmp.eq.s32.totalorder %s105, 0
      %p146 = por %p144, %p145
      %p147 = scmp.ne.s32.totalorder %s139, %s141
      %p148 = scmp.eq.s32.totalorder %s110, 1
      %p149 = por %p147, %p148
      %p150 = scmp.ne.s32.totalorder %s141, %s142
      %p151 = scmp.eq.s32.totalorder %s110, 0
      %p152 = por %p150, %p151
      %p153 = scmp.ne.s32.totalorder %s141, %s142
      %p154 = scmp.eq.s32.totalorder %s111, 1
      %p155 = por %p153, %p154
      %p157 = scmp.ne.s32.totalorder %s142, %s156
      %p158 = scmp.eq.s32.totalorder %s111, 0
      %p159 = por %p157, %p158
      %s161 = sadd.s32 %s160, 1
      %p164 = scmp.eq.s32.totalorder %s105, 1
      %p165 = scmp.ne.s32.totalorder %s160, %s162
      %p166 = scmp.eq.s32.totalorder %s105, 0
      %p167 = por %p165, %p166
      %p168 = scmp.ne.s32.totalorder %s160, %s162
      %p169 = scmp.eq.s32.totalorder %s110, 1
      %p170 = por %p168, %p169
      %p171 = scmp.ne.s32.totalorder %s162, %s163
      %p172 = scmp.eq.s32.totalorder %s110, 0
      %p173 = por %p171, %p172
      %p174 = scmp.ne.s32.totalorder %s162, %s163
      %p175 = scmp.eq.s32.totalorder %s111, 1
      %p176 = por %p174, %p175
      %p178 = scmp.ne.s32.totalorder %s163, %s177
      %p179 = scmp.eq.s32.totalorder %s111, 0
      %p180 = por %p178, %p179
      %s182 = sadd.s32 %s181, 1
      %p185 = scmp.eq.s32.totalorder %s105, 1
      %p186 = scmp.ne.s32.totalorder %s181, %s183
      %p187 = scmp.eq.s32.totalorder %s105, 0
      %p188 = por %p186, %p187
      %p189 = scmp.ne.s32.totalorder %s181, %s183
      %p190 = scmp.eq.s32.totalorder %s110, 1
      %p191 = por %p189, %p190
      %p192 = scmp.ne.s32.totalorder %s183, %s184
      %p193 = scmp.eq.s32.totalorder %s110, 0
      %p194 = por %p192, %p193
      %p195 = scmp.ne.s32.totalorder %s183, %s184
      %p196 = scmp.eq.s32.totalorder %s111, 1
      %p197 = por %p195, %p196
      %p199 = scmp.ne.s32.totalorder %s184, %s198
      %p200 = scmp.eq.s32.totalorder %s111, 0
      %p201 = por %p199, %p200
      %s203 = sadd.s32 %s202, 1
      %p206 = scmp.eq.s32.totalorder %s105, 1
      %p207 = scmp.ne.s32.totalorder %s202, %s204
      %p208 = scmp.eq.s32.totalorder %s105, 0
      %p209 = por %p207, %p208
      %p210 = scmp.ne.s32.totalorder %s202, %s204
      %p211 = scmp.eq.s32.totalorder %s110, 1
      %p212 = por %p210, %p211
      %p213 = scmp.ne.s32.totalorder %s204, %s205
      %p214 = scmp.eq.s32.totalorder %s110, 0
      %p215 = por %p213, %p214
      %p216 = scmp.ne.s32.totalorder %s204, %s205
      %p217 = scmp.eq.s32.totalorder %s111, 1
      %p218 = por %p216, %p217
      %p220 = scmp.ne.s32.totalorder %s205, %s219
      %p221 = scmp.eq.s32.totalorder %s111, 0
      %p222 = por %p220, %p221
      %s224 = sadd.s32 %s223, 1
      %p227 = scmp.eq.s32.totalorder %s105, 1
      %p228 = scmp.ne.s32.totalorder %s223, %s225
      %p229 = scmp.eq.s32.totalorder %s105, 0
      %p230 = por %p228, %p229
      %p231 = scmp.ne.s32.totalorder %s223, %s225
      %p232 = scmp.eq.s32.totalorder %s110, 1
      %p233 = por %p231, %p232
      %p234 = scmp.ne.s32.totalorder %s225, %s226
      %p235 = scmp.eq.s32.totalorder %s110, 0
      %p236 = por %p234, %p235
      %p237 = scmp.ne.s32.totalorder %s225, %s226
      %p238 = scmp.eq.s32.totalorder %s111, 1
      %p239 = por %p237, %p238
      %p241 = scmp.ne.s32.totalorder %s226, %s240
      %p242 = scmp.eq.s32.totalorder %s111, 0
      %p243 = por %p241, %p242
      %s245 = sadd.s32 %s244, 1
      %p248 = scmp.eq.s32.totalorder %s105, 1
      %p249 = scmp.ne.s32.totalorder %s244, %s246
      %p250 = scmp.eq.s32.totalorder %s105, 0
      %p251 = por %p249, %p250
      %p252 = scmp.ne.s32.totalorder %s244, %s246
      %p253 = scmp.eq.s32.totalorder %s110, 1
      %p254 = por %p252, %p253
      %p255 = scmp.ne.s32.totalorder %s246, %s247
      %p256 = scmp.eq.s32.totalorder %s110, 0
      %p257 = por %p255, %p256
      %p258 = scmp.ne.s32.totalorder %s246, %s247
      %p259 = scmp.eq.s32.totalorder %s111, 1
      %p260 = por %p258, %p259
      %p262 = scmp.ne.s32.totalorder %s247, %s261
      %p263 = scmp.eq.s32.totalorder %s111, 0
      %p264 = por %p262, %p263
      %s266 = sadd.s32 %s265, 1
      %p269 = scmp.eq.s32.totalorder %s105, 1
      %p270 = scmp.ne.s32.totalorder %s265, %s267
      %p271 = scmp.eq.s32.totalorder %s105, 0
      %p272 = por %p270, %p271
      %p273 = scmp.ne.s32.totalorder %s265, %s267
      %p274 = scmp.eq.s32.totalorder %s110, 1
      %p275 = por %p273, %p274
      %p276 = scmp.ne.s32.totalorder %s267, %s268
      %p277 = scmp.eq.s32.totalorder %s110, 0
      %p278 = por %p276, %p277
      %p279 = scmp.ne.s32.totalorder %s267, %s268
      %p280 = scmp.eq.s32.totalorder %s111, 1
      %p281 = por %p279, %p280
      %p283 = scmp.ne.s32.totalorder %s268, %s282
      %p284 = scmp.eq.s32.totalorder %s111, 0
      %p285 = por %p283, %p284
      %s287 = sadd.s32 %s286, 1
      %p290 = scmp.eq.s32.totalorder %s105, 1
      %p291 = scmp.ne.s32.totalorder %s286, %s288
      %p292 = scmp.eq.s32.totalorder %s105, 0
      %p293 = por %p291, %p292
      %p294 = scmp.ne.s32.totalorder %s286, %s288
      %p295 = scmp.eq.s32.totalorder %s110, 1
      %p296 = por %p294, %p295
      %p297 = scmp.ne.s32.totalorder %s288, %s289
      %p298 = scmp.eq.s32.totalorder %s110, 0
      %p299 = por %p297, %p298
      %p300 = scmp.ne.s32.totalorder %s288, %s289
      %p301 = scmp.eq.s32.totalorder %s111, 1
      %p302 = por %p300, %p301
      %p304 = scmp.ne.s32.totalorder %s289, %s303
      %p305 = scmp.eq.s32.totalorder %s111, 0
      %p306 = por %p304, %p305
      %s308 = sadd.s32 %s307, 1
      %p311 = scmp.eq.s32.totalorder %s105, 1
      %p312 = scmp.ne.s32.totalorder %s307, %s309
      %p313 = scmp.eq.s32.totalorder %s105, 0
      %p314 = por %p312, %p313
      %p315 = scmp.ne.s32.totalorder %s307, %s309
      %p316 = scmp.eq.s32.totalorder %s110, 1
      %p317 = por %p315, %p316
      %p318 = scmp.ne.s32.totalorder %s309, %s310
      %p319 = scmp.eq.s32.totalorder %s110, 0
      %p320 = por %p318, %p319
      %p321 = scmp.ne.s32.totalorder %s309, %s310
      %p322 = scmp.eq.s32.totalorder %s111, 1
      %p323 = por %p321, %p322
      %p325 = scmp.ne.s32.totalorder %s310, %s324
      %p326 = scmp.eq.s32.totalorder %s111, 0
      %p327 = por %p325, %p326
      %s329 = sadd.s32 %s328, 1
      %p332 = scmp.eq.s32.totalorder %s105, 1
      %p333 = scmp.ne.s32.totalorder %s328, %s330
      %p334 = scmp.eq.s32.totalorder %s105, 0
      %p335 = por %p333, %p334
      %p336 = scmp.ne.s32.totalorder %s328, %s330
      %p337 = scmp.eq.s32.totalorder %s110, 1
      %p338 = por %p336, %p337
      %p339 = scmp.ne.s32.totalorder %s330, %s331
      %p340 = scmp.eq.s32.totalorder %s110, 0
      %p341 = por %p339, %p340
      %p342 = scmp.ne.s32.totalorder %s330, %s331
      %p343 = scmp.eq.s32.totalorder %s111, 1
      %p344 = por %p342, %p343
      %p346 = scmp.ne.s32.totalorder %s331, %s345
      %p347 = scmp.eq.s32.totalorder %s111, 0
      %p348 = por %p346, %p347
      %s350 = sadd.s32 %s349, 1
      %p353 = scmp.eq.s32.totalorder %s105, 1
      %p354 = scmp.ne.s32.totalorder %s349, %s351
      %p355 = scmp.eq.s32.totalorder %s105, 0
      %p356 = por %p354, %p355
      %p357 = scmp.ne.s32.totalorder %s349, %s351
      %p358 = scmp.eq.s32.totalorder %s110, 1
      %p359 = por %p357, %p358
      %p360 = scmp.ne.s32.totalorder %s351, %s352
      %p361 = scmp.eq.s32.totalorder %s110, 0
      %p362 = por %p360, %p361
      %p363 = scmp.ne.s32.totalorder %s351, %s352
      %p364 = scmp.eq.s32.totalorder %s111, 1
      %p365 = por %p363, %p364
      %p367 = scmp.ne.s32.totalorder %s352, %s366
      %p368 = scmp.eq.s32.totalorder %s111, 0
      %p369 = por %p367, %p368
      %s371 = sadd.s32 %s370, 1
      %p374 = scmp.eq.s32.totalorder %s105, 1
      %p375 = scmp.ne.s32.totalorder %s370, %s372
      %p376 = scmp.eq.s32.totalorder %s105, 0
      %p377 = por %p375, %p376
      %p378 = scmp.ne.s32.totalorder %s370, %s372
      %p379 = scmp.eq.s32.totalorder %s110, 1
      %p380 = por %p378, %p379
      %p381 = scmp.ne.s32.totalorder %s372, %s373
      %p382 = scmp.eq.s32.totalorder %s110, 0
      %p383 = por %p381, %p382
      %p384 = scmp.ne.s32.totalorder %s372, %s373
      %p385 = scmp.eq.s32.totalorder %s111, 1
      %p386 = por %p384, %p385
      %p388 = scmp.ne.s32.totalorder %s373, %s387
      %p389 = scmp.eq.s32.totalorder %s111, 0
      %p390 = por %p388, %p389
      %s392 = sadd.s32 %s391, 1
      %p395 = scmp.eq.s32.totalorder %s105, 1
      %p396 = scmp.ne.s32.totalorder %s391, %s393
      %p397 = scmp.eq.s32.totalorder %s105, 0
      %p398 = por %p396, %p397
      %p399 = scmp.ne.s32.totalorder %s391, %s393
      %p400 = scmp.eq.s32.totalorder %s110, 1
      %p401 = por %p399, %p400
      %p402 = scmp.ne.s32.totalorder %s393, %s394
      %p403 = scmp.eq.s32.totalorder %s110, 0
      %p404 = por %p402, %p403
      %p405 = scmp.ne.s32.totalorder %s393, %s394
      %p406 = scmp.eq.s32.totalorder %s111, 1
      %p407 = por %p405, %p406
      %p409 = scmp.ne.s32.totalorder %s394, %s408
      %p410 = scmp.eq.s32.totalorder %s111, 0
      %p411 = por %p409, %p410
      %s413 = sadd.s32 %s412, 1
      %p416 = scmp.eq.s32.totalorder %s105, 1
      %p417 = scmp.ne.s32.totalorder %s412, %s414
      %p418 = scmp.eq.s32.totalorder %s105, 0
      %p419 = por %p417, %p418
      %p420 = scmp.ne.s32.totalorder %s412, %s414
      %p421 = scmp.eq.s32.totalorder %s110, 1
      %p422 = por %p420, %p421
      %p423 = scmp.ne.s32.totalorder %s414, %s415
      %p424 = scmp.eq.s32.totalorder %s110, 0
      %p425 = por %p423, %p424
      %p426 = scmp.ne.s32.totalorder %s414, %s415
      %p427 = scmp.eq.s32.totalorder %s111, 1
      %p428 = por %p426, %p427
      %p430 = scmp.ne.s32.totalorder %s415, %s429
      %p431 = scmp.eq.s32.totalorder %s111, 0
      %p432 = por %p430, %p431
      %s434 = sadd.s32 %s433, 1
      %p437 = scmp.eq.s32.totalorder %s105, 1
      %p438 = scmp.ne.s32.totalorder %s433, %s435
      %p439 = scmp.eq.s32.totalorder %s105, 0
      %p440 = por %p438, %p439
      %p441 = scmp.ne.s32.totalorder %s433, %s435
      %p442 = scmp.eq.s32.totalorder %s110, 1
      %p443 = por %p441, %p442
      %p444 = scmp.ne.s32.totalorder %s435, %s436
      %p445 = scmp.eq.s32.totalorder %s110, 0
      %p446 = por %p444, %p445
      %p447 = scmp.ne.s32.totalorder %s435, %s436
      %p448 = scmp.eq.s32.totalorder %s111, 1
      %p449 = por %p447, %p448
      %p451 = scmp.ne.s32.totalorder %s436, %s450
      %p452 = scmp.eq.s32.totalorder %s111, 0
      %p453 = por %p451, %p452
      %s455 = sadd.s32 %s454, 1
      %p458 = scmp.eq.s32.totalorder %s105, 1
      %p459 = scmp.ne.s32.totalorder %s454, %s456
      %p460 = scmp.eq.s32.totalorder %s105, 0
      %p461 = por %p459, %p460
      %p462 = scmp.ne.s32.totalorder %s454, %s456
      %p463 = scmp.eq.s32.totalorder %s110, 1
      %p464 = por %p462, %p463
      %p465 = scmp.ne.s32.totalorder %s456, %s457
      %p466 = scmp.eq.s32.totalorder %s110, 0
      %p467 = por %p465, %p466
      %p468 = scmp.ne.s32.totalorder %s456, %s457
      %p469 = scmp.eq.s32.totalorder %s111, 1
      %p470 = por %p468, %p469
      %p472 = scmp.ne.s32.totalorder %s457, %s471
      %p473 = scmp.eq.s32.totalorder %s111, 0
      %p474 = por %p472, %p473
      %s476 = sadd.s32 %s475, 1
      %p479 = scmp.eq.s32.totalorder %s105, 1
      %p480 = scmp.ne.s32.totalorder %s475, %s477
      %p481 = scmp.eq.s32.totalorder %s105, 0
      %p482 = por %p480, %p481
      %p483 = scmp.ne.s32.totalorder %s475, %s477
      %p484 = scmp.eq.s32.totalorder %s110, 1
      %p485 = por %p483, %p484
      %p486 = scmp.ne.s32.totalorder %s477, %s478
      %p487 = scmp.eq.s32.totalorder %s110, 0
      %p488 = por %p486, %p487
      %p489 = scmp.ne.s32.totalorder %s477, %s478
      %p490 = scmp.eq.s32.totalorder %s111, 1
      %p491 = por %p489, %p490
      %p493 = scmp.ne.s32.totalorder %s478, %s492
      %p494 = scmp.eq.s32.totalorder %s111, 0
      %p495 = por %p493, %p494
      %s497 = sadd.s32 %s496, 1
      %p500 = scmp.eq.s32.totalorder %s105, 1
      %p501 = scmp.ne.s32.totalorder %s496, %s498
      %p502 = scmp.eq.s32.totalorder %s105, 0
      %p503 = por %p501, %p502
      %p504 = scmp.ne.s32.totalorder %s496, %s498
      %p505 = scmp.eq.s32.totalorder %s110, 1
      %p506 = por %p504, %p505
      %p507 = scmp.ne.s32.totalorder %s498, %s499
      %p508 = scmp.eq.s32.totalorder %s110, 0
      %p509 = por %p507, %p508
      %p510 = scmp.ne.s32.totalorder %s498, %s499
      %p511 = scmp.eq.s32.totalorder %s111, 1
      %p512 = por %p510, %p511
      %p514 = scmp.ne.s32.totalorder %s499, %s513
      %p515 = scmp.eq.s32.totalorder %s111, 0
      %p516 = por %p514, %p515
      %s518 = sadd.s32 %s517, 1
      %p521 = scmp.eq.s32.totalorder %s105, 1
      %p522 = scmp.ne.s32.totalorder %s517, %s519
      %p523 = scmp.eq.s32.totalorder %s105, 0
      %p524 = por %p522, %p523
      %p525 = scmp.ne.s32.totalorder %s517, %s519
      %p526 = scmp.eq.s32.totalorder %s110, 1
      %p527 = por %p525, %p526
      %p528 = scmp.ne.s32.totalorder %s519, %s520
      %p529 = scmp.eq.s32.totalorder %s110, 0
      %p530 = por %p528, %p529
      %p531 = scmp.ne.s32.totalorder %s519, %s520
      %p532 = scmp.eq.s32.totalorder %s111, 1
      %p533 = por %p531, %p532
      %p535 = scmp.ne.s32.totalorder %s520, %s534
      %p536 = scmp.eq.s32.totalorder %s111, 0
      %p537 = por %p535, %p536
      %s539 = sadd.s32 %s538, 1
      %p542 = scmp.eq.s32.totalorder %s105, 1
      %p543 = scmp.ne.s32.totalorder %s538, %s540
      %p544 = scmp.eq.s32.totalorder %s105, 0
      %p545 = por %p543, %p544
      %p546 = scmp.ne.s32.totalorder %s538, %s540
      %p547 = scmp.eq.s32.totalorder %s110, 1
      %p548 = por %p546, %p547
      %p549 = scmp.ne.s32.totalorder %s540, %s541
      %p550 = scmp.eq.s32.totalorder %s110, 0
      %p551 = por %p549, %p550
      %p552 = scmp.ne.s32.totalorder %s540, %s541
      %p553 = scmp.eq.s32.totalorder %s111, 1
      %p554 = por %p552, %p553
      %p556 = scmp.ne.s32.totalorder %s541, %s555
      %p557 = scmp.eq.s32.totalorder %s111, 0
      %p558 = por %p556, %p557
      %s560 = sadd.s32 %s559, 1
      %p563 = scmp.eq.s32.totalorder %s105, 1
      %p564 = scmp.ne.s32.totalorder %s559, %s561
      %p565 = scmp.eq.s32.totalorder %s105, 0
      %p566 = por %p564, %p565
      %p567 = scmp.ne.s32.totalorder %s559, %s561
      %p568 = scmp.eq.s32.totalorder %s110, 1
      %p569 = por %p567, %p568
      %p570 = scmp.ne.s32.totalorder %s561, %s562
      %p571 = scmp.eq.s32.totalorder %s110, 0
      %p572 = por %p570, %p571
      %p573 = scmp.ne.s32.totalorder %s561, %s562
      %p574 = scmp.eq.s32.totalorder %s111, 1
      %p575 = por %p573, %p574
      %p577 = scmp.ne.s32.totalorder %s562, %s576
      %p578 = scmp.eq.s32.totalorder %s111, 0
      %p579 = por %p577, %p578
      %s581 = sadd.s32 %s580, 1
      %p584 = scmp.eq.s32.totalorder %s105, 1
      %p585 = scmp.ne.s32.totalorder %s580, %s582
      %p586 = scmp.eq.s32.totalorder %s105, 0
      %p587 = por %p585, %p586
      %p588 = scmp.ne.s32.totalorder %s580, %s582
      %p589 = scmp.eq.s32.totalorder %s110, 1
      %p590 = por %p588, %p589
      %p591 = scmp.ne.s32.totalorder %s582, %s583
      %p592 = scmp.eq.s32.totalorder %s110, 0
      %p593 = por %p591, %p592
      %p594 = scmp.ne.s32.totalorder %s582, %s583
      %p595 = scmp.eq.s32.totalorder %s111, 1
      %p596 = por %p594, %p595
      %p598 = scmp.ne.s32.totalorder %s583, %s597
      %p599 = scmp.eq.s32.totalorder %s111, 0
      %p600 = por %p598, %p599
      %s602 = sadd.s32 %s601, 1
      %p605 = scmp.eq.s32.totalorder %s105, 1
      %p606 = scmp.ne.s32.totalorder %s601, %s603
      %p607 = scmp.eq.s32.totalorder %s105, 0
      %p608 = por %p606, %p607
      %p609 = scmp.ne.s32.totalorder %s601, %s603
      %p610 = scmp.eq.s32.totalorder %s110, 1
      %p611 = por %p609, %p610
      %p612 = scmp.ne.s32.totalorder %s603, %s604
      %p613 = scmp.eq.s32.totalorder %s110, 0
      %p614 = por %p612, %p613
      %p615 = scmp.ne.s32.totalorder %s603, %s604
      %p616 = scmp.eq.s32.totalorder %s111, 1
      %p617 = por %p615, %p616
      %p619 = scmp.ne.s32.totalorder %s604, %s618
      %p620 = scmp.eq.s32.totalorder %s111, 0
      %p621 = por %p619, %p620
      %s623 = sadd.s32 %s622, 1
      %p626 = scmp.eq.s32.totalorder %s105, 1
      %p627 = scmp.ne.s32.totalorder %s622, %s624
      %p628 = scmp.eq.s32.totalorder %s105, 0
      %p629 = por %p627, %p628
      %p630 = scmp.ne.s32.totalorder %s622, %s624
      %p631 = scmp.eq.s32.totalorder %s110, 1
      %p632 = por %p630, %p631
      %p633 = scmp.ne.s32.totalorder %s624, %s625
      %p634 = scmp.eq.s32.totalorder %s110, 0
      %p635 = por %p633, %p634
      %p636 = scmp.ne.s32.totalorder %s624, %s625
      %p637 = scmp.eq.s32.totalorder %s111, 1
      %p638 = por %p636, %p637
      %p640 = scmp.ne.s32.totalorder %s625, %s639
      %p641 = scmp.eq.s32.totalorder %s111, 0
      %p642 = por %p640, %p641
      %s644 = sadd.s32 %s643, 1
      %p647 = scmp.eq.s32.totalorder %s105, 1
      %p648 = scmp.ne.s32.totalorder %s643, %s645
      %p649 = scmp.eq.s32.totalorder %s105, 0
      %p650 = por %p648, %p649
      %p651 = scmp.ne.s32.totalorder %s643, %s645
      %p652 = scmp.eq.s32.totalorder %s110, 1
      %p653 = por %p651, %p652
      %p654 = scmp.ne.s32.totalorder %s645, %s646
      %p655 = scmp.eq.s32.totalorder %s110, 0
      %p656 = por %p654, %p655
      %p657 = scmp.ne.s32.totalorder %s645, %s646
      %p658 = scmp.eq.s32.totalorder %s111, 1
      %p659 = por %p657, %p658
      %p661 = scmp.ne.s32.totalorder %s646, %s660
      %p662 = scmp.eq.s32.totalorder %s111, 0
      %p663 = por %p661, %p662
      %s665 = sadd.s32 %s664, 1
      %p668 = scmp.eq.s32.totalorder %s105, 1
      %p669 = scmp.ne.s32.totalorder %s664, %s666
      %p670 = scmp.eq.s32.totalorder %s105, 0
      %p671 = por %p669, %p670
      %p672 = scmp.ne.s32.totalorder %s664, %s666
      %p673 = scmp.eq.s32.totalorder %s110, 1
      %p674 = por %p672, %p673
      %p675 = scmp.ne.s32.totalorder %s666, %s667
      %p676 = scmp.eq.s32.totalorder %s110, 0
      %p677 = por %p675, %p676
      %p678 = scmp.ne.s32.totalorder %s666, %s667
      %p679 = scmp.eq.s32.totalorder %s111, 1
      %p680 = por %p678, %p679
      %p682 = scmp.ne.s32.totalorder %s667, %s681
      %p683 = scmp.eq.s32.totalorder %s111, 0
      %p684 = por %p682, %p683
      %s686 = sadd.s32 %s685, 1
      %p689 = scmp.eq.s32.totalorder %s105, 1
      %p690 = scmp.ne.s32.totalorder %s685, %s687
      %p691 = scmp.eq.s32.totalorder %s105, 0
      %p692 = por %p690, %p691
      %p693 = scmp.ne.s32.totalorder %s685, %s687
      %p694 = scmp.eq.s32.totalorder %s110, 1
      %p695 = por %p693, %p694
      %p696 = scmp.ne.s32.totalorder %s687, %s688
      %p697 = scmp.eq.s32.totalorder %s110, 0
      %p698 = por %p696, %p697
      %p699 = scmp.ne.s32.totalorder %s687, %s688
      %p700 = scmp.eq.s32.totalorder %s111, 1
      %p701 = por %p699, %p700
      %p703 = scmp.ne.s32.totalorder %s688, %s702
      %p704 = scmp.eq.s32.totalorder %s111, 0
      %p705 = por %p703, %p704
      %s707 = sadd.s32 %s706, 1
      %p710 = scmp.eq.s32.totalorder %s105, 1
      %p711 = scmp.ne.s32.totalorder %s706, %s708
      %p712 = scmp.eq.s32.totalorder %s105, 0
      %p713 = por %p711, %p712
      %p714 = scmp.ne.s32.totalorder %s706, %s708
      %p715 = scmp.eq.s32.totalorder %s110, 1
      %p716 = por %p714, %p715
      %p717 = scmp.ne.s32.totalorder %s708, %s709
      %p718 = scmp.eq.s32.totalorder %s110, 0
      %p719 = por %p717, %p718
      %p720 = scmp.ne.s32.totalorder %s708, %s709
      %p721 = scmp.eq.s32.totalorder %s111, 1
      %p722 = por %p720, %p721
      %p724 = scmp.ne.s32.totalorder %s709, %s723
      %p725 = scmp.eq.s32.totalorder %s111, 0
      %p726 = por %p724, %p725
      %s728 = sadd.s32 %s727, 1
      %p731 = scmp.eq.s32.totalorder %s105, 1
      %p732 = scmp.ne.s32.totalorder %s727, %s729
      %p733 = scmp.eq.s32.totalorder %s105, 0
      %p734 = por %p732, %p733
      %p735 = scmp.ne.s32.totalorder %s727, %s729
      %p736 = scmp.eq.s32.totalorder %s110, 1
      %p737 = por %p735, %p736
      %p738 = scmp.ne.s32.totalorder %s729, %s730
      %p739 = scmp.eq.s32.totalorder %s110, 0
      %p740 = por %p738, %p739
      %p741 = scmp.ne.s32.totalorder %s729, %s730
      %p742 = scmp.eq.s32.totalorder %s111, 1
      %p743 = por %p741, %p742
      %p745 = scmp.ne.s32.totalorder %s730, %s744
      %p746 = scmp.eq.s32.totalorder %s111, 0
      %p747 = por %p745, %p746
      %s749 = sadd.s32 %s748, 1
      %p752 = scmp.eq.s32.totalorder %s105, 1
      %p753 = scmp.ne.s32.totalorder %s748, %s750
      %p754 = scmp.eq.s32.totalorder %s105, 0
      %p755 = por %p753, %p754
      %p756 = scmp.ne.s32.totalorder %s748, %s750
      %p757 = scmp.eq.s32.totalorder %s110, 1
      %p758 = por %p756, %p757
      %p759 = scmp.ne.s32.totalorder %s750, %s751
      %p760 = scmp.eq.s32.totalorder %s110, 0
      %p761 = por %p759, %p760
      %p762 = scmp.ne.s32.totalorder %s750, %s751
      %p763 = scmp.eq.s32.totalorder %s111, 1
      %p764 = por %p762, %p763
      %p766 = scmp.ne.s32.totalorder %s751, %s765
      %p767 = scmp.eq.s32.totalorder %s111, 0
      %p768 = por %p766, %p767
      %s770 = sadd.s32 %s769, 1
      %p773 = scmp.eq.s32.totalorder %s105, 1
      %p774 = scmp.ne.s32.totalorder %s769, %s771
      %p775 = scmp.eq.s32.totalorder %s105, 0
      %p776 = por %p774, %p775
      %p777 = scmp.ne.s32.totalorder %s769, %s771
      %p778 = scmp.eq.s32.totalorder %s110, 1
      %p779 = por %p777, %p778
      %p780 = scmp.ne.s32.totalorder %s771, %s772
      %p781 = scmp.eq.s32.totalorder %s110, 0
      %p782 = por %p780, %p781
      %p783 = scmp.ne.s32.totalorder %s771, %s772
      %p784 = scmp.eq.s32.totalorder %s111, 1
      %p785 = por %p783, %p784
      %p787 = scmp.ne.s32.totalorder %s772, %s786
      %p788 = scmp.eq.s32.totalorder %s111, 0
      %p789 = por %p787, %p788
      %s791 = sadd.s32 %s790, 1
      %p794 = scmp.eq.s32.totalorder %s105, 1
      %p795 = scmp.ne.s32.totalorder %s790, %s792
      %p796 = scmp.eq.s32.totalorder %s105, 0
      %p797 = por %p795, %p796
      %p798 = scmp.ne.s32.totalorder %s790, %s792
      %p799 = scmp.eq.s32.totalorder %s110, 1
      %p800 = por %p798, %p799
      %p801 = scmp.ne.s32.totalorder %s792, %s793
      %p802 = scmp.eq.s32.totalorder %s110, 0
      %p803 = por %p801, %p802
      %p804 = scmp.ne.s32.totalorder %s792, %s793
      %p805 = scmp.eq.s32.totalorder %s111, 1
      %p806 = por %p804, %p805
      %p808 = scmp.ne.s32.totalorder %s793, %s807
      %p809 = scmp.eq.s32.totalorder %s111, 0
      %p810 = por %p808, %p809
      %s812 = sadd.s32 %s811, 1
      %p815 = scmp.eq.s32.totalorder %s105, 1
      %p816 = scmp.ne.s32.totalorder %s811, %s813
      %p817 = scmp.eq.s32.totalorder %s105, 0
      %p818 = por %p816, %p817
      %p819 = scmp.ne.s32.totalorder %s811, %s813
      %p820 = scmp.eq.s32.totalorder %s110, 1
      %p821 = por %p819, %p820
      %p822 = scmp.ne.s32.totalorder %s813, %s814
      %p823 = scmp.eq.s32.totalorder %s110, 0
      %p824 = por %p822, %p823
      %p825 = scmp.ne.s32.totalorder %s813, %s814
      %p826 = scmp.eq.s32.totalorder %s111, 1
      %p827 = por %p825, %p826
      %p829 = scmp.ne.s32.totalorder %s814, %s828
      %p830 = scmp.eq.s32.totalorder %s111, 0
      %p831 = por %p829, %p830
      %s833 = sadd.s32 %s832, 1
      %p836 = scmp.eq.s32.totalorder %s105, 1
      %p837 = scmp.ne.s32.totalorder %s832, %s834
      %p838 = scmp.eq.s32.totalorder %s105, 0
      %p839 = por %p837, %p838
      %p840 = scmp.ne.s32.totalorder %s832, %s834
      %p841 = scmp.eq.s32.totalorder %s110, 1
      %p842 = por %p840, %p841
      %p843 = scmp.ne.s32.totalorder %s834, %s835
      %p844 = scmp.eq.s32.totalorder %s110, 0
      %p845 = por %p843, %p844
      %p846 = scmp.ne.s32.totalorder %s834, %s835
      %p847 = scmp.eq.s32.totalorder %s111, 1
      %p848 = por %p846, %p847
      %p850 = scmp.ne.s32.totalorder %s835, %s849
      %p851 = scmp.eq.s32.totalorder %s111, 0
      %p852 = por %p850, %p851
      %s854 = sadd.s32 %s853, 1
      %p857 = scmp.eq.s32.totalorder %s105, 1
      %p858 = scmp.ne.s32.totalorder %s853, %s855
      %p859 = scmp.eq.s32.totalorder %s105, 0
      %p860 = por %p858, %p859
      %p861 = scmp.ne.s32.totalorder %s853, %s855
      %p862 = scmp.eq.s32.totalorder %s110, 1
      %p863 = por %p861, %p862
      %p864 = scmp.ne.s32.totalorder %s855, %s856
      %p865 = scmp.eq.s32.totalorder %s110, 0
      %p866 = por %p864, %p865
      %p867 = scmp.ne.s32.totalorder %s855, %s856
      %p868 = scmp.eq.s32.totalorder %s111, 1
      %p869 = por %p867, %p868
      %p871 = scmp.ne.s32.totalorder %s856, %s870
      %p872 = scmp.eq.s32.totalorder %s111, 0
      %p873 = por %p871, %p872
      %s875 = sadd.s32 %s874, 1
      %p878 = scmp.eq.s32.totalorder %s105, 1
      %p879 = scmp.ne.s32.totalorder %s874, %s876
      %p880 = scmp.eq.s32.totalorder %s105, 0
      %p881 = por %p879, %p880
      %p882 = scmp.ne.s32.totalorder %s874, %s876
      %p883 = scmp.eq.s32.totalorder %s110, 1
      %p884 = por %p882, %p883
      %p885 = scmp.ne.s32.totalorder %s876, %s877
      %p886 = scmp.eq.s32.totalorder %s110, 0
      %p887 = por %p885, %p886
      %p888 = scmp.ne.s32.totalorder %s876, %s877
      %p889 = scmp.eq.s32.totalorder %s111, 1
      %p890 = por %p888, %p889
      %p892 = scmp.ne.s32.totalorder %s877, %s891
      %p893 = scmp.eq.s32.totalorder %s111, 0
      %p894 = por %p892, %p893
      %s896 = sadd.s32 %s895, 1
      %p899 = scmp.eq.s32.totalorder %s105, 1
      %p900 = scmp.ne.s32.totalorder %s895, %s897
      %p901 = scmp.eq.s32.totalorder %s105, 0
      %p902 = por %p900, %p901
      %p903 = scmp.ne.s32.totalorder %s895, %s897
      %p904 = scmp.eq.s32.totalorder %s110, 1
      %p905 = por %p903, %p904
      %p906 = scmp.ne.s32.totalorder %s897, %s898
      %p907 = scmp.eq.s32.totalorder %s110, 0
      %p908 = por %p906, %p907
      %p909 = scmp.ne.s32.totalorder %s897, %s898
      %p910 = scmp.eq.s32.totalorder %s111, 1
      %p911 = por %p909, %p910
      %p913 = scmp.ne.s32.totalorder %s898, %s912
      %p914 = scmp.eq.s32.totalorder %s111, 0
      %p915 = por %p913, %p914
      %s917 = sadd.s32 %s916, 1
      %p920 = scmp.eq.s32.totalorder %s105, 1
      %p921 = scmp.ne.s32.totalorder %s916, %s918
      %p922 = scmp.eq.s32.totalorder %s105, 0
      %p923 = por %p921, %p922
      %p924 = scmp.ne.s32.totalorder %s916, %s918
      %p925 = scmp.eq.s32.totalorder %s110, 1
      %p926 = por %p924, %p925
      %p927 = scmp.ne.s32.totalorder %s918, %s919
      %p928 = scmp.eq.s32.totalorder %s110, 0
      %p929 = por %p927, %p928
      %p930 = scmp.ne.s32.totalorder %s918, %s919
      %p931 = scmp.eq.s32.totalorder %s111, 1
      %p932 = por %p930, %p931
      %p934 = scmp.ne.s32.totalorder %s919, %s933
      %p935 = scmp.eq.s32.totalorder %s111, 0
      %p936 = por %p934, %p935
      %s938 = sadd.s32 %s937, 1
      %p941 = scmp.eq.s32.totalorder %s105, 1
      %p942 = scmp.ne.s32.totalorder %s937, %s939
      %p943 = scmp.eq.s32.totalorder %s105, 0
      %p944 = por %p942, %p943
      %p945 = scmp.ne.s32.totalorder %s937, %s939
      %p946 = scmp.eq.s32.totalorder %s110, 1
      %p947 = por %p945, %p946
      %p948 = scmp.ne.s32.totalorder %s939, %s940
      %p949 = scmp.eq.s32.totalorder %s110, 0
      %p950 = por %p948, %p949
      %p951 = scmp.ne.s32.totalorder %s939, %s940
      %p952 = scmp.eq.s32.totalorder %s111, 1
      %p953 = por %p951, %p952
      %p955 = scmp.ne.s32.totalorder %s940, %s954
      %p956 = scmp.eq.s32.totalorder %s111, 0
      %p957 = por %p955, %p956
      %s959 = sadd.s32 %s958, 1
      %p962 = scmp.eq.s32.totalorder %s105, 1
      %p963 = scmp.ne.s32.totalorder %s958, %s960
      %p964 = scmp.eq.s32.totalorder %s105, 0
      %p965 = por %p963, %p964
      %p966 = scmp.ne.s32.totalorder %s958, %s960
      %p967 = scmp.eq.s32.totalorder %s110, 1
      %p968 = por %p966, %p967
      %p969 = scmp.ne.s32.totalorder %s960, %s961
      %p970 = scmp.eq.s32.totalorder %s110, 0
      %p971 = por %p969, %p970
      %p972 = scmp.ne.s32.totalorder %s960, %s961
      %p973 = scmp.eq.s32.totalorder %s111, 1
      %p974 = por %p972, %p973
      %p976 = scmp.ne.s32.totalorder %s961, %s975
      %p977 = scmp.eq.s32.totalorder %s111, 0
      %p978 = por %p976, %p977
      %s980 = sadd.s32 %s979, 1
      %p983 = scmp.eq.s32.totalorder %s105, 1
      %p984 = scmp.ne.s32.totalorder %s979, %s981
      %p985 = scmp.eq.s32.totalorder %s105, 0
      %p986 = por %p984, %p985
      %p987 = scmp.ne.s32.totalorder %s979, %s981
      %p988 = scmp.eq.s32.totalorder %s110, 1
      %p989 = por %p987, %p988
      %p990 = scmp.ne.s32.totalorder %s981, %s982
      %p991 = scmp.eq.s32.totalorder %s110, 0
      %p992 = por %p990, %p991
      %p993 = scmp.ne.s32.totalorder %s981, %s982
      %p994 = scmp.eq.s32.totalorder %s111, 1
      %p995 = por %p993, %p994
      %p997 = scmp.ne.s32.totalorder %s982, %s996
      %p998 = scmp.eq.s32.totalorder %s111, 0
      %p999 = por %p997, %p998
      %s1000 = ssub.s32 %s105, %s112
      %p1001 = scmp.eq.s32.totalorder %s1000, 0
      %s1003 = sadd.s32 %s1002, 1
      %s1004 = scalar_select %p1001, %s1002, %s1003
      %p1007 = pneg %p1001
      %p1008 = scmp.eq.s32.totalorder %s105, 1
      %p1009 = por %p1007, %p1008
      %p1010 = scmp.ne.s32.totalorder %s1002, %s1005
      %p1011 = scmp.eq.s32.totalorder %s105, 0
      %p1012 = por %p1010, %p1011
      %p1013 = scmp.ne.s32.totalorder %s1002, %s1005
      %p1014 = scmp.eq.s32.totalorder %s110, 1
      %p1015 = por %p1013, %p1014
      %p1016 = scmp.ne.s32.totalorder %s1005, %s1006
      %p1017 = scmp.eq.s32.totalorder %s110, 0
      %p1018 = por %p1016, %p1017
      %p1019 = scmp.ne.s32.totalorder %s1005, %s1006
      %p1020 = scmp.eq.s32.totalorder %s111, 1
      %p1021 = por %p1019, %p1020
      %p1023 = scmp.ne.s32.totalorder %s1006, %s1022
      %p1024 = scmp.eq.s32.totalorder %s111, 0
      %p1025 = por %p1023, %p1024
      %p1026 = scmp.le.s32.totalorder 1, %s105
      %p1027 = scmp.lt.s32.totalorder %s105, 3
      %p1028 = pnand %p1026, %p1027
      %p1029 = pneg %p1028
      // Predicated region
      $region9: #{_lambda_.1} parent=5 // pred_check
        _
      $region10: #{_lambda_.1} parent=5 // pred_check_branch
        %1031 = sbr.rel (%p1028) target = $region12
      $region11: #{_lambda_.1} parent=5 // pred_region
        %s1032 = ssub.s32 %s105, 1
        // Predicated region
        $region13: #{_lambda_.1} parent=11 // pred_check
          %p1033 = pneg %p152
        $region14: #{_lambda_.1} parent=11 // pred_check_branch
          %1035 = sbr.rel (%p1033) target = $region16
        $region15: #{_lambda_.1} parent=11 // pred_region
          _
        $region16: #{_lambda_.1} parent=11 // pred_fallthru
          _
        // Predicated region
        $region17: #{_lambda_.1} parent=11 // pred_check
          %p1036 = pneg %p173
        $region18: #{_lambda_.1} parent=11 // pred_check_branch
          %1038 = sbr.rel (%p1036) target = $region20
        $region19: #{_lambda_.1} parent=11 // pred_region
          _
        $region20: #{_lambda_.1} parent=11 // pred_fallthru
          _
        // Predicated region
        $region21: #{_lambda_.1} parent=11 // pred_check
          %p1039 = pneg %p194
        $region22: #{_lambda_.1} parent=11 // pred_check_branch
          %1041 = sbr.rel (%p1039) target = $region24
        $region23: #{_lambda_.1} parent=11 // pred_region
          _
        $region24: #{_lambda_.1} parent=11 // pred_fallthru
          _
        // Predicated region
        $region25: #{_lambda_.1} parent=11 // pred_check
          %p1042 = pneg %p215
        $region26: #{_lambda_.1} parent=11 // pred_check_branch
          %1044 = sbr.rel (%p1042) target = $region28
        $region27: #{_lambda_.1} parent=11 // pred_region
          %s1046 = ssub.s32 896, 896
          %1047 = vsyncadd [#allocation3], %s1046
          %s1048 = sshll.u32 [#allocation2], 4
          %s1049 = int_to_ptr.vmem [resolvable:$true] %s1048
          %1054 = dma.hbm_to_vmem [thread:$0]  %s9, 896, %s1049, [#allocation3], 64, 64, 4
        $region28: #{_lambda_.1} parent=11 // pred_fallthru
          _
        // Predicated region
        $region29: #{_lambda_.1} parent=11 // pred_check
          %p1055 = pneg %p236
        $region30: #{_lambda_.1} parent=11 // pred_check_branch
          %1057 = sbr.rel (%p1055) target = $region32
        $region31: #{_lambda_.1} parent=11 // pred_region
          %s1059 = ssub.s32 16, 16
          %1060 = vsyncadd [#allocation6], %s1059
          %s1062 = sshll.u32 [#allocation5], 4
          %s1063 = int_to_ptr.vmem [resolvable:$true] %s1062
          %1065 = dma.hbm_to_vmem [thread:$0]  %s11, 16, %s1063, [#allocation6]
        $region32: #{_lambda_.1} parent=11 // pred_fallthru
          _
        // Predicated region
        $region33: #{_lambda_.1} parent=11 // pred_check
          %p1066 = pneg %p257
        $region34: #{_lambda_.1} parent=11 // pred_check_branch
          %1068 = sbr.rel (%p1066) target = $region36
        $region35: #{_lambda_.1} parent=11 // pred_region
          %s1070 = ssub.s32 64, 64
          %1071 = vsyncadd [#allocation6], %s1070
          %s1073 = sshll.u32 [#allocation7], 4
          %s1074 = int_to_ptr.vmem [resolvable:$true] %s1073
          %1076 = dma.hbm_to_vmem [thread:$0]  %s13, 64, %s1074, [#allocation6]
        $region36: #{_lambda_.1} parent=11 // pred_fallthru
          _
        // Predicated region
        $region37: #{_lambda_.1} parent=11 // pred_check
          %p1077 = pneg %p278
        $region38: #{_lambda_.1} parent=11 // pred_check_branch
          %1079 = sbr.rel (%p1077) target = $region40
        $region39: #{_lambda_.1} parent=11 // pred_region
          _
        $region40: #{_lambda_.1} parent=11 // pred_fallthru
          _
        // Predicated region
        $region41: #{_lambda_.1} parent=11 // pred_check
          %p1080 = pneg %p299
        $region42: #{_lambda_.1} parent=11 // pred_check_branch
          %1082 = sbr.rel (%p1080) target = $region44
        $region43: #{_lambda_.1} parent=11 // pred_region
          %s1084 = ssub.s32 16, 16
          %1085 = vsyncadd [#allocation9], %s1084
          %s1087 = sshll.u32 [#allocation8], 4
          %s1088 = int_to_ptr.vmem [resolvable:$true] %s1087
          %1090 = dma.hbm_to_vmem [thread:$0]  %s17, 16, %s1088, [#allocation9]
        $region44: #{_lambda_.1} parent=11 // pred_fallthru
          _
        // Predicated region
        $region45: #{_lambda_.1} parent=11 // pred_check
          %p1091 = pneg %p320
        $region46: #{_lambda_.1} parent=11 // pred_check_branch
          %1093 = sbr.rel (%p1091) target = $region48
        $region47: #{_lambda_.1} parent=11 // pred_region
          %s1095 = ssub.s32 16, 16
          %1096 = vsyncadd [#allocation9], %s1095
          %s1098 = sshll.u32 [#allocation10], 4
          %s1099 = int_to_ptr.vmem [resolvable:$true] %s1098
          %1101 = dma.hbm_to_vmem [thread:$0]  %s19, 16, %s1099, [#allocation9]
        $region48: #{_lambda_.1} parent=11 // pred_fallthru
          _
        // Predicated region
        $region49: #{_lambda_.1} parent=11 // pred_check
          %p1102 = pneg %p341
        $region50: #{_lambda_.1} parent=11 // pred_check_branch
          %1104 = sbr.rel (%p1102) target = $region52
        $region51: #{_lambda_.1} parent=11 // pred_region
          %s1106 = ssub.s32 64, 64
          %1107 = vsyncadd [#allocation12], %s1106
          %s1109 = sshll.u32 [#allocation11], 4
          %s1110 = int_to_ptr.vmem [resolvable:$true] %s1109
          %1112 = dma.hbm_to_vmem [thread:$0]  %s21, 64, %s1110, [#allocation12]
        $region52: #{_lambda_.1} parent=11 // pred_fallthru
          _
        // Predicated region
        $region53: #{_lambda_.1} parent=11 // pred_check
          %p1113 = pneg %p362
        $region54: #{_lambda_.1} parent=11 // pred_check_branch
          %1115 = sbr.rel (%p1113) target = $region56
        $region55: #{_lambda_.1} parent=11 // pred_region
          %s1117 = ssub.s32 64, 64
          %1118 = vsyncadd [#allocation12], %s1117
          %s1120 = sshll.u32 [#allocation13], 4
          %s1121 = int_to_ptr.vmem [resolvable:$true] %s1120
          %1123 = dma.hbm_to_vmem [thread:$0]  %s23, 64, %s1121, [#allocation12]
        $region56: #{_lambda_.1} parent=11 // pred_fallthru
          _
        // Predicated region
        $region57: #{_lambda_.1} parent=11 // pred_check
          %p1124 = pneg %p383
        $region58: #{_lambda_.1} parent=11 // pred_check_branch
          %1126 = sbr.rel (%p1124) target = $region60
        $region59: #{_lambda_.1} parent=11 // pred_region
          _
        $region60: #{_lambda_.1} parent=11 // pred_fallthru
          _
        // Predicated region
        $region61: #{_lambda_.1} parent=11 // pred_check
          %p1127 = pneg %p404
        $region62: #{_lambda_.1} parent=11 // pred_check_branch
          %1129 = sbr.rel (%p1127) target = $region64
        $region63: #{_lambda_.1} parent=11 // pred_region
          _
        $region64: #{_lambda_.1} parent=11 // pred_fallthru
          _
        // Predicated region
        $region65: #{_lambda_.1} parent=11 // pred_check
          %p1130 = pneg %p425
        $region66: #{_lambda_.1} parent=11 // pred_check_branch
          %1132 = sbr.rel (%p1130) target = $region68
        $region67: #{_lambda_.1} parent=11 // pred_region
          %s1134 = ssub.s32 32, 32
          %1135 = vsyncadd [#allocation15], %s1134
          %s1137 = sshll.u32 [#allocation14], 4
          %s1138 = int_to_ptr.vmem [resolvable:$true] %s1137
          %1140 = dma.hbm_to_vmem [thread:$0]  %s29, 32, %s1138, [#allocation15]
        $region68: #{_lambda_.1} parent=11 // pred_fallthru
          _
        // Predicated region
        $region69: #{_lambda_.1} parent=11 // pred_check
          %p1141 = pneg %p446
        $region70: #{_lambda_.1} parent=11 // pred_check_branch
          %1143 = sbr.rel (%p1141) target = $region72
        $region71: #{_lambda_.1} parent=11 // pred_region
          _
        $region72: #{_lambda_.1} parent=11 // pred_fallthru
          _
        // Predicated region
        $region73: #{_lambda_.1} parent=11 // pred_check
          %p1144 = pneg %p467
        $region74: #{_lambda_.1} parent=11 // pred_check_branch
          %1146 = sbr.rel (%p1144) target = $region76
        $region75: #{_lambda_.1} parent=11 // pred_region
          %s1148 = ssub.s32 48, 48
          %1149 = vsyncadd [#allocation15], %s1148
          %s1151 = sshll.u32 [#allocation16], 4
          %s1152 = int_to_ptr.vmem [resolvable:$true] %s1151
          %1154 = dma.hbm_to_vmem [thread:$0]  %s33, 48, %s1152, [#allocation15]
        $region76: #{_lambda_.1} parent=11 // pred_fallthru
          _
        // Predicated region
        $region77: #{_lambda_.1} parent=11 // pred_check
          %p1155 = pneg %p488
        $region78: #{_lambda_.1} parent=11 // pred_check_branch
          %1157 = sbr.rel (%p1155) target = $region80
        $region79: #{_lambda_.1} parent=11 // pred_region
          _
        $region80: #{_lambda_.1} parent=11 // pred_fallthru
          _
        // Predicated region
        $region81: #{_lambda_.1} parent=11 // pred_check
          %p1158 = pneg %p509
        $region82: #{_lambda_.1} parent=11 // pred_check_branch
          %1160 = sbr.rel (%p1158) target = $region84
        $region83: #{_lambda_.1} parent=11 // pred_region
          %s1162 = ssub.s32 16, 16
          %1163 = vsyncadd [#allocation18], %s1162
          %s1165 = sshll.u32 [#allocation17], 4
          %s1166 = int_to_ptr.vmem [resolvable:$true] %s1165
          %1168 = dma.hbm_to_vmem [thread:$0]  %s37, 16, %s1166, [#allocation18]
        $region84: #{_lambda_.1} parent=11 // pred_fallthru
          _
        // Predicated region
        $region85: #{_lambda_.1} parent=11 // pred_check
          %p1169 = pneg %p530
        $region86: #{_lambda_.1} parent=11 // pred_check_branch
          %1171 = sbr.rel (%p1169) target = $region88
        $region87: #{_lambda_.1} parent=11 // pred_region
          _
        $region88: #{_lambda_.1} parent=11 // pred_fallthru
          _
        // Predicated region
        $region89: #{_lambda_.1} parent=11 // pred_check
          %p1172 = pneg %p551
        $region90: #{_lambda_.1} parent=11 // pred_check_branch
          %1174 = sbr.rel (%p1172) target = $region92
        $region91: #{_lambda_.1} parent=11 // pred_region
          _
        $region92: #{_lambda_.1} parent=11 // pred_fallthru
          _
        // Predicated region
        $region93: #{_lambda_.1} parent=11 // pred_check
          %p1175 = pneg %p572
        $region94: #{_lambda_.1} parent=11 // pred_check_branch
          %1177 = sbr.rel (%p1175) target = $region96
        $region95: #{_lambda_.1} parent=11 // pred_region
          %s1179 = ssub.s32 32, 32
          %1180 = vsyncadd [#allocation18], %s1179
          %s1182 = sshll.u32 [#allocation19], 4
          %s1183 = int_to_ptr.vmem [resolvable:$true] %s1182
          %1185 = dma.hbm_to_vmem [thread:$0]  %s43, 32, %s1183, [#allocation18]
        $region96: #{_lambda_.1} parent=11 // pred_fallthru
          _
        // Predicated region
        $region97: #{_lambda_.1} parent=11 // pred_check
          %p1186 = pneg %p593
        $region98: #{_lambda_.1} parent=11 // pred_check_branch
          %1188 = sbr.rel (%p1186) target = $region100
        $region99: #{_lambda_.1} parent=11 // pred_region
          _
        $region100: #{_lambda_.1} parent=11 // pred_fallthru
          _
        // Predicated region
        $region101: #{_lambda_.1} parent=11 // pred_check
          %p1189 = pneg %p614
        $region102: #{_lambda_.1} parent=11 // pred_check_branch
          %1191 = sbr.rel (%p1189) target = $region104
        $region103: #{_lambda_.1} parent=11 // pred_region
          %s1193 = ssub.s32 32, 32
          %1194 = vsyncadd [#allocation21], %s1193
          %s1196 = sshll.u32 [#allocation20], 4
          %s1197 = int_to_ptr.vmem [resolvable:$true] %s1196
          %1199 = dma.hbm_to_vmem [thread:$0]  %s47, 32, %s1197, [#allocation21]
        $region104: #{_lambda_.1} parent=11 // pred_fallthru
          _
        // Predicated region
        $region105: #{_lambda_.1} parent=11 // pred_check
          %p1200 = pneg %p635
        $region106: #{_lambda_.1} parent=11 // pred_check_branch
          %1202 = sbr.rel (%p1200) target = $region108
        $region107: #{_lambda_.1} parent=11 // pred_region
          %s1204 = ssub.s32 1792, 1792
          %1205 = vsyncadd [#allocation21], %s1204
          %s1206 = sshll.u32 [#allocation22], 4
          %s1207 = int_to_ptr.vmem [resolvable:$true] %s1206
          %1212 = dma.hbm_to_vmem [thread:$0]  %s49, 1792, %s1207, [#allocation21], 64, 64, 4
        $region108: #{_lambda_.1} parent=11 // pred_fallthru
          _
        // Predicated region
        $region109: #{_lambda_.1} parent=11 // pred_check
          %p1213 = pneg %p656
        $region110: #{_lambda_.1} parent=11 // pred_check_branch
          %1215 = sbr.rel (%p1213) target = $region112
        $region111: #{_lambda_.1} parent=11 // pred_region
          %s1217 = ssub.s32 16, 16
          %1218 = vsyncadd [#allocation24], %s1217
          %s1220 = sshll.u32 [#allocation23], 4
          %s1221 = int_to_ptr.vmem [resolvable:$true] %s1220
          %1223 = dma.hbm_to_vmem [thread:$0]  %s51, 16, %s1221, [#allocation24]
        $region112: #{_lambda_.1} parent=11 // pred_fallthru
          _
        // Predicated region
        $region113: #{_lambda_.1} parent=11 // pred_check
          %p1224 = pneg %p677
        $region114: #{_lambda_.1} parent=11 // pred_check_branch
          %1226 = sbr.rel (%p1224) target = $region116
        $region115: #{_lambda_.1} parent=11 // pred_region
          %s1228 = ssub.s32 512, 512
          %1229 = vsyncadd [#allocation24], %s1228
          %s1230 = sshll.u32 [#allocation25], 4
          %s1231 = int_to_ptr.vmem [resolvable:$true] %s1230
          %1236 = dma.hbm_to_vmem [thread:$0]  %s53, 512, %s1231, [#allocation24], 128, 128, 8
        $region116: #{_lambda_.1} parent=11 // pred_fallthru
          _
        // Predicated region
        $region117: #{_lambda_.1} parent=11 // pred_check
          %p1237 = pneg %p698
        $region118: #{_lambda_.1} parent=11 // pred_check_branch
          %1239 = sbr.rel (%p1237) target = $region120
        $region119: #{_lambda_.1} parent=11 // pred_region
          _
        $region120: #{_lambda_.1} parent=11 // pred_fallthru
          _
        // Predicated region
        $region121: #{_lambda_.1} parent=11 // pred_check
          %p1240 = pneg %p719
        $region122: #{_lambda_.1} parent=11 // pred_check_branch
          %1242 = sbr.rel (%p1240) target = $region124
        $region123: #{_lambda_.1} parent=11 // pred_region
          %s1244 = ssub.s32 16, 16
          %1245 = vsyncadd [#allocation27], %s1244
          %s1247 = sshll.u32 [#allocation26], 4
          %s1248 = int_to_ptr.vmem [resolvable:$true] %s1247
          %1250 = dma.hbm_to_vmem [thread:$0]  %s57, 16, %s1248, [#allocation27]
        $region124: #{_lambda_.1} parent=11 // pred_fallthru
          _
        // Predicated region
        $region125: #{_lambda_.1} parent=11 // pred_check
          %p1251 = pneg %p740
        $region126: #{_lambda_.1} parent=11 // pred_check_branch
          %1253 = sbr.rel (%p1251) target = $region128
        $region127: #{_lambda_.1} parent=11 // pred_region
          %s1255 = ssub.s32 16, 16
          %1256 = vsyncadd [#allocation27], %s1255
          %s1258 = sshll.u32 [#allocation28], 4
          %s1259 = int_to_ptr.vmem [resolvable:$true] %s1258
          %1261 = dma.hbm_to_vmem [thread:$0]  %s59, 16, %s1259, [#allocation27]
        $region128: #{_lambda_.1} parent=11 // pred_fallthru
          _
        // Predicated region
        $region129: #{_lambda_.1} parent=11 // pred_check
          %p1262 = pneg %p761
        $region130: #{_lambda_.1} parent=11 // pred_check_branch
          %1264 = sbr.rel (%p1262) target = $region132
        $region131: #{_lambda_.1} parent=11 // pred_region
          _
        $region132: #{_lambda_.1} parent=11 // pred_fallthru
          _
        // Predicated region
        $region133: #{_lambda_.1} parent=11 // pred_check
          %p1265 = pneg %p782
        $region134: #{_lambda_.1} parent=11 // pred_check_branch
          %1267 = sbr.rel (%p1265) target = $region136
        $region135: #{_lambda_.1} parent=11 // pred_region
          %s1269 = ssub.s32 64, 64
          %1270 = vsyncadd [#allocation30], %s1269
          %s1272 = sshll.u32 [#allocation29], 4
          %s1273 = int_to_ptr.vmem [resolvable:$true] %s1272
          %1275 = dma.hbm_to_vmem [thread:$0]  %s63, 64, %s1273, [#allocation30]
        $region136: #{_lambda_.1} parent=11 // pred_fallthru
          _
        // Predicated region
        $region137: #{_lambda_.1} parent=11 // pred_check
          %p1276 = pneg %p803
        $region138: #{_lambda_.1} parent=11 // pred_check_branch
          %1278 = sbr.rel (%p1276) target = $region140
        $region139: #{_lambda_.1} parent=11 // pred_region
          _
        $region140: #{_lambda_.1} parent=11 // pred_fallthru
          _
        // Predicated region
        $region141: #{_lambda_.1} parent=11 // pred_check
          %p1279 = pneg %p824
        $region142: #{_lambda_.1} parent=11 // pred_check_branch
          %1281 = sbr.rel (%p1279) target = $region144
        $region143: #{_lambda_.1} parent=11 // pred_region
          _
        $region144: #{_lambda_.1} parent=11 // pred_fallthru
          _
        // Predicated region
        $region145: #{_lambda_.1} parent=11 // pred_check
          %p1282 = pneg %p845
        $region146: #{_lambda_.1} parent=11 // pred_check_branch
          %1284 = sbr.rel (%p1282) target = $region148
        $region147: #{_lambda_.1} parent=11 // pred_region
          %s1286 = ssub.s32 32, 32
          %1287 = vsyncadd [#allocation30], %s1286
          %s1289 = sshll.u32 [#allocation31], 4
          %s1290 = int_to_ptr.vmem [resolvable:$true] %s1289
          %1292 = dma.hbm_to_vmem [thread:$0]  %s69, 32, %s1290, [#allocation30]
        $region148: #{_lambda_.1} parent=11 // pred_fallthru
          _
        // Predicated region
        $region149: #{_lambda_.1} parent=11 // pred_check
          %p1293 = pneg %p866
        $region150: #{_lambda_.1} parent=11 // pred_check_branch
          %1295 = sbr.rel (%p1293) target = $region152
        $region151: #{_lambda_.1} parent=11 // pred_region
          %s1297 = ssub.s32 16, 16
          %1298 = vsyncadd [#allocation33], %s1297
          %s1300 = sshll.u32 [#allocation32], 4
          %s1301 = int_to_ptr.vmem [resolvable:$true] %s1300
          %1303 = dma.hbm_to_vmem [thread:$0]  %s71, 16, %s1301, [#allocation33]
        $region152: #{_lambda_.1} parent=11 // pred_fallthru
          _
        // Predicated region
        $region153: #{_lambda_.1} parent=11 // pred_check
          %p1304 = pneg %p887
        $region154: #{_lambda_.1} parent=11 // pred_check_branch
          %1306 = sbr.rel (%p1304) target = $region156
        $region155: #{_lambda_.1} parent=11 // pred_region
          _
        $region156: #{_lambda_.1} parent=11 // pred_fallthru
          _
        // Predicated region
        $region157: #{_lambda_.1} parent=11 // pred_check
          %p1307 = pneg %p908
        $region158: #{_lambda_.1} parent=11 // pred_check_branch
          %1309 = sbr.rel (%p1307) target = $region160
        $region159: #{_lambda_.1} parent=11 // pred_region
          _
        $region160: #{_lambda_.1} parent=11 // pred_fallthru
          _
        // Predicated region
        $region161: #{_lambda_.1} parent=11 // pred_check
          %p1310 = pneg %p929
        $region162: #{_lambda_.1} parent=11 // pred_check_branch
          %1312 = sbr.rel (%p1310) target = $region164
        $region163: #{_lambda_.1} parent=11 // pred_region
          _
        $region164: #{_lambda_.1} parent=11 // pred_fallthru
          _
        // Predicated region
        $region165: #{_lambda_.1} parent=11 // pred_check
          %p1313 = pneg %p950
        $region166: #{_lambda_.1} parent=11 // pred_check_branch
          %1315 = sbr.rel (%p1313) target = $region168
        $region167: #{_lambda_.1} parent=11 // pred_region
          _
        $region168: #{_lambda_.1} parent=11 // pred_fallthru
          _
        // Predicated region
        $region169: #{_lambda_.1} parent=11 // pred_check
          %p1316 = pneg %p971
        $region170: #{_lambda_.1} parent=11 // pred_check_branch
          %1318 = sbr.rel (%p1316) target = $region172
        $region171: #{_lambda_.1} parent=11 // pred_region
          _
        $region172: #{_lambda_.1} parent=11 // pred_fallthru
          _
        // Predicated region
        $region173: #{_lambda_.1} parent=11 // pred_check
          %p1319 = pneg %p992
        $region174: #{_lambda_.1} parent=11 // pred_check_branch
          %1321 = sbr.rel (%p1319) target = $region176
        $region175: #{_lambda_.1} parent=11 // pred_region
          _
        $region176: #{_lambda_.1} parent=11 // pred_fallthru
          _
      $region12: #{_lambda_.1} parent=5 // pred_fallthru
        _
      %p1322 = scmp.lt.s32.totalorder %s105, 2
      // Predicated region
      $region177: #{_lambda_.1} parent=5 // pred_check
        %p1323 = pneg %p1322
      $region178: #{_lambda_.1} parent=5 // pred_check_branch
        %1325 = sbr.rel (%p1323) target = $region180
      $region179: #{_lambda_.1} parent=5 // pred_region
        // Predicated region
        $region181: #{_lambda_.1} parent=179 // pred_check
          %p1326 = pneg %p125
        $region182: #{_lambda_.1} parent=179 // pred_check_branch
          %1328 = sbr.rel (%p1326) target = $region184
        $region183: #{_lambda_.1} parent=179 // pred_region
          %p1329 = scmp.lt.s32.totalorder %s105, 1
          %s1330 = scalar_select %p1329, %s105, 1
          %s1331 = smul.addr %s1330, 14
          %s1332 = smul.addr %s1331, 8
          %s1333 = scalar_lea.vmem %s1, %s1332
        $region184: #{_lambda_.1} parent=179 // pred_fallthru
          _
      $region180: #{_lambda_.1} parent=5 // pred_fallthru
        _
      %p1334 = scmp.le.s32.totalorder 1, %s105
      %p1335 = scmp.lt.s32.totalorder %s105, 3
      %p1336 = pnand %p1334, %p1335
      %p1337 = pneg %p1336
      // Predicated region
      $region185: #{_lambda_.1} parent=5 // pred_check
        _
      $region186: #{_lambda_.1} parent=5 // pred_check_branch
        %1339 = sbr.rel (%p1336) target = $region188
      $region187: #{_lambda_.1} parent=5 // pred_region
        %s1340 = ssub.s32 %s105, 1
        // Predicated region
        $region189: #{_lambda_.1} parent=187 // pred_check
          %p1341 = pneg %p215
        $region190: #{_lambda_.1} parent=187 // pred_check_branch
          %1343 = sbr.rel (%p1341) target = $region192
        $region191: #{_lambda_.1} parent=187 // pred_region
          %1344 = dma.done [#allocation3], 896
        $region192: #{_lambda_.1} parent=187 // pred_fallthru
          _
        // Predicated region
        $region193: #{_lambda_.1} parent=187 // pred_check
          %p1345 = pneg %p236
        $region194: #{_lambda_.1} parent=187 // pred_check_branch
          %1347 = sbr.rel (%p1345) target = $region196
        $region195: #{_lambda_.1} parent=187 // pred_region
          %1348 = dma.done [#allocation6], 16
        $region196: #{_lambda_.1} parent=187 // pred_fallthru
          _
        // Predicated region
        $region197: #{_lambda_.1} parent=187 // pred_check
          %p1349 = pneg %p257
        $region198: #{_lambda_.1} parent=187 // pred_check_branch
          %1351 = sbr.rel (%p1349) target = $region200
        $region199: #{_lambda_.1} parent=187 // pred_region
          %1352 = dma.done [#allocation6], 64
        $region200: #{_lambda_.1} parent=187 // pred_fallthru
          _
        // Predicated region
        $region201: #{_lambda_.1} parent=187 // pred_check
          %p1353 = pneg %p299
        $region202: #{_lambda_.1} parent=187 // pred_check_branch
          %1355 = sbr.rel (%p1353) target = $region204
        $region203: #{_lambda_.1} parent=187 // pred_region
          %1356 = dma.done [#allocation9], 16
        $region204: #{_lambda_.1} parent=187 // pred_fallthru
          _
        // Predicated region
        $region205: #{_lambda_.1} parent=187 // pred_check
          %p1357 = pneg %p320
        $region206: #{_lambda_.1} parent=187 // pred_check_branch
          %1359 = sbr.rel (%p1357) target = $region208
        $region207: #{_lambda_.1} parent=187 // pred_region
          %1360 = dma.done [#allocation9], 16
        $region208: #{_lambda_.1} parent=187 // pred_fallthru
          _
        // Predicated region
        $region209: #{_lambda_.1} parent=187 // pred_check
          %p1361 = pneg %p341
        $region210: #{_lambda_.1} parent=187 // pred_check_branch
          %1363 = sbr.rel (%p1361) target = $region212
        $region211: #{_lambda_.1} parent=187 // pred_region
          %1364 = dma.done [#allocation12], 64
        $region212: #{_lambda_.1} parent=187 // pred_fallthru
          _
        // Predicated region
        $region213: #{_lambda_.1} parent=187 // pred_check
          %p1365 = pneg %p362
        $region214: #{_lambda_.1} parent=187 // pred_check_branch
          %1367 = sbr.rel (%p1365) target = $region216
        $region215: #{_lambda_.1} parent=187 // pred_region
          %1368 = dma.done [#allocation12], 64
        $region216: #{_lambda_.1} parent=187 // pred_fallthru
          _
        // Predicated region
        $region217: #{_lambda_.1} parent=187 // pred_check
          %p1369 = pneg %p425
        $region218: #{_lambda_.1} parent=187 // pred_check_branch
          %1371 = sbr.rel (%p1369) target = $region220
        $region219: #{_lambda_.1} parent=187 // pred_region
          %1372 = dma.done [#allocation15], 32
        $region220: #{_lambda_.1} parent=187 // pred_fallthru
          _
        // Predicated region
        $region221: #{_lambda_.1} parent=187 // pred_check
          %p1373 = pneg %p467
        $region222: #{_lambda_.1} parent=187 // pred_check_branch
          %1375 = sbr.rel (%p1373) target = $region224
        $region223: #{_lambda_.1} parent=187 // pred_region
          %1376 = dma.done [#allocation15], 48
        $region224: #{_lambda_.1} parent=187 // pred_fallthru
          _
        // Predicated region
        $region225: #{_lambda_.1} parent=187 // pred_check
          %p1377 = pneg %p509
        $region226: #{_lambda_.1} parent=187 // pred_check_branch
          %1379 = sbr.rel (%p1377) target = $region228
        $region227: #{_lambda_.1} parent=187 // pred_region
          %1380 = dma.done [#allocation18], 16
        $region228: #{_lambda_.1} parent=187 // pred_fallthru
          _
        // Predicated region
        $region229: #{_lambda_.1} parent=187 // pred_check
          %p1381 = pneg %p572
        $region230: #{_lambda_.1} parent=187 // pred_check_branch
          %1383 = sbr.rel (%p1381) target = $region232
        $region231: #{_lambda_.1} parent=187 // pred_region
          %1384 = dma.done [#allocation18], 32
        $region232: #{_lambda_.1} parent=187 // pred_fallthru
          _
        // Predicated region
        $region233: #{_lambda_.1} parent=187 // pred_check
          %p1385 = pneg %p614
        $region234: #{_lambda_.1} parent=187 // pred_check_branch
          %1387 = sbr.rel (%p1385) target = $region236
        $region235: #{_lambda_.1} parent=187 // pred_region
          %1388 = dma.done [#allocation21], 32
        $region236: #{_lambda_.1} parent=187 // pred_fallthru
          _
        // Predicated region
        $region237: #{_lambda_.1} parent=187 // pred_check
          %p1389 = pneg %p635
        $region238: #{_lambda_.1} parent=187 // pred_check_branch
          %1391 = sbr.rel (%p1389) target = $region240
        $region239: #{_lambda_.1} parent=187 // pred_region
          %1392 = dma.done [#allocation21], 1792
        $region240: #{_lambda_.1} parent=187 // pred_fallthru
          _
        // Predicated region
        $region241: #{_lambda_.1} parent=187 // pred_check
          %p1393 = pneg %p656
        $region242: #{_lambda_.1} parent=187 // pred_check_branch
          %1395 = sbr.rel (%p1393) target = $region244
        $region243: #{_lambda_.1} parent=187 // pred_region
          %1396 = dma.done [#allocation24], 16
        $region244: #{_lambda_.1} parent=187 // pred_fallthru
          _
        // Predicated region
        $region245: #{_lambda_.1} parent=187 // pred_check
          %p1397 = pneg %p677
        $region246: #{_lambda_.1} parent=187 // pred_check_branch
          %1399 = sbr.rel (%p1397) target = $region248
        $region247: #{_lambda_.1} parent=187 // pred_region
          %1400 = dma.done [#allocation24], 512
        $region248: #{_lambda_.1} parent=187 // pred_fallthru
          _
        // Predicated region
        $region249: #{_lambda_.1} parent=187 // pred_check
          %p1401 = pneg %p719
        $region250: #{_lambda_.1} parent=187 // pred_check_branch
          %1403 = sbr.rel (%p1401) target = $region252
        $region251: #{_lambda_.1} parent=187 // pred_region
          %1404 = dma.done [#allocation27], 16
        $region252: #{_lambda_.1} parent=187 // pred_fallthru
          _
        // Predicated region
        $region253: #{_lambda_.1} parent=187 // pred_check
          %p1405 = pneg %p740
        $region254: #{_lambda_.1} parent=187 // pred_check_branch
          %1407 = sbr.rel (%p1405) target = $region256
        $region255: #{_lambda_.1} parent=187 // pred_region
          %1408 = dma.done [#allocation27], 16
        $region256: #{_lambda_.1} parent=187 // pred_fallthru
          _
        // Predicated region
        $region257: #{_lambda_.1} parent=187 // pred_check
          %p1409 = pneg %p782
        $region258: #{_lambda_.1} parent=187 // pred_check_branch
          %1411 = sbr.rel (%p1409) target = $region260
        $region259: #{_lambda_.1} parent=187 // pred_region
          %1412 = dma.done [#allocation30], 64
        $region260: #{_lambda_.1} parent=187 // pred_fallthru
          _
        // Predicated region
        $region261: #{_lambda_.1} parent=187 // pred_check
          %p1413 = pneg %p845
        $region262: #{_lambda_.1} parent=187 // pred_check_branch
          %1415 = sbr.rel (%p1413) target = $region264
        $region263: #{_lambda_.1} parent=187 // pred_region
          %1416 = dma.done [#allocation30], 32
        $region264: #{_lambda_.1} parent=187 // pred_fallthru
          _
        // Predicated region
        $region265: #{_lambda_.1} parent=187 // pred_check
          %p1417 = pneg %p866
        $region266: #{_lambda_.1} parent=187 // pred_check_branch
          %1419 = sbr.rel (%p1417) target = $region268
        $region267: #{_lambda_.1} parent=187 // pred_region
          %1420 = dma.done [#allocation33], 16
        $region268: #{_lambda_.1} parent=187 // pred_fallthru
          _
        %p1421 = scmp.lt.s32.totalorder %s110, 1
        %s1422 = scalar_select %p1421, %s110, 1
        %s1423 = smul.addr %s1422, 14
        %s1424 = smul.addr %s1423, 8
        %s1425 = scalar_lea.vmem %s1, %s1424
        %p1426 = pneg %p131
        %p1427 = pneg %p128
        %p1428 = pneg %p152
        %p1429 = pneg %p149
        %p1430 = pneg %p173
        %p1431 = pneg %p170
        %p1432 = pneg %p194
        %p1433 = pneg %p191
        %p1434 = pneg %p215
        %p1435 = pneg %p212
        %p1436 = pneg %p236
        %p1437 = pneg %p233
        %p1438 = pneg %p257
        %p1439 = pneg %p254
        %p1440 = pneg %p278
        %p1441 = pneg %p275
        %p1442 = pneg %p299
        %p1443 = pneg %p296
        %p1444 = pneg %p320
        %p1445 = pneg %p317
        %p1446 = pneg %p341
        %p1447 = pneg %p338
        %p1448 = pneg %p362
        %p1449 = pneg %p359
        %p1450 = pneg %p383
        %p1451 = pneg %p380
        %p1452 = pneg %p404
        %p1453 = pneg %p401
        %p1454 = pneg %p425
        %p1455 = pneg %p422
        %p1456 = pneg %p446
        %p1457 = pneg %p443
        %p1458 = pneg %p467
        %p1459 = pneg %p464
        %p1460 = pneg %p488
        %p1461 = pneg %p485
        %p1462 = pneg %p509
        %p1463 = pneg %p506
        %p1464 = pneg %p530
        %p1465 = pneg %p527
        %p1466 = pneg %p551
        %p1467 = pneg %p548
        %p1468 = pneg %p572
        %p1469 = pneg %p569
        %p1470 = pneg %p593
        %p1471 = pneg %p590
        %p1472 = pneg %p614
        %p1473 = pneg %p611
        %p1474 = pneg %p635
        %p1475 = pneg %p632
        %p1476 = pneg %p656
        %p1477 = pneg %p653
        %p1478 = pneg %p677
        %p1479 = pneg %p674
        %p1480 = pneg %p698
        %p1481 = pneg %p695
        %p1482 = pneg %p719
        %p1483 = pneg %p716
        %p1484 = pneg %p740
        %p1485 = pneg %p737
        %p1486 = pneg %p761
        %p1487 = pneg %p758
        %p1488 = pneg %p782
        %p1489 = pneg %p779
        %p1490 = pneg %p803
        %p1491 = pneg %p800
        %p1492 = pneg %p824
        %p1493 = pneg %p821
        %p1494 = pneg %p845
        %p1495 = pneg %p842
        %p1496 = pneg %p866
        %p1497 = pneg %p863
        %p1498 = pneg %p887
        %p1499 = pneg %p884
        %p1500 = pneg %p908
        %p1501 = pneg %p905
        %p1502 = pneg %p929
        %p1503 = pneg %p926
        %p1504 = pneg %p950
        %p1505 = pneg %p947
        %p1506 = pneg %p971
        %p1507 = pneg %p968
        %p1508 = pneg %p992
        %p1509 = pneg %p989
        %p1510 = pneg %p1018
        %p1511 = pneg %p1015
        %s1512 = sand.u32 %s1005, 1
        %s1513 = scalar_lea.sflag [#allocation4], %s1512
        %s1514 = sand.u32 %s1005, 1
        %s1515 = scalar_lea.vmem [#allocation34], %s1514
        %p1516 = scmp.lt.s32.totalorder %s110, 1
        %s1517 = scalar_select %p1516, %s110, 1
        %s1518 = smul.addr %s1517, 14
        %s1519 = smul.addr %s1518, 8
        %s1520 = scalar_lea.vmem %s1, %s1519
        %v1522 = vld [vmem:[%s1520] sm:$0xff]
        %v1523 = vld [vmem:[%s1520 + $0x8] sm:$0xff]
        %v1524 = vld [vmem:[%s1520 + $0x10] sm:$0xff]
        %v1525 = vld [vmem:[%s1520 + $0x18] sm:$0xff]
        %v1526 = vld [vmem:[%s1520 + $0x20] sm:$0xff]
        %v1527 = vld [vmem:[%s1520 + $0x28] sm:$0xff]
        %v1528 = vld [vmem:[%s1520 + $0x30] sm:$0xff]
        %v1529 = vld [vmem:[%s1520 + $0x38] sm:$0xff]
        %v1530 = vld [vmem:[%s1520 + $0x40] sm:$0xff]
        %v1531 = vld [vmem:[%s1520 + $0x48] sm:$0xff]
        %v1532 = vld [vmem:[%s1520 + $0x50] sm:$0xff]
        %v1533 = vld [vmem:[%s1520 + $0x58] sm:$0xff]
        %v1534 = vld [vmem:[%s1520 + $0x60] sm:$0xff]
        %v1535 = vld [vmem:[%s1520 + $0x68] sm:$0xff]
        %v1536 = vld [vmem:[%s67] sm:$0xf]
        %v1537 = vld [vmem:[%s67 + $0x4] sm:$0xf]
        %v1538 = vld [vmem:[%s67 + $0x8] sm:$0xf]
        %v1539 = vld [vmem:[%s67 + $0xc] sm:$0xf]
        %v1540 = vld [vmem:[%s67 + $0x10] sm:$0xf]
        %v1541 = vld [vmem:[%s67 + $0x14] sm:$0xf]
        %v1542 = vld [vmem:[%s67 + $0x18] sm:$0xf]
        %v1543 = vld [vmem:[%s67 + $0x1c] sm:$0xf]
        %v1544 = vld [vmem:[%s67 + $0x20] sm:$0xf]
        %v1545 = vld [vmem:[%s67 + $0x24] sm:$0xf]
        %v1546 = vld [vmem:[%s67 + $0x28] sm:$0x3]
        %v1547 = vpack.c.bf16 %v1524, %v1522
        %v1548 = vpack.c.bf16 %v1525, %v1523
        %v1549 = vpack.c.bf16 %v1528, %v1526
        %v1550 = vpack.c.bf16 %v1529, %v1527
        %v1551 = vpack.c.bf16 %v1532, %v1530
        %v1552 = vpack.c.bf16 %v1533, %v1531
        %v1553 = vpack.c.bf16 %v1534, %v1534
        %v1554 = vpack.c.bf16 %v1535, %v1535
        %v1566 = vunpack.c.l.b16 %v1536
        %v1567 = vunpack.c.l.b16 %v1537
        %v1568 = vunpack.c.l.b16 %v1538
        %v1569 = vunpack.c.l.b16 %v1539
        %v1570 = vunpack.c.l.b16 %v1540
        %v1571 = vunpack.c.l.b16 %v1541
        %v1572 = vunpack.c.l.b16 %v1542
        %v1573 = vunpack.c.l.b16 %v1543
        %v1574 = vunpack.c.l.b16 %v1544
        %v1575 = vunpack.c.l.b16 %v1545
        %v1576 = vunpack.c.l.b16 %v1546
        %v1577 = vpack.c.b16 %v1567, %v1566
        %v1578 = vpack.c.b16 %v1569, %v1568
        %v1579 = vpack.c.b16 %v1571, %v1570
        %v1580 = vpack.c.b16 %v1573, %v1572
        %v1581 = vpack.c.b16 %v1575, %v1574
        %v1582 = vpack.c.b16 %v1576, %v1576
        %vm1583 = vcmask 457728
        %v1585 = vsel %vm1583, %v1577, 0
        %v1588 = vsel %vm1583, %v1578, 0
        %v1591 = vsel %vm1583, %v1579, 0
        %v1594 = vsel %vm1583, %v1580, 0
        %v1597 = vsel %vm1583, %v1581, 0
        %v1600 = vsel %vm1583, %v1582, 0
        %vm1602 = vcmask 1043456
        %v1604 = vsel %vm1602, %v1553, 0
        %v1607 = vsel %vm1602, %v1554, 0
        %1609 = vmatprep.subr.bf16.mxu0 %v1548
        %1610 = vmatpush1.bf16.msra.mxu0 %v1547
        %1611 = vmatprep.subr.bf16.mxu0 %v1550
        %1612 = vmatpush1.bf16.msra.mxu0 %v1549
        %1613 = vmatprep.subr.bf16.mxu0 %v1552
        %1614 = vmatpush1.bf16.msra.mxu0 %v1551
        %1615 = vmatprep.subr.bf16.mxu0 %v1607
        %1616 = vmatpush1.bf16.msra.mxu0 %v1604
        %1617 = vmatprep.subr.bf16.mxu0 0
        %1618 = vmatpush1.bf16.msra.mxu0 0
        %1619 = vmatprep.subr.bf16.mxu0 0
        %1620 = vmatpush1.bf16.msra.mxu0 0
        %1621 = vmatprep.subr.bf16.mxu0 0
        %1622 = vmatpush1.bf16.msra.mxu0 0
        %1623 = vmatprep.subr.bf16.mxu0 0
        %1624 = vmatpush1.bf16.msra.mxu0 0
        %1625 = vmatprep.subr.bf16.mxu0 0
        %1626 = vmatpush1.bf16.msra.mxu0 0
        %1627 = vmatprep.subr.bf16.mxu0 0
        %1628 = vmatpush1.bf16.msra.mxu0 0
        %1629 = vmatprep.subr.bf16.mxu0 0
        %1630 = vmatpush1.bf16.msra.mxu0 0
        %1631 = vmatprep.subr.bf16.mxu0 0
        %1632 = vmatpush1.bf16.msra.mxu0 0
        %1633 = vmatprep.subr.bf16.mxu0 0
        %1634 = vmatpush1.bf16.msra.mxu0 0
        %1635 = vmatprep.subr.bf16.mxu0 0
        %1636 = vmatpush1.bf16.msra.mxu0 0
        %1637 = vmatprep.subr.bf16.mxu0 0
        %1638 = vmatpush1.bf16.msra.mxu0 0
        %1639 = vmatprep.subr.bf16.mxu0 0
        %1640 = vmatpush1.bf16.msra.mxu0 0
        %1641 = vmatprep.mubr.bf16.mxu0 0
        %1642 = vmatmul.mubr.bf16.gmra.mrb[0].mxu0 %v1585
        %v1643 = vpop.f32.mrb[0].mxu0
        %v1644 = vadd.f32 0.0, %v1643
        %v1645 = vpop.f32.mrb[0].mxu0
        %v1646 = vadd.f32 0.0, %v1645
        %v1647 = vpop.f32.mrb[0].mxu0
        %v1648 = vadd.f32 0.0, %v1647
        %v1649 = vpop.f32.mrb[0].mxu0
        %v1650 = vadd.f32 0.0, %v1649
        %1651 = vmatprep.mubr.bf16.mxu0 0
        %1652 = vmatmul.mubr.bf16.gmra.mrb[0].mxu0 %v1588
        %v1653 = vpop.f32.mrb[0].mxu0
        %v1654 = vadd.f32 0.0, %v1653
        %v1655 = vpop.f32.mrb[0].mxu0
        %v1656 = vadd.f32 0.0, %v1655
        %v1657 = vpop.f32.mrb[0].mxu0
        %v1658 = vadd.f32 0.0, %v1657
        %v1659 = vpop.f32.mrb[0].mxu0
        %v1660 = vadd.f32 0.0, %v1659
        %1661 = vmatprep.mubr.bf16.mxu0 0
        %1662 = vmatmul.mubr.bf16.gmra.mrb[0].mxu0 %v1591
        %v1663 = vpop.f32.mrb[0].mxu0
        %v1664 = vadd.f32 0.0, %v1663
        %v1665 = vpop.f32.mrb[0].mxu0
        %v1666 = vadd.f32 0.0, %v1665
        %v1667 = vpop.f32.mrb[0].mxu0
        %v1668 = vadd.f32 0.0, %v1667
        %v1669 = vpop.f32.mrb[0].mxu0
        %v1670 = vadd.f32 0.0, %v1669
        %1671 = vmatprep.mubr.bf16.mxu0 0
        %1672 = vmatmul.mubr.bf16.gmra.mrb[0].mxu0 %v1594
        %v1673 = vpop.f32.mrb[0].mxu0
        %v1674 = vadd.f32 0.0, %v1673
        %v1675 = vpop.f32.mrb[0].mxu0
        %v1676 = vadd.f32 0.0, %v1675
        %v1677 = vpop.f32.mrb[0].mxu0
        %v1678 = vadd.f32 0.0, %v1677
        %v1679 = vpop.f32.mrb[0].mxu0
        %v1680 = vadd.f32 0.0, %v1679
        %1681 = vmatprep.mubr.bf16.mxu0 0
        %1682 = vmatmul.mubr.bf16.gmra.mrb[0].mxu0 %v1597
        %v1683 = vpop.f32.mrb[0].mxu0
        %v1684 = vadd.f32 0.0, %v1683
        %v1685 = vpop.f32.mrb[0].mxu0
        %v1686 = vadd.f32 0.0, %v1685
        %v1687 = vpop.f32.mrb[0].mxu0
        %v1688 = vadd.f32 0.0, %v1687
        %v1689 = vpop.f32.mrb[0].mxu0
        %v1690 = vadd.f32 0.0, %v1689
        %1691 = vmatprep.mubr.bf16.mxu0 0
        %1692 = vmatmul.mubr.bf16.gmra.mrb[0].mxu0 %v1600
        %v1693 = vpop.f32.mrb[0].mxu0
        %v1694 = vadd.f32 0.0, %v1693
        %v1695 = vpop.f32.mrb[0].mxu0
        %v1696 = vadd.f32 0.0, %v1695
        %v1697 = vpop.f32.mrb[0].mxu0
        %v1698 = vpop.f32.mrb[0].mxu0
        %1699 = vdwg.mxu0
        %v1700 = vld [vmem:[%s65] sm:$0xff]
        %v1701 = vld [vmem:[%s65 + $0x8] sm:$0xff]
        %v1702 = vld [vmem:[%s65 + $0x10] sm:$0xff]
        %v1703 = vld [vmem:[%s65 + $0x18] sm:$0xff]
        %v1704 = vld [vmem:[%s65 + $0x20] sm:$0xff]
        %v1705 = vld [vmem:[%s65 + $0x28] sm:$0xff]
        %v1706 = vld [vmem:[%s65 + $0x30] sm:$0xff]
        %v1707 = vld [vmem:[%s65 + $0x38] sm:$0xff]
        %v1708 = vld [vmem:[%s65 + $0x40] sm:$0xff]
        %v1709 = vld [vmem:[%s65 + $0x48] sm:$0xff]
        %v1710 = vld [vmem:[%s65 + $0x50] sm:$0xff]
        %v1711 = vld [vmem:[%s65 + $0x58] sm:$0xff]
        %v1712 = vld [vmem:[%s65 + $0x60] sm:$0xff]
        %v1713 = vld [vmem:[%s65 + $0x68] sm:$0xff]
        %v1714 = vld [vmem:[%s65 + $0x70] sm:$0xff]
        %v1715 = vld [vmem:[%s65 + $0x78] sm:$0xff]
        %v1716 = vld [vmem:[%s65 + $0x80] sm:$0xff]
        %v1717 = vld [vmem:[%s65 + $0x88] sm:$0xff]
        %v1718 = vld [vmem:[%s65 + $0x90] sm:$0xff]
        %v1719 = vld [vmem:[%s65 + $0x98] sm:$0xff]
        %v1720 = vld [vmem:[%s65 + $0xa0] sm:$0xff]
        %v1721 = vpack.c.bf16 %v1648, %v1644
        %v1722 = vpack.c.bf16 %v1650, %v1646
        %v1723 = vpack.c.bf16 %v1658, %v1654
        %v1724 = vpack.c.bf16 %v1660, %v1656
        %s1725 = scalar_lea.vmem %s65, 168
        %v1726 = vld [vmem:[%s1725] sm:$0xff]
        %v1727 = vld [vmem:[%s1725 + $0x8] sm:$0xff]
        %v1728 = vld [vmem:[%s1725 + $0x10] sm:$0xff]
        %v1729 = vld [vmem:[%s1725 + $0x18] sm:$0xff]
        %v1730 = vld [vmem:[%s1725 + $0x20] sm:$0xff]
        %v1731 = vld [vmem:[%s1725 + $0x28] sm:$0xff]
        %v1732 = vld [vmem:[%s1725 + $0x30] sm:$0xff]
        %v1733 = vld [vmem:[%s1725 + $0x38] sm:$0xff]
        %v1734 = vld [vmem:[%s1725 + $0x40] sm:$0xff]
        %v1735 = vld [vmem:[%s1725 + $0x48] sm:$0xff]
        %v1736 = vld [vmem:[%s1725 + $0x50] sm:$0xff]
        %v1737 = vld [vmem:[%s1725 + $0x58] sm:$0xff]
        %v1738 = vld [vmem:[%s1725 + $0x60] sm:$0xff]
        %v1739 = vld [vmem:[%s1725 + $0x68] sm:$0xff]
        %v1740 = vld [vmem:[%s1725 + $0x70] sm:$0xff]
        %v1741 = vld [vmem:[%s1725 + $0x78] sm:$0xff]
        %v1742 = vld [vmem:[%s1725 + $0x80] sm:$0xff]
        %v1743 = vld [vmem:[%s1725 + $0x88] sm:$0xff]
        %v1744 = vld [vmem:[%s1725 + $0x90] sm:$0xff]
        %v1745 = vld [vmem:[%s1725 + $0x98] sm:$0xff]
        %v1746 = vld [vmem:[%s1725 + $0xa0] sm:$0xff]
        %v1747 = vpack.c.bf16 %v1664, %v1658
        %v1748 = vpack.c.bf16 %v1666, %v1660
        %v1749 = vpack.c.bf16 %v1674, %v1668
        %v1750 = vpack.c.bf16 %v1676, %v1670
        %vm1755 = vcmask 1045504
        %v1756 = vrot.slane %v1747, 2
        %v1757 = vrot.slane %v1749, 2
        %v1758 = vsel %vm1755, %v1756, %v1757
        %v1759 = vrot.slane %v1748, 2
        %v1760 = vrot.slane %v1750, 2
        %v1761 = vsel %vm1755, %v1759, %v1760
        %v1785 = vunpack.c.l.b16 %v1726
        %v1786 = vunpack.c.h.b16 %v1726
        %v1787 = vunpack.c.l.b16 %v1727
        %v1788 = vunpack.c.h.b16 %v1727
        %v1789 = vunpack.c.l.b16 %v1728
        %v1790 = vunpack.c.h.b16 %v1728
        %v1791 = vunpack.c.l.b16 %v1729
        %v1792 = vunpack.c.h.b16 %v1729
        %v1793 = vunpack.c.l.b16 %v1730
        %v1794 = vunpack.c.h.b16 %v1730
        %v1795 = vunpack.c.l.b16 %v1731
        %v1796 = vunpack.c.h.b16 %v1731
        %v1797 = vunpack.c.l.b16 %v1732
        %v1798 = vunpack.c.h.b16 %v1732
        %v1799 = vunpack.c.l.b16 %v1733
        %v1800 = vunpack.c.h.b16 %v1733
        %v1801 = vunpack.c.l.b16 %v1734
        %v1802 = vunpack.c.h.b16 %v1734
        %v1803 = vunpack.c.l.b16 %v1735
        %v1804 = vunpack.c.h.b16 %v1735
        %v1805 = vunpack.c.l.b16 %v1736
        %v1806 = vunpack.c.h.b16 %v1736
        %v1807 = vunpack.c.l.b16 %v1737
        %v1808 = vunpack.c.h.b16 %v1737
        %v1809 = vunpack.c.l.b16 %v1738
        %v1810 = vunpack.c.h.b16 %v1738
        %v1811 = vunpack.c.l.b16 %v1739
        %v1812 = vunpack.c.h.b16 %v1739
        %v1813 = vunpack.c.l.b16 %v1740
        %v1814 = vunpack.c.h.b16 %v1740
        %v1815 = vunpack.c.l.b16 %v1741
        %v1816 = vunpack.c.h.b16 %v1741
        %v1817 = vunpack.c.l.b16 %v1742
        %v1818 = vunpack.c.h.b16 %v1742
        %v1819 = vunpack.c.l.b16 %v1743
        %v1820 = vunpack.c.h.b16 %v1743
        %v1821 = vunpack.c.l.b16 %v1744
        %v1822 = vunpack.c.h.b16 %v1744
        %v1823 = vunpack.c.l.b16 %v1745
        %v1824 = vunpack.c.h.b16 %v1745
        %v1825 = vunpack.c.l.b16 %v1746
        %v1826 = vunpack.c.h.b16 %v1746
        %v1827 = vpack.c.b16 %v1787, %v1785
        %v1828 = vpack.c.b16 %v1788, %v1786
        %v1829 = vpack.c.b16 %v1791, %v1789
        %v1830 = vpack.c.b16 %v1792, %v1790
        %v1831 = vpack.c.b16 %v1795, %v1793
        %v1832 = vpack.c.b16 %v1796, %v1794
        %v1833 = vpack.c.b16 %v1799, %v1797
        %v1834 = vpack.c.b16 %v1800, %v1798
        %v1835 = vpack.c.b16 %v1803, %v1801
        %v1836 = vpack.c.b16 %v1804, %v1802
        %v1837 = vpack.c.b16 %v1807, %v1805
        %v1838 = vpack.c.b16 %v1808, %v1806
        %v1839 = vpack.c.b16 %v1811, %v1809
        %v1840 = vpack.c.b16 %v1812, %v1810
        %v1841 = vpack.c.b16 %v1815, %v1813
        %v1842 = vpack.c.b16 %v1816, %v1814
        %v1843 = vpack.c.b16 %v1819, %v1817
        %v1844 = vpack.c.b16 %v1820, %v1818
        %v1845 = vpack.c.b16 %v1823, %v1821
        %v1846 = vpack.c.b16 %v1824, %v1822
        %v1847 = vpack.c.b16 %v1825, %v1825
        %v1848 = vpack.c.b16 %v1826, %v1826
        %vm1869 = vcmask 326656
        %v1871 = vsel %vm1869, %v1761, 0
        %v1874 = vsel %vm1869, %v1760, 0
        %v1877 = vsel %vm1602, %v1847, 0
        %v1880 = vsel %vm1602, %v1848, 0
        %1882 = vmatprep.subr.bf16.mxu0 %v1828
        %1883 = vmatpush1.bf16.msra.mxu0 %v1827
        %1884 = vmatprep.subr.bf16.mxu0 %v1830
        %1885 = vmatpush1.bf16.msra.mxu0 %v1829
        %1886 = vmatprep.subr.bf16.mxu0 %v1832
        %1887 = vmatpush1.bf16.msra.mxu0 %v1831
        %1888 = vmatprep.subr.bf16.mxu0 %v1834
        %1889 = vmatpush1.bf16.msra.mxu0 %v1833
        %1890 = vmatprep.subr.bf16.mxu0 %v1836
        %1891 = vmatpush1.bf16.msra.mxu0 %v1835
        %1892 = vmatprep.subr.bf16.mxu0 %v1838
        %1893 = vmatpush1.bf16.msra.mxu0 %v1837
        %1894 = vmatprep.subr.bf16.mxu0 %v1840
        %1895 = vmatpush1.bf16.msra.mxu0 %v1839
        %1896 = vmatprep.subr.bf16.mxu0 %v1842
        %1897 = vmatpush1.bf16.msra.mxu0 %v1841
        %1898 = vmatprep.subr.bf16.mxu0 %v1844
        %1899 = vmatpush1.bf16.msra.mxu0 %v1843
        %1900 = vmatprep.subr.bf16.mxu0 %v1846
        %1901 = vmatpush1.bf16.msra.mxu0 %v1845
        %1902 = vmatprep.subr.bf16.mxu0 %v1880
        %1903 = vmatpush1.bf16.msra.mxu0 %v1877
        %1904 = vmatprep.subr.bf16.mxu0 0
        %1905 = vmatpush1.bf16.msra.mxu0 0
        %1906 = vmatprep.subr.bf16.mxu0 0
        %1907 = vmatpush1.bf16.msra.mxu0 0
        %1908 = vmatprep.subr.bf16.mxu0 0
        %1909 = vmatpush1.bf16.msra.mxu0 0
        %1910 = vmatprep.subr.bf16.mxu0 0
        %1911 = vmatpush1.bf16.msra.mxu0 0
        %1912 = vmatprep.subr.bf16.mxu0 0
        %1913 = vmatpush1.bf16.msra.mxu0 0
        %1914 = vmatprep.mubr.bf16.mxu0 %v1871
        %1915 = vmatmul.mubr.bf16.gmra.mrb[0].mxu0 %v1758
        %v1916 = vpop.f32.mrb[0].mxu0
        %v1917 = vadd.f32 0.0, %v1916
        %v1918 = vpop.f32.mrb[0].mxu0
        %v1919 = vadd.f32 0.0, %v1918
        %v1920 = vpop.f32.mrb[0].mxu0
        %v1921 = vadd.f32 0.0, %v1920
        %v1922 = vpop.f32.mrb[0].mxu0
        %v1923 = vadd.f32 0.0, %v1922
        %1924 = vmatprep.mubr.bf16.mxu0 %v1874
        %1925 = vmatmul.mubr.bf16.gmra.mrb[0].mxu0 %v1757
        %v1926 = vpop.f32.mrb[0].mxu0
        %v1927 = vadd.f32 0.0, %v1926
        %v1928 = vpop.f32.mrb[0].mxu0
        %v1929 = vadd.f32 0.0, %v1928
        %v1930 = vpop.f32.mrb[0].mxu0
        %v1931 = vadd.f32 0.0, %v1930
        %v1932 = vpop.f32.mrb[0].mxu0
        %v1933 = vadd.f32 0.0, %v1932
        %1934 = vdwg.mxu0
        %v1956 = vunpack.c.l.b16 %v1700
        %v1957 = vunpack.c.h.b16 %v1700
        %v1958 = vunpack.c.l.b16 %v1701
        %v1959 = vunpack.c.h.b16 %v1701
        %v1960 = vunpack.c.l.b16 %v1702
        %v1961 = vunpack.c.h.b16 %v1702
        %v1962 = vunpack.c.l.b16 %v1703
        %v1963 = vunpack.c.h.b16 %v1703
        %v1964 = vunpack.c.l.b16 %v1704
        %v1965 = vunpack.c.h.b16 %v1704
        %v1966 = vunpack.c.l.b16 %v1705
        %v1967 = vunpack.c.h.b16 %v1705
        %v1968 = vunpack.c.l.b16 %v1706
        %v1969 = vunpack.c.h.b16 %v1706
        %v1970 = vunpack.c.l.b16 %v1707
        %v1971 = vunpack.c.h.b16 %v1707
        %v1972 = vunpack.c.l.b16 %v1708
        %v1973 = vunpack.c.h.b16 %v1708
        %v1974 = vunpack.c.l.b16 %v1709
        %v1975 = vunpack.c.h.b16 %v1709
        %v1976 = vunpack.c.l.b16 %v1710
        %v1977 = vunpack.c.h.b16 %v1710
        %v1978 = vunpack.c.l.b16 %v1711
        %v1979 = vunpack.c.h.b16 %v1711
        %v1980 = vunpack.c.l.b16 %v1712
        %v1981 = vunpack.c.h.b16 %v1712
        %v1982 = vunpack.c.l.b16 %v1713
        %v1983 = vunpack.c.h.b16 %v1713
        %v1984 = vunpack.c.l.b16 %v1714
        %v1985 = vunpack.c.h.b16 %v1714
        %v1986 = vunpack.c.l.b16 %v1715
        %v1987 = vunpack.c.h.b16 %v1715
        %v1988 = vunpack.c.l.b16 %v1716
        %v1989 = vunpack.c.h.b16 %v1716
        %v1990 = vunpack.c.l.b16 %v1717
        %v1991 = vunpack.c.h.b16 %v1717
        %v1992 = vunpack.c.l.b16 %v1718
        %v1993 = vunpack.c.h.b16 %v1718
        %v1994 = vunpack.c.l.b16 %v1719
        %v1995 = vunpack.c.h.b16 %v1719
        %v1996 = vunpack.c.l.b16 %v1720
        %v1997 = vunpack.c.h.b16 %v1720
        %v1998 = vpack.c.b16 %v1958, %v1956
        %v1999 = vpack.c.b16 %v1959, %v1957
        %v2000 = vpack.c.b16 %v1962, %v1960
        %v2001 = vpack.c.b16 %v1963, %v1961
        %v2002 = vpack.c.b16 %v1966, %v1964
        %v2003 = vpack.c.b16 %v1967, %v1965
        %v2004 = vpack.c.b16 %v1970, %v1968
        %v2005 = vpack.c.b16 %v1971, %v1969
        %v2006 = vpack.c.b16 %v1974, %v1972
        %v2007 = vpack.c.b16 %v1975, %v1973
        %v2008 = vpack.c.b16 %v1978, %v1976
        %v2009 = vpack.c.b16 %v1979, %v1977
        %v2010 = vpack.c.b16 %v1982, %v1980
        %v2011 = vpack.c.b16 %v1983, %v1981
        %v2012 = vpack.c.b16 %v1986, %v1984
        %v2013 = vpack.c.b16 %v1987, %v1985
        %v2014 = vpack.c.b16 %v1990, %v1988
        %v2015 = vpack.c.b16 %v1991, %v1989
        %v2016 = vpack.c.b16 %v1994, %v1992
        %v2017 = vpack.c.b16 %v1995, %v1993
        %v2018 = vpack.c.b16 %v1996, %v1996
        %v2019 = vpack.c.b16 %v1997, %v1997
        %v2041 = vsel %vm1869, %v1722, 0
        %v2044 = vsel %vm1869, %v1724, 0
        %v2047 = vsel %vm1602, %v2018, 0
        %v2050 = vsel %vm1602, %v2019, 0
        %2052 = vmatprep.subr.bf16.mxu0 %v1999
        %2053 = vmatpush1.bf16.msra.mxu0 %v1998
        %2054 = vmatprep.subr.bf16.mxu0 %v2001
        %2055 = vmatpush1.bf16.msra.mxu0 %v2000
        %2056 = vmatprep.subr.bf16.mxu0 %v2003
        %2057 = vmatpush1.bf16.msra.mxu0 %v2002
        %2058 = vmatprep.subr.bf16.mxu0 %v2005
        %2059 = vmatpush1.bf16.msra.mxu0 %v2004
        %2060 = vmatprep.subr.bf16.mxu0 %v2007
        %2061 = vmatpush1.bf16.msra.mxu0 %v2006
        %2062 = vmatprep.subr.bf16.mxu0 %v2009
        %2063 = vmatpush1.bf16.msra.mxu0 %v2008
        %2064 = vmatprep.subr.bf16.mxu0 %v2011
        %2065 = vmatpush1.bf16.msra.mxu0 %v2010
        %2066 = vmatprep.subr.bf16.mxu0 %v2013
        %2067 = vmatpush1.bf16.msra.mxu0 %v2012
        %2068 = vmatprep.subr.bf16.mxu0 %v2015
        %2069 = vmatpush1.bf16.msra.mxu0 %v2014
        %2070 = vmatprep.subr.bf16.mxu0 %v2017
        %2071 = vmatpush1.bf16.msra.mxu0 %v2016
        %2072 = vmatprep.subr.bf16.mxu0 %v2050
        %2073 = vmatpush1.bf16.msra.mxu0 %v2047
        %2074 = vmatprep.subr.bf16.mxu0 0
        %2075 = vmatpush1.bf16.msra.mxu0 0
        %2076 = vmatprep.subr.bf16.mxu0 0
        %2077 = vmatpush1.bf16.msra.mxu0 0
        %2078 = vmatprep.subr.bf16.mxu0 0
        %2079 = vmatpush1.bf16.msra.mxu0 0
        %2080 = vmatprep.subr.bf16.mxu0 0
        %2081 = vmatpush1.bf16.msra.mxu0 0
        %2082 = vmatprep.subr.bf16.mxu0 0
        %2083 = vmatpush1.bf16.msra.mxu0 0
        %2084 = vmatprep.mubr.bf16.mxu0 %v2041
        %2085 = vmatmul.mubr.bf16.gmra.mrb[0].mxu0 %v1721
        %v2086 = vpop.f32.mrb[0].mxu0
        %v2087 = vadd.f32 %v1917, %v2086
        %v2088 = vpop.f32.mrb[0].mxu0
        %v2089 = vadd.f32 %v1919, %v2088
        %v2090 = vpop.f32.mrb[0].mxu0
        %v2091 = vadd.f32 %v1921, %v2090
        %v2092 = vpop.f32.mrb[0].mxu0
        %v2093 = vadd.f32 %v1923, %v2092
        %2094 = vmatprep.mubr.bf16.mxu0 %v2044
        %2095 = vmatmul.mubr.bf16.gmra.mrb[0].mxu0 %v1723
        %v2096 = vpop.f32.mrb[0].mxu0
        %v2097 = vadd.f32 %v1927, %v2096
        %v2098 = vpop.f32.mrb[0].mxu0
        %v2099 = vadd.f32 %v1929, %v2098
        %v2100 = vpop.f32.mrb[0].mxu0
        %v2101 = vadd.f32 %v1931, %v2100
        %v2102 = vpop.f32.mrb[0].mxu0
        %v2103 = vadd.f32 %v1933, %v2102
        %2104 = vdwg.mxu0
        %s2105 = scalar_lea.vmem %s65, 336
        %v2106 = vld [vmem:[%s2105] sm:$0xff]
        %v2107 = vld [vmem:[%s2105 + $0x8] sm:$0xff]
        %v2108 = vld [vmem:[%s2105 + $0x10] sm:$0xff]
        %v2109 = vld [vmem:[%s2105 + $0x18] sm:$0xff]
        %v2110 = vld [vmem:[%s2105 + $0x20] sm:$0xff]
        %v2111 = vld [vmem:[%s2105 + $0x28] sm:$0xff]
        %v2112 = vld [vmem:[%s2105 + $0x30] sm:$0xff]
        %v2113 = vld [vmem:[%s2105 + $0x38] sm:$0xff]
        %v2114 = vld [vmem:[%s2105 + $0x40] sm:$0xff]
        %v2115 = vld [vmem:[%s2105 + $0x48] sm:$0xff]
        %v2116 = vld [vmem:[%s2105 + $0x50] sm:$0xff]
        %v2117 = vld [vmem:[%s2105 + $0x58] sm:$0xff]
        %v2118 = vld [vmem:[%s2105 + $0x60] sm:$0xff]
        %v2119 = vld [vmem:[%s2105 + $0x68] sm:$0xff]
        %v2120 = vld [vmem:[%s2105 + $0x70] sm:$0xff]
        %v2121 = vld [vmem:[%s2105 + $0x78] sm:$0xff]
        %v2122 = vld [vmem:[%s2105 + $0x80] sm:$0xff]
        %v2123 = vld [vmem:[%s2105 + $0x88] sm:$0xff]
        %v2124 = vld [vmem:[%s2105 + $0x90] sm:$0xff]
        %v2125 = vld [vmem:[%s2105 + $0x98] sm:$0xff]
        %v2126 = vld [vmem:[%s2105 + $0xa0] sm:$0xff]
        %v2127 = vpack.c.bf16 %v1684, %v1678
        %v2128 = vpack.c.bf16 %v1686, %v1680
        %v2129 = vpack.c.bf16 %v1694, %v1688
        %v2130 = vpack.c.bf16 %v1696, %v1690
        %v2152 = vunpack.c.l.b16 %v2106
        %v2153 = vunpack.c.h.b16 %v2106
        %v2154 = vunpack.c.l.b16 %v2107
        %v2155 = vunpack.c.h.b16 %v2107
        %v2156 = vunpack.c.l.b16 %v2108
        %v2157 = vunpack.c.h.b16 %v2108
        %v2158 = vunpack.c.l.b16 %v2109
        %v2159 = vunpack.c.h.b16 %v2109
        %v2160 = vunpack.c.l.b16 %v2110
        %v2161 = vunpack.c.h.b16 %v2110
        %v2162 = vunpack.c.l.b16 %v2111
        %v2163 = vunpack.c.h.b16 %v2111
        %v2164 = vunpack.c.l.b16 %v2112
        %v2165 = vunpack.c.h.b16 %v2112
        %v2166 = vunpack.c.l.b16 %v2113
        %v2167 = vunpack.c.h.b16 %v2113
        %v2168 = vunpack.c.l.b16 %v2114
        %v2169 = vunpack.c.h.b16 %v2114
        %v2170 = vunpack.c.l.b16 %v2115
        %v2171 = vunpack.c.h.b16 %v2115
        %v2172 = vunpack.c.l.b16 %v2116
        %v2173 = vunpack.c.h.b16 %v2116
        %v2174 = vunpack.c.l.b16 %v2117
        %v2175 = vunpack.c.h.b16 %v2117
        %v2176 = vunpack.c.l.b16 %v2118
        %v2177 = vunpack.c.h.b16 %v2118
        %v2178 = vunpack.c.l.b16 %v2119
        %v2179 = vunpack.c.h.b16 %v2119
        %v2180 = vunpack.c.l.b16 %v2120
        %v2181 = vunpack.c.h.b16 %v2120
        %v2182 = vunpack.c.l.b16 %v2121
        %v2183 = vunpack.c.h.b16 %v2121
        %v2184 = vunpack.c.l.b16 %v2122
        %v2185 = vunpack.c.h.b16 %v2122
        %v2186 = vunpack.c.l.b16 %v2123
        %v2187 = vunpack.c.h.b16 %v2123
        %v2188 = vunpack.c.l.b16 %v2124
        %v2189 = vunpack.c.h.b16 %v2124
        %v2190 = vunpack.c.l.b16 %v2125
        %v2191 = vunpack.c.h.b16 %v2125
        %v2192 = vunpack.c.l.b16 %v2126
        %v2193 = vunpack.c.h.b16 %v2126
        %v2194 = vpack.c.b16 %v2154, %v2152
        %v2195 = vpack.c.b16 %v2155, %v2153
        %v2196 = vpack.c.b16 %v2158, %v2156
        %v2197 = vpack.c.b16 %v2159, %v2157
        %v2198 = vpack.c.b16 %v2162, %v2160
        %v2199 = vpack.c.b16 %v2163, %v2161
        %v2200 = vpack.c.b16 %v2166, %v2164
        %v2201 = vpack.c.b16 %v2167, %v2165
        %v2202 = vpack.c.b16 %v2170, %v2168
        %v2203 = vpack.c.b16 %v2171, %v2169
        %v2204 = vpack.c.b16 %v2174, %v2172
        %v2205 = vpack.c.b16 %v2175, %v2173
        %v2206 = vpack.c.b16 %v2178, %v2176
        %v2207 = vpack.c.b16 %v2179, %v2177
        %v2208 = vpack.c.b16 %v2182, %v2180
        %v2209 = vpack.c.b16 %v2183, %v2181
        %v2210 = vpack.c.b16 %v2186, %v2184
        %v2211 = vpack.c.b16 %v2187, %v2185
        %v2212 = vpack.c.b16 %v2190, %v2188
        %v2213 = vpack.c.b16 %v2191, %v2189
        %v2214 = vpack.c.b16 %v2192, %v2192
        %v2215 = vpack.c.b16 %v2193, %v2193
        %v2237 = vsel %vm1869, %v2128, 0
        %v2240 = vsel %vm1869, %v2130, 0
        %v2243 = vsel %vm1602, %v2214, 0
        %v2246 = vsel %vm1602, %v2215, 0
        %2248 = vmatprep.subr.bf16.mxu0 %v2195
        %2249 = vmatpush1.bf16.msra.mxu0 %v2194
        %2250 = vmatprep.subr.bf16.mxu0 %v2197
        %2251 = vmatpush1.bf16.msra.mxu0 %v2196
        %2252 = vmatprep.subr.bf16.mxu0 %v2199
        %2253 = vmatpush1.bf16.msra.mxu0 %v2198
        %2254 = vmatprep.subr.bf16.mxu0 %v2201
        %2255 = vmatpush1.bf16.msra.mxu0 %v2200
        %2256 = vmatprep.subr.bf16.mxu0 %v2203
        %2257 = vmatpush1.bf16.msra.mxu0 %v2202
        %2258 = vmatprep.subr.bf16.mxu0 %v2205
        %2259 = vmatpush1.bf16.msra.mxu0 %v2204
        %2260 = vmatprep.subr.bf16.mxu0 %v2207
        %2261 = vmatpush1.bf16.msra.mxu0 %v2206
        %2262 = vmatprep.subr.bf16.mxu0 %v2209
        %2263 = vmatpush1.bf16.msra.mxu0 %v2208
        %2264 = vmatprep.subr.bf16.mxu0 %v2211
        %2265 = vmatpush1.bf16.msra.mxu0 %v2210
        %2266 = vmatprep.subr.bf16.mxu0 %v2213
        %2267 = vmatpush1.bf16.msra.mxu0 %v2212
        %2268 = vmatprep.subr.bf16.mxu0 %v2246
        %2269 = vmatpush1.bf16.msra.mxu0 %v2243
        %2270 = vmatprep.subr.bf16.mxu0 0
        %2271 = vmatpush1.bf16.msra.mxu0 0
        %2272 = vmatprep.subr.bf16.mxu0 0
        %2273 = vmatpush1.bf16.msra.mxu0 0
        %2274 = vmatprep.subr.bf16.mxu0 0
        %2275 = vmatpush1.bf16.msra.mxu0 0
        %2276 = vmatprep.subr.bf16.mxu0 0
        %2277 = vmatpush1.bf16.msra.mxu0 0
        %2278 = vmatprep.subr.bf16.mxu0 0
        %2279 = vmatpush1.bf16.msra.mxu0 0
        %2280 = vmatprep.mubr.bf16.mxu0 %v2237
        %2281 = vmatmul.mubr.bf16.gmra.mrb[0].mxu0 %v2127
        %v2282 = vpop.f32.mrb[0].mxu0
        %v2283 = vadd.f32 0.0, %v2282
        %v2284 = vpop.f32.mrb[0].mxu0
        %v2285 = vadd.f32 0.0, %v2284
        %v2286 = vpop.f32.mrb[0].mxu0
        %v2287 = vadd.f32 0.0, %v2286
        %v2288 = vpop.f32.mrb[0].mxu0
        %v2289 = vadd.f32 0.0, %v2288
        %2290 = vmatprep.mubr.bf16.mxu0 %v2240
        %2291 = vmatmul.mubr.bf16.gmra.mrb[0].mxu0 %v2129
        %v2292 = vpop.f32.mrb[0].mxu0
        %v2293 = vadd.f32 0.0, %v2292
        %v2294 = vpop.f32.mrb[0].mxu0
        %v2295 = vadd.f32 0.0, %v2294
        %v2296 = vpop.f32.mrb[0].mxu0
        %v2297 = vadd.f32 0.0, %v2296
        %v2298 = vpop.f32.mrb[0].mxu0
        %v2299 = vadd.f32 0.0, %v2298
        %2300 = vdwg.mxu0
        %v2301 = vadd.f32 %v2087, %v2283
        %v2302 = vadd.f32 %v2089, %v2285
        %v2303 = vadd.f32 %v2091, %v2287
        %v2304 = vadd.f32 %v2093, %v2289
        %v2305 = vadd.f32 %v2097, %v2293
        %v2306 = vadd.f32 %v2099, %v2295
        %v2307 = vadd.f32 %v2101, %v2297
        %v2308 = vadd.f32 %v2103, %v2299
        %v2309 = vld [vmem:[#allocation31] sm:$0x3]
        %v2311 = vlaneseq
        %v2312 = vshrl.u32 %v2311, 7
        %v2313 = vsub.s32 0, %v2312
        %v2314 = vrot.slane %v2309, %v2313
        %v2315 = vlaneseq
        %v2316 = vshrl.u32 %v2315, 7
        %v2317 = vsub.s32 1, %v2316
        %v2318 = vrot.slane %v2309, %v2317
        %v2321 = vadd.f32 %v2301, %v2314
        %v2322 = vadd.f32 %v2302, %v2318
        %v2323 = vadd.f32 %v2303, %v2314
        %v2324 = vadd.f32 %v2304, %v2318
        %v2325 = vadd.f32 %v2305, %v2314
        %v2326 = vadd.f32 %v2306, %v2318
        %v2327 = vadd.f32 %v2307, %v2314
        %v2328 = vadd.f32 %v2308, %v2318
        %v2329 = vadd.f32 %v2321, 3.0
        %v2330 = vadd.f32 %v2322, 3.0
        %v2331 = vadd.f32 %v2323, 3.0
        %v2332 = vadd.f32 %v2324, 3.0
        %v2333 = vadd.f32 %v2325, 3.0
        %v2334 = vadd.f32 %v2326, 3.0
        %v2335 = vadd.f32 %v2327, 3.0
        %v2336 = vadd.f32 %v2328, 3.0
        %v2337 = vmax.f32 %v2329, 0.0
        %v2338 = vmax.f32 %v2330, 0.0
        %v2339 = vmax.f32 %v2331, 0.0
        %v2340 = vmax.f32 %v2332, 0.0
        %v2341 = vmax.f32 %v2333, 0.0
        %v2342 = vmax.f32 %v2334, 0.0
        %v2343 = vmax.f32 %v2335, 0.0
        %v2344 = vmax.f32 %v2336, 0.0
        %v2345 = vmin.f32 %v2337, 6.0
        %v2346 = vmin.f32 %v2338, 6.0
        %v2347 = vmin.f32 %v2339, 6.0
        %v2348 = vmin.f32 %v2340, 6.0
        %v2349 = vmin.f32 %v2341, 6.0
        %v2350 = vmin.f32 %v2342, 6.0
        %v2351 = vmin.f32 %v2343, 6.0
        %v2352 = vmin.f32 %v2344, 6.0
        %v2353 = vmul.f32 %v2345, 0.16666667
        %v2354 = vmul.f32 %v2346, 0.16666667
        %v2355 = vmul.f32 %v2347, 0.16666667
        %v2356 = vmul.f32 %v2348, 0.16666667
        %v2357 = vmul.f32 %v2349, 0.16666667
        %v2358 = vmul.f32 %v2350, 0.16666667
        %v2359 = vmul.f32 %v2351, 0.16666667
        %v2360 = vmul.f32 %v2352, 0.16666667
        %v2361 = vmul.f32 %v2321, %v2353
        %v2362 = vmul.f32 %v2322, %v2354
        %v2363 = vmul.f32 %v2323, %v2355
        %v2364 = vmul.f32 %v2324, %v2356
        %v2365 = vmul.f32 %v2325, %v2357
        %v2366 = vmul.f32 %v2326, %v2358
        %v2367 = vmul.f32 %v2327, %v2359
        %v2368 = vmul.f32 %v2328, %v2360
        %v2369 = vld [vmem:[%s5] sm:$0xf]
        %v2370 = vld [vmem:[%s5 + $0x4] sm:$0xf]
        %v2371 = vld [vmem:[%s5 + $0x8] sm:$0xf]
        %v2372 = vld [vmem:[%s5 + $0xc] sm:$0xf]
        %v2373 = vld [vmem:[%s5 + $0x10] sm:$0xf]
        %v2374 = vld [vmem:[%s5 + $0x14] sm:$0x1]
        %v2375 = vpack.c.bf16 %v2363, %v2361
        %v2376 = vpack.c.bf16 %v2364, %v2362
        %v2377 = vpack.c.bf16 %v2367, %v2365
        %v2378 = vpack.c.bf16 %v2368, %v2366
        %v2385 = vunpack.c.l.b16 %v2369
        %v2386 = vunpack.c.l.b16 %v2370
        %v2387 = vunpack.c.l.b16 %v2371
        %v2388 = vunpack.c.l.b16 %v2372
        %v2389 = vunpack.c.l.b16 %v2373
        %v2390 = vunpack.c.l.b16 %v2374
        %v2391 = vpack.c.b16 %v2386, %v2385
        %v2392 = vpack.c.b16 %v2388, %v2387
        %v2393 = vpack.c.b16 %v2390, %v2389
        %vm2394 = vcmask 228352
        %v2396 = vsel %vm2394, %v2391, 0
        %v2399 = vsel %vm2394, %v2392, 0
        %v2402 = vsel %vm2394, %v2393, 0
        %vm2404 = vcmask 1045504
        %v2406 = vsel %vm2404, %v2377, 0
        %v2409 = vsel %vm2404, %v2378, 0
        %2411 = vmatprep.subr.bf16.mxu0 %v2376
        %2412 = vmatpush1.bf16.msra.mxu0 %v2375
        %2413 = vmatprep.subr.bf16.mxu0 %v2409
        %2414 = vmatpush1.bf16.msra.mxu0 %v2406
        %2415 = vmatprep.subr.bf16.mxu0 0
        %2416 = vmatpush1.bf16.msra.mxu0 0
        %2417 = vmatprep.subr.bf16.mxu0 0
        %2418 = vmatpush1.bf16.msra.mxu0 0
        %2419 = vmatprep.subr.bf16.mxu0 0
        %2420 = vmatpush1.bf16.msra.mxu0 0
        %2421 = vmatprep.subr.bf16.mxu0 0
        %2422 = vmatpush1.bf16.msra.mxu0 0
        %2423 = vmatprep.subr.bf16.mxu0 0
        %2424 = vmatpush1.bf16.msra.mxu0 0
        %2425 = vmatprep.subr.bf16.mxu0 0
        %2426 = vmatpush1.bf16.msra.mxu0 0
        %2427 = vmatprep.subr.bf16.mxu0 0
        %2428 = vmatpush1.bf16.msra.mxu0 0
        %2429 = vmatprep.subr.bf16.mxu0 0
        %2430 = vmatpush1.bf16.msra.mxu0 0
        %2431 = vmatprep.subr.bf16.mxu0 0
        %2432 = vmatpush1.bf16.msra.mxu0 0
        %2433 = vmatprep.subr.bf16.mxu0 0
        %2434 = vmatpush1.bf16.msra.mxu0 0
        %2435 = vmatprep.subr.bf16.mxu0 0
        %2436 = vmatpush1.bf16.msra.mxu0 0
        %2437 = vmatprep.subr.bf16.mxu0 0
        %2438 = vmatpush1.bf16.msra.mxu0 0
        %2439 = vmatprep.subr.bf16.mxu0 0
        %2440 = vmatpush1.bf16.msra.mxu0 0
        %2441 = vmatprep.subr.bf16.mxu0 0
        %2442 = vmatpush1.bf16.msra.mxu0 0
        %2443 = vmatprep.mubr.bf16.mxu0 0
        %2444 = vmatmul.mubr.bf16.gmra.mrb[0].mxu0 %v2396
        %v2445 = vpop.f32.mrb[0].mxu0
        %v2446 = vadd.f32 0.0, %v2445
        %v2447 = vpop.f32.mrb[0].mxu0
        %v2448 = vadd.f32 0.0, %v2447
        %v2449 = vpop.f32.mrb[0].mxu0
        %v2450 = vadd.f32 0.0, %v2449
        %v2451 = vpop.f32.mrb[0].mxu0
        %v2452 = vadd.f32 0.0, %v2451
        %2453 = vmatprep.mubr.bf16.mxu0 0
        %2454 = vmatmul.mubr.bf16.gmra.mrb[0].mxu0 %v2399
        %v2455 = vpop.f32.mrb[0].mxu0
        %v2456 = vadd.f32 0.0, %v2455
        %v2457 = vpop.f32.mrb[0].mxu0
        %v2458 = vadd.f32 0.0, %v2457
        %v2459 = vpop.f32.mrb[0].mxu0
        %v2460 = vadd.f32 0.0, %v2459
        %v2461 = vpop.f32.mrb[0].mxu0
        %v2462 = vadd.f32 0.0, %v2461
        %2463 = vmatprep.mubr.bf16.mxu0 0
        %2464 = vmatmul.mubr.bf16.gmra.mrb[0].mxu0 %v2402
        %v2465 = vpop.f32.mrb[0].mxu0
        %v2466 = vadd.f32 0.0, %v2465
        %v2467 = vpop.f32.mrb[0].mxu0
        %v2468 = vadd.f32 0.0, %v2467
        %v2469 = vpop.f32.mrb[0].mxu0
        %v2470 = vadd.f32 0.0, %v2469
        %v2471 = vpop.f32.mrb[0].mxu0
        %v2472 = vadd.f32 0.0, %v2471
        %2473 = vdwg.mxu0
        %v2474 = vld [vmem:[%s3] sm:$0xf]
        %v2475 = vld [vmem:[%s3 + $0x4] sm:$0xf]
        %v2476 = vld [vmem:[%s3 + $0x8] sm:$0xf]
        %v2477 = vld [vmem:[%s3 + $0xc] sm:$0xf]
        %v2478 = vld [vmem:[%s3 + $0x10] sm:$0xf]
        %v2479 = vld [vmem:[%s3 + $0x14] sm:$0xf]
        %v2480 = vld [vmem:[%s3 + $0x18] sm:$0xf]
        %v2481 = vld [vmem:[%s3 + $0x1c] sm:$0xf]
        %v2482 = vld [vmem:[%s3 + $0x20] sm:$0xf]
        %v2483 = vld [vmem:[%s3 + $0x24] sm:$0xf]
        %v2484 = vld [vmem:[%s3 + $0x28] sm:$0xf]
        %v2485 = vld [vmem:[%s3 + $0x2c] sm:$0xf]
        %v2486 = vld [vmem:[%s3 + $0x30] sm:$0xf]
        %v2487 = vld [vmem:[%s3 + $0x34] sm:$0xf]
        %v2488 = vld [vmem:[%s3 + $0x38] sm:$0xf]
        %v2489 = vld [vmem:[%s3 + $0x3c] sm:$0xf]
        %v2490 = vld [vmem:[%s3 + $0x40] sm:$0xf]
        %v2491 = vld [vmem:[%s3 + $0x44] sm:$0xf]
        %v2492 = vld [vmem:[%s3 + $0x48] sm:$0xf]
        %v2493 = vld [vmem:[%s3 + $0x4c] sm:$0xf]
        %v2494 = vld [vmem:[%s3 + $0x50] sm:$0xf]
        %v2495 = vld [vmem:[%s3 + $0x54] sm:$0xf]
        %v2496 = vld [vmem:[%s3 + $0x58] sm:$0xf]
        %v2497 = vld [vmem:[%s3 + $0x5c] sm:$0xf]
        %v2498 = vld [vmem:[%s3 + $0x60] sm:$0xf]
        %v2499 = vld [vmem:[%s3 + $0x64] sm:$0xf]
        %v2500 = vld [vmem:[%s3 + $0x68] sm:$0xf]
        %v2501 = vld [vmem:[%s3 + $0x6c] sm:$0xf]
        %v2502 = vpack.c.bf16 %v2450, %v2446
        %v2503 = vpack.c.bf16 %v2452, %v2448
        %s2504 = scalar_lea.vmem %s3, 112
        %v2505 = vld [vmem:[%s2504] sm:$0xf]
        %v2506 = vld [vmem:[%s2504 + $0x4] sm:$0xf]
        %v2507 = vld [vmem:[%s2504 + $0x8] sm:$0xf]
        %v2508 = vld [vmem:[%s2504 + $0xc] sm:$0xf]
        %v2509 = vld [vmem:[%s2504 + $0x10] sm:$0xf]
        %v2510 = vld [vmem:[%s2504 + $0x14] sm:$0xf]
        %v2511 = vld [vmem:[%s2504 + $0x18] sm:$0xf]
        %v2512 = vld [vmem:[%s2504 + $0x1c] sm:$0xf]
        %v2513 = vld [vmem:[%s2504 + $0x20] sm:$0xf]
        %v2514 = vld [vmem:[%s2504 + $0x24] sm:$0xf]
        %v2515 = vld [vmem:[%s2504 + $0x28] sm:$0xf]
        %v2516 = vld [vmem:[%s2504 + $0x2c] sm:$0xf]
        %v2517 = vld [vmem:[%s2504 + $0x30] sm:$0xf]
        %v2518 = vld [vmem:[%s2504 + $0x34] sm:$0xf]
        %v2519 = vld [vmem:[%s2504 + $0x38] sm:$0xf]
        %v2520 = vld [vmem:[%s2504 + $0x3c] sm:$0xf]
        %v2521 = vld [vmem:[%s2504 + $0x40] sm:$0xf]
        %v2522 = vld [vmem:[%s2504 + $0x44] sm:$0xf]
        %v2523 = vld [vmem:[%s2504 + $0x48] sm:$0xf]
        %v2524 = vld [vmem:[%s2504 + $0x4c] sm:$0xf]
        %v2525 = vld [vmem:[%s2504 + $0x50] sm:$0xf]
        %v2526 = vld [vmem:[%s2504 + $0x54] sm:$0xf]
        %v2527 = vld [vmem:[%s2504 + $0x58] sm:$0xf]
        %v2528 = vld [vmem:[%s2504 + $0x5c] sm:$0xf]
        %v2529 = vld [vmem:[%s2504 + $0x60] sm:$0xf]
        %v2530 = vld [vmem:[%s2504 + $0x64] sm:$0xf]
        %v2531 = vld [vmem:[%s2504 + $0x68] sm:$0xf]
        %v2532 = vld [vmem:[%s2504 + $0x6c] sm:$0xf]
        %v2533 = vpack.c.bf16 %v2456, %v2450
        %v2534 = vpack.c.bf16 %v2458, %v2452
        %v2535 = vpack.c.bf16 %v2460, %v2460
        %v2536 = vpack.c.bf16 %v2462, %v2462
        %vm2541 = vcmask 1044480
        %v2542 = vrot.slane %v2533, 3
        %v2543 = vrot.slane %v2535, 3
        %v2544 = vsel %vm2541, %v2542, %v2543
        %v2545 = vrot.slane %v2534, 3
        %v2546 = vrot.slane %v2536, 3
        %v2547 = vsel %vm2541, %v2545, %v2546
        %v2577 = vunpack.c.l.b16 %v2505
        %v2578 = vunpack.c.l.b16 %v2506
        %v2579 = vunpack.c.l.b16 %v2507
        %v2580 = vunpack.c.l.b16 %v2508
        %v2581 = vunpack.c.l.b16 %v2509
        %v2582 = vunpack.c.l.b16 %v2510
        %v2583 = vunpack.c.l.b16 %v2511
        %v2584 = vunpack.c.l.b16 %v2512
        %v2585 = vunpack.c.l.b16 %v2513
        %v2586 = vunpack.c.l.b16 %v2514
        %v2587 = vunpack.c.l.b16 %v2515
        %v2588 = vunpack.c.l.b16 %v2516
        %v2589 = vunpack.c.l.b16 %v2517
        %v2590 = vunpack.c.l.b16 %v2518
        %v2591 = vunpack.c.l.b16 %v2519
        %v2592 = vunpack.c.l.b16 %v2520
        %v2593 = vunpack.c.l.b16 %v2521
        %v2594 = vunpack.c.l.b16 %v2522
        %v2595 = vunpack.c.l.b16 %v2523
        %v2596 = vunpack.c.l.b16 %v2524
        %v2597 = vunpack.c.l.b16 %v2525
        %v2598 = vunpack.c.l.b16 %v2526
        %v2599 = vunpack.c.l.b16 %v2527
        %v2600 = vunpack.c.l.b16 %v2528
        %v2601 = vunpack.c.l.b16 %v2529
        %v2602 = vunpack.c.l.b16 %v2530
        %v2603 = vunpack.c.l.b16 %v2531
        %v2604 = vunpack.c.l.b16 %v2532
        %v2605 = vpack.c.b16 %v2578, %v2577
        %v2606 = vpack.c.b16 %v2580, %v2579
        %v2607 = vpack.c.b16 %v2582, %v2581
        %v2608 = vpack.c.b16 %v2584, %v2583
        %v2609 = vpack.c.b16 %v2586, %v2585
        %v2610 = vpack.c.b16 %v2588, %v2587
        %v2611 = vpack.c.b16 %v2590, %v2589
        %v2612 = vpack.c.b16 %v2592, %v2591
        %v2613 = vpack.c.b16 %v2594, %v2593
        %v2614 = vpack.c.b16 %v2596, %v2595
        %v2615 = vpack.c.b16 %v2598, %v2597
        %v2616 = vpack.c.b16 %v2600, %v2599
        %v2617 = vpack.c.b16 %v2602, %v2601
        %v2618 = vpack.c.b16 %v2604, %v2603
        %vm2633 = vcmask 785408
        %v2635 = vsel %vm2633, %v2547, 0
        %2637 = vmatprep.subr.bf16.mxu0 0
        %2638 = vmatpush1.bf16.msra.mxu0 %v2605
        %2639 = vmatprep.subr.bf16.mxu0 0
        %2640 = vmatpush1.bf16.msra.mxu0 %v2606
        %2641 = vmatprep.subr.bf16.mxu0 0
        %2642 = vmatpush1.bf16.msra.mxu0 %v2607
        %2643 = vmatprep.subr.bf16.mxu0 0
        %2644 = vmatpush1.bf16.msra.mxu0 %v2608
        %2645 = vmatprep.subr.bf16.mxu0 0
        %2646 = vmatpush1.bf16.msra.mxu0 %v2609
        %2647 = vmatprep.subr.bf16.mxu0 0
        %2648 = vmatpush1.bf16.msra.mxu0 %v2610
        %2649 = vmatprep.subr.bf16.mxu0 0
        %2650 = vmatpush1.bf16.msra.mxu0 %v2611
        %2651 = vmatprep.subr.bf16.mxu0 0
        %2652 = vmatpush1.bf16.msra.mxu0 %v2612
        %2653 = vmatprep.subr.bf16.mxu0 0
        %2654 = vmatpush1.bf16.msra.mxu0 %v2613
        %2655 = vmatprep.subr.bf16.mxu0 0
        %2656 = vmatpush1.bf16.msra.mxu0 %v2614
        %2657 = vmatprep.subr.bf16.mxu0 0
        %2658 = vmatpush1.bf16.msra.mxu0 %v2615
        %2659 = vmatprep.subr.bf16.mxu0 0
        %2660 = vmatpush1.bf16.msra.mxu0 %v2616
        %2661 = vmatprep.subr.bf16.mxu0 0
        %2662 = vmatpush1.bf16.msra.mxu0 %v2617
        %2663 = vmatprep.subr.bf16.mxu0 0
        %2664 = vmatpush1.bf16.msra.mxu0 %v2618
        %2665 = vmatprep.subr.bf16.mxu0 0
        %2666 = vmatpush1.bf16.msra.mxu0 0
        %2667 = vmatprep.subr.bf16.mxu0 0
        %2668 = vmatpush1.bf16.msra.mxu0 0
        %2669 = vmatprep.mubr.bf16.mxu0 %v2635
        %2670 = vmatmul.mubr.bf16.gmra.mrb[0].mxu0 %v2544
        %v2671 = vpop.f32.mrb[0].mxu0
        %v2672 = vadd.f32 0.0, %v2671
        %v2673 = vpop.f32.mrb[0].mxu0
        %v2674 = vpop.f32.mrb[0].mxu0
        %v2675 = vadd.f32 0.0, %v2674
        %v2676 = vpop.f32.mrb[0].mxu0
        %2677 = vdwg.mxu0
        %v2706 = vunpack.c.l.b16 %v2474
        %v2707 = vunpack.c.l.b16 %v2475
        %v2708 = vunpack.c.l.b16 %v2476
        %v2709 = vunpack.c.l.b16 %v2477
        %v2710 = vunpack.c.l.b16 %v2478
        %v2711 = vunpack.c.l.b16 %v2479
        %v2712 = vunpack.c.l.b16 %v2480
        %v2713 = vunpack.c.l.b16 %v2481
        %v2714 = vunpack.c.l.b16 %v2482
        %v2715 = vunpack.c.l.b16 %v2483
        %v2716 = vunpack.c.l.b16 %v2484
        %v2717 = vunpack.c.l.b16 %v2485
        %v2718 = vunpack.c.l.b16 %v2486
        %v2719 = vunpack.c.l.b16 %v2487
        %v2720 = vunpack.c.l.b16 %v2488
        %v2721 = vunpack.c.l.b16 %v2489
        %v2722 = vunpack.c.l.b16 %v2490
        %v2723 = vunpack.c.l.b16 %v2491
        %v2724 = vunpack.c.l.b16 %v2492
        %v2725 = vunpack.c.l.b16 %v2493
        %v2726 = vunpack.c.l.b16 %v2494
        %v2727 = vunpack.c.l.b16 %v2495
        %v2728 = vunpack.c.l.b16 %v2496
        %v2729 = vunpack.c.l.b16 %v2497
        %v2730 = vunpack.c.l.b16 %v2498
        %v2731 = vunpack.c.l.b16 %v2499
        %v2732 = vunpack.c.l.b16 %v2500
        %v2733 = vunpack.c.l.b16 %v2501
        %v2734 = vpack.c.b16 %v2707, %v2706
        %v2735 = vpack.c.b16 %v2709, %v2708
        %v2736 = vpack.c.b16 %v2711, %v2710
        %v2737 = vpack.c.b16 %v2713, %v2712
        %v2738 = vpack.c.b16 %v2715, %v2714
        %v2739 = vpack.c.b16 %v2717, %v2716
        %v2740 = vpack.c.b16 %v2719, %v2718
        %v2741 = vpack.c.b16 %v2721, %v2720
        %v2742 = vpack.c.b16 %v2723, %v2722
        %v2743 = vpack.c.b16 %v2725, %v2724
        %v2744 = vpack.c.b16 %v2727, %v2726
        %v2745 = vpack.c.b16 %v2729, %v2728
        %v2746 = vpack.c.b16 %v2731, %v2730
        %v2747 = vpack.c.b16 %v2733, %v2732
        %v2763 = vsel %vm2633, %v2503, 0
        %2765 = vmatprep.subr.bf16.mxu0 0
        %2766 = vmatpush1.bf16.msra.mxu0 %v2734
        %2767 = vmatprep.subr.bf16.mxu0 0
        %2768 = vmatpush1.bf16.msra.mxu0 %v2735
        %2769 = vmatprep.subr.bf16.mxu0 0
        %2770 = vmatpush1.bf16.msra.mxu0 %v2736
        %2771 = vmatprep.subr.bf16.mxu0 0
        %2772 = vmatpush1.bf16.msra.mxu0 %v2737
        %2773 = vmatprep.subr.bf16.mxu0 0
        %2774 = vmatpush1.bf16.msra.mxu0 %v2738
        %2775 = vmatprep.subr.bf16.mxu0 0
        %2776 = vmatpush1.bf16.msra.mxu0 %v2739
        %2777 = vmatprep.subr.bf16.mxu0 0
        %2778 = vmatpush1.bf16.msra.mxu0 %v2740
        %2779 = vmatprep.subr.bf16.mxu0 0
        %2780 = vmatpush1.bf16.msra.mxu0 %v2741
        %2781 = vmatprep.subr.bf16.mxu0 0
        %2782 = vmatpush1.bf16.msra.mxu0 %v2742
        %2783 = vmatprep.subr.bf16.mxu0 0
        %2784 = vmatpush1.bf16.msra.mxu0 %v2743
        %2785 = vmatprep.subr.bf16.mxu0 0
        %2786 = vmatpush1.bf16.msra.mxu0 %v2744
        %2787 = vmatprep.subr.bf16.mxu0 0
        %2788 = vmatpush1.bf16.msra.mxu0 %v2745
        %2789 = vmatprep.subr.bf16.mxu0 0
        %2790 = vmatpush1.bf16.msra.mxu0 %v2746
        %2791 = vmatprep.subr.bf16.mxu0 0
        %2792 = vmatpush1.bf16.msra.mxu0 %v2747
        %2793 = vmatprep.subr.bf16.mxu0 0
        %2794 = vmatpush1.bf16.msra.mxu0 0
        %2795 = vmatprep.subr.bf16.mxu0 0
        %2796 = vmatpush1.bf16.msra.mxu0 0
        %2797 = vmatprep.mubr.bf16.mxu0 %v2763
        %2798 = vmatmul.mubr.bf16.gmra.mrb[0].mxu0 %v2502
        %v2799 = vpop.f32.mrb[0].mxu0
        %v2800 = vadd.f32 %v2672, %v2799
        %v2801 = vpop.f32.mrb[0].mxu0
        %v2802 = vpop.f32.mrb[0].mxu0
        %v2803 = vadd.f32 %v2675, %v2802
        %v2804 = vpop.f32.mrb[0].mxu0
        %2805 = vdwg.mxu0
        %s2806 = scalar_lea.vmem %s3, 224
        %v2807 = vld [vmem:[%s2806] sm:$0xf]
        %v2808 = vld [vmem:[%s2806 + $0x4] sm:$0xf]
        %v2809 = vld [vmem:[%s2806 + $0x8] sm:$0xf]
        %v2810 = vld [vmem:[%s2806 + $0xc] sm:$0xf]
        %v2811 = vld [vmem:[%s2806 + $0x10] sm:$0xf]
        %v2812 = vld [vmem:[%s2806 + $0x14] sm:$0xf]
        %v2813 = vld [vmem:[%s2806 + $0x18] sm:$0xf]
        %v2814 = vld [vmem:[%s2806 + $0x1c] sm:$0xf]
        %v2815 = vld [vmem:[%s2806 + $0x20] sm:$0xf]
        %v2816 = vld [vmem:[%s2806 + $0x24] sm:$0xf]
        %v2817 = vld [vmem:[%s2806 + $0x28] sm:$0xf]
        %v2818 = vld [vmem:[%s2806 + $0x2c] sm:$0xf]
        %v2819 = vld [vmem:[%s2806 + $0x30] sm:$0xf]
        %v2820 = vld [vmem:[%s2806 + $0x34] sm:$0xf]
        %v2821 = vld [vmem:[%s2806 + $0x38] sm:$0xf]
        %v2822 = vld [vmem:[%s2806 + $0x3c] sm:$0xf]
        %v2823 = vld [vmem:[%s2806 + $0x40] sm:$0xf]
        %v2824 = vld [vmem:[%s2806 + $0x44] sm:$0xf]
        %v2825 = vld [vmem:[%s2806 + $0x48] sm:$0xf]
        %v2826 = vld [vmem:[%s2806 + $0x4c] sm:$0xf]
        %v2827 = vld [vmem:[%s2806 + $0x50] sm:$0xf]
        %v2828 = vld [vmem:[%s2806 + $0x54] sm:$0xf]
        %v2829 = vld [vmem:[%s2806 + $0x58] sm:$0xf]
        %v2830 = vld [vmem:[%s2806 + $0x5c] sm:$0xf]
        %v2831 = vld [vmem:[%s2806 + $0x60] sm:$0xf]
        %v2832 = vld [vmem:[%s2806 + $0x64] sm:$0xf]
        %v2833 = vld [vmem:[%s2806 + $0x68] sm:$0xf]
        %v2834 = vld [vmem:[%s2806 + $0x6c] sm:$0xf]
        %v2835 = vpack.c.bf16 %v2466, %v2460
        %v2836 = vpack.c.bf16 %v2468, %v2462
        %v2837 = vpack.c.bf16 %v2470, %v2470
        %v2838 = vpack.c.bf16 %v2472, %v2472
        %v2843 = vrot.slane %v2835, 2
        %v2844 = vrot.slane %v2837, 2
        %v2845 = vsel %vm1755, %v2843, %v2844
        %v2846 = vrot.slane %v2836, 2
        %v2847 = vrot.slane %v2838, 2
        %v2848 = vsel %vm1755, %v2846, %v2847
        %v2878 = vunpack.c.l.b16 %v2807
        %v2879 = vunpack.c.l.b16 %v2808
        %v2880 = vunpack.c.l.b16 %v2809
        %v2881 = vunpack.c.l.b16 %v2810
        %v2882 = vunpack.c.l.b16 %v2811
        %v2883 = vunpack.c.l.b16 %v2812
        %v2884 = vunpack.c.l.b16 %v2813
        %v2885 = vunpack.c.l.b16 %v2814
        %v2886 = vunpack.c.l.b16 %v2815
        %v2887 = vunpack.c.l.b16 %v2816
        %v2888 = vunpack.c.l.b16 %v2817
        %v2889 = vunpack.c.l.b16 %v2818
        %v2890 = vunpack.c.l.b16 %v2819
        %v2891 = vunpack.c.l.b16 %v2820
        %v2892 = vunpack.c.l.b16 %v2821
        %v2893 = vunpack.c.l.b16 %v2822
        %v2894 = vunpack.c.l.b16 %v2823
        %v2895 = vunpack.c.l.b16 %v2824
        %v2896 = vunpack.c.l.b16 %v2825
        %v2897 = vunpack.c.l.b16 %v2826
        %v2898 = vunpack.c.l.b16 %v2827
        %v2899 = vunpack.c.l.b16 %v2828
        %v2900 = vunpack.c.l.b16 %v2829
        %v2901 = vunpack.c.l.b16 %v2830
        %v2902 = vunpack.c.l.b16 %v2831
        %v2903 = vunpack.c.l.b16 %v2832
        %v2904 = vunpack.c.l.b16 %v2833
        %v2905 = vunpack.c.l.b16 %v2834
        %v2906 = vpack.c.b16 %v2879, %v2878
        %v2907 = vpack.c.b16 %v2881, %v2880
        %v2908 = vpack.c.b16 %v2883, %v2882
        %v2909 = vpack.c.b16 %v2885, %v2884
        %v2910 = vpack.c.b16 %v2887, %v2886
        %v2911 = vpack.c.b16 %v2889, %v2888
        %v2912 = vpack.c.b16 %v2891, %v2890
        %v2913 = vpack.c.b16 %v2893, %v2892
        %v2914 = vpack.c.b16 %v2895, %v2894
        %v2915 = vpack.c.b16 %v2897, %v2896
        %v2916 = vpack.c.b16 %v2899, %v2898
        %v2917 = vpack.c.b16 %v2901, %v2900
        %v2918 = vpack.c.b16 %v2903, %v2902
        %v2919 = vpack.c.b16 %v2905, %v2904
        %v2935 = vsel %vm2633, %v2848, 0
        %2937 = vmatprep.subr.bf16.mxu0 0
        %2938 = vmatpush1.bf16.msra.mxu0 %v2906
        %2939 = vmatprep.subr.bf16.mxu0 0
        %2940 = vmatpush1.bf16.msra.mxu0 %v2907
        %2941 = vmatprep.subr.bf16.mxu0 0
        %2942 = vmatpush1.bf16.msra.mxu0 %v2908
        %2943 = vmatprep.subr.bf16.mxu0 0
        %2944 = vmatpush1.bf16.msra.mxu0 %v2909
        %2945 = vmatprep.subr.bf16.mxu0 0
        %2946 = vmatpush1.bf16.msra.mxu0 %v2910
        %2947 = vmatprep.subr.bf16.mxu0 0
        %2948 = vmatpush1.bf16.msra.mxu0 %v2911
        %2949 = vmatprep.subr.bf16.mxu0 0
        %2950 = vmatpush1.bf16.msra.mxu0 %v2912
        %2951 = vmatprep.subr.bf16.mxu0 0
        %2952 = vmatpush1.bf16.msra.mxu0 %v2913
        %2953 = vmatprep.subr.bf16.mxu0 0
        %2954 = vmatpush1.bf16.msra.mxu0 %v2914
        %2955 = vmatprep.subr.bf16.mxu0 0
        %2956 = vmatpush1.bf16.msra.mxu0 %v2915
        %2957 = vmatprep.subr.bf16.mxu0 0
        %2958 = vmatpush1.bf16.msra.mxu0 %v2916
        %2959 = vmatprep.subr.bf16.mxu0 0
        %2960 = vmatpush1.bf16.msra.mxu0 %v2917
        %2961 = vmatprep.subr.bf16.mxu0 0
        %2962 = vmatpush1.bf16.msra.mxu0 %v2918
        %2963 = vmatprep.subr.bf16.mxu0 0
        %2964 = vmatpush1.bf16.msra.mxu0 %v2919
        %2965 = vmatprep.subr.bf16.mxu0 0
        %2966 = vmatpush1.bf16.msra.mxu0 0
        %2967 = vmatprep.subr.bf16.mxu0 0
        %2968 = vmatpush1.bf16.msra.mxu0 0
        %2969 = vmatprep.mubr.bf16.mxu0 %v2935
        %2970 = vmatmul.mubr.bf16.gmra.mrb[0].mxu0 %v2845
        %v2971 = vpop.f32.mrb[0].mxu0
        %v2972 = vadd.f32 0.0, %v2971
        %v2973 = vpop.f32.mrb[0].mxu0
        %v2974 = vpop.f32.mrb[0].mxu0
        %v2975 = vadd.f32 0.0, %v2974
        %v2976 = vpop.f32.mrb[0].mxu0
        %2977 = vdwg.mxu0
        %v2978 = vadd.f32 %v2800, %v2972
        %v2979 = vadd.f32 %v2803, %v2975
        %v2980 = vld [vmem:[%s7] sm:$0x1]
        %v2982 = vlaneseq
        %v2983 = vshrl.u32 %v2982, 7
        %v2984 = vsub.s32 0, %v2983
        %v2985 = vrot.slane %v2980, %v2984
        %v2987 = vadd.f32 %v2978, %v2985
        %v2988 = vadd.f32 %v2979, %v2985
        %v2989 = vmax.f32 %v2987, 0.0
        %v2990 = vmax.f32 %v2988, 0.0
        %vm2991 = vcmask 916480
        %v2992 = vsel %vm2991, %v2989, 0.0
        %vm2993 = vcmask 914432
        %v2994 = vsel %vm2993, %v2990, 0.0
        %v2995 = vadd.f32 %v2992, %v2994
        %v2996 = vrot.slane %v2995, 4
        %v2997 = vadd.f32 %v2995, %v2996
        %v2998 = vrot.slane %v2997, 2
        %v2999 = vadd.f32 %v2997, %v2998
        %v3000 = vrot.slane %v2999, 1
        %v3001 = vadd.f32 %v2999, %v3000
        %v3002 = vld [vmem:[%s15] sm:$0xf]
        %v3003 = vld [vmem:[%s15 + $0x4] sm:$0xf]
        %v3004 = vld [vmem:[%s15 + $0x8] sm:$0xf]
        %v3005 = vld [vmem:[%s15 + $0xc] sm:$0xf]
        %v3006 = vld [vmem:[%s15 + $0x10] sm:$0xf]
        %v3007 = vld [vmem:[%s15 + $0x14] sm:$0xf]
        %v3008 = vld [vmem:[%s15 + $0x18] sm:$0xf]
        %v3009 = vld [vmem:[%s15 + $0x1c] sm:$0xf]
        %v3010 = vld [vmem:[%s15 + $0x20] sm:$0xf]
        %v3011 = vld [vmem:[%s15 + $0x24] sm:$0xf]
        %v3012 = vld [vmem:[%s15 + $0x28] sm:$0xf]
        %v3013 = vld [vmem:[%s15 + $0x2c] sm:$0xf]
        %v3014 = vld [vmem:[%s15 + $0x30] sm:$0xf]
        %v3015 = vld [vmem:[%s15 + $0x34] sm:$0xf]
        %v3016 = vpack.c.bf16 %v3001, %v3001
        %v3031 = vunpack.c.l.b16 %v3002
        %v3032 = vunpack.c.l.b16 %v3003
        %v3033 = vunpack.c.l.b16 %v3004
        %v3034 = vunpack.c.l.b16 %v3005
        %v3035 = vunpack.c.l.b16 %v3006
        %v3036 = vunpack.c.l.b16 %v3007
        %v3037 = vunpack.c.l.b16 %v3008
        %v3038 = vunpack.c.l.b16 %v3009
        %v3039 = vunpack.c.l.b16 %v3010
        %v3040 = vunpack.c.l.b16 %v3011
        %v3041 = vunpack.c.l.b16 %v3012
        %v3042 = vunpack.c.l.b16 %v3013
        %v3043 = vunpack.c.l.b16 %v3014
        %v3044 = vunpack.c.l.b16 %v3015
        %v3045 = vpack.c.b16 %v3032, %v3031
        %v3046 = vpack.c.b16 %v3034, %v3033
        %v3047 = vpack.c.b16 %v3036, %v3035
        %v3048 = vpack.c.b16 %v3038, %v3037
        %v3049 = vpack.c.b16 %v3040, %v3039
        %v3050 = vpack.c.b16 %v3042, %v3041
        %v3051 = vpack.c.b16 %v3044, %v3043
        %v3060 = vsel %vm2991, %v3016, 0
        %3062 = vmatprep.subr.bf16.mxu0 0
        %3063 = vmatpush1.bf16.msra.mxu0 %v3045
        %3064 = vmatprep.subr.bf16.mxu0 0
        %3065 = vmatpush1.bf16.msra.mxu0 %v3046
        %3066 = vmatprep.subr.bf16.mxu0 0
        %3067 = vmatpush1.bf16.msra.mxu0 %v3047
        %3068 = vmatprep.subr.bf16.mxu0 0
        %3069 = vmatpush1.bf16.msra.mxu0 %v3048
        %3070 = vmatprep.subr.bf16.mxu0 0
        %3071 = vmatpush1.bf16.msra.mxu0 %v3049
        %3072 = vmatprep.subr.bf16.mxu0 0
        %3073 = vmatpush1.bf16.msra.mxu0 %v3050
        %3074 = vmatprep.subr.bf16.mxu0 0
        %3075 = vmatpush1.bf16.msra.mxu0 %v3051
        %3076 = vmatprep.subr.bf16.mxu0 0
        %3077 = vmatpush1.bf16.msra.mxu0 0
        %3078 = vmatprep.subr.bf16.mxu0 0
        %3079 = vmatpush1.bf16.msra.mxu0 0
        %3080 = vmatprep.subr.bf16.mxu0 0
        %3081 = vmatpush1.bf16.msra.mxu0 0
        %3082 = vmatprep.subr.bf16.mxu0 0
        %3083 = vmatpush1.bf16.msra.mxu0 0
        %3084 = vmatprep.subr.bf16.mxu0 0
        %3085 = vmatpush1.bf16.msra.mxu0 0
        %3086 = vmatprep.subr.bf16.mxu0 0
        %3087 = vmatpush1.bf16.msra.mxu0 0
        %3088 = vmatprep.subr.bf16.mxu0 0
        %3089 = vmatpush1.bf16.msra.mxu0 0
        %3090 = vmatprep.subr.bf16.mxu0 0
        %3091 = vmatpush1.bf16.msra.mxu0 0
        %3092 = vmatprep.subr.bf16.mxu0 0
        %3093 = vmatpush1.bf16.msra.mxu0 0
        %3094 = vmatprep.mubr.bf16.mxu0 0
        %3095 = vmatmul.mubr.bf16.gmra.mrb[0].mxu0 %v3060
        %v3096 = vpop.f32.mrb[0].mxu0
        %v3097 = vadd.f32 0.0, %v3096
        %v3098 = vpop.f32.mrb[0].mxu0
        %v3099 = vpop.f32.mrb[0].mxu0
        %v3100 = vpop.f32.mrb[0].mxu0
        %3101 = vdwg.mxu0
        %v3102 = vmul.f32 %v3097, 0.0051020407
        %v3103 = vld [vmem:[#allocation11] sm:$0xf]
        %v3104 = vpack.c.bf16 %v3102, %v3102
        %v3105 = vld [vmem:[#allocation8] sm:$0x1]
        %vm3106 = vcmask 64512
        %v3108 = vsel %vm3106, %v3104, 0
        %v3111 = vsel %vm1602, %v3103, 0
        %3113 = vmatprep.subr.bf16.mxu0 0
        %3114 = vmatpush1.bf16.msra.mxu0 %v3111
        %3115 = vmatprep.subr.bf16.mxu0 0
        %3116 = vmatpush1.bf16.msra.mxu0 0
        %3117 = vmatprep.subr.bf16.mxu0 0
        %3118 = vmatpush1.bf16.msra.mxu0 0
        %3119 = vmatprep.subr.bf16.mxu0 0
        %3120 = vmatpush1.bf16.msra.mxu0 0
        %3121 = vmatprep.subr.bf16.mxu0 0
        %3122 = vmatpush1.bf16.msra.mxu0 0
        %3123 = vmatprep.subr.bf16.mxu0 0
        %3124 = vmatpush1.bf16.msra.mxu0 0
        %3125 = vmatprep.subr.bf16.mxu0 0
        %3126 = vmatpush1.bf16.msra.mxu0 0
        %3127 = vmatprep.subr.bf16.mxu0 0
        %3128 = vmatpush1.bf16.msra.mxu0 0
        %3129 = vmatprep.subr.bf16.mxu0 0
        %3130 = vmatpush1.bf16.msra.mxu0 0
        %3131 = vmatprep.subr.bf16.mxu0 0
        %3132 = vmatpush1.bf16.msra.mxu0 0
        %3133 = vmatprep.subr.bf16.mxu0 0
        %3134 = vmatpush1.bf16.msra.mxu0 0
        %3135 = vmatprep.subr.bf16.mxu0 0
        %3136 = vmatpush1.bf16.msra.mxu0 0
        %3137 = vmatprep.subr.bf16.mxu0 0
        %3138 = vmatpush1.bf16.msra.mxu0 0
        %3139 = vmatprep.subr.bf16.mxu0 0
        %3140 = vmatpush1.bf16.msra.mxu0 0
        %3141 = vmatprep.subr.bf16.mxu0 0
        %3142 = vmatpush1.bf16.msra.mxu0 0
        %3143 = vmatprep.subr.bf16.mxu0 0
        %3144 = vmatpush1.bf16.msra.mxu0 0
        %3145 = vmatprep.mubr.bf16.mxu0 0
        %3146 = vmatmul.mubr.bf16.gmra.mrb[0].mxu0 %v3108
        %v3147 = vpop.f32.mrb[0].mxu0
        %v3148 = vadd.f32 %v3105, %v3147
        %v3149 = vpop.f32.mrb[0].mxu0
        %v3150 = vpop.f32.mrb[0].mxu0
        %v3151 = vpop.f32.mrb[0].mxu0
        %3152 = vdwg.mxu0
        %v3153 = vmax.f32 %v3148, 0.0
        %v3154 = vld [vmem:[#allocation13] sm:$0xf]
        %v3155 = vpack.c.bf16 %v3153, %v3153
        %v3156 = vld [vmem:[#allocation10] sm:$0x1]
        %v3158 = vsel %vm3106, %v3155, 0
        %v3161 = vsel %vm1602, %v3154, 0
        %3163 = vmatprep.subr.bf16.mxu0 0
        %3164 = vmatpush1.bf16.msra.mxu0 %v3161
        %3165 = vmatprep.subr.bf16.mxu0 0
        %3166 = vmatpush1.bf16.msra.mxu0 0
        %3167 = vmatprep.subr.bf16.mxu0 0
        %3168 = vmatpush1.bf16.msra.mxu0 0
        %3169 = vmatprep.subr.bf16.mxu0 0
        %3170 = vmatpush1.bf16.msra.mxu0 0
        %3171 = vmatprep.subr.bf16.mxu0 0
        %3172 = vmatpush1.bf16.msra.mxu0 0
        %3173 = vmatprep.subr.bf16.mxu0 0
        %3174 = vmatpush1.bf16.msra.mxu0 0
        %3175 = vmatprep.subr.bf16.mxu0 0
        %3176 = vmatpush1.bf16.msra.mxu0 0
        %3177 = vmatprep.subr.bf16.mxu0 0
        %3178 = vmatpush1.bf16.msra.mxu0 0
        %3179 = vmatprep.subr.bf16.mxu0 0
        %3180 = vmatpush1.bf16.msra.mxu0 0
        %3181 = vmatprep.subr.bf16.mxu0 0
        %3182 = vmatpush1.bf16.msra.mxu0 0
        %3183 = vmatprep.subr.bf16.mxu0 0
        %3184 = vmatpush1.bf16.msra.mxu0 0
        %3185 = vmatprep.subr.bf16.mxu0 0
        %3186 = vmatpush1.bf16.msra.mxu0 0
        %3187 = vmatprep.subr.bf16.mxu0 0
        %3188 = vmatpush1.bf16.msra.mxu0 0
        %3189 = vmatprep.subr.bf16.mxu0 0
        %3190 = vmatpush1.bf16.msra.mxu0 0
        %3191 = vmatprep.subr.bf16.mxu0 0
        %3192 = vmatpush1.bf16.msra.mxu0 0
        %3193 = vmatprep.subr.bf16.mxu0 0
        %3194 = vmatpush1.bf16.msra.mxu0 0
        %3195 = vmatprep.mubr.bf16.mxu0 0
        %3196 = vmatmul.mubr.bf16.gmra.mrb[0].mxu0 %v3158
        %v3197 = vpop.f32.mrb[0].mxu0
        %v3198 = vadd.f32 %v3156, %v3197
        %v3199 = vpop.f32.mrb[0].mxu0
        %v3200 = vpop.f32.mrb[0].mxu0
        %v3201 = vpop.f32.mrb[0].mxu0
        %3202 = vdwg.mxu0
        %v3203 = vadd.f32 %v3198, 3.0
        %v3204 = vmax.f32 %v3203, 0.0
        %v3205 = vmin.f32 %v3204, 6.0
        %v3206 = vmul.f32 %v3205, 0.16666667
        %v3207 = vld [vmem:[#allocation7] sm:$0xf]
        %v3208 = vpack.c.bf16 %v3206, %v3206
        %v3210 = vsel %vm3106, %v3208, 0
        %v3213 = vsel %vm1602, %v3207, 0
        %3215 = vmatprep.subr.bf16.mxu0 0
        %3216 = vmatpush1.bf16.msra.mxu0 %v3213
        %3217 = vmatprep.subr.bf16.mxu0 0
        %3218 = vmatpush1.bf16.msra.mxu0 0
        %3219 = vmatprep.subr.bf16.mxu0 0
        %3220 = vmatpush1.bf16.msra.mxu0 0
        %3221 = vmatprep.subr.bf16.mxu0 0
        %3222 = vmatpush1.bf16.msra.mxu0 0
        %3223 = vmatprep.subr.bf16.mxu0 0
        %3224 = vmatpush1.bf16.msra.mxu0 0
        %3225 = vmatprep.subr.bf16.mxu0 0
        %3226 = vmatpush1.bf16.msra.mxu0 0
        %3227 = vmatprep.subr.bf16.mxu0 0
        %3228 = vmatpush1.bf16.msra.mxu0 0
        %3229 = vmatprep.subr.bf16.mxu0 0
        %3230 = vmatpush1.bf16.msra.mxu0 0
        %3231 = vmatprep.subr.bf16.mxu0 0
        %3232 = vmatpush1.bf16.msra.mxu0 0
        %3233 = vmatprep.subr.bf16.mxu0 0
        %3234 = vmatpush1.bf16.msra.mxu0 0
        %3235 = vmatprep.subr.bf16.mxu0 0
        %3236 = vmatpush1.bf16.msra.mxu0 0
        %3237 = vmatprep.subr.bf16.mxu0 0
        %3238 = vmatpush1.bf16.msra.mxu0 0
        %3239 = vmatprep.subr.bf16.mxu0 0
        %3240 = vmatpush1.bf16.msra.mxu0 0
        %3241 = vmatprep.subr.bf16.mxu0 0
        %3242 = vmatpush1.bf16.msra.mxu0 0
        %3243 = vmatprep.subr.bf16.mxu0 0
        %3244 = vmatpush1.bf16.msra.mxu0 0
        %3245 = vmatprep.subr.bf16.mxu0 0
        %3246 = vmatpush1.bf16.msra.mxu0 0
        %3247 = vmatprep.mubr.bf16.mxu0 0
        %3248 = vmatmul.mubr.bf16.gmra.mrb[0].mxu0 %v3210
        %v3249 = vpop.f32.mrb[0].mxu0
        %v3250 = vadd.f32 0.0, %v3249
        %v3251 = vpop.f32.mrb[0].mxu0
        %v3252 = vpop.f32.mrb[0].mxu0
        %v3253 = vpop.f32.mrb[0].mxu0
        %3254 = vdwg.mxu0
        %v3255 = vlaneseq
        %v3256 = vshrl.u32 %v3255, 7
        %v3257 = vsub.s32 0, %v3256
        %v3258 = vrot.slane %v3250, %v3257
        %v3259 = vmul.f32 %v2989, %v3258
        %v3260 = vmul.f32 %v2990, %v3258
        %v3261 = vld [vmem:[#allocation2] sm:$0xf]
        %v3262 = vld [vmem:[#allocation2 + $0x4] sm:$0xf]
        %v3263 = vld [vmem:[#allocation2 + $0x8] sm:$0xf]
        %v3264 = vld [vmem:[#allocation2 + $0xc] sm:$0xf]
        %v3265 = vld [vmem:[#allocation2 + $0x10] sm:$0xf]
        %v3266 = vld [vmem:[#allocation2 + $0x14] sm:$0xf]
        %v3267 = vld [vmem:[#allocation2 + $0x18] sm:$0xf]
        %v3268 = vld [vmem:[#allocation2 + $0x1c] sm:$0xf]
        %v3269 = vld [vmem:[#allocation2 + $0x20] sm:$0xf]
        %v3270 = vld [vmem:[#allocation2 + $0x24] sm:$0xf]
        %v3271 = vld [vmem:[#allocation2 + $0x28] sm:$0xf]
        %v3272 = vld [vmem:[#allocation2 + $0x2c] sm:$0xf]
        %v3273 = vld [vmem:[#allocation2 + $0x30] sm:$0xf]
        %v3274 = vld [vmem:[#allocation2 + $0x34] sm:$0xf]
        %v3275 = vpack.c.bf16 %v3260, %v3259
        %v3276 = vld [vmem:[#allocation5] sm:$0x1]
        %v3278 = vlaneseq
        %v3279 = vshrl.u32 %v3278, 7
        %v3280 = vsub.s32 0, %v3279
        %v3281 = vrot.slane %v3276, %v3280
        %v3297 = vunpack.c.l.b16 %v3261
        %v3298 = vunpack.c.l.b16 %v3262
        %v3299 = vunpack.c.l.b16 %v3263
        %v3300 = vunpack.c.l.b16 %v3264
        %v3301 = vunpack.c.l.b16 %v3265
        %v3302 = vunpack.c.l.b16 %v3266
        %v3303 = vunpack.c.l.b16 %v3267
        %v3304 = vunpack.c.l.b16 %v3268
        %v3305 = vunpack.c.l.b16 %v3269
        %v3306 = vunpack.c.l.b16 %v3270
        %v3307 = vunpack.c.l.b16 %v3271
        %v3308 = vunpack.c.l.b16 %v3272
        %v3309 = vunpack.c.l.b16 %v3273
        %v3310 = vunpack.c.l.b16 %v3274
        %v3311 = vpack.c.b16 %v3298, %v3297
        %v3312 = vpack.c.b16 %v3300, %v3299
        %v3313 = vpack.c.b16 %v3302, %v3301
        %v3314 = vpack.c.b16 %v3304, %v3303
        %v3315 = vpack.c.b16 %v3306, %v3305
        %v3316 = vpack.c.b16 %v3308, %v3307
        %v3317 = vpack.c.b16 %v3310, %v3309
        %v3326 = vsel %vm2991, %v3275, 0
        %3328 = vmatprep.subr.bf16.mxu0 0
        %3329 = vmatpush1.bf16.msra.mxu0 %v3311
        %3330 = vmatprep.subr.bf16.mxu0 0
        %3331 = vmatpush1.bf16.msra.mxu0 %v3312
        %3332 = vmatprep.subr.bf16.mxu0 0
        %3333 = vmatpush1.bf16.msra.mxu0 %v3313
        %3334 = vmatprep.subr.bf16.mxu0 0
        %3335 = vmatpush1.bf16.msra.mxu0 %v3314
        %3336 = vmatprep.subr.bf16.mxu0 0
        %3337 = vmatpush1.bf16.msra.mxu0 %v3315
        %3338 = vmatprep.subr.bf16.mxu0 0
        %3339 = vmatpush1.bf16.msra.mxu0 %v3316
        %3340 = vmatprep.subr.bf16.mxu0 0
        %3341 = vmatpush1.bf16.msra.mxu0 %v3317
        %3342 = vmatprep.subr.bf16.mxu0 0
        %3343 = vmatpush1.bf16.msra.mxu0 0
        %3344 = vmatprep.subr.bf16.mxu0 0
        %3345 = vmatpush1.bf16.msra.mxu0 0
        %3346 = vmatprep.subr.bf16.mxu0 0
        %3347 = vmatpush1.bf16.msra.mxu0 0
        %3348 = vmatprep.subr.bf16.mxu0 0
        %3349 = vmatpush1.bf16.msra.mxu0 0
        %3350 = vmatprep.subr.bf16.mxu0 0
        %3351 = vmatpush1.bf16.msra.mxu0 0
        %3352 = vmatprep.subr.bf16.mxu0 0
        %3353 = vmatpush1.bf16.msra.mxu0 0
        %3354 = vmatprep.subr.bf16.mxu0 0
        %3355 = vmatpush1.bf16.msra.mxu0 0
        %3356 = vmatprep.subr.bf16.mxu0 0
        %3357 = vmatpush1.bf16.msra.mxu0 0
        %3358 = vmatprep.subr.bf16.mxu0 0
        %3359 = vmatpush1.bf16.msra.mxu0 0
        %3360 = vmatprep.mubr.bf16.mxu0 0
        %3361 = vmatmul.mubr.bf16.gmra.mrb[0].mxu0 %v3326
        %v3362 = vpop.f32.mrb[0].mxu0
        %v3363 = vadd.f32 %v3281, %v3362
        %v3364 = vpop.f32.mrb[0].mxu0
        %v3365 = vpop.f32.mrb[0].mxu0
        %v3366 = vadd.f32 %v3281, %v3365
        %v3367 = vpop.f32.mrb[0].mxu0
        %3368 = vdwg.mxu0
        %v3369 = vld [vmem:[%s31] sm:$0xff]
        %v3370 = vld [vmem:[%s31 + $0x8] sm:$0xf]
        %v3371 = vld [vmem:[%s31 + $0xc] sm:$0xff]
        %v3372 = vld [vmem:[%s31 + $0x14] sm:$0xf]
        %v3373 = vld [vmem:[%s31 + $0x18] sm:$0xff]
        %v3374 = vld [vmem:[%s31 + $0x20] sm:$0xf]
        %v3375 = vld [vmem:[%s31 + $0x24] sm:$0xff]
        %v3376 = vld [vmem:[%s31 + $0x2c] sm:$0xf]
        %v3377 = vld [vmem:[%s31 + $0x30] sm:$0xff]
        %v3378 = vld [vmem:[%s31 + $0x38] sm:$0xf]
        %v3379 = vld [vmem:[%s31 + $0x3c] sm:$0xff]
        %v3380 = vld [vmem:[%s31 + $0x44] sm:$0xf]
        %v3381 = vld [vmem:[%s31 + $0x48] sm:$0xff]
        %v3382 = vld [vmem:[%s31 + $0x50] sm:$0xf]
        %v3383 = vld [vmem:[%s31 + $0x54] sm:$0xff]
        %v3384 = vld [vmem:[%s31 + $0x5c] sm:$0xf]
        %v3385 = vld [vmem:[%s31 + $0x60] sm:$0xff]
        %v3386 = vld [vmem:[%s31 + $0x68] sm:$0xf]
        %v3387 = vld [vmem:[%s31 + $0x6c] sm:$0xff]
        %v3388 = vld [vmem:[%s31 + $0x74] sm:$0xf]
        %v3389 = vld [vmem:[%s31 + $0x78] sm:$0xff]
        %v3390 = vld [vmem:[%s31 + $0x80] sm:$0xf]
        %v3391 = vld [vmem:[%s31 + $0x84] sm:$0xff]
        %v3392 = vld [vmem:[%s31 + $0x8c] sm:$0xf]
        %v3393 = vld [vmem:[%s31 + $0x90] sm:$0xff]
        %v3394 = vld [vmem:[%s31 + $0x98] sm:$0xf]
        %v3395 = vld [vmem:[%s31 + $0x9c] sm:$0xff]
        %v3396 = vld [vmem:[%s31 + $0xa4] sm:$0xf]
        %v3397 = vpack.c.bf16 %v3366, %v3363
        %v3398 = vld [vmem:[#allocation16] sm:$0x7]
        %v3400 = vlaneseq
        %v3401 = vshrl.u32 %v3400, 7
        %v3402 = vsub.s32 0, %v3401
        %v3403 = vrot.slane %v3398, %v3402
        %v3404 = vlaneseq
        %v3405 = vshrl.u32 %v3404, 7
        %v3406 = vsub.s32 1, %v3405
        %v3407 = vrot.slane %v3398, %v3406
        %v3408 = vlaneseq
        %v3409 = vshrl.u32 %v3408, 7
        %v3410 = vsub.s32 2, %v3409
        %v3411 = vrot.slane %v3398, %v3410
        %v3443 = vunpack.c.l.b16 %v3369
        %v3444 = vunpack.c.h.b16 %v3369
        %v3445 = vunpack.c.l.b16 %v3370
        %v3446 = vunpack.c.l.b16 %v3371
        %v3447 = vunpack.c.h.b16 %v3371
        %v3448 = vunpack.c.l.b16 %v3372
        %v3449 = vunpack.c.l.b16 %v3373
        %v3450 = vunpack.c.h.b16 %v3373
        %v3451 = vunpack.c.l.b16 %v3374
        %v3452 = vunpack.c.l.b16 %v3375
        %v3453 = vunpack.c.h.b16 %v3375
        %v3454 = vunpack.c.l.b16 %v3376
        %v3455 = vunpack.c.l.b16 %v3377
        %v3456 = vunpack.c.h.b16 %v3377
        %v3457 = vunpack.c.l.b16 %v3378
        %v3458 = vunpack.c.l.b16 %v3379
        %v3459 = vunpack.c.h.b16 %v3379
        %v3460 = vunpack.c.l.b16 %v3380
        %v3461 = vunpack.c.l.b16 %v3381
        %v3462 = vunpack.c.h.b16 %v3381
        %v3463 = vunpack.c.l.b16 %v3382
        %v3464 = vunpack.c.l.b16 %v3383
        %v3465 = vunpack.c.h.b16 %v3383
        %v3466 = vunpack.c.l.b16 %v3384
        %v3467 = vunpack.c.l.b16 %v3385
        %v3468 = vunpack.c.h.b16 %v3385
        %v3469 = vunpack.c.l.b16 %v3386
        %v3470 = vunpack.c.l.b16 %v3387
        %v3471 = vunpack.c.h.b16 %v3387
        %v3472 = vunpack.c.l.b16 %v3388
        %v3473 = vunpack.c.l.b16 %v3389
        %v3474 = vunpack.c.h.b16 %v3389
        %v3475 = vunpack.c.l.b16 %v3390
        %v3476 = vunpack.c.l.b16 %v3391
        %v3477 = vunpack.c.h.b16 %v3391
        %v3478 = vunpack.c.l.b16 %v3392
        %v3479 = vunpack.c.l.b16 %v3393
        %v3480 = vunpack.c.h.b16 %v3393
        %v3481 = vunpack.c.l.b16 %v3394
        %v3482 = vunpack.c.l.b16 %v3395
        %v3483 = vunpack.c.h.b16 %v3395
        %v3484 = vunpack.c.l.b16 %v3396
        %v3485 = vpack.c.b16 %v3446, %v3443
        %v3486 = vpack.c.b16 %v3447, %v3444
        %v3487 = vpack.c.b16 %v3448, %v3445
        %v3488 = vpack.c.b16 %v3452, %v3449
        %v3489 = vpack.c.b16 %v3453, %v3450
        %v3490 = vpack.c.b16 %v3454, %v3451
        %v3491 = vpack.c.b16 %v3458, %v3455
        %v3492 = vpack.c.b16 %v3459, %v3456
        %v3493 = vpack.c.b16 %v3460, %v3457
        %v3494 = vpack.c.b16 %v3464, %v3461
        %v3495 = vpack.c.b16 %v3465, %v3462
        %v3496 = vpack.c.b16 %v3466, %v3463
        %v3497 = vpack.c.b16 %v3470, %v3467
        %v3498 = vpack.c.b16 %v3471, %v3468
        %v3499 = vpack.c.b16 %v3472, %v3469
        %v3500 = vpack.c.b16 %v3476, %v3473
        %v3501 = vpack.c.b16 %v3477, %v3474
        %v3502 = vpack.c.b16 %v3478, %v3475
        %v3503 = vpack.c.b16 %v3482, %v3479
        %v3504 = vpack.c.b16 %v3483, %v3480
        %v3505 = vpack.c.b16 %v3484, %v3481
        %v3528 = vsel %vm2991, %v3397, 0
        %3530 = vmatprep.subr.bf16.mxu0 %v3486
        %3531 = vmatpush1.bf16.msra.mxu0 %v3485
        %3532 = vmatprep.subr.bf16.mxu0 %v3489
        %3533 = vmatpush1.bf16.msra.mxu0 %v3488
        %3534 = vmatprep.subr.bf16.mxu0 %v3492
        %3535 = vmatpush1.bf16.msra.mxu0 %v3491
        %3536 = vmatprep.subr.bf16.mxu0 %v3495
        %3537 = vmatpush1.bf16.msra.mxu0 %v3494
        %3538 = vmatprep.subr.bf16.mxu0 %v3498
        %3539 = vmatpush1.bf16.msra.mxu0 %v3497
        %3540 = vmatprep.subr.bf16.mxu0 %v3501
        %3541 = vmatpush1.bf16.msra.mxu0 %v3500
        %3542 = vmatprep.subr.bf16.mxu0 %v3504
        %3543 = vmatpush1.bf16.msra.mxu0 %v3503
        %3544 = vmatprep.subr.bf16.mxu0 0
        %3545 = vmatpush1.bf16.msra.mxu0 0
        %3546 = vmatprep.subr.bf16.mxu0 0
        %3547 = vmatpush1.bf16.msra.mxu0 0
        %3548 = vmatprep.subr.bf16.mxu0 0
        %3549 = vmatpush1.bf16.msra.mxu0 0
        %3550 = vmatprep.subr.bf16.mxu0 0
        %3551 = vmatpush1.bf16.msra.mxu0 0
        %3552 = vmatprep.subr.bf16.mxu0 0
        %3553 = vmatpush1.bf16.msra.mxu0 0
        %3554 = vmatprep.subr.bf16.mxu0 0
        %3555 = vmatpush1.bf16.msra.mxu0 0
        %3556 = vmatprep.subr.bf16.mxu0 0
        %3557 = vmatpush1.bf16.msra.mxu0 0
        %3558 = vmatprep.subr.bf16.mxu0 0
        %3559 = vmatpush1.bf16.msra.mxu0 0
        %3560 = vmatprep.subr.bf16.mxu0 0
        %3561 = vmatpush1.bf16.msra.mxu0 0
        %3562 = vmatprep.mubr.bf16.mxu0 0
        %3563 = vmatmul.mubr.bf16.gmra.mrb[0].mxu0 %v3528
        %v3564 = vpop.f32.mrb[0].mxu0
        %v3565 = vadd.f32 %v3403, %v3564
        %v3566 = vpop.f32.mrb[0].mxu0
        %v3567 = vadd.f32 %v3407, %v3566
        %v3568 = vpop.f32.mrb[0].mxu0
        %v3569 = vadd.f32 %v3403, %v3568
        %v3570 = vpop.f32.mrb[0].mxu0
        %v3571 = vadd.f32 %v3407, %v3570
        %3572 = vdwg.mxu0
        %3573 = vmatprep.subr.bf16.mxu0 0
        %3574 = vmatpush1.bf16.msra.mxu0 %v3487
        %3575 = vmatprep.subr.bf16.mxu0 0
        %3576 = vmatpush1.bf16.msra.mxu0 %v3490
        %3577 = vmatprep.subr.bf16.mxu0 0
        %3578 = vmatpush1.bf16.msra.mxu0 %v3493
        %3579 = vmatprep.subr.bf16.mxu0 0
        %3580 = vmatpush1.bf16.msra.mxu0 %v3496
        %3581 = vmatprep.subr.bf16.mxu0 0
        %3582 = vmatpush1.bf16.msra.mxu0 %v3499
        %3583 = vmatprep.subr.bf16.mxu0 0
        %3584 = vmatpush1.bf16.msra.mxu0 %v3502
        %3585 = vmatprep.subr.bf16.mxu0 0
        %3586 = vmatpush1.bf16.msra.mxu0 %v3505
        %3587 = vmatprep.subr.bf16.mxu0 0
        %3588 = vmatpush1.bf16.msra.mxu0 0
        %3589 = vmatprep.subr.bf16.mxu0 0
        %3590 = vmatpush1.bf16.msra.mxu0 0
        %3591 = vmatprep.subr.bf16.mxu0 0
        %3592 = vmatpush1.bf16.msra.mxu0 0
        %3593 = vmatprep.subr.bf16.mxu0 0
        %3594 = vmatpush1.bf16.msra.mxu0 0
        %3595 = vmatprep.subr.bf16.mxu0 0
        %3596 = vmatpush1.bf16.msra.mxu0 0
        %3597 = vmatprep.subr.bf16.mxu0 0
        %3598 = vmatpush1.bf16.msra.mxu0 0
        %3599 = vmatprep.subr.bf16.mxu0 0
        %3600 = vmatpush1.bf16.msra.mxu0 0
        %3601 = vmatprep.subr.bf16.mxu0 0
        %3602 = vmatpush1.bf16.msra.mxu0 0
        %3603 = vmatprep.subr.bf16.mxu0 0
        %3604 = vmatpush1.bf16.msra.mxu0 0
        %3605 = vmatprep.mubr.bf16.mxu0 0
        %3606 = vmatmul.mubr.bf16.gmra.mrb[0].mxu0 %v3528
        %v3607 = vpop.f32.mrb[0].mxu0
        %v3608 = vadd.f32 %v3411, %v3607
        %v3609 = vpop.f32.mrb[0].mxu0
        %v3610 = vpop.f32.mrb[0].mxu0
        %v3611 = vadd.f32 %v3411, %v3610
        %v3612 = vpop.f32.mrb[0].mxu0
        %3613 = vdwg.mxu0
        %v3614 = vadd.f32 %v3565, 3.0
        %v3615 = vadd.f32 %v3567, 3.0
        %v3616 = vadd.f32 %v3608, 3.0
        %v3617 = vadd.f32 %v3569, 3.0
        %v3618 = vadd.f32 %v3571, 3.0
        %v3619 = vadd.f32 %v3611, 3.0
        %v3620 = vmax.f32 %v3614, 0.0
        %v3621 = vmax.f32 %v3615, 0.0
        %v3622 = vmax.f32 %v3616, 0.0
        %v3623 = vmax.f32 %v3617, 0.0
        %v3624 = vmax.f32 %v3618, 0.0
        %v3625 = vmax.f32 %v3619, 0.0
        %v3626 = vmin.f32 %v3620, 6.0
        %v3627 = vmin.f32 %v3621, 6.0
        %v3628 = vmin.f32 %v3622, 6.0
        %v3629 = vmin.f32 %v3623, 6.0
        %v3630 = vmin.f32 %v3624, 6.0
        %v3631 = vmin.f32 %v3625, 6.0
        %v3632 = vmul.f32 %v3626, 0.16666667
        %v3633 = vmul.f32 %v3627, 0.16666667
        %v3634 = vmul.f32 %v3628, 0.16666667
        %v3635 = vmul.f32 %v3629, 0.16666667
        %v3636 = vmul.f32 %v3630, 0.16666667
        %v3637 = vmul.f32 %v3631, 0.16666667
        %v3638 = vmul.f32 %v3565, %v3632
        %v3639 = vmul.f32 %v3567, %v3633
        %v3640 = vmul.f32 %v3608, %v3634
        %v3641 = vmul.f32 %v3569, %v3635
        %v3642 = vmul.f32 %v3571, %v3636
        %v3643 = vmul.f32 %v3611, %v3637
        %v3644 = vld [vmem:[%s27] sm:$0xf]
        %v3645 = vld [vmem:[%s27 + $0x4] sm:$0xf]
        %v3646 = vld [vmem:[%s27 + $0x8] sm:$0x7]
        %v3647 = vpack.c.bf16 %v3641, %v3638
        %v3648 = vpack.c.bf16 %v3642, %v3639
        %v3649 = vpack.c.bf16 %v3643, %v3640
        %v3653 = vunpack.c.l.b16 %v3644
        %v3654 = vunpack.c.l.b16 %v3645
        %v3655 = vunpack.c.l.b16 %v3646
        %v3656 = vpack.c.b16 %v3654, %v3653
        %v3657 = vpack.c.b16 %v3655, %v3655
        %vm3658 = vcmask 113664
        %v3660 = vsel %vm3658, %v3656, 0
        %v3663 = vsel %vm3658, %v3657, 0
        %vm3665 = vcmask 1046528
        %v3667 = vsel %vm3665, %v3647, 0
        %v3670 = vsel %vm3665, %v3648, 0
        %v3673 = vsel %vm3665, %v3649, 0
        %3675 = vmatprep.subr.bf16.mxu0 %v3670
        %3676 = vmatpush1.bf16.msra.mxu0 %v3667
        %3677 = vmatprep.subr.bf16.mxu0 0
        %3678 = vmatpush1.bf16.msra.mxu0 0
        %3679 = vmatprep.subr.bf16.mxu0 0
        %3680 = vmatpush1.bf16.msra.mxu0 0
        %3681 = vmatprep.subr.bf16.mxu0 0
        %3682 = vmatpush1.bf16.msra.mxu0 0
        %3683 = vmatprep.subr.bf16.mxu0 0
        %3684 = vmatpush1.bf16.msra.mxu0 0
        %3685 = vmatprep.subr.bf16.mxu0 0
        %3686 = vmatpush1.bf16.msra.mxu0 0
        %3687 = vmatprep.subr.bf16.mxu0 0
        %3688 = vmatpush1.bf16.msra.mxu0 0
        %3689 = vmatprep.subr.bf16.mxu0 0
        %3690 = vmatpush1.bf16.msra.mxu0 0
        %3691 = vmatprep.subr.bf16.mxu0 0
        %3692 = vmatpush1.bf16.msra.mxu0 0
        %3693 = vmatprep.subr.bf16.mxu0 0
        %3694 = vmatpush1.bf16.msra.mxu0 0
        %3695 = vmatprep.subr.bf16.mxu0 0
        %3696 = vmatpush1.bf16.msra.mxu0 0
        %3697 = vmatprep.subr.bf16.mxu0 0
        %3698 = vmatpush1.bf16.msra.mxu0 0
        %3699 = vmatprep.subr.bf16.mxu0 0
        %3700 = vmatpush1.bf16.msra.mxu0 0
        %3701 = vmatprep.subr.bf16.mxu0 0
        %3702 = vmatpush1.bf16.msra.mxu0 0
        %3703 = vmatprep.subr.bf16.mxu0 0
        %3704 = vmatpush1.bf16.msra.mxu0 0
        %3705 = vmatprep.subr.bf16.mxu0 0
        %3706 = vmatpush1.bf16.msra.mxu0 0
        %3707 = vmatprep.mubr.bf16.mxu0 0
        %3708 = vmatmul.mubr.bf16.gmra.mrb[0].mxu0 %v3660
        %v3709 = vpop.f32.mrb[0].mxu0
        %v3710 = vadd.f32 0.0, %v3709
        %v3711 = vpop.f32.mrb[0].mxu0
        %v3712 = vadd.f32 0.0, %v3711
        %v3713 = vpop.f32.mrb[0].mxu0
        %v3714 = vadd.f32 0.0, %v3713
        %v3715 = vpop.f32.mrb[0].mxu0
        %v3716 = vadd.f32 0.0, %v3715
        %3717 = vmatprep.mubr.bf16.mxu0 0
        %3718 = vmatmul.mubr.bf16.gmra.mrb[0].mxu0 %v3663
        %v3719 = vpop.f32.mrb[0].mxu0
        %v3720 = vadd.f32 0.0, %v3719
        %v3721 = vpop.f32.mrb[0].mxu0
        %v3722 = vadd.f32 0.0, %v3721
        %v3723 = vpop.f32.mrb[0].mxu0
        %v3724 = vpop.f32.mrb[0].mxu0
        %3725 = vdwg.mxu0
        %3726 = vmatprep.subr.bf16.mxu0 0
        %3727 = vmatpush1.bf16.msra.mxu0 %v3673
        %3728 = vmatprep.subr.bf16.mxu0 0
        %3729 = vmatpush1.bf16.msra.mxu0 0
        %3730 = vmatprep.subr.bf16.mxu0 0
        %3731 = vmatpush1.bf16.msra.mxu0 0
        %3732 = vmatprep.subr.bf16.mxu0 0
        %3733 = vmatpush1.bf16.msra.mxu0 0
        %3734 = vmatprep.subr.bf16.mxu0 0
        %3735 = vmatpush1.bf16.msra.mxu0 0
        %3736 = vmatprep.subr.bf16.mxu0 0
        %3737 = vmatpush1.bf16.msra.mxu0 0
        %3738 = vmatprep.subr.bf16.mxu0 0
        %3739 = vmatpush1.bf16.msra.mxu0 0
        %3740 = vmatprep.subr.bf16.mxu0 0
        %3741 = vmatpush1.bf16.msra.mxu0 0
        %3742 = vmatprep.subr.bf16.mxu0 0
        %3743 = vmatpush1.bf16.msra.mxu0 0
        %3744 = vmatprep.subr.bf16.mxu0 0
        %3745 = vmatpush1.bf16.msra.mxu0 0
        %3746 = vmatprep.subr.bf16.mxu0 0
        %3747 = vmatpush1.bf16.msra.mxu0 0
        %3748 = vmatprep.subr.bf16.mxu0 0
        %3749 = vmatpush1.bf16.msra.mxu0 0
        %3750 = vmatprep.subr.bf16.mxu0 0
        %3751 = vmatpush1.bf16.msra.mxu0 0
        %3752 = vmatprep.subr.bf16.mxu0 0
        %3753 = vmatpush1.bf16.msra.mxu0 0
        %3754 = vmatprep.subr.bf16.mxu0 0
        %3755 = vmatpush1.bf16.msra.mxu0 0
        %3756 = vmatprep.subr.bf16.mxu0 0
        %3757 = vmatpush1.bf16.msra.mxu0 0
        %3758 = vmatprep.mubr.bf16.mxu0 0
        %3759 = vmatmul.mubr.bf16.gmra.mrb[0].mxu0 %v3660
        %v3760 = vpop.f32.mrb[0].mxu0
        %v3761 = vadd.f32 0.0, %v3760
        %v3762 = vpop.f32.mrb[0].mxu0
        %v3763 = vpop.f32.mrb[0].mxu0
        %v3764 = vadd.f32 0.0, %v3763
        %v3765 = vpop.f32.mrb[0].mxu0
        %3766 = vmatprep.mubr.bf16.mxu0 0
        %3767 = vmatmul.mubr.bf16.gmra.mrb[0].mxu0 %v3663
        %v3768 = vpop.f32.mrb[0].mxu0
        %v3769 = vadd.f32 0.0, %v3768
        %v3770 = vpop.f32.mrb[0].mxu0
        %v3771 = vpop.f32.mrb[0].mxu0
        %v3772 = vpop.f32.mrb[0].mxu0
        %3773 = vdwg.mxu0
        %v3774 = vld [vmem:[%s25] sm:$0xff]
        %v3775 = vld [vmem:[%s25 + $0x8] sm:$0xff]
        %v3776 = vld [vmem:[%s25 + $0x10] sm:$0xff]
        %v3777 = vld [vmem:[%s25 + $0x18] sm:$0xff]
        %v3778 = vld [vmem:[%s25 + $0x20] sm:$0xff]
        %v3779 = vld [vmem:[%s25 + $0x28] sm:$0xff]
        %v3780 = vld [vmem:[%s25 + $0x30] sm:$0xff]
        %v3781 = vld [vmem:[%s25 + $0x38] sm:$0xff]
        %v3782 = vld [vmem:[%s25 + $0x40] sm:$0xff]
        %v3783 = vld [vmem:[%s25 + $0x48] sm:$0xff]
        %v3784 = vld [vmem:[%s25 + $0x50] sm:$0xff]
        %v3785 = vld [vmem:[%s25 + $0x58] sm:$0xff]
        %v3786 = vld [vmem:[%s25 + $0x60] sm:$0xff]
        %v3787 = vld [vmem:[%s25 + $0x68] sm:$0xff]
        %v3788 = vld [vmem:[%s25 + $0x70] sm:$0xff]
        %v3789 = vld [vmem:[%s25 + $0x78] sm:$0xff]
        %v3790 = vld [vmem:[%s25 + $0x80] sm:$0xff]
        %v3791 = vld [vmem:[%s25 + $0x88] sm:$0xff]
        %v3792 = vld [vmem:[%s25 + $0x90] sm:$0xff]
        %v3793 = vld [vmem:[%s25 + $0x98] sm:$0xff]
        %v3794 = vld [vmem:[%s25 + $0xa0] sm:$0xff]
        %v3795 = vld [vmem:[%s25 + $0xa8] sm:$0xff]
        %v3796 = vld [vmem:[%s25 + $0xb0] sm:$0xff]
        %v3797 = vld [vmem:[%s25 + $0xb8] sm:$0xff]
        %v3798 = vld [vmem:[%s25 + $0xc0] sm:$0xff]
        %v3799 = vld [vmem:[%s25 + $0xc8] sm:$0xff]
        %v3800 = vld [vmem:[%s25 + $0xd0] sm:$0xff]
        %v3801 = vld [vmem:[%s25 + $0xd8] sm:$0xff]
        %v3802 = vld [vmem:[%s25 + $0xe0] sm:$0xff]
        %v3803 = vld [vmem:[%s25 + $0xe8] sm:$0xff]
        %v3804 = vld [vmem:[%s25 + $0xf0] sm:$0xff]
        %v3805 = vld [vmem:[%s25 + $0xf8] sm:$0xff]
        %v3806 = vld [vmem:[%s25 + $0x100] sm:$0xff]
        %v3807 = vld [vmem:[%s25 + $0x108] sm:$0xff]
        %v3808 = vld [vmem:[%s25 + $0x110] sm:$0xff]
        %v3809 = vld [vmem:[%s25 + $0x118] sm:$0xff]
        %v3810 = vld [vmem:[%s25 + $0x120] sm:$0xff]
        %v3811 = vld [vmem:[%s25 + $0x128] sm:$0xff]
        %v3812 = vld [vmem:[%s25 + $0x130] sm:$0xff]
        %v3813 = vld [vmem:[%s25 + $0x138] sm:$0xff]
        %v3814 = vld [vmem:[%s25 + $0x140] sm:$0xff]
        %v3815 = vld [vmem:[%s25 + $0x148] sm:$0xff]
        %v3816 = vpack.c.bf16 %v3710, %v3710
        %v3817 = vpack.c.bf16 %v3712, %v3712
        %v3818 = vpack.c.bf16 %v3761, %v3761
        %s3819 = scalar_lea.vmem %s25, 336
        %v3820 = vld [vmem:[%s3819] sm:$0xff]
        %v3821 = vld [vmem:[%s3819 + $0x8] sm:$0xff]
        %v3822 = vld [vmem:[%s3819 + $0x10] sm:$0xff]
        %v3823 = vld [vmem:[%s3819 + $0x18] sm:$0xff]
        %v3824 = vld [vmem:[%s3819 + $0x20] sm:$0xff]
        %v3825 = vld [vmem:[%s3819 + $0x28] sm:$0xff]
        %v3826 = vld [vmem:[%s3819 + $0x30] sm:$0xff]
        %v3827 = vld [vmem:[%s3819 + $0x38] sm:$0xff]
        %v3828 = vld [vmem:[%s3819 + $0x40] sm:$0xff]
        %v3829 = vld [vmem:[%s3819 + $0x48] sm:$0xff]
        %v3830 = vld [vmem:[%s3819 + $0x50] sm:$0xff]
        %v3831 = vld [vmem:[%s3819 + $0x58] sm:$0xff]
        %v3832 = vld [vmem:[%s3819 + $0x60] sm:$0xff]
        %v3833 = vld [vmem:[%s3819 + $0x68] sm:$0xff]
        %v3834 = vld [vmem:[%s3819 + $0x70] sm:$0xff]
        %v3835 = vld [vmem:[%s3819 + $0x78] sm:$0xff]
        %v3836 = vld [vmem:[%s3819 + $0x80] sm:$0xff]
        %v3837 = vld [vmem:[%s3819 + $0x88] sm:$0xff]
        %v3838 = vld [vmem:[%s3819 + $0x90] sm:$0xff]
        %v3839 = vld [vmem:[%s3819 + $0x98] sm:$0xff]
        %v3840 = vld [vmem:[%s3819 + $0xa0] sm:$0xff]
        %v3841 = vld [vmem:[%s3819 + $0xa8] sm:$0xff]
        %v3842 = vld [vmem:[%s3819 + $0xb0] sm:$0xff]
        %v3843 = vld [vmem:[%s3819 + $0xb8] sm:$0xff]
        %v3844 = vld [vmem:[%s3819 + $0xc0] sm:$0xff]
        %v3845 = vld [vmem:[%s3819 + $0xc8] sm:$0xff]
        %v3846 = vld [vmem:[%s3819 + $0xd0] sm:$0xff]
        %v3847 = vld [vmem:[%s3819 + $0xd8] sm:$0xff]
        %v3848 = vld [vmem:[%s3819 + $0xe0] sm:$0xff]
        %v3849 = vld [vmem:[%s3819 + $0xe8] sm:$0xff]
        %v3850 = vld [vmem:[%s3819 + $0xf0] sm:$0xff]
        %v3851 = vld [vmem:[%s3819 + $0xf8] sm:$0xff]
        %v3852 = vld [vmem:[%s3819 + $0x100] sm:$0xff]
        %v3853 = vld [vmem:[%s3819 + $0x108] sm:$0xff]
        %v3854 = vld [vmem:[%s3819 + $0x110] sm:$0xff]
        %v3855 = vld [vmem:[%s3819 + $0x118] sm:$0xff]
        %v3856 = vld [vmem:[%s3819 + $0x120] sm:$0xff]
        %v3857 = vld [vmem:[%s3819 + $0x128] sm:$0xff]
        %v3858 = vld [vmem:[%s3819 + $0x130] sm:$0xff]
        %v3859 = vld [vmem:[%s3819 + $0x138] sm:$0xff]
        %v3860 = vld [vmem:[%s3819 + $0x140] sm:$0xff]
        %v3861 = vld [vmem:[%s3819 + $0x148] sm:$0xff]
        %v3862 = vpack.c.bf16 %v3714, %v3710
        %v3863 = vpack.c.bf16 %v3716, %v3712
        %v3864 = vpack.c.bf16 %v3764, %v3761
        %v3866 = vshrl.u32 %v3862, 16
        %v3868 = vrot.slane %v3866, 3
        %v3869 = vshll.u32 %v3862, 16
        %v3871 = vrot.slane %v3869, 4
        %v3872 = vor.u32 %v3868, %v3871
        %v3874 = vshrl.u32 %v3863, 16
        %v3876 = vrot.slane %v3874, 3
        %v3877 = vshll.u32 %v3863, 16
        %v3879 = vrot.slane %v3877, 4
        %v3880 = vor.u32 %v3876, %v3879
        %v3882 = vshrl.u32 %v3864, 16
        %v3884 = vrot.slane %v3882, 3
        %v3885 = vshll.u32 %v3864, 16
        %v3887 = vrot.slane %v3885, 4
        %v3888 = vor.u32 %v3884, %v3887
        %v3933 = vunpack.c.l.b16 %v3820
        %v3934 = vunpack.c.h.b16 %v3820
        %v3935 = vunpack.c.l.b16 %v3821
        %v3936 = vunpack.c.h.b16 %v3821
        %v3937 = vunpack.c.l.b16 %v3822
        %v3938 = vunpack.c.h.b16 %v3822
        %v3939 = vunpack.c.l.b16 %v3823
        %v3940 = vunpack.c.h.b16 %v3823
        %v3941 = vunpack.c.l.b16 %v3824
        %v3942 = vunpack.c.h.b16 %v3824
        %v3943 = vunpack.c.l.b16 %v3825
        %v3944 = vunpack.c.h.b16 %v3825
        %v3945 = vunpack.c.l.b16 %v3826
        %v3946 = vunpack.c.h.b16 %v3826
        %v3947 = vunpack.c.l.b16 %v3827
        %v3948 = vunpack.c.h.b16 %v3827
        %v3949 = vunpack.c.l.b16 %v3828
        %v3950 = vunpack.c.h.b16 %v3828
        %v3951 = vunpack.c.l.b16 %v3829
        %v3952 = vunpack.c.h.b16 %v3829
        %v3953 = vunpack.c.l.b16 %v3830
        %v3954 = vunpack.c.h.b16 %v3830
        %v3955 = vunpack.c.l.b16 %v3831
        %v3956 = vunpack.c.h.b16 %v3831
        %v3957 = vunpack.c.l.b16 %v3832
        %v3958 = vunpack.c.h.b16 %v3832
        %v3959 = vunpack.c.l.b16 %v3833
        %v3960 = vunpack.c.h.b16 %v3833
        %v3961 = vunpack.c.l.b16 %v3834
        %v3962 = vunpack.c.h.b16 %v3834
        %v3963 = vunpack.c.l.b16 %v3835
        %v3964 = vunpack.c.h.b16 %v3835
        %v3965 = vunpack.c.l.b16 %v3836
        %v3966 = vunpack.c.h.b16 %v3836
        %v3967 = vunpack.c.l.b16 %v3837
        %v3968 = vunpack.c.h.b16 %v3837
        %v3969 = vunpack.c.l.b16 %v3838
        %v3970 = vunpack.c.h.b16 %v3838
        %v3971 = vunpack.c.l.b16 %v3839
        %v3972 = vunpack.c.h.b16 %v3839
        %v3973 = vunpack.c.l.b16 %v3840
        %v3974 = vunpack.c.h.b16 %v3840
        %v3975 = vunpack.c.l.b16 %v3841
        %v3976 = vunpack.c.h.b16 %v3841
        %v3977 = vunpack.c.l.b16 %v3842
        %v3978 = vunpack.c.h.b16 %v3842
        %v3979 = vunpack.c.l.b16 %v3843
        %v3980 = vunpack.c.h.b16 %v3843
        %v3981 = vunpack.c.l.b16 %v3844
        %v3982 = vunpack.c.h.b16 %v3844
        %v3983 = vunpack.c.l.b16 %v3845
        %v3984 = vunpack.c.h.b16 %v3845
        %v3985 = vunpack.c.l.b16 %v3846
        %v3986 = vunpack.c.h.b16 %v3846
        %v3987 = vunpack.c.l.b16 %v3847
        %v3988 = vunpack.c.h.b16 %v3847
        %v3989 = vunpack.c.l.b16 %v3848
        %v3990 = vunpack.c.h.b16 %v3848
        %v3991 = vunpack.c.l.b16 %v3849
        %v3992 = vunpack.c.h.b16 %v3849
        %v3993 = vunpack.c.l.b16 %v3850
        %v3994 = vunpack.c.h.b16 %v3850
        %v3995 = vunpack.c.l.b16 %v3851
        %v3996 = vunpack.c.h.b16 %v3851
        %v3997 = vunpack.c.l.b16 %v3852
        %v3998 = vunpack.c.h.b16 %v3852
        %v3999 = vunpack.c.l.b16 %v3853
        %v4000 = vunpack.c.h.b16 %v3853
        %v4001 = vunpack.c.l.b16 %v3854
        %v4002 = vunpack.c.h.b16 %v3854
        %v4003 = vunpack.c.l.b16 %v3855
        %v4004 = vunpack.c.h.b16 %v3855
        %v4005 = vunpack.c.l.b16 %v3856
        %v4006 = vunpack.c.h.b16 %v3856
        %v4007 = vunpack.c.l.b16 %v3857
        %v4008 = vunpack.c.h.b16 %v3857
        %v4009 = vunpack.c.l.b16 %v3858
        %v4010 = vunpack.c.h.b16 %v3858
        %v4011 = vunpack.c.l.b16 %v3859
        %v4012 = vunpack.c.h.b16 %v3859
        %v4013 = vunpack.c.l.b16 %v3860
        %v4014 = vunpack.c.h.b16 %v3860
        %v4015 = vunpack.c.l.b16 %v3861
        %v4016 = vunpack.c.h.b16 %v3861
        %v4017 = vpack.c.b16 %v3935, %v3933
        %v4018 = vpack.c.b16 %v3936, %v3934
        %v4019 = vpack.c.b16 %v3939, %v3937
        %v4020 = vpack.c.b16 %v3940, %v3938
        %v4021 = vpack.c.b16 %v3943, %v3941
        %v4022 = vpack.c.b16 %v3944, %v3942
        %v4023 = vpack.c.b16 %v3947, %v3945
        %v4024 = vpack.c.b16 %v3948, %v3946
        %v4025 = vpack.c.b16 %v3951, %v3949
        %v4026 = vpack.c.b16 %v3952, %v3950
        %v4027 = vpack.c.b16 %v3955, %v3953
        %v4028 = vpack.c.b16 %v3956, %v3954
        %v4029 = vpack.c.b16 %v3959, %v3957
        %v4030 = vpack.c.b16 %v3960, %v3958
        %v4031 = vpack.c.b16 %v3963, %v3961
        %v4032 = vpack.c.b16 %v3964, %v3962
        %v4033 = vpack.c.b16 %v3967, %v3965
        %v4034 = vpack.c.b16 %v3968, %v3966
        %v4035 = vpack.c.b16 %v3971, %v3969
        %v4036 = vpack.c.b16 %v3972, %v3970
        %v4037 = vpack.c.b16 %v3975, %v3973
        %v4038 = vpack.c.b16 %v3976, %v3974
        %v4039 = vpack.c.b16 %v3979, %v3977
        %v4040 = vpack.c.b16 %v3980, %v3978
        %v4041 = vpack.c.b16 %v3983, %v3981
        %v4042 = vpack.c.b16 %v3984, %v3982
        %v4043 = vpack.c.b16 %v3987, %v3985
        %v4044 = vpack.c.b16 %v3988, %v3986
        %v4045 = vpack.c.b16 %v3991, %v3989
        %v4046 = vpack.c.b16 %v3992, %v3990
        %v4047 = vpack.c.b16 %v3995, %v3993
        %v4048 = vpack.c.b16 %v3996, %v3994
        %v4049 = vpack.c.b16 %v3999, %v3997
        %v4050 = vpack.c.b16 %v4000, %v3998
        %v4051 = vpack.c.b16 %v4003, %v4001
        %v4052 = vpack.c.b16 %v4004, %v4002
        %v4053 = vpack.c.b16 %v4007, %v4005
        %v4054 = vpack.c.b16 %v4008, %v4006
        %v4055 = vpack.c.b16 %v4011, %v4009
        %v4056 = vpack.c.b16 %v4012, %v4010
        %v4057 = vpack.c.b16 %v4015, %v4013
        %v4058 = vpack.c.b16 %v4016, %v4014
        %vm4101 = vcmask 654336
        %v4103 = vsel %vm4101, %v3888, 0
        %4105 = vmatprep.subr.bf16.mxu0 %v4018
        %4106 = vmatpush1.bf16.msra.mxu0 %v4017
        %4107 = vmatprep.subr.bf16.mxu0 %v4020
        %4108 = vmatpush1.bf16.msra.mxu0 %v4019
        %4109 = vmatprep.subr.bf16.mxu0 %v4022
        %4110 = vmatpush1.bf16.msra.mxu0 %v4021
        %4111 = vmatprep.subr.bf16.mxu0 %v4024
        %4112 = vmatpush1.bf16.msra.mxu0 %v4023
        %4113 = vmatprep.subr.bf16.mxu0 %v4026
        %4114 = vmatpush1.bf16.msra.mxu0 %v4025
        %4115 = vmatprep.subr.bf16.mxu0 %v4028
        %4116 = vmatpush1.bf16.msra.mxu0 %v4027
        %4117 = vmatprep.subr.bf16.mxu0 %v4030
        %4118 = vmatpush1.bf16.msra.mxu0 %v4029
        %4119 = vmatprep.subr.bf16.mxu0 %v4032
        %4120 = vmatpush1.bf16.msra.mxu0 %v4031
        %4121 = vmatprep.subr.bf16.mxu0 %v4034
        %4122 = vmatpush1.bf16.msra.mxu0 %v4033
        %4123 = vmatprep.subr.bf16.mxu0 %v4036
        %4124 = vmatpush1.bf16.msra.mxu0 %v4035
        %4125 = vmatprep.subr.bf16.mxu0 %v4038
        %4126 = vmatpush1.bf16.msra.mxu0 %v4037
        %4127 = vmatprep.subr.bf16.mxu0 %v4040
        %4128 = vmatpush1.bf16.msra.mxu0 %v4039
        %4129 = vmatprep.subr.bf16.mxu0 %v4042
        %4130 = vmatpush1.bf16.msra.mxu0 %v4041
        %4131 = vmatprep.subr.bf16.mxu0 %v4044
        %4132 = vmatpush1.bf16.msra.mxu0 %v4043
        %4133 = vmatprep.subr.bf16.mxu0 %v4046
        %4134 = vmatpush1.bf16.msra.mxu0 %v4045
        %4135 = vmatprep.subr.bf16.mxu0 %v4048
        %4136 = vmatpush1.bf16.msra.mxu0 %v4047
        %4137 = vmatprep.mubr.bf16.mxu0 %v3880
        %4138 = vmatmul.mubr.bf16.gmra.mrb[0].mxu0 %v3872
        %v4139 = vpop.f32.mrb[0].mxu0
        %v4140 = vadd.f32 0.0, %v4139
        %v4141 = vpop.f32.mrb[0].mxu0
        %v4142 = vadd.f32 0.0, %v4141
        %v4143 = vpop.f32.mrb[0].mxu0
        %v4144 = vpop.f32.mrb[0].mxu0
        %4145 = vdwg.mxu0
        %4146 = vmatprep.subr.bf16.mxu0 %v4050
        %4147 = vmatpush1.bf16.msra.mxu0 %v4049
        %4148 = vmatprep.subr.bf16.mxu0 %v4052
        %4149 = vmatpush1.bf16.msra.mxu0 %v4051
        %4150 = vmatprep.subr.bf16.mxu0 %v4054
        %4151 = vmatpush1.bf16.msra.mxu0 %v4053
        %4152 = vmatprep.subr.bf16.mxu0 %v4056
        %4153 = vmatpush1.bf16.msra.mxu0 %v4055
        %4154 = vmatprep.subr.bf16.mxu0 %v4058
        %4155 = vmatpush1.bf16.msra.mxu0 %v4057
        %4156 = vmatprep.subr.bf16.mxu0 0
        %4157 = vmatpush1.bf16.msra.mxu0 0
        %4158 = vmatprep.subr.bf16.mxu0 0
        %4159 = vmatpush1.bf16.msra.mxu0 0
        %4160 = vmatprep.subr.bf16.mxu0 0
        %4161 = vmatpush1.bf16.msra.mxu0 0
        %4162 = vmatprep.subr.bf16.mxu0 0
        %4163 = vmatpush1.bf16.msra.mxu0 0
        %4164 = vmatprep.subr.bf16.mxu0 0
        %4165 = vmatpush1.bf16.msra.mxu0 0
        %4166 = vmatprep.subr.bf16.mxu0 0
        %4167 = vmatpush1.bf16.msra.mxu0 0
        %4168 = vmatprep.subr.bf16.mxu0 0
        %4169 = vmatpush1.bf16.msra.mxu0 0
        %4170 = vmatprep.subr.bf16.mxu0 0
        %4171 = vmatpush1.bf16.msra.mxu0 0
        %4172 = vmatprep.subr.bf16.mxu0 0
        %4173 = vmatpush1.bf16.msra.mxu0 0
        %4174 = vmatprep.subr.bf16.mxu0 0
        %4175 = vmatpush1.bf16.msra.mxu0 0
        %4176 = vmatprep.subr.bf16.mxu0 0
        %4177 = vmatpush1.bf16.msra.mxu0 0
        %4178 = vmatprep.mubr.bf16.mxu0 0
        %4179 = vmatmul.mubr.bf16.gmra.mrb[0].mxu0 %v4103
        %v4180 = vpop.f32.mrb[0].mxu0
        %v4181 = vadd.f32 %v4140, %v4180
        %v4182 = vpop.f32.mrb[0].mxu0
        %v4183 = vadd.f32 %v4142, %v4182
        %v4184 = vpop.f32.mrb[0].mxu0
        %v4185 = vpop.f32.mrb[0].mxu0
        %4186 = vdwg.mxu0
        %v4229 = vunpack.c.l.b16 %v3774
        %v4230 = vunpack.c.h.b16 %v3774
        %v4231 = vunpack.c.l.b16 %v3775
        %v4232 = vunpack.c.h.b16 %v3775
        %v4233 = vunpack.c.l.b16 %v3776
        %v4234 = vunpack.c.h.b16 %v3776
        %v4235 = vunpack.c.l.b16 %v3777
        %v4236 = vunpack.c.h.b16 %v3777
        %v4237 = vunpack.c.l.b16 %v3778
        %v4238 = vunpack.c.h.b16 %v3778
        %v4239 = vunpack.c.l.b16 %v3779
        %v4240 = vunpack.c.h.b16 %v3779
        %v4241 = vunpack.c.l.b16 %v3780
        %v4242 = vunpack.c.h.b16 %v3780
        %v4243 = vunpack.c.l.b16 %v3781
        %v4244 = vunpack.c.h.b16 %v3781
        %v4245 = vunpack.c.l.b16 %v3782
        %v4246 = vunpack.c.h.b16 %v3782
        %v4247 = vunpack.c.l.b16 %v3783
        %v4248 = vunpack.c.h.b16 %v3783
        %v4249 = vunpack.c.l.b16 %v3784
        %v4250 = vunpack.c.h.b16 %v3784
        %v4251 = vunpack.c.l.b16 %v3785
        %v4252 = vunpack.c.h.b16 %v3785
        %v4253 = vunpack.c.l.b16 %v3786
        %v4254 = vunpack.c.h.b16 %v3786
        %v4255 = vunpack.c.l.b16 %v3787
        %v4256 = vunpack.c.h.b16 %v3787
        %v4257 = vunpack.c.l.b16 %v3788
        %v4258 = vunpack.c.h.b16 %v3788
        %v4259 = vunpack.c.l.b16 %v3789
        %v4260 = vunpack.c.h.b16 %v3789
        %v4261 = vunpack.c.l.b16 %v3790
        %v4262 = vunpack.c.h.b16 %v3790
        %v4263 = vunpack.c.l.b16 %v3791
        %v4264 = vunpack.c.h.b16 %v3791
        %v4265 = vunpack.c.l.b16 %v3792
        %v4266 = vunpack.c.h.b16 %v3792
        %v4267 = vunpack.c.l.b16 %v3793
        %v4268 = vunpack.c.h.b16 %v3793
        %v4269 = vunpack.c.l.b16 %v3794
        %v4270 = vunpack.c.h.b16 %v3794
        %v4271 = vunpack.c.l.b16 %v3795
        %v4272 = vunpack.c.h.b16 %v3795
        %v4273 = vunpack.c.l.b16 %v3796
        %v4274 = vunpack.c.h.b16 %v3796
        %v4275 = vunpack.c.l.b16 %v3797
        %v4276 = vunpack.c.h.b16 %v3797
        %v4277 = vunpack.c.l.b16 %v3798
        %v4278 = vunpack.c.h.b16 %v3798
        %v4279 = vunpack.c.l.b16 %v3799
        %v4280 = vunpack.c.h.b16 %v3799
        %v4281 = vunpack.c.l.b16 %v3800
        %v4282 = vunpack.c.h.b16 %v3800
        %v4283 = vunpack.c.l.b16 %v3801
        %v4284 = vunpack.c.h.b16 %v3801
        %v4285 = vunpack.c.l.b16 %v3802
        %v4286 = vunpack.c.h.b16 %v3802
        %v4287 = vunpack.c.l.b16 %v3803
        %v4288 = vunpack.c.h.b16 %v3803
        %v4289 = vunpack.c.l.b16 %v3804
        %v4290 = vunpack.c.h.b16 %v3804
        %v4291 = vunpack.c.l.b16 %v3805
        %v4292 = vunpack.c.h.b16 %v3805
        %v4293 = vunpack.c.l.b16 %v3806
        %v4294 = vunpack.c.h.b16 %v3806
        %v4295 = vunpack.c.l.b16 %v3807
        %v4296 = vunpack.c.h.b16 %v3807
        %v4297 = vunpack.c.l.b16 %v3808
        %v4298 = vunpack.c.h.b16 %v3808
        %v4299 = vunpack.c.l.b16 %v3809
        %v4300 = vunpack.c.h.b16 %v3809
        %v4301 = vunpack.c.l.b16 %v3810
        %v4302 = vunpack.c.h.b16 %v3810
        %v4303 = vunpack.c.l.b16 %v3811
        %v4304 = vunpack.c.h.b16 %v3811
        %v4305 = vunpack.c.l.b16 %v3812
        %v4306 = vunpack.c.h.b16 %v3812
        %v4307 = vunpack.c.l.b16 %v3813
        %v4308 = vunpack.c.h.b16 %v3813
        %v4309 = vunpack.c.l.b16 %v3814
        %v4310 = vunpack.c.h.b16 %v3814
        %v4311 = vunpack.c.l.b16 %v3815
        %v4312 = vunpack.c.h.b16 %v3815
        %v4313 = vpack.c.b16 %v4231, %v4229
        %v4314 = vpack.c.b16 %v4232, %v4230
        %v4315 = vpack.c.b16 %v4235, %v4233
        %v4316 = vpack.c.b16 %v4236, %v4234
        %v4317 = vpack.c.b16 %v4239, %v4237
        %v4318 = vpack.c.b16 %v4240, %v4238
        %v4319 = vpack.c.b16 %v4243, %v4241
        %v4320 = vpack.c.b16 %v4244, %v4242
        %v4321 = vpack.c.b16 %v4247, %v4245
        %v4322 = vpack.c.b16 %v4248, %v4246
        %v4323 = vpack.c.b16 %v4251, %v4249
        %v4324 = vpack.c.b16 %v4252, %v4250
        %v4325 = vpack.c.b16 %v4255, %v4253
        %v4326 = vpack.c.b16 %v4256, %v4254
        %v4327 = vpack.c.b16 %v4259, %v4257
        %v4328 = vpack.c.b16 %v4260, %v4258
        %v4329 = vpack.c.b16 %v4263, %v4261
        %v4330 = vpack.c.b16 %v4264, %v4262
        %v4331 = vpack.c.b16 %v4267, %v4265
        %v4332 = vpack.c.b16 %v4268, %v4266
        %v4333 = vpack.c.b16 %v4271, %v4269
        %v4334 = vpack.c.b16 %v4272, %v4270
        %v4335 = vpack.c.b16 %v4275, %v4273
        %v4336 = vpack.c.b16 %v4276, %v4274
        %v4337 = vpack.c.b16 %v4279, %v4277
        %v4338 = vpack.c.b16 %v4280, %v4278
        %v4339 = vpack.c.b16 %v4283, %v4281
        %v4340 = vpack.c.b16 %v4284, %v4282
        %v4341 = vpack.c.b16 %v4287, %v4285
        %v4342 = vpack.c.b16 %v4288, %v4286
        %v4343 = vpack.c.b16 %v4291, %v4289
        %v4344 = vpack.c.b16 %v4292, %v4290
        %v4345 = vpack.c.b16 %v4295, %v4293
        %v4346 = vpack.c.b16 %v4296, %v4294
        %v4347 = vpack.c.b16 %v4299, %v4297
        %v4348 = vpack.c.b16 %v4300, %v4298
        %v4349 = vpack.c.b16 %v4303, %v4301
        %v4350 = vpack.c.b16 %v4304, %v4302
        %v4351 = vpack.c.b16 %v4307, %v4305
        %v4352 = vpack.c.b16 %v4308, %v4306
        %v4353 = vpack.c.b16 %v4311, %v4309
        %v4354 = vpack.c.b16 %v4312, %v4310
        %v4398 = vsel %vm4101, %v3818, 0
        %4400 = vmatprep.subr.bf16.mxu0 %v4314
        %4401 = vmatpush1.bf16.msra.mxu0 %v4313
        %4402 = vmatprep.subr.bf16.mxu0 %v4316
        %4403 = vmatpush1.bf16.msra.mxu0 %v4315
        %4404 = vmatprep.subr.bf16.mxu0 %v4318
        %4405 = vmatpush1.bf16.msra.mxu0 %v4317
        %4406 = vmatprep.subr.bf16.mxu0 %v4320
        %4407 = vmatpush1.bf16.msra.mxu0 %v4319
        %4408 = vmatprep.subr.bf16.mxu0 %v4322
        %4409 = vmatpush1.bf16.msra.mxu0 %v4321
        %4410 = vmatprep.subr.bf16.mxu0 %v4324
        %4411 = vmatpush1.bf16.msra.mxu0 %v4323
        %4412 = vmatprep.subr.bf16.mxu0 %v4326
        %4413 = vmatpush1.bf16.msra.mxu0 %v4325
        %4414 = vmatprep.subr.bf16.mxu0 %v4328
        %4415 = vmatpush1.bf16.msra.mxu0 %v4327
        %4416 = vmatprep.subr.bf16.mxu0 %v4330
        %4417 = vmatpush1.bf16.msra.mxu0 %v4329
        %4418 = vmatprep.subr.bf16.mxu0 %v4332
        %4419 = vmatpush1.bf16.msra.mxu0 %v4331
        %4420 = vmatprep.subr.bf16.mxu0 %v4334
        %4421 = vmatpush1.bf16.msra.mxu0 %v4333
        %4422 = vmatprep.subr.bf16.mxu0 %v4336
        %4423 = vmatpush1.bf16.msra.mxu0 %v4335
        %4424 = vmatprep.subr.bf16.mxu0 %v4338
        %4425 = vmatpush1.bf16.msra.mxu0 %v4337
        %4426 = vmatprep.subr.bf16.mxu0 %v4340
        %4427 = vmatpush1.bf16.msra.mxu0 %v4339
        %4428 = vmatprep.subr.bf16.mxu0 %v4342
        %4429 = vmatpush1.bf16.msra.mxu0 %v4341
        %4430 = vmatprep.subr.bf16.mxu0 %v4344
        %4431 = vmatpush1.bf16.msra.mxu0 %v4343
        %4432 = vmatprep.mubr.bf16.mxu0 %v3817
        %4433 = vmatmul.mubr.bf16.gmra.mrb[0].mxu0 %v3816
        %v4434 = vpop.f32.mrb[0].mxu0
        %v4435 = vadd.f32 %v4181, %v4434
        %v4436 = vpop.f32.mrb[0].mxu0
        %v4437 = vadd.f32 %v4183, %v4436
        %v4438 = vpop.f32.mrb[0].mxu0
        %v4439 = vpop.f32.mrb[0].mxu0
        %4440 = vdwg.mxu0
        %4441 = vmatprep.subr.bf16.mxu0 %v4346
        %4442 = vmatpush1.bf16.msra.mxu0 %v4345
        %4443 = vmatprep.subr.bf16.mxu0 %v4348
        %4444 = vmatpush1.bf16.msra.mxu0 %v4347
        %4445 = vmatprep.subr.bf16.mxu0 %v4350
        %4446 = vmatpush1.bf16.msra.mxu0 %v4349
        %4447 = vmatprep.subr.bf16.mxu0 %v4352
        %4448 = vmatpush1.bf16.msra.mxu0 %v4351
        %4449 = vmatprep.subr.bf16.mxu0 %v4354
        %4450 = vmatpush1.bf16.msra.mxu0 %v4353
        %4451 = vmatprep.subr.bf16.mxu0 0
        %4452 = vmatpush1.bf16.msra.mxu0 0
        %4453 = vmatprep.subr.bf16.mxu0 0
        %4454 = vmatpush1.bf16.msra.mxu0 0
        %4455 = vmatprep.subr.bf16.mxu0 0
        %4456 = vmatpush1.bf16.msra.mxu0 0
        %4457 = vmatprep.subr.bf16.mxu0 0
        %4458 = vmatpush1.bf16.msra.mxu0 0
        %4459 = vmatprep.subr.bf16.mxu0 0
        %4460 = vmatpush1.bf16.msra.mxu0 0
        %4461 = vmatprep.subr.bf16.mxu0 0
        %4462 = vmatpush1.bf16.msra.mxu0 0
        %4463 = vmatprep.subr.bf16.mxu0 0
        %4464 = vmatpush1.bf16.msra.mxu0 0
        %4465 = vmatprep.subr.bf16.mxu0 0
        %4466 = vmatpush1.bf16.msra.mxu0 0
        %4467 = vmatprep.subr.bf16.mxu0 0
        %4468 = vmatpush1.bf16.msra.mxu0 0
        %4469 = vmatprep.subr.bf16.mxu0 0
        %4470 = vmatpush1.bf16.msra.mxu0 0
        %4471 = vmatprep.subr.bf16.mxu0 0
        %4472 = vmatpush1.bf16.msra.mxu0 0
        %4473 = vmatprep.mubr.bf16.mxu0 0
        %4474 = vmatmul.mubr.bf16.gmra.mrb[0].mxu0 %v4398
        %v4475 = vpop.f32.mrb[0].mxu0
        %v4476 = vadd.f32 %v4435, %v4475
        %v4477 = vpop.f32.mrb[0].mxu0
        %v4478 = vadd.f32 %v4437, %v4477
        %v4479 = vpop.f32.mrb[0].mxu0
        %v4480 = vpop.f32.mrb[0].mxu0
        %4481 = vdwg.mxu0
        %s4482 = scalar_lea.vmem %s25, 672
        %v4483 = vld [vmem:[%s4482] sm:$0xff]
        %v4484 = vld [vmem:[%s4482 + $0x8] sm:$0xff]
        %v4485 = vld [vmem:[%s4482 + $0x10] sm:$0xff]
        %v4486 = vld [vmem:[%s4482 + $0x18] sm:$0xff]
        %v4487 = vld [vmem:[%s4482 + $0x20] sm:$0xff]
        %v4488 = vld [vmem:[%s4482 + $0x28] sm:$0xff]
        %v4489 = vld [vmem:[%s4482 + $0x30] sm:$0xff]
        %v4490 = vld [vmem:[%s4482 + $0x38] sm:$0xff]
        %v4491 = vld [vmem:[%s4482 + $0x40] sm:$0xff]
        %v4492 = vld [vmem:[%s4482 + $0x48] sm:$0xff]
        %v4493 = vld [vmem:[%s4482 + $0x50] sm:$0xff]
        %v4494 = vld [vmem:[%s4482 + $0x58] sm:$0xff]
        %v4495 = vld [vmem:[%s4482 + $0x60] sm:$0xff]
        %v4496 = vld [vmem:[%s4482 + $0x68] sm:$0xff]
        %v4497 = vld [vmem:[%s4482 + $0x70] sm:$0xff]
        %v4498 = vld [vmem:[%s4482 + $0x78] sm:$0xff]
        %v4499 = vld [vmem:[%s4482 + $0x80] sm:$0xff]
        %v4500 = vld [vmem:[%s4482 + $0x88] sm:$0xff]
        %v4501 = vld [vmem:[%s4482 + $0x90] sm:$0xff]
        %v4502 = vld [vmem:[%s4482 + $0x98] sm:$0xff]
        %v4503 = vld [vmem:[%s4482 + $0xa0] sm:$0xff]
        %v4504 = vld [vmem:[%s4482 + $0xa8] sm:$0xff]
        %v4505 = vld [vmem:[%s4482 + $0xb0] sm:$0xff]
        %v4506 = vld [vmem:[%s4482 + $0xb8] sm:$0xff]
        %v4507 = vld [vmem:[%s4482 + $0xc0] sm:$0xff]
        %v4508 = vld [vmem:[%s4482 + $0xc8] sm:$0xff]
        %v4509 = vld [vmem:[%s4482 + $0xd0] sm:$0xff]
        %v4510 = vld [vmem:[%s4482 + $0xd8] sm:$0xff]
        %v4511 = vld [vmem:[%s4482 + $0xe0] sm:$0xff]
        %v4512 = vld [vmem:[%s4482 + $0xe8] sm:$0xff]
        %v4513 = vld [vmem:[%s4482 + $0xf0] sm:$0xff]
        %v4514 = vld [vmem:[%s4482 + $0xf8] sm:$0xff]
        %v4515 = vld [vmem:[%s4482 + $0x100] sm:$0xff]
        %v4516 = vld [vmem:[%s4482 + $0x108] sm:$0xff]
        %v4517 = vld [vmem:[%s4482 + $0x110] sm:$0xff]
        %v4518 = vld [vmem:[%s4482 + $0x118] sm:$0xff]
        %v4519 = vld [vmem:[%s4482 + $0x120] sm:$0xff]
        %v4520 = vld [vmem:[%s4482 + $0x128] sm:$0xff]
        %v4521 = vld [vmem:[%s4482 + $0x130] sm:$0xff]
        %v4522 = vld [vmem:[%s4482 + $0x138] sm:$0xff]
        %v4523 = vld [vmem:[%s4482 + $0x140] sm:$0xff]
        %v4524 = vld [vmem:[%s4482 + $0x148] sm:$0xff]
        %v4525 = vpack.c.bf16 %v3720, %v3714
        %v4526 = vpack.c.bf16 %v3722, %v3716
        %v4527 = vpack.c.bf16 %v3769, %v3764
        %v4531 = vrot.slane %v4525, 3
        %v4532 = vrot.slane %v4526, 3
        %v4533 = vrot.slane %v4527, 3
        %v4578 = vunpack.c.l.b16 %v4483
        %v4579 = vunpack.c.h.b16 %v4483
        %v4580 = vunpack.c.l.b16 %v4484
        %v4581 = vunpack.c.h.b16 %v4484
        %v4582 = vunpack.c.l.b16 %v4485
        %v4583 = vunpack.c.h.b16 %v4485
        %v4584 = vunpack.c.l.b16 %v4486
        %v4585 = vunpack.c.h.b16 %v4486
        %v4586 = vunpack.c.l.b16 %v4487
        %v4587 = vunpack.c.h.b16 %v4487
        %v4588 = vunpack.c.l.b16 %v4488
        %v4589 = vunpack.c.h.b16 %v4488
        %v4590 = vunpack.c.l.b16 %v4489
        %v4591 = vunpack.c.h.b16 %v4489
        %v4592 = vunpack.c.l.b16 %v4490
        %v4593 = vunpack.c.h.b16 %v4490
        %v4594 = vunpack.c.l.b16 %v4491
        %v4595 = vunpack.c.h.b16 %v4491
        %v4596 = vunpack.c.l.b16 %v4492
        %v4597 = vunpack.c.h.b16 %v4492
        %v4598 = vunpack.c.l.b16 %v4493
        %v4599 = vunpack.c.h.b16 %v4493
        %v4600 = vunpack.c.l.b16 %v4494
        %v4601 = vunpack.c.h.b16 %v4494
        %v4602 = vunpack.c.l.b16 %v4495
        %v4603 = vunpack.c.h.b16 %v4495
        %v4604 = vunpack.c.l.b16 %v4496
        %v4605 = vunpack.c.h.b16 %v4496
        %v4606 = vunpack.c.l.b16 %v4497
        %v4607 = vunpack.c.h.b16 %v4497
        %v4608 = vunpack.c.l.b16 %v4498
        %v4609 = vunpack.c.h.b16 %v4498
        %v4610 = vunpack.c.l.b16 %v4499
        %v4611 = vunpack.c.h.b16 %v4499
        %v4612 = vunpack.c.l.b16 %v4500
        %v4613 = vunpack.c.h.b16 %v4500
        %v4614 = vunpack.c.l.b16 %v4501
        %v4615 = vunpack.c.h.b16 %v4501
        %v4616 = vunpack.c.l.b16 %v4502
        %v4617 = vunpack.c.h.b16 %v4502
        %v4618 = vunpack.c.l.b16 %v4503
        %v4619 = vunpack.c.h.b16 %v4503
        %v4620 = vunpack.c.l.b16 %v4504
        %v4621 = vunpack.c.h.b16 %v4504
        %v4622 = vunpack.c.l.b16 %v4505
        %v4623 = vunpack.c.h.b16 %v4505
        %v4624 = vunpack.c.l.b16 %v4506
        %v4625 = vunpack.c.h.b16 %v4506
        %v4626 = vunpack.c.l.b16 %v4507
        %v4627 = vunpack.c.h.b16 %v4507
        %v4628 = vunpack.c.l.b16 %v4508
        %v4629 = vunpack.c.h.b16 %v4508
        %v4630 = vunpack.c.l.b16 %v4509
        %v4631 = vunpack.c.h.b16 %v4509
        %v4632 = vunpack.c.l.b16 %v4510
        %v4633 = vunpack.c.h.b16 %v4510
        %v4634 = vunpack.c.l.b16 %v4511
        %v4635 = vunpack.c.h.b16 %v4511
        %v4636 = vunpack.c.l.b16 %v4512
        %v4637 = vunpack.c.h.b16 %v4512
        %v4638 = vunpack.c.l.b16 %v4513
        %v4639 = vunpack.c.h.b16 %v4513
        %v4640 = vunpack.c.l.b16 %v4514
        %v4641 = vunpack.c.h.b16 %v4514
        %v4642 = vunpack.c.l.b16 %v4515
        %v4643 = vunpack.c.h.b16 %v4515
        %v4644 = vunpack.c.l.b16 %v4516
        %v4645 = vunpack.c.h.b16 %v4516
        %v4646 = vunpack.c.l.b16 %v4517
        %v4647 = vunpack.c.h.b16 %v4517
        %v4648 = vunpack.c.l.b16 %v4518
        %v4649 = vunpack.c.h.b16 %v4518
        %v4650 = vunpack.c.l.b16 %v4519
        %v4651 = vunpack.c.h.b16 %v4519
        %v4652 = vunpack.c.l.b16 %v4520
        %v4653 = vunpack.c.h.b16 %v4520
        %v4654 = vunpack.c.l.b16 %v4521
        %v4655 = vunpack.c.h.b16 %v4521
        %v4656 = vunpack.c.l.b16 %v4522
        %v4657 = vunpack.c.h.b16 %v4522
        %v4658 = vunpack.c.l.b16 %v4523
        %v4659 = vunpack.c.h.b16 %v4523
        %v4660 = vunpack.c.l.b16 %v4524
        %v4661 = vunpack.c.h.b16 %v4524
        %v4662 = vpack.c.b16 %v4580, %v4578
        %v4663 = vpack.c.b16 %v4581, %v4579
        %v4664 = vpack.c.b16 %v4584, %v4582
        %v4665 = vpack.c.b16 %v4585, %v4583
        %v4666 = vpack.c.b16 %v4588, %v4586
        %v4667 = vpack.c.b16 %v4589, %v4587
        %v4668 = vpack.c.b16 %v4592, %v4590
        %v4669 = vpack.c.b16 %v4593, %v4591
        %v4670 = vpack.c.b16 %v4596, %v4594
        %v4671 = vpack.c.b16 %v4597, %v4595
        %v4672 = vpack.c.b16 %v4600, %v4598
        %v4673 = vpack.c.b16 %v4601, %v4599
        %v4674 = vpack.c.b16 %v4604, %v4602
        %v4675 = vpack.c.b16 %v4605, %v4603
        %v4676 = vpack.c.b16 %v4608, %v4606
        %v4677 = vpack.c.b16 %v4609, %v4607
        %v4678 = vpack.c.b16 %v4612, %v4610
        %v4679 = vpack.c.b16 %v4613, %v4611
        %v4680 = vpack.c.b16 %v4616, %v4614
        %v4681 = vpack.c.b16 %v4617, %v4615
        %v4682 = vpack.c.b16 %v4620, %v4618
        %v4683 = vpack.c.b16 %v4621, %v4619
        %v4684 = vpack.c.b16 %v4624, %v4622
        %v4685 = vpack.c.b16 %v4625, %v4623
        %v4686 = vpack.c.b16 %v4628, %v4626
        %v4687 = vpack.c.b16 %v4629, %v4627
        %v4688 = vpack.c.b16 %v4632, %v4630
        %v4689 = vpack.c.b16 %v4633, %v4631
        %v4690 = vpack.c.b16 %v4636, %v4634
        %v4691 = vpack.c.b16 %v4637, %v4635
        %v4692 = vpack.c.b16 %v4640, %v4638
        %v4693 = vpack.c.b16 %v4641, %v4639
        %v4694 = vpack.c.b16 %v4644, %v4642
        %v4695 = vpack.c.b16 %v4645, %v4643
        %v4696 = vpack.c.b16 %v4648, %v4646
        %v4697 = vpack.c.b16 %v4649, %v4647
        %v4698 = vpack.c.b16 %v4652, %v4650
        %v4699 = vpack.c.b16 %v4653, %v4651
        %v4700 = vpack.c.b16 %v4656, %v4654
        %v4701 = vpack.c.b16 %v4657, %v4655
        %v4702 = vpack.c.b16 %v4660, %v4658
        %v4703 = vpack.c.b16 %v4661, %v4659
        %v4747 = vsel %vm4101, %v4533, 0
        %4749 = vmatprep.subr.bf16.mxu0 %v4663
        %4750 = vmatpush1.bf16.msra.mxu0 %v4662
        %4751 = vmatprep.subr.bf16.mxu0 %v4665
        %4752 = vmatpush1.bf16.msra.mxu0 %v4664
        %4753 = vmatprep.subr.bf16.mxu0 %v4667
        %4754 = vmatpush1.bf16.msra.mxu0 %v4666
        %4755 = vmatprep.subr.bf16.mxu0 %v4669
        %4756 = vmatpush1.bf16.msra.mxu0 %v4668
        %4757 = vmatprep.subr.bf16.mxu0 %v4671
        %4758 = vmatpush1.bf16.msra.mxu0 %v4670
        %4759 = vmatprep.subr.bf16.mxu0 %v4673
        %4760 = vmatpush1.bf16.msra.mxu0 %v4672
        %4761 = vmatprep.subr.bf16.mxu0 %v4675
        %4762 = vmatpush1.bf16.msra.mxu0 %v4674
        %4763 = vmatprep.subr.bf16.mxu0 %v4677
        %4764 = vmatpush1.bf16.msra.mxu0 %v4676
        %4765 = vmatprep.subr.bf16.mxu0 %v4679
        %4766 = vmatpush1.bf16.msra.mxu0 %v4678
        %4767 = vmatprep.subr.bf16.mxu0 %v4681
        %4768 = vmatpush1.bf16.msra.mxu0 %v4680
        %4769 = vmatprep.subr.bf16.mxu0 %v4683
        %4770 = vmatpush1.bf16.msra.mxu0 %v4682
        %4771 = vmatprep.subr.bf16.mxu0 %v4685
        %4772 = vmatpush1.bf16.msra.mxu0 %v4684
        %4773 = vmatprep.subr.bf16.mxu0 %v4687
        %4774 = vmatpush1.bf16.msra.mxu0 %v4686
        %4775 = vmatprep.subr.bf16.mxu0 %v4689
        %4776 = vmatpush1.bf16.msra.mxu0 %v4688
        %4777 = vmatprep.subr.bf16.mxu0 %v4691
        %4778 = vmatpush1.bf16.msra.mxu0 %v4690
        %4779 = vmatprep.subr.bf16.mxu0 %v4693
        %4780 = vmatpush1.bf16.msra.mxu0 %v4692
        %4781 = vmatprep.mubr.bf16.mxu0 %v4532
        %4782 = vmatmul.mubr.bf16.gmra.mrb[0].mxu0 %v4531
        %v4783 = vpop.f32.mrb[0].mxu0
        %v4784 = vadd.f32 0.0, %v4783
        %v4785 = vpop.f32.mrb[0].mxu0
        %v4786 = vadd.f32 0.0, %v4785
        %v4787 = vpop.f32.mrb[0].mxu0
        %v4788 = vpop.f32.mrb[0].mxu0
        %4789 = vdwg.mxu0
        %4790 = vmatprep.subr.bf16.mxu0 %v4695
        %4791 = vmatpush1.bf16.msra.mxu0 %v4694
        %4792 = vmatprep.subr.bf16.mxu0 %v4697
        %4793 = vmatpush1.bf16.msra.mxu0 %v4696
        %4794 = vmatprep.subr.bf16.mxu0 %v4699
        %4795 = vmatpush1.bf16.msra.mxu0 %v4698
        %4796 = vmatprep.subr.bf16.mxu0 %v4701
        %4797 = vmatpush1.bf16.msra.mxu0 %v4700
        %4798 = vmatprep.subr.bf16.mxu0 %v4703
        %4799 = vmatpush1.bf16.msra.mxu0 %v4702
        %4800 = vmatprep.subr.bf16.mxu0 0
        %4801 = vmatpush1.bf16.msra.mxu0 0
        %4802 = vmatprep.subr.bf16.mxu0 0
        %4803 = vmatpush1.bf16.msra.mxu0 0
        %4804 = vmatprep.subr.bf16.mxu0 0
        %4805 = vmatpush1.bf16.msra.mxu0 0
        %4806 = vmatprep.subr.bf16.mxu0 0
        %4807 = vmatpush1.bf16.msra.mxu0 0
        %4808 = vmatprep.subr.bf16.mxu0 0
        %4809 = vmatpush1.bf16.msra.mxu0 0
        %4810 = vmatprep.subr.bf16.mxu0 0
        %4811 = vmatpush1.bf16.msra.mxu0 0
        %4812 = vmatprep.subr.bf16.mxu0 0
        %4813 = vmatpush1.bf16.msra.mxu0 0
        %4814 = vmatprep.subr.bf16.mxu0 0
        %4815 = vmatpush1.bf16.msra.mxu0 0
        %4816 = vmatprep.subr.bf16.mxu0 0
        %4817 = vmatpush1.bf16.msra.mxu0 0
        %4818 = vmatprep.subr.bf16.mxu0 0
        %4819 = vmatpush1.bf16.msra.mxu0 0
        %4820 = vmatprep.subr.bf16.mxu0 0
        %4821 = vmatpush1.bf16.msra.mxu0 0
        %4822 = vmatprep.mubr.bf16.mxu0 0
        %4823 = vmatmul.mubr.bf16.gmra.mrb[0].mxu0 %v4747
        %v4824 = vpop.f32.mrb[0].mxu0
        %v4825 = vadd.f32 %v4784, %v4824
        %v4826 = vpop.f32.mrb[0].mxu0
        %v4827 = vadd.f32 %v4786, %v4826
        %v4828 = vpop.f32.mrb[0].mxu0
        %v4829 = vpop.f32.mrb[0].mxu0
        %4830 = vdwg.mxu0
        %v4831 = vadd.f32 %v4476, %v4825
        %v4832 = vadd.f32 %v4478, %v4827
        %v4833 = vld [vmem:[#allocation14] sm:$0x3]
        %v4835 = vlaneseq
        %v4836 = vshrl.u32 %v4835, 7
        %v4837 = vsub.s32 0, %v4836
        %v4838 = vrot.slane %v4833, %v4837
        %v4839 = vlaneseq
        %v4840 = vshrl.u32 %v4839, 7
        %v4841 = vsub.s32 1, %v4840
        %v4842 = vrot.slane %v4833, %v4841
        %v4845 = vadd.f32 %v4831, %v4838
        %v4846 = vadd.f32 %v4832, %v4842
        %v4847 = vadd.f32 %v4845, 3.0
        %v4848 = vadd.f32 %v4846, 3.0
        %v4849 = vmax.f32 %v4847, 0.0
        %v4850 = vmax.f32 %v4848, 0.0
        %v4851 = vmin.f32 %v4849, 6.0
        %v4852 = vmin.f32 %v4850, 6.0
        %v4853 = vmul.f32 %v4851, 0.16666667
        %v4854 = vmul.f32 %v4852, 0.16666667
        %v4855 = vmul.f32 %v4845, %v4853
        %v4856 = vmul.f32 %v4846, %v4854
        %v4857 = vld [vmem:[%s35] sm:$0xf]
        %v4858 = vld [vmem:[%s35 + $0x4] sm:$0xf]
        %v4859 = vld [vmem:[%s35 + $0x8] sm:$0xf]
        %v4860 = vld [vmem:[%s35 + $0xc] sm:$0xf]
        %v4861 = vld [vmem:[%s35 + $0x10] sm:$0xf]
        %v4862 = vld [vmem:[%s35 + $0x14] sm:$0xf]
        %v4863 = vld [vmem:[%s35 + $0x18] sm:$0xf]
        %v4864 = vld [vmem:[%s35 + $0x1c] sm:$0xf]
        %v4865 = vld [vmem:[%s35 + $0x20] sm:$0xf]
        %v4866 = vld [vmem:[%s35 + $0x24] sm:$0xf]
        %v4867 = vld [vmem:[%s35 + $0x28] sm:$0xf]
        %v4868 = vld [vmem:[%s35 + $0x2c] sm:$0xf]
        %v4869 = vld [vmem:[%s35 + $0x30] sm:$0xf]
        %v4870 = vld [vmem:[%s35 + $0x34] sm:$0xf]
        %v4871 = vld [vmem:[%s35 + $0x38] sm:$0xf]
        %v4872 = vld [vmem:[%s35 + $0x3c] sm:$0xf]
        %v4873 = vld [vmem:[%s35 + $0x40] sm:$0xf]
        %v4874 = vld [vmem:[%s35 + $0x44] sm:$0xf]
        %v4875 = vld [vmem:[%s35 + $0x48] sm:$0xf]
        %v4876 = vld [vmem:[%s35 + $0x4c] sm:$0xf]
        %v4877 = vld [vmem:[%s35 + $0x50] sm:$0xf]
        %v4878 = vpack.c.bf16 %v4855, %v4855
        %v4879 = vpack.c.bf16 %v4856, %v4856
        %v4880 = vld [vmem:[#allocation17] sm:$0x1]
        %v4882 = vlaneseq
        %v4883 = vshrl.u32 %v4882, 7
        %v4884 = vsub.s32 0, %v4883
        %v4885 = vrot.slane %v4880, %v4884
        %v4908 = vunpack.c.l.b16 %v4857
        %v4909 = vunpack.c.l.b16 %v4858
        %v4910 = vunpack.c.l.b16 %v4859
        %v4911 = vunpack.c.l.b16 %v4860
        %v4912 = vunpack.c.l.b16 %v4861
        %v4913 = vunpack.c.l.b16 %v4862
        %v4914 = vunpack.c.l.b16 %v4863
        %v4915 = vunpack.c.l.b16 %v4864
        %v4916 = vunpack.c.l.b16 %v4865
        %v4917 = vunpack.c.l.b16 %v4866
        %v4918 = vunpack.c.l.b16 %v4867
        %v4919 = vunpack.c.l.b16 %v4868
        %v4920 = vunpack.c.l.b16 %v4869
        %v4921 = vunpack.c.l.b16 %v4870
        %v4922 = vunpack.c.l.b16 %v4871
        %v4923 = vunpack.c.l.b16 %v4872
        %v4924 = vunpack.c.l.b16 %v4873
        %v4925 = vunpack.c.l.b16 %v4874
        %v4926 = vunpack.c.l.b16 %v4875
        %v4927 = vunpack.c.l.b16 %v4876
        %v4928 = vunpack.c.l.b16 %v4877
        %v4929 = vpack.c.b16 %v4909, %v4908
        %v4930 = vpack.c.b16 %v4911, %v4910
        %v4931 = vpack.c.b16 %v4913, %v4912
        %v4932 = vpack.c.b16 %v4915, %v4914
        %v4933 = vpack.c.b16 %v4917, %v4916
        %v4934 = vpack.c.b16 %v4919, %v4918
        %v4935 = vpack.c.b16 %v4921, %v4920
        %v4936 = vpack.c.b16 %v4923, %v4922
        %v4937 = vpack.c.b16 %v4925, %v4924
        %v4938 = vpack.c.b16 %v4927, %v4926
        %v4939 = vpack.c.b16 %v4928, %v4928
        %v4951 = vsel %vm1869, %v4879, 0
        %v4954 = vsel %vm1602, %v4939, 0
        %4956 = vmatprep.subr.bf16.mxu0 0
        %4957 = vmatpush1.bf16.msra.mxu0 %v4929
        %4958 = vmatprep.subr.bf16.mxu0 0
        %4959 = vmatpush1.bf16.msra.mxu0 %v4930
        %4960 = vmatprep.subr.bf16.mxu0 0
        %4961 = vmatpush1.bf16.msra.mxu0 %v4931
        %4962 = vmatprep.subr.bf16.mxu0 0
        %4963 = vmatpush1.bf16.msra.mxu0 %v4932
        %4964 = vmatprep.subr.bf16.mxu0 0
        %4965 = vmatpush1.bf16.msra.mxu0 %v4933
        %4966 = vmatprep.subr.bf16.mxu0 0
        %4967 = vmatpush1.bf16.msra.mxu0 %v4934
        %4968 = vmatprep.subr.bf16.mxu0 0
        %4969 = vmatpush1.bf16.msra.mxu0 %v4935
        %4970 = vmatprep.subr.bf16.mxu0 0
        %4971 = vmatpush1.bf16.msra.mxu0 %v4936
        %4972 = vmatprep.subr.bf16.mxu0 0
        %4973 = vmatpush1.bf16.msra.mxu0 %v4937
        %4974 = vmatprep.subr.bf16.mxu0 0
        %4975 = vmatpush1.bf16.msra.mxu0 %v4938
        %4976 = vmatprep.subr.bf16.mxu0 0
        %4977 = vmatpush1.bf16.msra.mxu0 %v4954
        %4978 = vmatprep.subr.bf16.mxu0 0
        %4979 = vmatpush1.bf16.msra.mxu0 0
        %4980 = vmatprep.subr.bf16.mxu0 0
        %4981 = vmatpush1.bf16.msra.mxu0 0
        %4982 = vmatprep.subr.bf16.mxu0 0
        %4983 = vmatpush1.bf16.msra.mxu0 0
        %4984 = vmatprep.subr.bf16.mxu0 0
        %4985 = vmatpush1.bf16.msra.mxu0 0
        %4986 = vmatprep.subr.bf16.mxu0 0
        %4987 = vmatpush1.bf16.msra.mxu0 0
        %4988 = vmatprep.mubr.bf16.mxu0 %v4951
        %4989 = vmatmul.mubr.bf16.gmra.mrb[0].mxu0 %v4878
        %v4990 = vpop.f32.mrb[0].mxu0
        %v4991 = vadd.f32 %v4885, %v4990
        %v4992 = vpop.f32.mrb[0].mxu0
        %v4993 = vpop.f32.mrb[0].mxu0
        %v4994 = vpop.f32.mrb[0].mxu0
        %4995 = vdwg.mxu0
        %v4996 = vld [vmem:[%s45] sm:$0xff]
        %v4997 = vld [vmem:[%s45 + $0x8] sm:$0xff]
        %v4998 = vld [vmem:[%s45 + $0x10] sm:$0xff]
        %v4999 = vld [vmem:[%s45 + $0x18] sm:$0xff]
        %v5000 = vld [vmem:[%s45 + $0x20] sm:$0xff]
        %v5001 = vld [vmem:[%s45 + $0x28] sm:$0xff]
        %v5002 = vld [vmem:[%s45 + $0x30] sm:$0xff]
        %v5003 = vld [vmem:[%s45 + $0x38] sm:$0xff]
        %v5004 = vld [vmem:[%s45 + $0x40] sm:$0xff]
        %v5005 = vld [vmem:[%s45 + $0x48] sm:$0xff]
        %v5006 = vld [vmem:[%s45 + $0x50] sm:$0xff]
        %v5007 = vld [vmem:[%s45 + $0x58] sm:$0xff]
        %v5008 = vld [vmem:[%s45 + $0x60] sm:$0xff]
        %v5009 = vld [vmem:[%s45 + $0x68] sm:$0xff]
        %v5010 = vpack.c.bf16 %v4991, %v4991
        %v5011 = vld [vmem:[#allocation20] sm:$0x3]
        %v5013 = vlaneseq
        %v5014 = vshrl.u32 %v5013, 7
        %v5015 = vsub.s32 0, %v5014
        %v5016 = vrot.slane %v5011, %v5015
        %v5017 = vlaneseq
        %v5018 = vshrl.u32 %v5017, 7
        %v5019 = vsub.s32 1, %v5018
        %v5020 = vrot.slane %v5011, %v5019
        %v5037 = vunpack.c.l.b16 %v4996
        %v5038 = vunpack.c.h.b16 %v4996
        %v5039 = vunpack.c.l.b16 %v4997
        %v5040 = vunpack.c.h.b16 %v4997
        %v5041 = vunpack.c.l.b16 %v4998
        %v5042 = vunpack.c.h.b16 %v4998
        %v5043 = vunpack.c.l.b16 %v4999
        %v5044 = vunpack.c.h.b16 %v4999
        %v5045 = vunpack.c.l.b16 %v5000
        %v5046 = vunpack.c.h.b16 %v5000
        %v5047 = vunpack.c.l.b16 %v5001
        %v5048 = vunpack.c.h.b16 %v5001
        %v5049 = vunpack.c.l.b16 %v5002
        %v5050 = vunpack.c.h.b16 %v5002
        %v5051 = vunpack.c.l.b16 %v5003
        %v5052 = vunpack.c.h.b16 %v5003
        %v5053 = vunpack.c.l.b16 %v5004
        %v5054 = vunpack.c.h.b16 %v5004
        %v5055 = vunpack.c.l.b16 %v5005
        %v5056 = vunpack.c.h.b16 %v5005
        %v5057 = vunpack.c.l.b16 %v5006
        %v5058 = vunpack.c.h.b16 %v5006
        %v5059 = vunpack.c.l.b16 %v5007
        %v5060 = vunpack.c.h.b16 %v5007
        %v5061 = vunpack.c.l.b16 %v5008
        %v5062 = vunpack.c.h.b16 %v5008
        %v5063 = vunpack.c.l.b16 %v5009
        %v5064 = vunpack.c.h.b16 %v5009
        %v5065 = vpack.c.b16 %v5039, %v5037
        %v5066 = vpack.c.b16 %v5040, %v5038
        %v5067 = vpack.c.b16 %v5043, %v5041
        %v5068 = vpack.c.b16 %v5044, %v5042
        %v5069 = vpack.c.b16 %v5047, %v5045
        %v5070 = vpack.c.b16 %v5048, %v5046
        %v5071 = vpack.c.b16 %v5051, %v5049
        %v5072 = vpack.c.b16 %v5052, %v5050
        %v5073 = vpack.c.b16 %v5055, %v5053
        %v5074 = vpack.c.b16 %v5056, %v5054
        %v5075 = vpack.c.b16 %v5059, %v5057
        %v5076 = vpack.c.b16 %v5060, %v5058
        %v5077 = vpack.c.b16 %v5063, %v5061
        %v5078 = vpack.c.b16 %v5064, %v5062
        %v5094 = vsel %vm2991, %v5010, 0
        %5096 = vmatprep.subr.bf16.mxu0 %v5066
        %5097 = vmatpush1.bf16.msra.mxu0 %v5065
        %5098 = vmatprep.subr.bf16.mxu0 %v5068
        %5099 = vmatpush1.bf16.msra.mxu0 %v5067
        %5100 = vmatprep.subr.bf16.mxu0 %v5070
        %5101 = vmatpush1.bf16.msra.mxu0 %v5069
        %5102 = vmatprep.subr.bf16.mxu0 %v5072
        %5103 = vmatpush1.bf16.msra.mxu0 %v5071
        %5104 = vmatprep.subr.bf16.mxu0 %v5074
        %5105 = vmatpush1.bf16.msra.mxu0 %v5073
        %5106 = vmatprep.subr.bf16.mxu0 %v5076
        %5107 = vmatpush1.bf16.msra.mxu0 %v5075
        %5108 = vmatprep.subr.bf16.mxu0 %v5078
        %5109 = vmatpush1.bf16.msra.mxu0 %v5077
        %5110 = vmatprep.subr.bf16.mxu0 0
        %5111 = vmatpush1.bf16.msra.mxu0 0
        %5112 = vmatprep.subr.bf16.mxu0 0
        %5113 = vmatpush1.bf16.msra.mxu0 0
        %5114 = vmatprep.subr.bf16.mxu0 0
        %5115 = vmatpush1.bf16.msra.mxu0 0
        %5116 = vmatprep.subr.bf16.mxu0 0
        %5117 = vmatpush1.bf16.msra.mxu0 0
        %5118 = vmatprep.subr.bf16.mxu0 0
        %5119 = vmatpush1.bf16.msra.mxu0 0
        %5120 = vmatprep.subr.bf16.mxu0 0
        %5121 = vmatpush1.bf16.msra.mxu0 0
        %5122 = vmatprep.subr.bf16.mxu0 0
        %5123 = vmatpush1.bf16.msra.mxu0 0
        %5124 = vmatprep.subr.bf16.mxu0 0
        %5125 = vmatpush1.bf16.msra.mxu0 0
        %5126 = vmatprep.subr.bf16.mxu0 0
        %5127 = vmatpush1.bf16.msra.mxu0 0
        %5128 = vmatprep.mubr.bf16.mxu0 0
        %5129 = vmatmul.mubr.bf16.gmra.mrb[0].mxu0 %v5094
        %v5130 = vpop.f32.mrb[0].mxu0
        %v5131 = vadd.f32 %v5016, %v5130
        %v5132 = vpop.f32.mrb[0].mxu0
        %v5133 = vadd.f32 %v5020, %v5132
        %v5134 = vpop.f32.mrb[0].mxu0
        %v5135 = vpop.f32.mrb[0].mxu0
        %5136 = vdwg.mxu0
        %v5137 = vadd.f32 %v5131, 3.0
        %v5138 = vadd.f32 %v5133, 3.0
        %v5139 = vmax.f32 %v5137, 0.0
        %v5140 = vmax.f32 %v5138, 0.0
        %v5141 = vmin.f32 %v5139, 6.0
        %v5142 = vmin.f32 %v5140, 6.0
        %v5143 = vmul.f32 %v5141, 0.16666667
        %v5144 = vmul.f32 %v5142, 0.16666667
        %v5145 = vmul.f32 %v5131, %v5143
        %v5146 = vmul.f32 %v5133, %v5144
        %v5147 = vld [vmem:[%s41] sm:$0xf]
        %v5148 = vld [vmem:[%s41 + $0x4] sm:$0xf]
        %v5149 = vld [vmem:[%s41 + $0x8] sm:$0xf]
        %v5150 = vld [vmem:[%s41 + $0xc] sm:$0xf]
        %v5151 = vld [vmem:[%s41 + $0x10] sm:$0x3]
        %v5152 = vpack.c.bf16 %v5145, %v5145
        %v5153 = vpack.c.bf16 %v5146, %v5146
        %v5159 = vunpack.c.l.b16 %v5147
        %v5160 = vunpack.c.l.b16 %v5148
        %v5161 = vunpack.c.l.b16 %v5149
        %v5162 = vunpack.c.l.b16 %v5150
        %v5163 = vunpack.c.l.b16 %v5151
        %v5164 = vpack.c.b16 %v5160, %v5159
        %v5165 = vpack.c.b16 %v5162, %v5161
        %v5166 = vpack.c.b16 %v5163, %v5163
        %vm5167 = vcmask 56320
        %v5169 = vsel %vm5167, %v5164, 0
        %v5172 = vsel %vm5167, %v5165, 0
        %v5175 = vsel %vm5167, %v5166, 0
        %vm5177 = vcmask 1042432
        %v5178 = vsel %vm5177, 4294967295, 65535
        %v5179 = vsel %vm1602, %v5178, 0
        %v5181 = vand.u32 %v5152, %v5179
        %v5184 = vand.u32 %v5153, %v5179
        %5186 = vmatprep.subr.bf16.mxu0 %v5184
        %5187 = vmatpush1.bf16.msra.mxu0 %v5181
        %5188 = vmatprep.subr.bf16.mxu0 0
        %5189 = vmatpush1.bf16.msra.mxu0 0
        %5190 = vmatprep.subr.bf16.mxu0 0
        %5191 = vmatpush1.bf16.msra.mxu0 0
        %5192 = vmatprep.subr.bf16.mxu0 0
        %5193 = vmatpush1.bf16.msra.mxu0 0
        %5194 = vmatprep.subr.bf16.mxu0 0
        %5195 = vmatpush1.bf16.msra.mxu0 0
        %5196 = vmatprep.subr.bf16.mxu0 0
        %5197 = vmatpush1.bf16.msra.mxu0 0
        %5198 = vmatprep.subr.bf16.mxu0 0
        %5199 = vmatpush1.bf16.msra.mxu0 0
        %5200 = vmatprep.subr.bf16.mxu0 0
        %5201 = vmatpush1.bf16.msra.mxu0 0
        %5202 = vmatprep.subr.bf16.mxu0 0
        %5203 = vmatpush1.bf16.msra.mxu0 0
        %5204 = vmatprep.subr.bf16.mxu0 0
        %5205 = vmatpush1.bf16.msra.mxu0 0
        %5206 = vmatprep.subr.bf16.mxu0 0
        %5207 = vmatpush1.bf16.msra.mxu0 0
        %5208 = vmatprep.subr.bf16.mxu0 0
        %5209 = vmatpush1.bf16.msra.mxu0 0
        %5210 = vmatprep.subr.bf16.mxu0 0
        %5211 = vmatpush1.bf16.msra.mxu0 0
        %5212 = vmatprep.subr.bf16.mxu0 0
        %5213 = vmatpush1.bf16.msra.mxu0 0
        %5214 = vmatprep.subr.bf16.mxu0 0
        %5215 = vmatpush1.bf16.msra.mxu0 0
        %5216 = vmatprep.subr.bf16.mxu0 0
        %5217 = vmatpush1.bf16.msra.mxu0 0
        %5218 = vmatprep.mubr.bf16.mxu0 0
        %5219 = vmatmul.mubr.bf16.gmra.mrb[0].mxu0 %v5169
        %v5220 = vpop.f32.mrb[0].mxu0
        %v5221 = vadd.f32 0.0, %v5220
        %v5222 = vpop.f32.mrb[0].mxu0
        %v5223 = vadd.f32 0.0, %v5222
        %v5224 = vpop.f32.mrb[0].mxu0
        %v5225 = vadd.f32 0.0, %v5224
        %v5226 = vpop.f32.mrb[0].mxu0
        %v5227 = vadd.f32 0.0, %v5226
        %5228 = vmatprep.mubr.bf16.mxu0 0
        %5229 = vmatmul.mubr.bf16.gmra.mrb[0].mxu0 %v5172
        %v5230 = vpop.f32.mrb[0].mxu0
        %v5231 = vadd.f32 0.0, %v5230
        %v5232 = vpop.f32.mrb[0].mxu0
        %v5233 = vadd.f32 0.0, %v5232
        %v5234 = vpop.f32.mrb[0].mxu0
        %v5235 = vadd.f32 0.0, %v5234
        %v5236 = vpop.f32.mrb[0].mxu0
        %v5237 = vadd.f32 0.0, %v5236
        %5238 = vmatprep.mubr.bf16.mxu0 0
        %5239 = vmatmul.mubr.bf16.gmra.mrb[0].mxu0 %v5175
        %v5240 = vpop.f32.mrb[0].mxu0
        %v5241 = vadd.f32 0.0, %v5240
        %v5242 = vpop.f32.mrb[0].mxu0
        %v5243 = vadd.f32 0.0, %v5242
        %v5244 = vpop.f32.mrb[0].mxu0
        %v5245 = vpop.f32.mrb[0].mxu0
        %5246 = vdwg.mxu0
        %v5247 = vld [vmem:[%s39] sm:$0xff]
        %v5248 = vld [vmem:[%s39 + $0x8] sm:$0xff]
        %v5249 = vld [vmem:[%s39 + $0x10] sm:$0xff]
        %v5250 = vld [vmem:[%s39 + $0x18] sm:$0xff]
        %v5251 = vld [vmem:[%s39 + $0x20] sm:$0xff]
        %v5252 = vld [vmem:[%s39 + $0x28] sm:$0xff]
        %v5253 = vld [vmem:[%s39 + $0x30] sm:$0xff]
        %v5254 = vld [vmem:[%s39 + $0x38] sm:$0xff]
        %v5255 = vld [vmem:[%s39 + $0x40] sm:$0xff]
        %v5256 = vld [vmem:[%s39 + $0x48] sm:$0xff]
        %v5257 = vld [vmem:[%s39 + $0x50] sm:$0xff]
        %v5258 = vld [vmem:[%s39 + $0x58] sm:$0xff]
        %v5259 = vld [vmem:[%s39 + $0x60] sm:$0xff]
        %v5260 = vld [vmem:[%s39 + $0x68] sm:$0xff]
        %v5261 = vld [vmem:[%s39 + $0x70] sm:$0xff]
        %v5262 = vld [vmem:[%s39 + $0x78] sm:$0xff]
        %v5263 = vld [vmem:[%s39 + $0x80] sm:$0xff]
        %v5264 = vld [vmem:[%s39 + $0x88] sm:$0xff]
        %v5265 = vld [vmem:[%s39 + $0x90] sm:$0xff]
        %v5266 = vld [vmem:[%s39 + $0x98] sm:$0xff]
        %v5267 = vld [vmem:[%s39 + $0xa0] sm:$0xff]
        %v5268 = vld [vmem:[%s39 + $0xa8] sm:$0xff]
        %v5269 = vld [vmem:[%s39 + $0xb0] sm:$0xff]
        %v5270 = vld [vmem:[%s39 + $0xb8] sm:$0xff]
        %v5271 = vld [vmem:[%s39 + $0xc0] sm:$0xff]
        %v5272 = vld [vmem:[%s39 + $0xc8] sm:$0xff]
        %v5273 = vld [vmem:[%s39 + $0xd0] sm:$0xff]
        %v5274 = vld [vmem:[%s39 + $0xd8] sm:$0xff]
        %v5275 = vpack.c.bf16 %v5221, %v5221
        %v5276 = vpack.c.bf16 %v5223, %v5223
        %s5277 = scalar_lea.vmem %s39, 224
        %v5278 = vld [vmem:[%s5277] sm:$0xff]
        %v5279 = vld [vmem:[%s5277 + $0x8] sm:$0xff]
        %v5280 = vld [vmem:[%s5277 + $0x10] sm:$0xff]
        %v5281 = vld [vmem:[%s5277 + $0x18] sm:$0xff]
        %v5282 = vld [vmem:[%s5277 + $0x20] sm:$0xff]
        %v5283 = vld [vmem:[%s5277 + $0x28] sm:$0xff]
        %v5284 = vld [vmem:[%s5277 + $0x30] sm:$0xff]
        %v5285 = vld [vmem:[%s5277 + $0x38] sm:$0xff]
        %v5286 = vld [vmem:[%s5277 + $0x40] sm:$0xff]
        %v5287 = vld [vmem:[%s5277 + $0x48] sm:$0xff]
        %v5288 = vld [vmem:[%s5277 + $0x50] sm:$0xff]
        %v5289 = vld [vmem:[%s5277 + $0x58] sm:$0xff]
        %v5290 = vld [vmem:[%s5277 + $0x60] sm:$0xff]
        %v5291 = vld [vmem:[%s5277 + $0x68] sm:$0xff]
        %v5292 = vld [vmem:[%s5277 + $0x70] sm:$0xff]
        %v5293 = vld [vmem:[%s5277 + $0x78] sm:$0xff]
        %v5294 = vld [vmem:[%s5277 + $0x80] sm:$0xff]
        %v5295 = vld [vmem:[%s5277 + $0x88] sm:$0xff]
        %v5296 = vld [vmem:[%s5277 + $0x90] sm:$0xff]
        %v5297 = vld [vmem:[%s5277 + $0x98] sm:$0xff]
        %v5298 = vld [vmem:[%s5277 + $0xa0] sm:$0xff]
        %v5299 = vld [vmem:[%s5277 + $0xa8] sm:$0xff]
        %v5300 = vld [vmem:[%s5277 + $0xb0] sm:$0xff]
        %v5301 = vld [vmem:[%s5277 + $0xb8] sm:$0xff]
        %v5302 = vld [vmem:[%s5277 + $0xc0] sm:$0xff]
        %v5303 = vld [vmem:[%s5277 + $0xc8] sm:$0xff]
        %v5304 = vld [vmem:[%s5277 + $0xd0] sm:$0xff]
        %v5305 = vld [vmem:[%s5277 + $0xd8] sm:$0xff]
        %v5306 = vpack.c.bf16 %v5225, %v5221
        %v5307 = vpack.c.bf16 %v5227, %v5223
        %v5309 = vshrl.u32 %v5306, 16
        %v5311 = vrot.slane %v5309, 3
        %v5312 = vshll.u32 %v5306, 16
        %v5314 = vrot.slane %v5312, 4
        %v5315 = vor.u32 %v5311, %v5314
        %v5317 = vshrl.u32 %v5307, 16
        %v5319 = vrot.slane %v5317, 3
        %v5320 = vshll.u32 %v5307, 16
        %v5322 = vrot.slane %v5320, 4
        %v5323 = vor.u32 %v5319, %v5322
        %v5353 = vunpack.c.l.b16 %v5278
        %v5354 = vunpack.c.h.b16 %v5278
        %v5355 = vunpack.c.l.b16 %v5279
        %v5356 = vunpack.c.h.b16 %v5279
        %v5357 = vunpack.c.l.b16 %v5280
        %v5358 = vunpack.c.h.b16 %v5280
        %v5359 = vunpack.c.l.b16 %v5281
        %v5360 = vunpack.c.h.b16 %v5281
        %v5361 = vunpack.c.l.b16 %v5282
        %v5362 = vunpack.c.h.b16 %v5282
        %v5363 = vunpack.c.l.b16 %v5283
        %v5364 = vunpack.c.h.b16 %v5283
        %v5365 = vunpack.c.l.b16 %v5284
        %v5366 = vunpack.c.h.b16 %v5284
        %v5367 = vunpack.c.l.b16 %v5285
        %v5368 = vunpack.c.h.b16 %v5285
        %v5369 = vunpack.c.l.b16 %v5286
        %v5370 = vunpack.c.h.b16 %v5286
        %v5371 = vunpack.c.l.b16 %v5287
        %v5372 = vunpack.c.h.b16 %v5287
        %v5373 = vunpack.c.l.b16 %v5288
        %v5374 = vunpack.c.h.b16 %v5288
        %v5375 = vunpack.c.l.b16 %v5289
        %v5376 = vunpack.c.h.b16 %v5289
        %v5377 = vunpack.c.l.b16 %v5290
        %v5378 = vunpack.c.h.b16 %v5290
        %v5379 = vunpack.c.l.b16 %v5291
        %v5380 = vunpack.c.h.b16 %v5291
        %v5381 = vunpack.c.l.b16 %v5292
        %v5382 = vunpack.c.h.b16 %v5292
        %v5383 = vunpack.c.l.b16 %v5293
        %v5384 = vunpack.c.h.b16 %v5293
        %v5385 = vunpack.c.l.b16 %v5294
        %v5386 = vunpack.c.h.b16 %v5294
        %v5387 = vunpack.c.l.b16 %v5295
        %v5388 = vunpack.c.h.b16 %v5295
        %v5389 = vunpack.c.l.b16 %v5296
        %v5390 = vunpack.c.h.b16 %v5296
        %v5391 = vunpack.c.l.b16 %v5297
        %v5392 = vunpack.c.h.b16 %v5297
        %v5393 = vunpack.c.l.b16 %v5298
        %v5394 = vunpack.c.h.b16 %v5298
        %v5395 = vunpack.c.l.b16 %v5299
        %v5396 = vunpack.c.h.b16 %v5299
        %v5397 = vunpack.c.l.b16 %v5300
        %v5398 = vunpack.c.h.b16 %v5300
        %v5399 = vunpack.c.l.b16 %v5301
        %v5400 = vunpack.c.h.b16 %v5301
        %v5401 = vunpack.c.l.b16 %v5302
        %v5402 = vunpack.c.h.b16 %v5302
        %v5403 = vunpack.c.l.b16 %v5303
        %v5404 = vunpack.c.h.b16 %v5303
        %v5405 = vunpack.c.l.b16 %v5304
        %v5406 = vunpack.c.h.b16 %v5304
        %v5407 = vunpack.c.l.b16 %v5305
        %v5408 = vunpack.c.h.b16 %v5305
        %v5409 = vpack.c.b16 %v5355, %v5353
        %v5410 = vpack.c.b16 %v5356, %v5354
        %v5411 = vpack.c.b16 %v5359, %v5357
        %v5412 = vpack.c.b16 %v5360, %v5358
        %v5413 = vpack.c.b16 %v5363, %v5361
        %v5414 = vpack.c.b16 %v5364, %v5362
        %v5415 = vpack.c.b16 %v5367, %v5365
        %v5416 = vpack.c.b16 %v5368, %v5366
        %v5417 = vpack.c.b16 %v5371, %v5369
        %v5418 = vpack.c.b16 %v5372, %v5370
        %v5419 = vpack.c.b16 %v5375, %v5373
        %v5420 = vpack.c.b16 %v5376, %v5374
        %v5421 = vpack.c.b16 %v5379, %v5377
        %v5422 = vpack.c.b16 %v5380, %v5378
        %v5423 = vpack.c.b16 %v5383, %v5381
        %v5424 = vpack.c.b16 %v5384, %v5382
        %v5425 = vpack.c.b16 %v5387, %v5385
        %v5426 = vpack.c.b16 %v5388, %v5386
        %v5427 = vpack.c.b16 %v5391, %v5389
        %v5428 = vpack.c.b16 %v5392, %v5390
        %v5429 = vpack.c.b16 %v5395, %v5393
        %v5430 = vpack.c.b16 %v5396, %v5394
        %v5431 = vpack.c.b16 %v5399, %v5397
        %v5432 = vpack.c.b16 %v5400, %v5398
        %v5433 = vpack.c.b16 %v5403, %v5401
        %v5434 = vpack.c.b16 %v5404, %v5402
        %v5435 = vpack.c.b16 %v5407, %v5405
        %v5436 = vpack.c.b16 %v5408, %v5406
        %v5466 = vsel %vm2633, %v5323, 0
        %5468 = vmatprep.subr.bf16.mxu0 %v5410
        %5469 = vmatpush1.bf16.msra.mxu0 %v5409
        %5470 = vmatprep.subr.bf16.mxu0 %v5412
        %5471 = vmatpush1.bf16.msra.mxu0 %v5411
        %5472 = vmatprep.subr.bf16.mxu0 %v5414
        %5473 = vmatpush1.bf16.msra.mxu0 %v5413
        %5474 = vmatprep.subr.bf16.mxu0 %v5416
        %5475 = vmatpush1.bf16.msra.mxu0 %v5415
        %5476 = vmatprep.subr.bf16.mxu0 %v5418
        %5477 = vmatpush1.bf16.msra.mxu0 %v5417
        %5478 = vmatprep.subr.bf16.mxu0 %v5420
        %5479 = vmatpush1.bf16.msra.mxu0 %v5419
        %5480 = vmatprep.subr.bf16.mxu0 %v5422
        %5481 = vmatpush1.bf16.msra.mxu0 %v5421
        %5482 = vmatprep.subr.bf16.mxu0 %v5424
        %5483 = vmatpush1.bf16.msra.mxu0 %v5423
        %5484 = vmatprep.subr.bf16.mxu0 %v5426
        %5485 = vmatpush1.bf16.msra.mxu0 %v5425
        %5486 = vmatprep.subr.bf16.mxu0 %v5428
        %5487 = vmatpush1.bf16.msra.mxu0 %v5427
        %5488 = vmatprep.subr.bf16.mxu0 %v5430
        %5489 = vmatpush1.bf16.msra.mxu0 %v5429
        %5490 = vmatprep.subr.bf16.mxu0 %v5432
        %5491 = vmatpush1.bf16.msra.mxu0 %v5431
        %5492 = vmatprep.subr.bf16.mxu0 %v5434
        %5493 = vmatpush1.bf16.msra.mxu0 %v5433
        %5494 = vmatprep.subr.bf16.mxu0 %v5436
        %5495 = vmatpush1.bf16.msra.mxu0 %v5435
        %5496 = vmatprep.subr.bf16.mxu0 0
        %5497 = vmatpush1.bf16.msra.mxu0 0
        %5498 = vmatprep.subr.bf16.mxu0 0
        %5499 = vmatpush1.bf16.msra.mxu0 0
        %5500 = vmatprep.mubr.bf16.mxu0 %v5466
        %5501 = vmatmul.mubr.bf16.gmra.mrb[0].mxu0 %v5315
        %v5502 = vpop.f32.mrb[0].mxu0
        %v5503 = vadd.f32 0.0, %v5502
        %v5504 = vpop.f32.mrb[0].mxu0
        %v5505 = vadd.f32 0.0, %v5504
        %v5506 = vpop.f32.mrb[0].mxu0
        %v5507 = vpop.f32.mrb[0].mxu0
        %5508 = vdwg.mxu0
        %v5537 = vunpack.c.l.b16 %v5247
        %v5538 = vunpack.c.h.b16 %v5247
        %v5539 = vunpack.c.l.b16 %v5248
        %v5540 = vunpack.c.h.b16 %v5248
        %v5541 = vunpack.c.l.b16 %v5249
        %v5542 = vunpack.c.h.b16 %v5249
        %v5543 = vunpack.c.l.b16 %v5250
        %v5544 = vunpack.c.h.b16 %v5250
        %v5545 = vunpack.c.l.b16 %v5251
        %v5546 = vunpack.c.h.b16 %v5251
        %v5547 = vunpack.c.l.b16 %v5252
        %v5548 = vunpack.c.h.b16 %v5252
        %v5549 = vunpack.c.l.b16 %v5253
        %v5550 = vunpack.c.h.b16 %v5253
        %v5551 = vunpack.c.l.b16 %v5254
        %v5552 = vunpack.c.h.b16 %v5254
        %v5553 = vunpack.c.l.b16 %v5255
        %v5554 = vunpack.c.h.b16 %v5255
        %v5555 = vunpack.c.l.b16 %v5256
        %v5556 = vunpack.c.h.b16 %v5256
        %v5557 = vunpack.c.l.b16 %v5257
        %v5558 = vunpack.c.h.b16 %v5257
        %v5559 = vunpack.c.l.b16 %v5258
        %v5560 = vunpack.c.h.b16 %v5258
        %v5561 = vunpack.c.l.b16 %v5259
        %v5562 = vunpack.c.h.b16 %v5259
        %v5563 = vunpack.c.l.b16 %v5260
        %v5564 = vunpack.c.h.b16 %v5260
        %v5565 = vunpack.c.l.b16 %v5261
        %v5566 = vunpack.c.h.b16 %v5261
        %v5567 = vunpack.c.l.b16 %v5262
        %v5568 = vunpack.c.h.b16 %v5262
        %v5569 = vunpack.c.l.b16 %v5263
        %v5570 = vunpack.c.h.b16 %v5263
        %v5571 = vunpack.c.l.b16 %v5264
        %v5572 = vunpack.c.h.b16 %v5264
        %v5573 = vunpack.c.l.b16 %v5265
        %v5574 = vunpack.c.h.b16 %v5265
        %v5575 = vunpack.c.l.b16 %v5266
        %v5576 = vunpack.c.h.b16 %v5266
        %v5577 = vunpack.c.l.b16 %v5267
        %v5578 = vunpack.c.h.b16 %v5267
        %v5579 = vunpack.c.l.b16 %v5268
        %v5580 = vunpack.c.h.b16 %v5268
        %v5581 = vunpack.c.l.b16 %v5269
        %v5582 = vunpack.c.h.b16 %v5269
        %v5583 = vunpack.c.l.b16 %v5270
        %v5584 = vunpack.c.h.b16 %v5270
        %v5585 = vunpack.c.l.b16 %v5271
        %v5586 = vunpack.c.h.b16 %v5271
        %v5587 = vunpack.c.l.b16 %v5272
        %v5588 = vunpack.c.h.b16 %v5272
        %v5589 = vunpack.c.l.b16 %v5273
        %v5590 = vunpack.c.h.b16 %v5273
        %v5591 = vunpack.c.l.b16 %v5274
        %v5592 = vunpack.c.h.b16 %v5274
        %v5593 = vpack.c.b16 %v5539, %v5537
        %v5594 = vpack.c.b16 %v5540, %v5538
        %v5595 = vpack.c.b16 %v5543, %v5541
        %v5596 = vpack.c.b16 %v5544, %v5542
        %v5597 = vpack.c.b16 %v5547, %v5545
        %v5598 = vpack.c.b16 %v5548, %v5546
        %v5599 = vpack.c.b16 %v5551, %v5549
        %v5600 = vpack.c.b16 %v5552, %v5550
        %v5601 = vpack.c.b16 %v5555, %v5553
        %v5602 = vpack.c.b16 %v5556, %v5554
        %v5603 = vpack.c.b16 %v5559, %v5557
        %v5604 = vpack.c.b16 %v5560, %v5558
        %v5605 = vpack.c.b16 %v5563, %v5561
        %v5606 = vpack.c.b16 %v5564, %v5562
        %v5607 = vpack.c.b16 %v5567, %v5565
        %v5608 = vpack.c.b16 %v5568, %v5566
        %v5609 = vpack.c.b16 %v5571, %v5569
        %v5610 = vpack.c.b16 %v5572, %v5570
        %v5611 = vpack.c.b16 %v5575, %v5573
        %v5612 = vpack.c.b16 %v5576, %v5574
        %v5613 = vpack.c.b16 %v5579, %v5577
        %v5614 = vpack.c.b16 %v5580, %v5578
        %v5615 = vpack.c.b16 %v5583, %v5581
        %v5616 = vpack.c.b16 %v5584, %v5582
        %v5617 = vpack.c.b16 %v5587, %v5585
        %v5618 = vpack.c.b16 %v5588, %v5586
        %v5619 = vpack.c.b16 %v5591, %v5589
        %v5620 = vpack.c.b16 %v5592, %v5590
        %v5650 = vsel %vm2633, %v5276, 0
        %5652 = vmatprep.subr.bf16.mxu0 %v5594
        %5653 = vmatpush1.bf16.msra.mxu0 %v5593
        %5654 = vmatprep.subr.bf16.mxu0 %v5596
        %5655 = vmatpush1.bf16.msra.mxu0 %v5595
        %5656 = vmatprep.subr.bf16.mxu0 %v5598
        %5657 = vmatpush1.bf16.msra.mxu0 %v5597
        %5658 = vmatprep.subr.bf16.mxu0 %v5600
        %5659 = vmatpush1.bf16.msra.mxu0 %v5599
        %5660 = vmatprep.subr.bf16.mxu0 %v5602
        %5661 = vmatpush1.bf16.msra.mxu0 %v5601
        %5662 = vmatprep.subr.bf16.mxu0 %v5604
        %5663 = vmatpush1.bf16.msra.mxu0 %v5603
        %5664 = vmatprep.subr.bf16.mxu0 %v5606
        %5665 = vmatpush1.bf16.msra.mxu0 %v5605
        %5666 = vmatprep.subr.bf16.mxu0 %v5608
        %5667 = vmatpush1.bf16.msra.mxu0 %v5607
        %5668 = vmatprep.subr.bf16.mxu0 %v5610
        %5669 = vmatpush1.bf16.msra.mxu0 %v5609
        %5670 = vmatprep.subr.bf16.mxu0 %v5612
        %5671 = vmatpush1.bf16.msra.mxu0 %v5611
        %5672 = vmatprep.subr.bf16.mxu0 %v5614
        %5673 = vmatpush1.bf16.msra.mxu0 %v5613
        %5674 = vmatprep.subr.bf16.mxu0 %v5616
        %5675 = vmatpush1.bf16.msra.mxu0 %v5615
        %5676 = vmatprep.subr.bf16.mxu0 %v5618
        %5677 = vmatpush1.bf16.msra.mxu0 %v5617
        %5678 = vmatprep.subr.bf16.mxu0 %v5620
        %5679 = vmatpush1.bf16.msra.mxu0 %v5619
        %5680 = vmatprep.subr.bf16.mxu0 0
        %5681 = vmatpush1.bf16.msra.mxu0 0
        %5682 = vmatprep.subr.bf16.mxu0 0
        %5683 = vmatpush1.bf16.msra.mxu0 0
        %5684 = vmatprep.mubr.bf16.mxu0 %v5650
        %5685 = vmatmul.mubr.bf16.gmra.mrb[0].mxu0 %v5275
        %v5686 = vpop.f32.mrb[0].mxu0
        %v5687 = vadd.f32 %v5503, %v5686
        %v5688 = vpop.f32.mrb[0].mxu0
        %v5689 = vadd.f32 %v5505, %v5688
        %v5690 = vpop.f32.mrb[0].mxu0
        %v5691 = vpop.f32.mrb[0].mxu0
        %5692 = vdwg.mxu0
        %s5693 = scalar_lea.vmem %s39, 448
        %v5694 = vld [vmem:[%s5693] sm:$0xff]
        %v5695 = vld [vmem:[%s5693 + $0x8] sm:$0xff]
        %v5696 = vld [vmem:[%s5693 + $0x10] sm:$0xff]
        %v5697 = vld [vmem:[%s5693 + $0x18] sm:$0xff]
        %v5698 = vld [vmem:[%s5693 + $0x20] sm:$0xff]
        %v5699 = vld [vmem:[%s5693 + $0x28] sm:$0xff]
        %v5700 = vld [vmem:[%s5693 + $0x30] sm:$0xff]
        %v5701 = vld [vmem:[%s5693 + $0x38] sm:$0xff]
        %v5702 = vld [vmem:[%s5693 + $0x40] sm:$0xff]
        %v5703 = vld [vmem:[%s5693 + $0x48] sm:$0xff]
        %v5704 = vld [vmem:[%s5693 + $0x50] sm:$0xff]
        %v5705 = vld [vmem:[%s5693 + $0x58] sm:$0xff]
        %v5706 = vld [vmem:[%s5693 + $0x60] sm:$0xff]
        %v5707 = vld [vmem:[%s5693 + $0x68] sm:$0xff]
        %v5708 = vld [vmem:[%s5693 + $0x70] sm:$0xff]
        %v5709 = vld [vmem:[%s5693 + $0x78] sm:$0xff]
        %v5710 = vld [vmem:[%s5693 + $0x80] sm:$0xff]
        %v5711 = vld [vmem:[%s5693 + $0x88] sm:$0xff]
        %v5712 = vld [vmem:[%s5693 + $0x90] sm:$0xff]
        %v5713 = vld [vmem:[%s5693 + $0x98] sm:$0xff]
        %v5714 = vld [vmem:[%s5693 + $0xa0] sm:$0xff]
        %v5715 = vld [vmem:[%s5693 + $0xa8] sm:$0xff]
        %v5716 = vld [vmem:[%s5693 + $0xb0] sm:$0xff]
        %v5717 = vld [vmem:[%s5693 + $0xb8] sm:$0xff]
        %v5718 = vld [vmem:[%s5693 + $0xc0] sm:$0xff]
        %v5719 = vld [vmem:[%s5693 + $0xc8] sm:$0xff]
        %v5720 = vld [vmem:[%s5693 + $0xd0] sm:$0xff]
        %v5721 = vld [vmem:[%s5693 + $0xd8] sm:$0xff]
        %v5722 = vpack.c.bf16 %v5231, %v5225
        %v5723 = vpack.c.bf16 %v5233, %v5227
        %v5726 = vrot.slane %v5722, 3
        %v5727 = vrot.slane %v5723, 3
        %v5757 = vunpack.c.l.b16 %v5694
        %v5758 = vunpack.c.h.b16 %v5694
        %v5759 = vunpack.c.l.b16 %v5695
        %v5760 = vunpack.c.h.b16 %v5695
        %v5761 = vunpack.c.l.b16 %v5696
        %v5762 = vunpack.c.h.b16 %v5696
        %v5763 = vunpack.c.l.b16 %v5697
        %v5764 = vunpack.c.h.b16 %v5697
        %v5765 = vunpack.c.l.b16 %v5698
        %v5766 = vunpack.c.h.b16 %v5698
        %v5767 = vunpack.c.l.b16 %v5699
        %v5768 = vunpack.c.h.b16 %v5699
        %v5769 = vunpack.c.l.b16 %v5700
        %v5770 = vunpack.c.h.b16 %v5700
        %v5771 = vunpack.c.l.b16 %v5701
        %v5772 = vunpack.c.h.b16 %v5701
        %v5773 = vunpack.c.l.b16 %v5702
        %v5774 = vunpack.c.h.b16 %v5702
        %v5775 = vunpack.c.l.b16 %v5703
        %v5776 = vunpack.c.h.b16 %v5703
        %v5777 = vunpack.c.l.b16 %v5704
        %v5778 = vunpack.c.h.b16 %v5704
        %v5779 = vunpack.c.l.b16 %v5705
        %v5780 = vunpack.c.h.b16 %v5705
        %v5781 = vunpack.c.l.b16 %v5706
        %v5782 = vunpack.c.h.b16 %v5706
        %v5783 = vunpack.c.l.b16 %v5707
        %v5784 = vunpack.c.h.b16 %v5707
        %v5785 = vunpack.c.l.b16 %v5708
        %v5786 = vunpack.c.h.b16 %v5708
        %v5787 = vunpack.c.l.b16 %v5709
        %v5788 = vunpack.c.h.b16 %v5709
        %v5789 = vunpack.c.l.b16 %v5710
        %v5790 = vunpack.c.h.b16 %v5710
        %v5791 = vunpack.c.l.b16 %v5711
        %v5792 = vunpack.c.h.b16 %v5711
        %v5793 = vunpack.c.l.b16 %v5712
        %v5794 = vunpack.c.h.b16 %v5712
        %v5795 = vunpack.c.l.b16 %v5713
        %v5796 = vunpack.c.h.b16 %v5713
        %v5797 = vunpack.c.l.b16 %v5714
        %v5798 = vunpack.c.h.b16 %v5714
        %v5799 = vunpack.c.l.b16 %v5715
        %v5800 = vunpack.c.h.b16 %v5715
        %v5801 = vunpack.c.l.b16 %v5716
        %v5802 = vunpack.c.h.b16 %v5716
        %v5803 = vunpack.c.l.b16 %v5717
        %v5804 = vunpack.c.h.b16 %v5717
        %v5805 = vunpack.c.l.b16 %v5718
        %v5806 = vunpack.c.h.b16 %v5718
        %v5807 = vunpack.c.l.b16 %v5719
        %v5808 = vunpack.c.h.b16 %v5719
        %v5809 = vunpack.c.l.b16 %v5720
        %v5810 = vunpack.c.h.b16 %v5720
        %v5811 = vunpack.c.l.b16 %v5721
        %v5812 = vunpack.c.h.b16 %v5721
        %v5813 = vpack.c.b16 %v5759, %v5757
        %v5814 = vpack.c.b16 %v5760, %v5758
        %v5815 = vpack.c.b16 %v5763, %v5761
        %v5816 = vpack.c.b16 %v5764, %v5762
        %v5817 = vpack.c.b16 %v5767, %v5765
        %v5818 = vpack.c.b16 %v5768, %v5766
        %v5819 = vpack.c.b16 %v5771, %v5769
        %v5820 = vpack.c.b16 %v5772, %v5770
        %v5821 = vpack.c.b16 %v5775, %v5773
        %v5822 = vpack.c.b16 %v5776, %v5774
        %v5823 = vpack.c.b16 %v5779, %v5777
        %v5824 = vpack.c.b16 %v5780, %v5778
        %v5825 = vpack.c.b16 %v5783, %v5781
        %v5826 = vpack.c.b16 %v5784, %v5782
        %v5827 = vpack.c.b16 %v5787, %v5785
        %v5828 = vpack.c.b16 %v5788, %v5786
        %v5829 = vpack.c.b16 %v5791, %v5789
        %v5830 = vpack.c.b16 %v5792, %v5790
        %v5831 = vpack.c.b16 %v5795, %v5793
        %v5832 = vpack.c.b16 %v5796, %v5794
        %v5833 = vpack.c.b16 %v5799, %v5797
        %v5834 = vpack.c.b16 %v5800, %v5798
        %v5835 = vpack.c.b16 %v5803, %v5801
        %v5836 = vpack.c.b16 %v5804, %v5802
        %v5837 = vpack.c.b16 %v5807, %v5805
        %v5838 = vpack.c.b16 %v5808, %v5806
        %v5839 = vpack.c.b16 %v5811, %v5809
        %v5840 = vpack.c.b16 %v5812, %v5810
        %v5870 = vsel %vm2633, %v5727, 0
        %5872 = vmatprep.subr.bf16.mxu0 %v5814
        %5873 = vmatpush1.bf16.msra.mxu0 %v5813
        %5874 = vmatprep.subr.bf16.mxu0 %v5816
        %5875 = vmatpush1.bf16.msra.mxu0 %v5815
        %5876 = vmatprep.subr.bf16.mxu0 %v5818
        %5877 = vmatpush1.bf16.msra.mxu0 %v5817
        %5878 = vmatprep.subr.bf16.mxu0 %v5820
        %5879 = vmatpush1.bf16.msra.mxu0 %v5819
        %5880 = vmatprep.subr.bf16.mxu0 %v5822
        %5881 = vmatpush1.bf16.msra.mxu0 %v5821
        %5882 = vmatprep.subr.bf16.mxu0 %v5824
        %5883 = vmatpush1.bf16.msra.mxu0 %v5823
        %5884 = vmatprep.subr.bf16.mxu0 %v5826
        %5885 = vmatpush1.bf16.msra.mxu0 %v5825
        %5886 = vmatprep.subr.bf16.mxu0 %v5828
        %5887 = vmatpush1.bf16.msra.mxu0 %v5827
        %5888 = vmatprep.subr.bf16.mxu0 %v5830
        %5889 = vmatpush1.bf16.msra.mxu0 %v5829
        %5890 = vmatprep.subr.bf16.mxu0 %v5832
        %5891 = vmatpush1.bf16.msra.mxu0 %v5831
        %5892 = vmatprep.subr.bf16.mxu0 %v5834
        %5893 = vmatpush1.bf16.msra.mxu0 %v5833
        %5894 = vmatprep.subr.bf16.mxu0 %v5836
        %5895 = vmatpush1.bf16.msra.mxu0 %v5835
        %5896 = vmatprep.subr.bf16.mxu0 %v5838
        %5897 = vmatpush1.bf16.msra.mxu0 %v5837
        %5898 = vmatprep.subr.bf16.mxu0 %v5840
        %5899 = vmatpush1.bf16.msra.mxu0 %v5839
        %5900 = vmatprep.subr.bf16.mxu0 0
        %5901 = vmatpush1.bf16.msra.mxu0 0
        %5902 = vmatprep.subr.bf16.mxu0 0
        %5903 = vmatpush1.bf16.msra.mxu0 0
        %5904 = vmatprep.mubr.bf16.mxu0 %v5870
        %5905 = vmatmul.mubr.bf16.gmra.mrb[0].mxu0 %v5726
        %v5906 = vpop.f32.mrb[0].mxu0
        %v5907 = vadd.f32 0.0, %v5906
        %v5908 = vpop.f32.mrb[0].mxu0
        %v5909 = vadd.f32 0.0, %v5908
        %v5910 = vpop.f32.mrb[0].mxu0
        %v5911 = vpop.f32.mrb[0].mxu0
        %5912 = vdwg.mxu0
        %v5913 = vadd.f32 %v5687, %v5907
        %v5914 = vadd.f32 %v5689, %v5909
        %s5915 = scalar_lea.vmem %s39, 672
        %v5916 = vld [vmem:[%s5915] sm:$0xff]
        %v5917 = vld [vmem:[%s5915 + $0x8] sm:$0xff]
        %v5918 = vld [vmem:[%s5915 + $0x10] sm:$0xff]
        %v5919 = vld [vmem:[%s5915 + $0x18] sm:$0xff]
        %v5920 = vld [vmem:[%s5915 + $0x20] sm:$0xff]
        %v5921 = vld [vmem:[%s5915 + $0x28] sm:$0xff]
        %v5922 = vld [vmem:[%s5915 + $0x30] sm:$0xff]
        %v5923 = vld [vmem:[%s5915 + $0x38] sm:$0xff]
        %v5924 = vld [vmem:[%s5915 + $0x40] sm:$0xff]
        %v5925 = vld [vmem:[%s5915 + $0x48] sm:$0xff]
        %v5926 = vld [vmem:[%s5915 + $0x50] sm:$0xff]
        %v5927 = vld [vmem:[%s5915 + $0x58] sm:$0xff]
        %v5928 = vld [vmem:[%s5915 + $0x60] sm:$0xff]
        %v5929 = vld [vmem:[%s5915 + $0x68] sm:$0xff]
        %v5930 = vld [vmem:[%s5915 + $0x70] sm:$0xff]
        %v5931 = vld [vmem:[%s5915 + $0x78] sm:$0xff]
        %v5932 = vld [vmem:[%s5915 + $0x80] sm:$0xff]
        %v5933 = vld [vmem:[%s5915 + $0x88] sm:$0xff]
        %v5934 = vld [vmem:[%s5915 + $0x90] sm:$0xff]
        %v5935 = vld [vmem:[%s5915 + $0x98] sm:$0xff]
        %v5936 = vld [vmem:[%s5915 + $0xa0] sm:$0xff]
        %v5937 = vld [vmem:[%s5915 + $0xa8] sm:$0xff]
        %v5938 = vld [vmem:[%s5915 + $0xb0] sm:$0xff]
        %v5939 = vld [vmem:[%s5915 + $0xb8] sm:$0xff]
        %v5940 = vld [vmem:[%s5915 + $0xc0] sm:$0xff]
        %v5941 = vld [vmem:[%s5915 + $0xc8] sm:$0xff]
        %v5942 = vld [vmem:[%s5915 + $0xd0] sm:$0xff]
        %v5943 = vld [vmem:[%s5915 + $0xd8] sm:$0xff]
        %v5944 = vpack.c.bf16 %v5235, %v5231
        %v5945 = vpack.c.bf16 %v5237, %v5233
        %v5947 = vshrl.u32 %v5944, 16
        %v5949 = vrot.slane %v5947, 2
        %v5950 = vshll.u32 %v5944, 16
        %v5952 = vrot.slane %v5950, 3
        %v5953 = vor.u32 %v5949, %v5952
        %v5955 = vshrl.u32 %v5945, 16
        %v5957 = vrot.slane %v5955, 2
        %v5958 = vshll.u32 %v5945, 16
        %v5960 = vrot.slane %v5958, 3
        %v5961 = vor.u32 %v5957, %v5960
        %v5991 = vunpack.c.l.b16 %v5916
        %v5992 = vunpack.c.h.b16 %v5916
        %v5993 = vunpack.c.l.b16 %v5917
        %v5994 = vunpack.c.h.b16 %v5917
        %v5995 = vunpack.c.l.b16 %v5918
        %v5996 = vunpack.c.h.b16 %v5918
        %v5997 = vunpack.c.l.b16 %v5919
        %v5998 = vunpack.c.h.b16 %v5919
        %v5999 = vunpack.c.l.b16 %v5920
        %v6000 = vunpack.c.h.b16 %v5920
        %v6001 = vunpack.c.l.b16 %v5921
        %v6002 = vunpack.c.h.b16 %v5921
        %v6003 = vunpack.c.l.b16 %v5922
        %v6004 = vunpack.c.h.b16 %v5922
        %v6005 = vunpack.c.l.b16 %v5923
        %v6006 = vunpack.c.h.b16 %v5923
        %v6007 = vunpack.c.l.b16 %v5924
        %v6008 = vunpack.c.h.b16 %v5924
        %v6009 = vunpack.c.l.b16 %v5925
        %v6010 = vunpack.c.h.b16 %v5925
        %v6011 = vunpack.c.l.b16 %v5926
        %v6012 = vunpack.c.h.b16 %v5926
        %v6013 = vunpack.c.l.b16 %v5927
        %v6014 = vunpack.c.h.b16 %v5927
        %v6015 = vunpack.c.l.b16 %v5928
        %v6016 = vunpack.c.h.b16 %v5928
        %v6017 = vunpack.c.l.b16 %v5929
        %v6018 = vunpack.c.h.b16 %v5929
        %v6019 = vunpack.c.l.b16 %v5930
        %v6020 = vunpack.c.h.b16 %v5930
        %v6021 = vunpack.c.l.b16 %v5931
        %v6022 = vunpack.c.h.b16 %v5931
        %v6023 = vunpack.c.l.b16 %v5932
        %v6024 = vunpack.c.h.b16 %v5932
        %v6025 = vunpack.c.l.b16 %v5933
        %v6026 = vunpack.c.h.b16 %v5933
        %v6027 = vunpack.c.l.b16 %v5934
        %v6028 = vunpack.c.h.b16 %v5934
        %v6029 = vunpack.c.l.b16 %v5935
        %v6030 = vunpack.c.h.b16 %v5935
        %v6031 = vunpack.c.l.b16 %v5936
        %v6032 = vunpack.c.h.b16 %v5936
        %v6033 = vunpack.c.l.b16 %v5937
        %v6034 = vunpack.c.h.b16 %v5937
        %v6035 = vunpack.c.l.b16 %v5938
        %v6036 = vunpack.c.h.b16 %v5938
        %v6037 = vunpack.c.l.b16 %v5939
        %v6038 = vunpack.c.h.b16 %v5939
        %v6039 = vunpack.c.l.b16 %v5940
        %v6040 = vunpack.c.h.b16 %v5940
        %v6041 = vunpack.c.l.b16 %v5941
        %v6042 = vunpack.c.h.b16 %v5941
        %v6043 = vunpack.c.l.b16 %v5942
        %v6044 = vunpack.c.h.b16 %v5942
        %v6045 = vunpack.c.l.b16 %v5943
        %v6046 = vunpack.c.h.b16 %v5943
        %v6047 = vpack.c.b16 %v5993, %v5991
        %v6048 = vpack.c.b16 %v5994, %v5992
        %v6049 = vpack.c.b16 %v5997, %v5995
        %v6050 = vpack.c.b16 %v5998, %v5996
        %v6051 = vpack.c.b16 %v6001, %v5999
        %v6052 = vpack.c.b16 %v6002, %v6000
        %v6053 = vpack.c.b16 %v6005, %v6003
        %v6054 = vpack.c.b16 %v6006, %v6004
        %v6055 = vpack.c.b16 %v6009, %v6007
        %v6056 = vpack.c.b16 %v6010, %v6008
        %v6057 = vpack.c.b16 %v6013, %v6011
        %v6058 = vpack.c.b16 %v6014, %v6012
        %v6059 = vpack.c.b16 %v6017, %v6015
        %v6060 = vpack.c.b16 %v6018, %v6016
        %v6061 = vpack.c.b16 %v6021, %v6019
        %v6062 = vpack.c.b16 %v6022, %v6020
        %v6063 = vpack.c.b16 %v6025, %v6023
        %v6064 = vpack.c.b16 %v6026, %v6024
        %v6065 = vpack.c.b16 %v6029, %v6027
        %v6066 = vpack.c.b16 %v6030, %v6028
        %v6067 = vpack.c.b16 %v6033, %v6031
        %v6068 = vpack.c.b16 %v6034, %v6032
        %v6069 = vpack.c.b16 %v6037, %v6035
        %v6070 = vpack.c.b16 %v6038, %v6036
        %v6071 = vpack.c.b16 %v6041, %v6039
        %v6072 = vpack.c.b16 %v6042, %v6040
        %v6073 = vpack.c.b16 %v6045, %v6043
        %v6074 = vpack.c.b16 %v6046, %v6044
        %v6104 = vsel %vm2633, %v5961, 0
        %6106 = vmatprep.subr.bf16.mxu0 %v6048
        %6107 = vmatpush1.bf16.msra.mxu0 %v6047
        %6108 = vmatprep.subr.bf16.mxu0 %v6050
        %6109 = vmatpush1.bf16.msra.mxu0 %v6049
        %6110 = vmatprep.subr.bf16.mxu0 %v6052
        %6111 = vmatpush1.bf16.msra.mxu0 %v6051
        %6112 = vmatprep.subr.bf16.mxu0 %v6054
        %6113 = vmatpush1.bf16.msra.mxu0 %v6053
        %6114 = vmatprep.subr.bf16.mxu0 %v6056
        %6115 = vmatpush1.bf16.msra.mxu0 %v6055
        %6116 = vmatprep.subr.bf16.mxu0 %v6058
        %6117 = vmatpush1.bf16.msra.mxu0 %v6057
        %6118 = vmatprep.subr.bf16.mxu0 %v6060
        %6119 = vmatpush1.bf16.msra.mxu0 %v6059
        %6120 = vmatprep.subr.bf16.mxu0 %v6062
        %6121 = vmatpush1.bf16.msra.mxu0 %v6061
        %6122 = vmatprep.subr.bf16.mxu0 %v6064
        %6123 = vmatpush1.bf16.msra.mxu0 %v6063
        %6124 = vmatprep.subr.bf16.mxu0 %v6066
        %6125 = vmatpush1.bf16.msra.mxu0 %v6065
        %6126 = vmatprep.subr.bf16.mxu0 %v6068
        %6127 = vmatpush1.bf16.msra.mxu0 %v6067
        %6128 = vmatprep.subr.bf16.mxu0 %v6070
        %6129 = vmatpush1.bf16.msra.mxu0 %v6069
        %6130 = vmatprep.subr.bf16.mxu0 %v6072
        %6131 = vmatpush1.bf16.msra.mxu0 %v6071
        %6132 = vmatprep.subr.bf16.mxu0 %v6074
        %6133 = vmatpush1.bf16.msra.mxu0 %v6073
        %6134 = vmatprep.subr.bf16.mxu0 0
        %6135 = vmatpush1.bf16.msra.mxu0 0
        %6136 = vmatprep.subr.bf16.mxu0 0
        %6137 = vmatpush1.bf16.msra.mxu0 0
        %6138 = vmatprep.mubr.bf16.mxu0 %v6104
        %6139 = vmatmul.mubr.bf16.gmra.mrb[0].mxu0 %v5953
        %v6140 = vpop.f32.mrb[0].mxu0
        %v6141 = vadd.f32 0.0, %v6140
        %v6142 = vpop.f32.mrb[0].mxu0
        %v6143 = vadd.f32 0.0, %v6142
        %v6144 = vpop.f32.mrb[0].mxu0
        %v6145 = vpop.f32.mrb[0].mxu0
        %6146 = vdwg.mxu0
        %v6147 = vadd.f32 %v5913, %v6141
        %v6148 = vadd.f32 %v5914, %v6143
        %s6149 = scalar_lea.vmem %s39, 896
        %v6150 = vld [vmem:[%s6149] sm:$0xff]
        %v6151 = vld [vmem:[%s6149 + $0x8] sm:$0xff]
        %v6152 = vld [vmem:[%s6149 + $0x10] sm:$0xff]
        %v6153 = vld [vmem:[%s6149 + $0x18] sm:$0xff]
        %v6154 = vld [vmem:[%s6149 + $0x20] sm:$0xff]
        %v6155 = vld [vmem:[%s6149 + $0x28] sm:$0xff]
        %v6156 = vld [vmem:[%s6149 + $0x30] sm:$0xff]
        %v6157 = vld [vmem:[%s6149 + $0x38] sm:$0xff]
        %v6158 = vld [vmem:[%s6149 + $0x40] sm:$0xff]
        %v6159 = vld [vmem:[%s6149 + $0x48] sm:$0xff]
        %v6160 = vld [vmem:[%s6149 + $0x50] sm:$0xff]
        %v6161 = vld [vmem:[%s6149 + $0x58] sm:$0xff]
        %v6162 = vld [vmem:[%s6149 + $0x60] sm:$0xff]
        %v6163 = vld [vmem:[%s6149 + $0x68] sm:$0xff]
        %v6164 = vld [vmem:[%s6149 + $0x70] sm:$0xff]
        %v6165 = vld [vmem:[%s6149 + $0x78] sm:$0xff]
        %v6166 = vld [vmem:[%s6149 + $0x80] sm:$0xff]
        %v6167 = vld [vmem:[%s6149 + $0x88] sm:$0xff]
        %v6168 = vld [vmem:[%s6149 + $0x90] sm:$0xff]
        %v6169 = vld [vmem:[%s6149 + $0x98] sm:$0xff]
        %v6170 = vld [vmem:[%s6149 + $0xa0] sm:$0xff]
        %v6171 = vld [vmem:[%s6149 + $0xa8] sm:$0xff]
        %v6172 = vld [vmem:[%s6149 + $0xb0] sm:$0xff]
        %v6173 = vld [vmem:[%s6149 + $0xb8] sm:$0xff]
        %v6174 = vld [vmem:[%s6149 + $0xc0] sm:$0xff]
        %v6175 = vld [vmem:[%s6149 + $0xc8] sm:$0xff]
        %v6176 = vld [vmem:[%s6149 + $0xd0] sm:$0xff]
        %v6177 = vld [vmem:[%s6149 + $0xd8] sm:$0xff]
        %v6178 = vpack.c.bf16 %v5241, %v5235
        %v6179 = vpack.c.bf16 %v5243, %v5237
        %v6182 = vrot.slane %v6178, 2
        %v6183 = vrot.slane %v6179, 2
        %v6213 = vunpack.c.l.b16 %v6150
        %v6214 = vunpack.c.h.b16 %v6150
        %v6215 = vunpack.c.l.b16 %v6151
        %v6216 = vunpack.c.h.b16 %v6151
        %v6217 = vunpack.c.l.b16 %v6152
        %v6218 = vunpack.c.h.b16 %v6152
        %v6219 = vunpack.c.l.b16 %v6153
        %v6220 = vunpack.c.h.b16 %v6153
        %v6221 = vunpack.c.l.b16 %v6154
        %v6222 = vunpack.c.h.b16 %v6154
        %v6223 = vunpack.c.l.b16 %v6155
        %v6224 = vunpack.c.h.b16 %v6155
        %v6225 = vunpack.c.l.b16 %v6156
        %v6226 = vunpack.c.h.b16 %v6156
        %v6227 = vunpack.c.l.b16 %v6157
        %v6228 = vunpack.c.h.b16 %v6157
        %v6229 = vunpack.c.l.b16 %v6158
        %v6230 = vunpack.c.h.b16 %v6158
        %v6231 = vunpack.c.l.b16 %v6159
        %v6232 = vunpack.c.h.b16 %v6159
        %v6233 = vunpack.c.l.b16 %v6160
        %v6234 = vunpack.c.h.b16 %v6160
        %v6235 = vunpack.c.l.b16 %v6161
        %v6236 = vunpack.c.h.b16 %v6161
        %v6237 = vunpack.c.l.b16 %v6162
        %v6238 = vunpack.c.h.b16 %v6162
        %v6239 = vunpack.c.l.b16 %v6163
        %v6240 = vunpack.c.h.b16 %v6163
        %v6241 = vunpack.c.l.b16 %v6164
        %v6242 = vunpack.c.h.b16 %v6164
        %v6243 = vunpack.c.l.b16 %v6165
        %v6244 = vunpack.c.h.b16 %v6165
        %v6245 = vunpack.c.l.b16 %v6166
        %v6246 = vunpack.c.h.b16 %v6166
        %v6247 = vunpack.c.l.b16 %v6167
        %v6248 = vunpack.c.h.b16 %v6167
        %v6249 = vunpack.c.l.b16 %v6168
        %v6250 = vunpack.c.h.b16 %v6168
        %v6251 = vunpack.c.l.b16 %v6169
        %v6252 = vunpack.c.h.b16 %v6169
        %v6253 = vunpack.c.l.b16 %v6170
        %v6254 = vunpack.c.h.b16 %v6170
        %v6255 = vunpack.c.l.b16 %v6171
        %v6256 = vunpack.c.h.b16 %v6171
        %v6257 = vunpack.c.l.b16 %v6172
        %v6258 = vunpack.c.h.b16 %v6172
        %v6259 = vunpack.c.l.b16 %v6173
        %v6260 = vunpack.c.h.b16 %v6173
        %v6261 = vunpack.c.l.b16 %v6174
        %v6262 = vunpack.c.h.b16 %v6174
        %v6263 = vunpack.c.l.b16 %v6175
        %v6264 = vunpack.c.h.b16 %v6175
        %v6265 = vunpack.c.l.b16 %v6176
        %v6266 = vunpack.c.h.b16 %v6176
        %v6267 = vunpack.c.l.b16 %v6177
        %v6268 = vunpack.c.h.b16 %v6177
        %v6269 = vpack.c.b16 %v6215, %v6213
        %v6270 = vpack.c.b16 %v6216, %v6214
        %v6271 = vpack.c.b16 %v6219, %v6217
        %v6272 = vpack.c.b16 %v6220, %v6218
        %v6273 = vpack.c.b16 %v6223, %v6221
        %v6274 = vpack.c.b16 %v6224, %v6222
        %v6275 = vpack.c.b16 %v6227, %v6225
        %v6276 = vpack.c.b16 %v6228, %v6226
        %v6277 = vpack.c.b16 %v6231, %v6229
        %v6278 = vpack.c.b16 %v6232, %v6230
        %v6279 = vpack.c.b16 %v6235, %v6233
        %v6280 = vpack.c.b16 %v6236, %v6234
        %v6281 = vpack.c.b16 %v6239, %v6237
        %v6282 = vpack.c.b16 %v6240, %v6238
        %v6283 = vpack.c.b16 %v6243, %v6241
        %v6284 = vpack.c.b16 %v6244, %v6242
        %v6285 = vpack.c.b16 %v6247, %v6245
        %v6286 = vpack.c.b16 %v6248, %v6246
        %v6287 = vpack.c.b16 %v6251, %v6249
        %v6288 = vpack.c.b16 %v6252, %v6250
        %v6289 = vpack.c.b16 %v6255, %v6253
        %v6290 = vpack.c.b16 %v6256, %v6254
        %v6291 = vpack.c.b16 %v6259, %v6257
        %v6292 = vpack.c.b16 %v6260, %v6258
        %v6293 = vpack.c.b16 %v6263, %v6261
        %v6294 = vpack.c.b16 %v6264, %v6262
        %v6295 = vpack.c.b16 %v6267, %v6265
        %v6296 = vpack.c.b16 %v6268, %v6266
        %v6326 = vsel %vm2633, %v6183, 0
        %6328 = vmatprep.subr.bf16.mxu0 %v6270
        %6329 = vmatpush1.bf16.msra.mxu0 %v6269
        %6330 = vmatprep.subr.bf16.mxu0 %v6272
        %6331 = vmatpush1.bf16.msra.mxu0 %v6271
        %6332 = vmatprep.subr.bf16.mxu0 %v6274
        %6333 = vmatpush1.bf16.msra.mxu0 %v6273
        %6334 = vmatprep.subr.bf16.mxu0 %v6276
        %6335 = vmatpush1.bf16.msra.mxu0 %v6275
        %6336 = vmatprep.subr.bf16.mxu0 %v6278
        %6337 = vmatpush1.bf16.msra.mxu0 %v6277
        %6338 = vmatprep.subr.bf16.mxu0 %v6280
        %6339 = vmatpush1.bf16.msra.mxu0 %v6279
        %6340 = vmatprep.subr.bf16.mxu0 %v6282
        %6341 = vmatpush1.bf16.msra.mxu0 %v6281
        %6342 = vmatprep.subr.bf16.mxu0 %v6284
        %6343 = vmatpush1.bf16.msra.mxu0 %v6283
        %6344 = vmatprep.subr.bf16.mxu0 %v6286
        %6345 = vmatpush1.bf16.msra.mxu0 %v6285
        %6346 = vmatprep.subr.bf16.mxu0 %v6288
        %6347 = vmatpush1.bf16.msra.mxu0 %v6287
        %6348 = vmatprep.subr.bf16.mxu0 %v6290
        %6349 = vmatpush1.bf16.msra.mxu0 %v6289
        %6350 = vmatprep.subr.bf16.mxu0 %v6292
        %6351 = vmatpush1.bf16.msra.mxu0 %v6291
        %6352 = vmatprep.subr.bf16.mxu0 %v6294
        %6353 = vmatpush1.bf16.msra.mxu0 %v6293
        %6354 = vmatprep.subr.bf16.mxu0 %v6296
        %6355 = vmatpush1.bf16.msra.mxu0 %v6295
        %6356 = vmatprep.subr.bf16.mxu0 0
        %6357 = vmatpush1.bf16.msra.mxu0 0
        %6358 = vmatprep.subr.bf16.mxu0 0
        %6359 = vmatpush1.bf16.msra.mxu0 0
        %6360 = vmatprep.mubr.bf16.mxu0 %v6326
        %6361 = vmatmul.mubr.bf16.gmra.mrb[0].mxu0 %v6182
        %v6362 = vpop.f32.mrb[0].mxu0
        %v6363 = vadd.f32 0.0, %v6362
        %v6364 = vpop.f32.mrb[0].mxu0
        %v6365 = vadd.f32 0.0, %v6364
        %v6366 = vpop.f32.mrb[0].mxu0
        %v6367 = vpop.f32.mrb[0].mxu0
        %6368 = vdwg.mxu0
        %v6369 = vadd.f32 %v6147, %v6363
        %v6370 = vadd.f32 %v6148, %v6365
        %v6371 = vld [vmem:[#allocation19] sm:$0x3]
        %v6373 = vlaneseq
        %v6374 = vshrl.u32 %v6373, 7
        %v6375 = vsub.s32 0, %v6374
        %v6376 = vrot.slane %v6371, %v6375
        %v6377 = vlaneseq
        %v6378 = vshrl.u32 %v6377, 7
        %v6379 = vsub.s32 1, %v6378
        %v6380 = vrot.slane %v6371, %v6379
        %v6383 = vadd.f32 %v6369, %v6376
        %v6384 = vadd.f32 %v6370, %v6380
        %v6385 = vadd.f32 %v6383, 3.0
        %v6386 = vadd.f32 %v6384, 3.0
        %v6387 = vmax.f32 %v6385, 0.0
        %v6388 = vmax.f32 %v6386, 0.0
        %v6389 = vmin.f32 %v6387, 6.0
        %v6390 = vmin.f32 %v6388, 6.0
        %v6391 = vmul.f32 %v6389, 0.16666667
        %v6392 = vmul.f32 %v6390, 0.16666667
        %v6393 = vmul.f32 %v6383, %v6391
        %v6394 = vmul.f32 %v6384, %v6392
        %v6395 = vsel %vm3665, %v6393, 0.0
        %v6396 = vrot.slane %v6395, 4
        %v6397 = vadd.f32 %v6395, %v6396
        %v6398 = vrot.slane %v6397, 2
        %v6399 = vadd.f32 %v6397, %v6398
        %v6400 = vrot.slane %v6399, 1
        %v6401 = vadd.f32 %v6399, %v6400
        %vm6402 = vcmask 784384
        %v6403 = vsel %vm6402, %v6394, 0.0
        %v6404 = vrot.slane %v6403, 4
        %v6405 = vadd.f32 %v6403, %v6404
        %v6406 = vrot.slane %v6405, 2
        %v6407 = vadd.f32 %v6405, %v6406
        %v6408 = vrot.slane %v6407, 1
        %v6409 = vadd.f32 %v6407, %v6408
        %v6410 = vld [vmem:[%s55] sm:$0xf]
        %v6411 = vld [vmem:[%s55 + $0x4] sm:$0xf]
        %v6412 = vld [vmem:[%s55 + $0x8] sm:$0xf]
        %v6413 = vld [vmem:[%s55 + $0xc] sm:$0xf]
        %v6414 = vld [vmem:[%s55 + $0x10] sm:$0xf]
        %v6415 = vld [vmem:[%s55 + $0x14] sm:$0xf]
        %v6416 = vld [vmem:[%s55 + $0x18] sm:$0xf]
        %v6417 = vld [vmem:[%s55 + $0x1c] sm:$0xf]
        %v6418 = vld [vmem:[%s55 + $0x20] sm:$0xf]
        %v6419 = vld [vmem:[%s55 + $0x24] sm:$0xf]
        %v6420 = vld [vmem:[%s55 + $0x28] sm:$0xf]
        %v6421 = vld [vmem:[%s55 + $0x2c] sm:$0xf]
        %v6422 = vld [vmem:[%s55 + $0x30] sm:$0xf]
        %v6423 = vld [vmem:[%s55 + $0x34] sm:$0xf]
        %v6424 = vld [vmem:[%s55 + $0x38] sm:$0xf]
        %v6425 = vld [vmem:[%s55 + $0x3c] sm:$0xf]
        %v6426 = vld [vmem:[%s55 + $0x40] sm:$0xf]
        %v6427 = vld [vmem:[%s55 + $0x44] sm:$0xf]
        %v6428 = vld [vmem:[%s55 + $0x48] sm:$0xf]
        %v6429 = vld [vmem:[%s55 + $0x4c] sm:$0xf]
        %v6430 = vld [vmem:[%s55 + $0x50] sm:$0xf]
        %v6431 = vld [vmem:[%s55 + $0x54] sm:$0xf]
        %v6432 = vld [vmem:[%s55 + $0x58] sm:$0xf]
        %v6433 = vld [vmem:[%s55 + $0x5c] sm:$0xf]
        %v6434 = vld [vmem:[%s55 + $0x60] sm:$0xf]
        %v6435 = vld [vmem:[%s55 + $0x64] sm:$0xf]
        %v6436 = vld [vmem:[%s55 + $0x68] sm:$0xf]
        %v6437 = vld [vmem:[%s55 + $0x6c] sm:$0xf]
        %v6438 = vpack.c.bf16 %v6401, %v6401
        %v6439 = vpack.c.bf16 %v6409, %v6409
        %v6468 = vunpack.c.l.b16 %v6410
        %v6469 = vunpack.c.l.b16 %v6411
        %v6470 = vunpack.c.l.b16 %v6412
        %v6471 = vunpack.c.l.b16 %v6413
        %v6472 = vunpack.c.l.b16 %v6414
        %v6473 = vunpack.c.l.b16 %v6415
        %v6474 = vunpack.c.l.b16 %v6416
        %v6475 = vunpack.c.l.b16 %v6417
        %v6476 = vunpack.c.l.b16 %v6418
        %v6477 = vunpack.c.l.b16 %v6419
        %v6478 = vunpack.c.l.b16 %v6420
        %v6479 = vunpack.c.l.b16 %v6421
        %v6480 = vunpack.c.l.b16 %v6422
        %v6481 = vunpack.c.l.b16 %v6423
        %v6482 = vunpack.c.l.b16 %v6424
        %v6483 = vunpack.c.l.b16 %v6425
        %v6484 = vunpack.c.l.b16 %v6426
        %v6485 = vunpack.c.l.b16 %v6427
        %v6486 = vunpack.c.l.b16 %v6428
        %v6487 = vunpack.c.l.b16 %v6429
        %v6488 = vunpack.c.l.b16 %v6430
        %v6489 = vunpack.c.l.b16 %v6431
        %v6490 = vunpack.c.l.b16 %v6432
        %v6491 = vunpack.c.l.b16 %v6433
        %v6492 = vunpack.c.l.b16 %v6434
        %v6493 = vunpack.c.l.b16 %v6435
        %v6494 = vunpack.c.l.b16 %v6436
        %v6495 = vunpack.c.l.b16 %v6437
        %v6496 = vpack.c.b16 %v6469, %v6468
        %v6497 = vpack.c.b16 %v6471, %v6470
        %v6498 = vpack.c.b16 %v6473, %v6472
        %v6499 = vpack.c.b16 %v6475, %v6474
        %v6500 = vpack.c.b16 %v6477, %v6476
        %v6501 = vpack.c.b16 %v6479, %v6478
        %v6502 = vpack.c.b16 %v6481, %v6480
        %v6503 = vpack.c.b16 %v6483, %v6482
        %v6504 = vpack.c.b16 %v6485, %v6484
        %v6505 = vpack.c.b16 %v6487, %v6486
        %v6506 = vpack.c.b16 %v6489, %v6488
        %v6507 = vpack.c.b16 %v6491, %v6490
        %v6508 = vpack.c.b16 %v6493, %v6492
        %v6509 = vpack.c.b16 %v6495, %v6494
        %v6525 = vsel %vm2633, %v6439, 0
        %6527 = vmatprep.subr.bf16.mxu0 0
        %6528 = vmatpush1.bf16.msra.mxu0 %v6496
        %6529 = vmatprep.subr.bf16.mxu0 0
        %6530 = vmatpush1.bf16.msra.mxu0 %v6497
        %6531 = vmatprep.subr.bf16.mxu0 0
        %6532 = vmatpush1.bf16.msra.mxu0 %v6498
        %6533 = vmatprep.subr.bf16.mxu0 0
        %6534 = vmatpush1.bf16.msra.mxu0 %v6499
        %6535 = vmatprep.subr.bf16.mxu0 0
        %6536 = vmatpush1.bf16.msra.mxu0 %v6500
        %6537 = vmatprep.subr.bf16.mxu0 0
        %6538 = vmatpush1.bf16.msra.mxu0 %v6501
        %6539 = vmatprep.subr.bf16.mxu0 0
        %6540 = vmatpush1.bf16.msra.mxu0 %v6502
        %6541 = vmatprep.subr.bf16.mxu0 0
        %6542 = vmatpush1.bf16.msra.mxu0 %v6503
        %6543 = vmatprep.subr.bf16.mxu0 0
        %6544 = vmatpush1.bf16.msra.mxu0 %v6504
        %6545 = vmatprep.subr.bf16.mxu0 0
        %6546 = vmatpush1.bf16.msra.mxu0 %v6505
        %6547 = vmatprep.subr.bf16.mxu0 0
        %6548 = vmatpush1.bf16.msra.mxu0 %v6506
        %6549 = vmatprep.subr.bf16.mxu0 0
        %6550 = vmatpush1.bf16.msra.mxu0 %v6507
        %6551 = vmatprep.subr.bf16.mxu0 0
        %6552 = vmatpush1.bf16.msra.mxu0 %v6508
        %6553 = vmatprep.subr.bf16.mxu0 0
        %6554 = vmatpush1.bf16.msra.mxu0 %v6509
        %6555 = vmatprep.subr.bf16.mxu0 0
        %6556 = vmatpush1.bf16.msra.mxu0 0
        %6557 = vmatprep.subr.bf16.mxu0 0
        %6558 = vmatpush1.bf16.msra.mxu0 0
        %6559 = vmatprep.mubr.bf16.mxu0 %v6525
        %6560 = vmatmul.mubr.bf16.gmra.mrb[0].mxu0 %v6438
        %v6561 = vpop.f32.mrb[0].mxu0
        %v6562 = vadd.f32 0.0, %v6561
        %v6563 = vpop.f32.mrb[0].mxu0
        %v6564 = vpop.f32.mrb[0].mxu0
        %v6565 = vpop.f32.mrb[0].mxu0
        %6566 = vdwg.mxu0
        %v6567 = vmul.f32 %v6562, 0.020408163
        %v6568 = vld [vmem:[%s61] sm:$0xf]
        %v6569 = vld [vmem:[%s61 + $0x4] sm:$0xf]
        %v6570 = vld [vmem:[%s61 + $0x8] sm:$0xf]
        %v6571 = vld [vmem:[%s61 + $0xc] sm:$0xf]
        %v6572 = vpack.c.bf16 %v6567, %v6567
        %v6573 = vld [vmem:[#allocation26] sm:$0x1]
        %v6578 = vunpack.c.l.b16 %v6568
        %v6579 = vunpack.c.l.b16 %v6569
        %v6580 = vunpack.c.l.b16 %v6570
        %v6581 = vunpack.c.l.b16 %v6571
        %v6582 = vpack.c.b16 %v6579, %v6578
        %v6583 = vpack.c.b16 %v6581, %v6580
        %vm6586 = vcmask 261120
        %v6588 = vsel %vm6586, %v6572, 0
        %6590 = vmatprep.subr.bf16.mxu0 0
        %6591 = vmatpush1.bf16.msra.mxu0 %v6582
        %6592 = vmatprep.subr.bf16.mxu0 0
        %6593 = vmatpush1.bf16.msra.mxu0 %v6583
        %6594 = vmatprep.subr.bf16.mxu0 0
        %6595 = vmatpush1.bf16.msra.mxu0 0
        %6596 = vmatprep.subr.bf16.mxu0 0
        %6597 = vmatpush1.bf16.msra.mxu0 0
        %6598 = vmatprep.subr.bf16.mxu0 0
        %6599 = vmatpush1.bf16.msra.mxu0 0
        %6600 = vmatprep.subr.bf16.mxu0 0
        %6601 = vmatpush1.bf16.msra.mxu0 0
        %6602 = vmatprep.subr.bf16.mxu0 0
        %6603 = vmatpush1.bf16.msra.mxu0 0
        %6604 = vmatprep.subr.bf16.mxu0 0
        %6605 = vmatpush1.bf16.msra.mxu0 0
        %6606 = vmatprep.subr.bf16.mxu0 0
        %6607 = vmatpush1.bf16.msra.mxu0 0
        %6608 = vmatprep.subr.bf16.mxu0 0
        %6609 = vmatpush1.bf16.msra.mxu0 0
        %6610 = vmatprep.subr.bf16.mxu0 0
        %6611 = vmatpush1.bf16.msra.mxu0 0
        %6612 = vmatprep.subr.bf16.mxu0 0
        %6613 = vmatpush1.bf16.msra.mxu0 0
        %6614 = vmatprep.subr.bf16.mxu0 0
        %6615 = vmatpush1.bf16.msra.mxu0 0
        %6616 = vmatprep.subr.bf16.mxu0 0
        %6617 = vmatpush1.bf16.msra.mxu0 0
        %6618 = vmatprep.subr.bf16.mxu0 0
        %6619 = vmatpush1.bf16.msra.mxu0 0
        %6620 = vmatprep.subr.bf16.mxu0 0
        %6621 = vmatpush1.bf16.msra.mxu0 0
        %6622 = vmatprep.mubr.bf16.mxu0 0
        %6623 = vmatmul.mubr.bf16.gmra.mrb[0].mxu0 %v6588
        %v6624 = vpop.f32.mrb[0].mxu0
        %v6625 = vadd.f32 %v6573, %v6624
        %v6626 = vpop.f32.mrb[0].mxu0
        %v6627 = vpop.f32.mrb[0].mxu0
        %v6628 = vpop.f32.mrb[0].mxu0
        %6629 = vdwg.mxu0
        %v6630 = vmax.f32 %v6625, 0.0
        %v6631 = vld [vmem:[#allocation29] sm:$0xf]
        %v6632 = vpack.c.bf16 %v6630, %v6630
        %v6633 = vld [vmem:[#allocation28] sm:$0x1]
        %v6635 = vsel %vm3106, %v6632, 0
        %v6638 = vsel %vm1602, %v6631, 0
        %6640 = vmatprep.subr.bf16.mxu0 0
        %6641 = vmatpush1.bf16.msra.mxu0 %v6638
        %6642 = vmatprep.subr.bf16.mxu0 0
        %6643 = vmatpush1.bf16.msra.mxu0 0
        %6644 = vmatprep.subr.bf16.mxu0 0
        %6645 = vmatpush1.bf16.msra.mxu0 0
        %6646 = vmatprep.subr.bf16.mxu0 0
        %6647 = vmatpush1.bf16.msra.mxu0 0
        %6648 = vmatprep.subr.bf16.mxu0 0
        %6649 = vmatpush1.bf16.msra.mxu0 0
        %6650 = vmatprep.subr.bf16.mxu0 0
        %6651 = vmatpush1.bf16.msra.mxu0 0
        %6652 = vmatprep.subr.bf16.mxu0 0
        %6653 = vmatpush1.bf16.msra.mxu0 0
        %6654 = vmatprep.subr.bf16.mxu0 0
        %6655 = vmatpush1.bf16.msra.mxu0 0
        %6656 = vmatprep.subr.bf16.mxu0 0
        %6657 = vmatpush1.bf16.msra.mxu0 0
        %6658 = vmatprep.subr.bf16.mxu0 0
        %6659 = vmatpush1.bf16.msra.mxu0 0
        %6660 = vmatprep.subr.bf16.mxu0 0
        %6661 = vmatpush1.bf16.msra.mxu0 0
        %6662 = vmatprep.subr.bf16.mxu0 0
        %6663 = vmatpush1.bf16.msra.mxu0 0
        %6664 = vmatprep.subr.bf16.mxu0 0
        %6665 = vmatpush1.bf16.msra.mxu0 0
        %6666 = vmatprep.subr.bf16.mxu0 0
        %6667 = vmatpush1.bf16.msra.mxu0 0
        %6668 = vmatprep.subr.bf16.mxu0 0
        %6669 = vmatpush1.bf16.msra.mxu0 0
        %6670 = vmatprep.subr.bf16.mxu0 0
        %6671 = vmatpush1.bf16.msra.mxu0 0
        %6672 = vmatprep.mubr.bf16.mxu0 0
        %6673 = vmatmul.mubr.bf16.gmra.mrb[0].mxu0 %v6635
        %v6674 = vpop.f32.mrb[0].mxu0
        %v6675 = vadd.f32 %v6633, %v6674
        %v6676 = vpop.f32.mrb[0].mxu0
        %v6677 = vpop.f32.mrb[0].mxu0
        %v6678 = vpop.f32.mrb[0].mxu0
        %6679 = vdwg.mxu0
        %v6680 = vadd.f32 %v6675, 3.0
        %v6681 = vmax.f32 %v6680, 0.0
        %v6682 = vmin.f32 %v6681, 6.0
        %v6683 = vmul.f32 %v6682, 0.16666667
        %v6684 = vld [vmem:[#allocation25] sm:$0xff]
        %v6685 = vld [vmem:[#allocation25 + $0x8] sm:$0xff]
        %v6686 = vld [vmem:[#allocation25 + $0x10] sm:$0xff]
        %v6687 = vld [vmem:[#allocation25 + $0x18] sm:$0xff]
        %v6688 = vpack.c.bf16 %v6683, %v6683
        %v6693 = vunpack.c.l.b16 %v6684
        %v6694 = vunpack.c.h.b16 %v6684
        %v6695 = vunpack.c.l.b16 %v6685
        %v6696 = vunpack.c.h.b16 %v6685
        %v6697 = vunpack.c.l.b16 %v6686
        %v6698 = vunpack.c.h.b16 %v6686
        %v6699 = vunpack.c.l.b16 %v6687
        %v6700 = vunpack.c.h.b16 %v6687
        %v6701 = vpack.c.b16 %v6695, %v6693
        %v6702 = vpack.c.b16 %v6696, %v6694
        %v6703 = vpack.c.b16 %v6699, %v6697
        %v6704 = vpack.c.b16 %v6700, %v6698
        %v6710 = vsel %vm6586, %v6688, 0
        %6712 = vmatprep.subr.bf16.mxu0 %v6702
        %6713 = vmatpush1.bf16.msra.mxu0 %v6701
        %6714 = vmatprep.subr.bf16.mxu0 %v6704
        %6715 = vmatpush1.bf16.msra.mxu0 %v6703
        %6716 = vmatprep.subr.bf16.mxu0 0
        %6717 = vmatpush1.bf16.msra.mxu0 0
        %6718 = vmatprep.subr.bf16.mxu0 0
        %6719 = vmatpush1.bf16.msra.mxu0 0
        %6720 = vmatprep.subr.bf16.mxu0 0
        %6721 = vmatpush1.bf16.msra.mxu0 0
        %6722 = vmatprep.subr.bf16.mxu0 0
        %6723 = vmatpush1.bf16.msra.mxu0 0
        %6724 = vmatprep.subr.bf16.mxu0 0
        %6725 = vmatpush1.bf16.msra.mxu0 0
        %6726 = vmatprep.subr.bf16.mxu0 0
        %6727 = vmatpush1.bf16.msra.mxu0 0
        %6728 = vmatprep.subr.bf16.mxu0 0
        %6729 = vmatpush1.bf16.msra.mxu0 0
        %6730 = vmatprep.subr.bf16.mxu0 0
        %6731 = vmatpush1.bf16.msra.mxu0 0
        %6732 = vmatprep.subr.bf16.mxu0 0
        %6733 = vmatpush1.bf16.msra.mxu0 0
        %6734 = vmatprep.subr.bf16.mxu0 0
        %6735 = vmatpush1.bf16.msra.mxu0 0
        %6736 = vmatprep.subr.bf16.mxu0 0
        %6737 = vmatpush1.bf16.msra.mxu0 0
        %6738 = vmatprep.subr.bf16.mxu0 0
        %6739 = vmatpush1.bf16.msra.mxu0 0
        %6740 = vmatprep.subr.bf16.mxu0 0
        %6741 = vmatpush1.bf16.msra.mxu0 0
        %6742 = vmatprep.subr.bf16.mxu0 0
        %6743 = vmatpush1.bf16.msra.mxu0 0
        %6744 = vmatprep.mubr.bf16.mxu0 0
        %6745 = vmatmul.mubr.bf16.gmra.mrb[0].mxu0 %v6710
        %v6746 = vpop.f32.mrb[0].mxu0
        %v6747 = vadd.f32 0.0, %v6746
        %v6748 = vpop.f32.mrb[0].mxu0
        %v6749 = vadd.f32 0.0, %v6748
        %v6750 = vpop.f32.mrb[0].mxu0
        %v6751 = vpop.f32.mrb[0].mxu0
        %6752 = vdwg.mxu0
        %v6753 = vlaneseq
        %v6754 = vshrl.u32 %v6753, 7
        %v6755 = vsub.s32 0, %v6754
        %v6756 = vrot.slane %v6747, %v6755
        %v6757 = vlaneseq
        %v6758 = vshrl.u32 %v6757, 7
        %v6759 = vsub.s32 0, %v6758
        %v6760 = vrot.slane %v6749, %v6759
        %v6761 = vmul.f32 %v6393, %v6756
        %v6762 = vmul.f32 %v6394, %v6760
        %v6763 = vld [vmem:[#allocation22] sm:$0xf]
        %v6764 = vld [vmem:[#allocation22 + $0x4] sm:$0xf]
        %v6765 = vld [vmem:[#allocation22 + $0x8] sm:$0xf]
        %v6766 = vld [vmem:[#allocation22 + $0xc] sm:$0xf]
        %v6767 = vld [vmem:[#allocation22 + $0x10] sm:$0xf]
        %v6768 = vld [vmem:[#allocation22 + $0x14] sm:$0xf]
        %v6769 = vld [vmem:[#allocation22 + $0x18] sm:$0xf]
        %v6770 = vld [vmem:[#allocation22 + $0x1c] sm:$0xf]
        %v6771 = vld [vmem:[#allocation22 + $0x20] sm:$0xf]
        %v6772 = vld [vmem:[#allocation22 + $0x24] sm:$0xf]
        %v6773 = vld [vmem:[#allocation22 + $0x28] sm:$0xf]
        %v6774 = vld [vmem:[#allocation22 + $0x2c] sm:$0xf]
        %v6775 = vld [vmem:[#allocation22 + $0x30] sm:$0xf]
        %v6776 = vld [vmem:[#allocation22 + $0x34] sm:$0xf]
        %v6777 = vld [vmem:[#allocation22 + $0x38] sm:$0xf]
        %v6778 = vld [vmem:[#allocation22 + $0x3c] sm:$0xf]
        %v6779 = vld [vmem:[#allocation22 + $0x40] sm:$0xf]
        %v6780 = vld [vmem:[#allocation22 + $0x44] sm:$0xf]
        %v6781 = vld [vmem:[#allocation22 + $0x48] sm:$0xf]
        %v6782 = vld [vmem:[#allocation22 + $0x4c] sm:$0xf]
        %v6783 = vld [vmem:[#allocation22 + $0x50] sm:$0xf]
        %v6784 = vld [vmem:[#allocation22 + $0x54] sm:$0xf]
        %v6785 = vld [vmem:[#allocation22 + $0x58] sm:$0xf]
        %v6786 = vld [vmem:[#allocation22 + $0x5c] sm:$0xf]
        %v6787 = vld [vmem:[#allocation22 + $0x60] sm:$0xf]
        %v6788 = vld [vmem:[#allocation22 + $0x64] sm:$0xf]
        %v6789 = vld [vmem:[#allocation22 + $0x68] sm:$0xf]
        %v6790 = vld [vmem:[#allocation22 + $0x6c] sm:$0xf]
        %v6791 = vpack.c.bf16 %v6761, %v6761
        %v6792 = vpack.c.bf16 %v6762, %v6762
        %v6793 = vld [vmem:[#allocation23] sm:$0x1]
        %v6795 = vlaneseq
        %v6796 = vshrl.u32 %v6795, 7
        %v6797 = vsub.s32 0, %v6796
        %v6798 = vrot.slane %v6793, %v6797
        %v6828 = vunpack.c.l.b16 %v6763
        %v6829 = vunpack.c.l.b16 %v6764
        %v6830 = vunpack.c.l.b16 %v6765
        %v6831 = vunpack.c.l.b16 %v6766
        %v6832 = vunpack.c.l.b16 %v6767
        %v6833 = vunpack.c.l.b16 %v6768
        %v6834 = vunpack.c.l.b16 %v6769
        %v6835 = vunpack.c.l.b16 %v6770
        %v6836 = vunpack.c.l.b16 %v6771
        %v6837 = vunpack.c.l.b16 %v6772
        %v6838 = vunpack.c.l.b16 %v6773
        %v6839 = vunpack.c.l.b16 %v6774
        %v6840 = vunpack.c.l.b16 %v6775
        %v6841 = vunpack.c.l.b16 %v6776
        %v6842 = vunpack.c.l.b16 %v6777
        %v6843 = vunpack.c.l.b16 %v6778
        %v6844 = vunpack.c.l.b16 %v6779
        %v6845 = vunpack.c.l.b16 %v6780
        %v6846 = vunpack.c.l.b16 %v6781
        %v6847 = vunpack.c.l.b16 %v6782
        %v6848 = vunpack.c.l.b16 %v6783
        %v6849 = vunpack.c.l.b16 %v6784
        %v6850 = vunpack.c.l.b16 %v6785
        %v6851 = vunpack.c.l.b16 %v6786
        %v6852 = vunpack.c.l.b16 %v6787
        %v6853 = vunpack.c.l.b16 %v6788
        %v6854 = vunpack.c.l.b16 %v6789
        %v6855 = vunpack.c.l.b16 %v6790
        %v6856 = vpack.c.b16 %v6829, %v6828
        %v6857 = vpack.c.b16 %v6831, %v6830
        %v6858 = vpack.c.b16 %v6833, %v6832
        %v6859 = vpack.c.b16 %v6835, %v6834
        %v6860 = vpack.c.b16 %v6837, %v6836
        %v6861 = vpack.c.b16 %v6839, %v6838
        %v6862 = vpack.c.b16 %v6841, %v6840
        %v6863 = vpack.c.b16 %v6843, %v6842
        %v6864 = vpack.c.b16 %v6845, %v6844
        %v6865 = vpack.c.b16 %v6847, %v6846
        %v6866 = vpack.c.b16 %v6849, %v6848
        %v6867 = vpack.c.b16 %v6851, %v6850
        %v6868 = vpack.c.b16 %v6853, %v6852
        %v6869 = vpack.c.b16 %v6855, %v6854
        %v6885 = vsel %vm2633, %v6792, 0
        %6887 = vmatprep.subr.bf16.mxu0 0
        %6888 = vmatpush1.bf16.msra.mxu0 %v6856
        %6889 = vmatprep.subr.bf16.mxu0 0
        %6890 = vmatpush1.bf16.msra.mxu0 %v6857
        %6891 = vmatprep.subr.bf16.mxu0 0
        %6892 = vmatpush1.bf16.msra.mxu0 %v6858
        %6893 = vmatprep.subr.bf16.mxu0 0
        %6894 = vmatpush1.bf16.msra.mxu0 %v6859
        %6895 = vmatprep.subr.bf16.mxu0 0
        %6896 = vmatpush1.bf16.msra.mxu0 %v6860
        %6897 = vmatprep.subr.bf16.mxu0 0
        %6898 = vmatpush1.bf16.msra.mxu0 %v6861
        %6899 = vmatprep.subr.bf16.mxu0 0
        %6900 = vmatpush1.bf16.msra.mxu0 %v6862
        %6901 = vmatprep.subr.bf16.mxu0 0
        %6902 = vmatpush1.bf16.msra.mxu0 %v6863
        %6903 = vmatprep.subr.bf16.mxu0 0
        %6904 = vmatpush1.bf16.msra.mxu0 %v6864
        %6905 = vmatprep.subr.bf16.mxu0 0
        %6906 = vmatpush1.bf16.msra.mxu0 %v6865
        %6907 = vmatprep.subr.bf16.mxu0 0
        %6908 = vmatpush1.bf16.msra.mxu0 %v6866
        %6909 = vmatprep.subr.bf16.mxu0 0
        %6910 = vmatpush1.bf16.msra.mxu0 %v6867
        %6911 = vmatprep.subr.bf16.mxu0 0
        %6912 = vmatpush1.bf16.msra.mxu0 %v6868
        %6913 = vmatprep.subr.bf16.mxu0 0
        %6914 = vmatpush1.bf16.msra.mxu0 %v6869
        %6915 = vmatprep.subr.bf16.mxu0 0
        %6916 = vmatpush1.bf16.msra.mxu0 0
        %6917 = vmatprep.subr.bf16.mxu0 0
        %6918 = vmatpush1.bf16.msra.mxu0 0
        %6919 = vmatprep.mubr.bf16.mxu0 %v6885
        %6920 = vmatmul.mubr.bf16.gmra.mrb[0].mxu0 %v6791
        %v6921 = vpop.f32.mrb[0].mxu0
        %v6922 = vadd.f32 %v6798, %v6921
        %v6923 = vpop.f32.mrb[0].mxu0
        %v6924 = vpop.f32.mrb[0].mxu0
        %v6925 = vpop.f32.mrb[0].mxu0
        %6926 = vdwg.mxu0
        %v6927 = vadd.f32 %v6922, %v4991
        %v6928 = vld [vmem:[%s75] sm:$0xff]
        %v6929 = vld [vmem:[%s75 + $0x8] sm:$0xff]
        %v6930 = vld [vmem:[%s75 + $0x10] sm:$0xff]
        %v6931 = vld [vmem:[%s75 + $0x18] sm:$0xff]
        %v6932 = vld [vmem:[%s75 + $0x20] sm:$0xff]
        %v6933 = vld [vmem:[%s75 + $0x28] sm:$0xff]
        %v6934 = vld [vmem:[%s75 + $0x30] sm:$0xff]
        %v6935 = vld [vmem:[%s75 + $0x38] sm:$0xff]
        %v6936 = vld [vmem:[%s75 + $0x40] sm:$0xff]
        %v6937 = vld [vmem:[%s75 + $0x48] sm:$0xff]
        %v6938 = vld [vmem:[%s75 + $0x50] sm:$0xff]
        %v6939 = vld [vmem:[%s75 + $0x58] sm:$0xff]
        %v6940 = vld [vmem:[%s75 + $0x60] sm:$0xff]
        %v6941 = vld [vmem:[%s75 + $0x68] sm:$0xff]
        %v6942 = vld [vmem:[%s75 + $0x70] sm:$0xff]
        %v6943 = vld [vmem:[%s75 + $0x78] sm:$0xff]
        %v6944 = vld [vmem:[%s75 + $0x80] sm:$0xff]
        %v6945 = vld [vmem:[%s75 + $0x88] sm:$0xff]
        %v6946 = vld [vmem:[%s75 + $0x90] sm:$0xff]
        %v6947 = vld [vmem:[%s75 + $0x98] sm:$0xff]
        %v6948 = vld [vmem:[%s75 + $0xa0] sm:$0xff]
        %v6949 = vld [vmem:[%s75 + $0xa8] sm:$0xff]
        %v6950 = vld [vmem:[%s75 + $0xb0] sm:$0xff]
        %v6951 = vld [vmem:[%s75 + $0xb8] sm:$0xff]
        %v6952 = vld [vmem:[%s75 + $0xc0] sm:$0xff]
        %v6953 = vld [vmem:[%s75 + $0xc8] sm:$0xff]
        %v6954 = vld [vmem:[%s75 + $0xd0] sm:$0xff]
        %v6955 = vld [vmem:[%s75 + $0xd8] sm:$0xff]
        %v6956 = vpack.c.bf16 %v6927, %v6927
        %v6957 = vld [vmem:[%s77] sm:$0xf]
        %v6959 = vlaneseq
        %v6960 = vshrl.u32 %v6959, 7
        %v6961 = vsub.s32 0, %v6960
        %v6962 = vrot.slane %v6957, %v6961
        %v6963 = vlaneseq
        %v6964 = vshrl.u32 %v6963, 7
        %v6965 = vsub.s32 1, %v6964
        %v6966 = vrot.slane %v6957, %v6965
        %v6967 = vlaneseq
        %v6968 = vshrl.u32 %v6967, 7
        %v6969 = vsub.s32 2, %v6968
        %v6970 = vrot.slane %v6957, %v6969
        %v6971 = vlaneseq
        %v6972 = vshrl.u32 %v6971, 7
        %v6973 = vsub.s32 3, %v6972
        %v6974 = vrot.slane %v6957, %v6973
        %v7007 = vunpack.c.l.b16 %v6928
        %v7008 = vunpack.c.h.b16 %v6928
        %v7009 = vunpack.c.l.b16 %v6929
        %v7010 = vunpack.c.h.b16 %v6929
        %v7011 = vunpack.c.l.b16 %v6930
        %v7012 = vunpack.c.h.b16 %v6930
        %v7013 = vunpack.c.l.b16 %v6931
        %v7014 = vunpack.c.h.b16 %v6931
        %v7015 = vunpack.c.l.b16 %v6932
        %v7016 = vunpack.c.h.b16 %v6932
        %v7017 = vunpack.c.l.b16 %v6933
        %v7018 = vunpack.c.h.b16 %v6933
        %v7019 = vunpack.c.l.b16 %v6934
        %v7020 = vunpack.c.h.b16 %v6934
        %v7021 = vunpack.c.l.b16 %v6935
        %v7022 = vunpack.c.h.b16 %v6935
        %v7023 = vunpack.c.l.b16 %v6936
        %v7024 = vunpack.c.h.b16 %v6936
        %v7025 = vunpack.c.l.b16 %v6937
        %v7026 = vunpack.c.h.b16 %v6937
        %v7027 = vunpack.c.l.b16 %v6938
        %v7028 = vunpack.c.h.b16 %v6938
        %v7029 = vunpack.c.l.b16 %v6939
        %v7030 = vunpack.c.h.b16 %v6939
        %v7031 = vunpack.c.l.b16 %v6940
        %v7032 = vunpack.c.h.b16 %v6940
        %v7033 = vunpack.c.l.b16 %v6941
        %v7034 = vunpack.c.h.b16 %v6941
        %v7035 = vunpack.c.l.b16 %v6942
        %v7036 = vunpack.c.h.b16 %v6942
        %v7037 = vunpack.c.l.b16 %v6943
        %v7038 = vunpack.c.h.b16 %v6943
        %v7039 = vunpack.c.l.b16 %v6944
        %v7040 = vunpack.c.h.b16 %v6944
        %v7041 = vunpack.c.l.b16 %v6945
        %v7042 = vunpack.c.h.b16 %v6945
        %v7043 = vunpack.c.l.b16 %v6946
        %v7044 = vunpack.c.h.b16 %v6946
        %v7045 = vunpack.c.l.b16 %v6947
        %v7046 = vunpack.c.h.b16 %v6947
        %v7047 = vunpack.c.l.b16 %v6948
        %v7048 = vunpack.c.h.b16 %v6948
        %v7049 = vunpack.c.l.b16 %v6949
        %v7050 = vunpack.c.h.b16 %v6949
        %v7051 = vunpack.c.l.b16 %v6950
        %v7052 = vunpack.c.h.b16 %v6950
        %v7053 = vunpack.c.l.b16 %v6951
        %v7054 = vunpack.c.h.b16 %v6951
        %v7055 = vunpack.c.l.b16 %v6952
        %v7056 = vunpack.c.h.b16 %v6952
        %v7057 = vunpack.c.l.b16 %v6953
        %v7058 = vunpack.c.h.b16 %v6953
        %v7059 = vunpack.c.l.b16 %v6954
        %v7060 = vunpack.c.h.b16 %v6954
        %v7061 = vunpack.c.l.b16 %v6955
        %v7062 = vunpack.c.h.b16 %v6955
        %v7063 = vpack.c.b16 %v7011, %v7007
        %v7064 = vpack.c.b16 %v7012, %v7008
        %v7065 = vpack.c.b16 %v7013, %v7009
        %v7066 = vpack.c.b16 %v7014, %v7010
        %v7067 = vpack.c.b16 %v7019, %v7015
        %v7068 = vpack.c.b16 %v7020, %v7016
        %v7069 = vpack.c.b16 %v7021, %v7017
        %v7070 = vpack.c.b16 %v7022, %v7018
        %v7071 = vpack.c.b16 %v7027, %v7023
        %v7072 = vpack.c.b16 %v7028, %v7024
        %v7073 = vpack.c.b16 %v7029, %v7025
        %v7074 = vpack.c.b16 %v7030, %v7026
        %v7075 = vpack.c.b16 %v7035, %v7031
        %v7076 = vpack.c.b16 %v7036, %v7032
        %v7077 = vpack.c.b16 %v7037, %v7033
        %v7078 = vpack.c.b16 %v7038, %v7034
        %v7079 = vpack.c.b16 %v7043, %v7039
        %v7080 = vpack.c.b16 %v7044, %v7040
        %v7081 = vpack.c.b16 %v7045, %v7041
        %v7082 = vpack.c.b16 %v7046, %v7042
        %v7083 = vpack.c.b16 %v7051, %v7047
        %v7084 = vpack.c.b16 %v7052, %v7048
        %v7085 = vpack.c.b16 %v7053, %v7049
        %v7086 = vpack.c.b16 %v7054, %v7050
        %v7087 = vpack.c.b16 %v7059, %v7055
        %v7088 = vpack.c.b16 %v7060, %v7056
        %v7089 = vpack.c.b16 %v7061, %v7057
        %v7090 = vpack.c.b16 %v7062, %v7058
        %v7120 = vsel %vm2991, %v6956, 0
        %7122 = vmatprep.subr.bf16.mxu0 %v7064
        %7123 = vmatpush1.bf16.msra.mxu0 %v7063
        %7124 = vmatprep.subr.bf16.mxu0 %v7068
        %7125 = vmatpush1.bf16.msra.mxu0 %v7067
        %7126 = vmatprep.subr.bf16.mxu0 %v7072
        %7127 = vmatpush1.bf16.msra.mxu0 %v7071
        %7128 = vmatprep.subr.bf16.mxu0 %v7076
        %7129 = vmatpush1.bf16.msra.mxu0 %v7075
        %7130 = vmatprep.subr.bf16.mxu0 %v7080
        %7131 = vmatpush1.bf16.msra.mxu0 %v7079
        %7132 = vmatprep.subr.bf16.mxu0 %v7084
        %7133 = vmatpush1.bf16.msra.mxu0 %v7083
        %7134 = vmatprep.subr.bf16.mxu0 %v7088
        %7135 = vmatpush1.bf16.msra.mxu0 %v7087
        %7136 = vmatprep.subr.bf16.mxu0 0
        %7137 = vmatpush1.bf16.msra.mxu0 0
        %7138 = vmatprep.subr.bf16.mxu0 0
        %7139 = vmatpush1.bf16.msra.mxu0 0
        %7140 = vmatprep.subr.bf16.mxu0 0
        %7141 = vmatpush1.bf16.msra.mxu0 0
        %7142 = vmatprep.subr.bf16.mxu0 0
        %7143 = vmatpush1.bf16.msra.mxu0 0
        %7144 = vmatprep.subr.bf16.mxu0 0
        %7145 = vmatpush1.bf16.msra.mxu0 0
        %7146 = vmatprep.subr.bf16.mxu0 0
        %7147 = vmatpush1.bf16.msra.mxu0 0
        %7148 = vmatprep.subr.bf16.mxu0 0
        %7149 = vmatpush1.bf16.msra.mxu0 0
        %7150 = vmatprep.subr.bf16.mxu0 0
        %7151 = vmatpush1.bf16.msra.mxu0 0
        %7152 = vmatprep.subr.bf16.mxu0 0
        %7153 = vmatpush1.bf16.msra.mxu0 0
        %7154 = vmatprep.mubr.bf16.mxu0 0
        %7155 = vmatmul.mubr.bf16.gmra.mrb[0].mxu0 %v7120
        %v7156 = vpop.f32.mrb[0].mxu0
        %v7157 = vadd.f32 %v6962, %v7156
        %v7158 = vpop.f32.mrb[0].mxu0
        %v7159 = vadd.f32 %v6966, %v7158
        %v7160 = vpop.f32.mrb[0].mxu0
        %v7161 = vpop.f32.mrb[0].mxu0
        %7162 = vdwg.mxu0
        %7163 = vmatprep.subr.bf16.mxu0 %v7066
        %7164 = vmatpush1.bf16.msra.mxu0 %v7065
        %7165 = vmatprep.subr.bf16.mxu0 %v7070
        %7166 = vmatpush1.bf16.msra.mxu0 %v7069
        %7167 = vmatprep.subr.bf16.mxu0 %v7074
        %7168 = vmatpush1.bf16.msra.mxu0 %v7073
        %7169 = vmatprep.subr.bf16.mxu0 %v7078
        %7170 = vmatpush1.bf16.msra.mxu0 %v7077
        %7171 = vmatprep.subr.bf16.mxu0 %v7082
        %7172 = vmatpush1.bf16.msra.mxu0 %v7081
        %7173 = vmatprep.subr.bf16.mxu0 %v7086
        %7174 = vmatpush1.bf16.msra.mxu0 %v7085
        %7175 = vmatprep.subr.bf16.mxu0 %v7090
        %7176 = vmatpush1.bf16.msra.mxu0 %v7089
        %7177 = vmatprep.subr.bf16.mxu0 0
        %7178 = vmatpush1.bf16.msra.mxu0 0
        %7179 = vmatprep.subr.bf16.mxu0 0
        %7180 = vmatpush1.bf16.msra.mxu0 0
        %7181 = vmatprep.subr.bf16.mxu0 0
        %7182 = vmatpush1.bf16.msra.mxu0 0
        %7183 = vmatprep.subr.bf16.mxu0 0
        %7184 = vmatpush1.bf16.msra.mxu0 0
        %7185 = vmatprep.subr.bf16.mxu0 0
        %7186 = vmatpush1.bf16.msra.mxu0 0
        %7187 = vmatprep.subr.bf16.mxu0 0
        %7188 = vmatpush1.bf16.msra.mxu0 0
        %7189 = vmatprep.subr.bf16.mxu0 0
        %7190 = vmatpush1.bf16.msra.mxu0 0
        %7191 = vmatprep.subr.bf16.mxu0 0
        %7192 = vmatpush1.bf16.msra.mxu0 0
        %7193 = vmatprep.subr.bf16.mxu0 0
        %7194 = vmatpush1.bf16.msra.mxu0 0
        %7195 = vmatprep.mubr.bf16.mxu0 0
        %7196 = vmatmul.mubr.bf16.gmra.mrb[0].mxu0 %v7120
        %v7197 = vpop.f32.mrb[0].mxu0
        %v7198 = vadd.f32 %v6970, %v7197
        %v7199 = vpop.f32.mrb[0].mxu0
        %v7200 = vadd.f32 %v6974, %v7199
        %v7201 = vpop.f32.mrb[0].mxu0
        %v7202 = vpop.f32.mrb[0].mxu0
        %7203 = vdwg.mxu0
        %v7204 = vadd.f32 %v7157, 3.0
        %v7205 = vadd.f32 %v7159, 3.0
        %v7206 = vadd.f32 %v7198, 3.0
        %v7207 = vadd.f32 %v7200, 3.0
        %v7208 = vmax.f32 %v7204, 0.0
        %v7209 = vmax.f32 %v7205, 0.0
        %v7210 = vmax.f32 %v7206, 0.0
        %v7211 = vmax.f32 %v7207, 0.0
        %v7212 = vmin.f32 %v7208, 6.0
        %v7213 = vmin.f32 %v7209, 6.0
        %v7214 = vmin.f32 %v7210, 6.0
        %v7215 = vmin.f32 %v7211, 6.0
        %v7216 = vmul.f32 %v7212, 0.16666667
        %v7217 = vmul.f32 %v7213, 0.16666667
        %v7218 = vmul.f32 %v7214, 0.16666667
        %v7219 = vmul.f32 %v7215, 0.16666667
        %v7220 = vmul.f32 %v7157, %v7216
        %v7221 = vmul.f32 %v7159, %v7217
        %v7222 = vmul.f32 %v7198, %v7218
        %v7223 = vmul.f32 %v7200, %v7219
        %v7224 = vsel %vm3665, %v7220, 0.0
        %v7225 = vrot.slane %v7224, 4
        %v7226 = vadd.f32 %v7224, %v7225
        %v7227 = vrot.slane %v7226, 2
        %v7228 = vadd.f32 %v7226, %v7227
        %v7229 = vrot.slane %v7228, 1
        %v7230 = vadd.f32 %v7228, %v7229
        %v7231 = vsel %vm3665, %v7221, 0.0
        %v7232 = vrot.slane %v7231, 4
        %v7233 = vadd.f32 %v7231, %v7232
        %v7234 = vrot.slane %v7233, 2
        %v7235 = vadd.f32 %v7233, %v7234
        %v7236 = vrot.slane %v7235, 1
        %v7237 = vadd.f32 %v7235, %v7236
        %v7238 = vsel %vm3665, %v7222, 0.0
        %v7239 = vrot.slane %v7238, 4
        %v7240 = vadd.f32 %v7238, %v7239
        %v7241 = vrot.slane %v7240, 2
        %v7242 = vadd.f32 %v7240, %v7241
        %v7243 = vrot.slane %v7242, 1
        %v7244 = vadd.f32 %v7242, %v7243
        %vm7245 = vcmask 522240
        %v7246 = vsel %vm7245, %v7223, 0.0
        %v7247 = vrot.slane %v7246, 4
        %v7248 = vadd.f32 %v7246, %v7247
        %v7249 = vrot.slane %v7248, 2
        %v7250 = vadd.f32 %v7248, %v7249
        %v7251 = vrot.slane %v7250, 1
        %v7252 = vadd.f32 %v7250, %v7251
        %v7253 = vld [vmem:[%s83] sm:$0xf]
        %v7254 = vld [vmem:[%s83 + $0x4] sm:$0xf]
        %v7255 = vld [vmem:[%s83 + $0x8] sm:$0xf]
        %v7256 = vld [vmem:[%s83 + $0xc] sm:$0xf]
        %v7257 = vld [vmem:[%s83 + $0x10] sm:$0xf]
        %v7258 = vld [vmem:[%s83 + $0x14] sm:$0xf]
        %v7259 = vld [vmem:[%s83 + $0x18] sm:$0xf]
        %v7260 = vld [vmem:[%s83 + $0x1c] sm:$0xf]
        %v7261 = vld [vmem:[%s83 + $0x20] sm:$0xf]
        %v7262 = vld [vmem:[%s83 + $0x24] sm:$0xf]
        %v7263 = vld [vmem:[%s83 + $0x28] sm:$0xf]
        %v7264 = vld [vmem:[%s83 + $0x2c] sm:$0xf]
        %v7265 = vld [vmem:[%s83 + $0x30] sm:$0xf]
        %v7266 = vld [vmem:[%s83 + $0x34] sm:$0xf]
        %v7267 = vld [vmem:[%s83 + $0x38] sm:$0xf]
        %v7268 = vld [vmem:[%s83 + $0x3c] sm:$0xf]
        %v7269 = vld [vmem:[%s83 + $0x40] sm:$0xf]
        %v7270 = vld [vmem:[%s83 + $0x44] sm:$0xf]
        %v7271 = vld [vmem:[%s83 + $0x48] sm:$0xf]
        %v7272 = vld [vmem:[%s83 + $0x4c] sm:$0xf]
        %v7273 = vld [vmem:[%s83 + $0x50] sm:$0xf]
        %v7274 = vld [vmem:[%s83 + $0x54] sm:$0xf]
        %v7275 = vld [vmem:[%s83 + $0x58] sm:$0xf]
        %v7276 = vld [vmem:[%s83 + $0x5c] sm:$0xf]
        %v7277 = vld [vmem:[%s83 + $0x60] sm:$0xf]
        %v7278 = vld [vmem:[%s83 + $0x64] sm:$0xf]
        %v7279 = vld [vmem:[%s83 + $0x68] sm:$0xf]
        %v7280 = vld [vmem:[%s83 + $0x6c] sm:$0xf]
        %v7281 = vld [vmem:[%s83 + $0x70] sm:$0xf]
        %v7282 = vld [vmem:[%s83 + $0x74] sm:$0xf]
        %v7283 = vld [vmem:[%s83 + $0x78] sm:$0xf]
        %v7284 = vld [vmem:[%s83 + $0x7c] sm:$0xf]
        %v7285 = vld [vmem:[%s83 + $0x80] sm:$0xf]
        %v7286 = vld [vmem:[%s83 + $0x84] sm:$0xf]
        %v7287 = vld [vmem:[%s83 + $0x88] sm:$0xf]
        %v7288 = vld [vmem:[%s83 + $0x8c] sm:$0xf]
        %v7289 = vld [vmem:[%s83 + $0x90] sm:$0xf]
        %v7290 = vld [vmem:[%s83 + $0x94] sm:$0xf]
        %v7291 = vld [vmem:[%s83 + $0x98] sm:$0xf]
        %v7292 = vld [vmem:[%s83 + $0x9c] sm:$0xf]
        %v7293 = vld [vmem:[%s83 + $0xa0] sm:$0xf]
        %v7294 = vld [vmem:[%s83 + $0xa4] sm:$0xf]
        %v7295 = vld [vmem:[%s83 + $0xa8] sm:$0xf]
        %v7296 = vld [vmem:[%s83 + $0xac] sm:$0xf]
        %v7297 = vld [vmem:[%s83 + $0xb0] sm:$0xf]
        %v7298 = vld [vmem:[%s83 + $0xb4] sm:$0xf]
        %v7299 = vld [vmem:[%s83 + $0xb8] sm:$0xf]
        %v7300 = vld [vmem:[%s83 + $0xbc] sm:$0xf]
        %v7301 = vld [vmem:[%s83 + $0xc0] sm:$0xf]
        %v7302 = vld [vmem:[%s83 + $0xc4] sm:$0xf]
        %v7303 = vld [vmem:[%s83 + $0xc8] sm:$0xf]
        %v7304 = vld [vmem:[%s83 + $0xcc] sm:$0xf]
        %v7305 = vld [vmem:[%s83 + $0xd0] sm:$0xf]
        %v7306 = vld [vmem:[%s83 + $0xd4] sm:$0xf]
        %v7307 = vld [vmem:[%s83 + $0xd8] sm:$0xf]
        %v7308 = vld [vmem:[%s83 + $0xdc] sm:$0xf]
        %v7309 = vpack.c.bf16 %v7230, %v7230
        %v7310 = vpack.c.bf16 %v7237, %v7237
        %v7311 = vpack.c.bf16 %v7244, %v7244
        %v7312 = vpack.c.bf16 %v7252, %v7252
        %v7369 = vunpack.c.l.b16 %v7253
        %v7370 = vunpack.c.l.b16 %v7254
        %v7371 = vunpack.c.l.b16 %v7255
        %v7372 = vunpack.c.l.b16 %v7256
        %v7373 = vunpack.c.l.b16 %v7257
        %v7374 = vunpack.c.l.b16 %v7258
        %v7375 = vunpack.c.l.b16 %v7259
        %v7376 = vunpack.c.l.b16 %v7260
        %v7377 = vunpack.c.l.b16 %v7261
        %v7378 = vunpack.c.l.b16 %v7262
        %v7379 = vunpack.c.l.b16 %v7263
        %v7380 = vunpack.c.l.b16 %v7264
        %v7381 = vunpack.c.l.b16 %v7265
        %v7382 = vunpack.c.l.b16 %v7266
        %v7383 = vunpack.c.l.b16 %v7267
        %v7384 = vunpack.c.l.b16 %v7268
        %v7385 = vunpack.c.l.b16 %v7269
        %v7386 = vunpack.c.l.b16 %v7270
        %v7387 = vunpack.c.l.b16 %v7271
        %v7388 = vunpack.c.l.b16 %v7272
        %v7389 = vunpack.c.l.b16 %v7273
        %v7390 = vunpack.c.l.b16 %v7274
        %v7391 = vunpack.c.l.b16 %v7275
        %v7392 = vunpack.c.l.b16 %v7276
        %v7393 = vunpack.c.l.b16 %v7277
        %v7394 = vunpack.c.l.b16 %v7278
        %v7395 = vunpack.c.l.b16 %v7279
        %v7396 = vunpack.c.l.b16 %v7280
        %v7397 = vunpack.c.l.b16 %v7281
        %v7398 = vunpack.c.l.b16 %v7282
        %v7399 = vunpack.c.l.b16 %v7283
        %v7400 = vunpack.c.l.b16 %v7284
        %v7401 = vunpack.c.l.b16 %v7285
        %v7402 = vunpack.c.l.b16 %v7286
        %v7403 = vunpack.c.l.b16 %v7287
        %v7404 = vunpack.c.l.b16 %v7288
        %v7405 = vunpack.c.l.b16 %v7289
        %v7406 = vunpack.c.l.b16 %v7290
        %v7407 = vunpack.c.l.b16 %v7291
        %v7408 = vunpack.c.l.b16 %v7292
        %v7409 = vunpack.c.l.b16 %v7293
        %v7410 = vunpack.c.l.b16 %v7294
        %v7411 = vunpack.c.l.b16 %v7295
        %v7412 = vunpack.c.l.b16 %v7296
        %v7413 = vunpack.c.l.b16 %v7297
        %v7414 = vunpack.c.l.b16 %v7298
        %v7415 = vunpack.c.l.b16 %v7299
        %v7416 = vunpack.c.l.b16 %v7300
        %v7417 = vunpack.c.l.b16 %v7301
        %v7418 = vunpack.c.l.b16 %v7302
        %v7419 = vunpack.c.l.b16 %v7303
        %v7420 = vunpack.c.l.b16 %v7304
        %v7421 = vunpack.c.l.b16 %v7305
        %v7422 = vunpack.c.l.b16 %v7306
        %v7423 = vunpack.c.l.b16 %v7307
        %v7424 = vunpack.c.l.b16 %v7308
        %v7425 = vpack.c.b16 %v7370, %v7369
        %v7426 = vpack.c.b16 %v7372, %v7371
        %v7427 = vpack.c.b16 %v7374, %v7373
        %v7428 = vpack.c.b16 %v7376, %v7375
        %v7429 = vpack.c.b16 %v7378, %v7377
        %v7430 = vpack.c.b16 %v7380, %v7379
        %v7431 = vpack.c.b16 %v7382, %v7381
        %v7432 = vpack.c.b16 %v7384, %v7383
        %v7433 = vpack.c.b16 %v7386, %v7385
        %v7434 = vpack.c.b16 %v7388, %v7387
        %v7435 = vpack.c.b16 %v7390, %v7389
        %v7436 = vpack.c.b16 %v7392, %v7391
        %v7437 = vpack.c.b16 %v7394, %v7393
        %v7438 = vpack.c.b16 %v7396, %v7395
        %v7439 = vpack.c.b16 %v7398, %v7397
        %v7440 = vpack.c.b16 %v7400, %v7399
        %v7441 = vpack.c.b16 %v7402, %v7401
        %v7442 = vpack.c.b16 %v7404, %v7403
        %v7443 = vpack.c.b16 %v7406, %v7405
        %v7444 = vpack.c.b16 %v7408, %v7407
        %v7445 = vpack.c.b16 %v7410, %v7409
        %v7446 = vpack.c.b16 %v7412, %v7411
        %v7447 = vpack.c.b16 %v7414, %v7413
        %v7448 = vpack.c.b16 %v7416, %v7415
        %v7449 = vpack.c.b16 %v7418, %v7417
        %v7450 = vpack.c.b16 %v7420, %v7419
        %v7451 = vpack.c.b16 %v7422, %v7421
        %v7452 = vpack.c.b16 %v7424, %v7423
        %vm7481 = vcmask 523264
        %v7483 = vsel %vm7481, %v7312, 0
        %7485 = vmatprep.subr.bf16.mxu0 0
        %7486 = vmatpush1.bf16.msra.mxu0 %v7425
        %7487 = vmatprep.subr.bf16.mxu0 0
        %7488 = vmatpush1.bf16.msra.mxu0 %v7426
        %7489 = vmatprep.subr.bf16.mxu0 0
        %7490 = vmatpush1.bf16.msra.mxu0 %v7427
        %7491 = vmatprep.subr.bf16.mxu0 0
        %7492 = vmatpush1.bf16.msra.mxu0 %v7428
        %7493 = vmatprep.subr.bf16.mxu0 0
        %7494 = vmatpush1.bf16.msra.mxu0 %v7429
        %7495 = vmatprep.subr.bf16.mxu0 0
        %7496 = vmatpush1.bf16.msra.mxu0 %v7430
        %7497 = vmatprep.subr.bf16.mxu0 0
        %7498 = vmatpush1.bf16.msra.mxu0 %v7431
        %7499 = vmatprep.subr.bf16.mxu0 0
        %7500 = vmatpush1.bf16.msra.mxu0 %v7432
        %7501 = vmatprep.subr.bf16.mxu0 0
        %7502 = vmatpush1.bf16.msra.mxu0 %v7433
        %7503 = vmatprep.subr.bf16.mxu0 0
        %7504 = vmatpush1.bf16.msra.mxu0 %v7434
        %7505 = vmatprep.subr.bf16.mxu0 0
        %7506 = vmatpush1.bf16.msra.mxu0 %v7435
        %7507 = vmatprep.subr.bf16.mxu0 0
        %7508 = vmatpush1.bf16.msra.mxu0 %v7436
        %7509 = vmatprep.subr.bf16.mxu0 0
        %7510 = vmatpush1.bf16.msra.mxu0 %v7437
        %7511 = vmatprep.subr.bf16.mxu0 0
        %7512 = vmatpush1.bf16.msra.mxu0 %v7438
        %7513 = vmatprep.subr.bf16.mxu0 0
        %7514 = vmatpush1.bf16.msra.mxu0 %v7439
        %7515 = vmatprep.subr.bf16.mxu0 0
        %7516 = vmatpush1.bf16.msra.mxu0 %v7440
        %7517 = vmatprep.mubr.bf16.mxu0 %v7310
        %7518 = vmatmul.mubr.bf16.gmra.mrb[0].mxu0 %v7309
        %v7519 = vpop.f32.mrb[0].mxu0
        %v7520 = vadd.f32 0.0, %v7519
        %v7521 = vpop.f32.mrb[0].mxu0
        %v7522 = vpop.f32.mrb[0].mxu0
        %v7523 = vpop.f32.mrb[0].mxu0
        %7524 = vdwg.mxu0
        %7525 = vmatprep.subr.bf16.mxu0 0
        %7526 = vmatpush1.bf16.msra.mxu0 %v7441
        %7527 = vmatprep.subr.bf16.mxu0 0
        %7528 = vmatpush1.bf16.msra.mxu0 %v7442
        %7529 = vmatprep.subr.bf16.mxu0 0
        %7530 = vmatpush1.bf16.msra.mxu0 %v7443
        %7531 = vmatprep.subr.bf16.mxu0 0
        %7532 = vmatpush1.bf16.msra.mxu0 %v7444
        %7533 = vmatprep.subr.bf16.mxu0 0
        %7534 = vmatpush1.bf16.msra.mxu0 %v7445
        %7535 = vmatprep.subr.bf16.mxu0 0
        %7536 = vmatpush1.bf16.msra.mxu0 %v7446
        %7537 = vmatprep.subr.bf16.mxu0 0
        %7538 = vmatpush1.bf16.msra.mxu0 %v7447
        %7539 = vmatprep.subr.bf16.mxu0 0
        %7540 = vmatpush1.bf16.msra.mxu0 %v7448
        %7541 = vmatprep.subr.bf16.mxu0 0
        %7542 = vmatpush1.bf16.msra.mxu0 %v7449
        %7543 = vmatprep.subr.bf16.mxu0 0
        %7544 = vmatpush1.bf16.msra.mxu0 %v7450
        %7545 = vmatprep.subr.bf16.mxu0 0
        %7546 = vmatpush1.bf16.msra.mxu0 %v7451
        %7547 = vmatprep.subr.bf16.mxu0 0
        %7548 = vmatpush1.bf16.msra.mxu0 %v7452
        %7549 = vmatprep.subr.bf16.mxu0 0
        %7550 = vmatpush1.bf16.msra.mxu0 0
        %7551 = vmatprep.subr.bf16.mxu0 0
        %7552 = vmatpush1.bf16.msra.mxu0 0
        %7553 = vmatprep.subr.bf16.mxu0 0
        %7554 = vmatpush1.bf16.msra.mxu0 0
        %7555 = vmatprep.subr.bf16.mxu0 0
        %7556 = vmatpush1.bf16.msra.mxu0 0
        %7557 = vmatprep.mubr.bf16.mxu0 %v7483
        %7558 = vmatmul.mubr.bf16.gmra.mrb[0].mxu0 %v7311
        %v7559 = vpop.f32.mrb[0].mxu0
        %v7560 = vadd.f32 %v7520, %v7559
        %v7561 = vpop.f32.mrb[0].mxu0
        %v7562 = vpop.f32.mrb[0].mxu0
        %v7563 = vpop.f32.mrb[0].mxu0
        %7564 = vdwg.mxu0
        %v7565 = vmul.f32 %v7560, 0.020408163
        %v7566 = vld [vmem:[%s81] sm:$0xf]
        %v7567 = vld [vmem:[%s81 + $0x4] sm:$0xf]
        %v7568 = vld [vmem:[%s81 + $0x8] sm:$0xf]
        %v7569 = vld [vmem:[%s81 + $0xc] sm:$0xf]
        %v7570 = vld [vmem:[%s81 + $0x10] sm:$0xf]
        %v7571 = vld [vmem:[%s81 + $0x14] sm:$0xf]
        %v7572 = vld [vmem:[%s81 + $0x18] sm:$0xf]
        %v7573 = vld [vmem:[%s81 + $0x1c] sm:$0xf]
        %v7574 = vpack.c.bf16 %v7565, %v7565
        %v7575 = vld [vmem:[%s79] sm:$0x1]
        %v7584 = vunpack.c.l.b16 %v7566
        %v7585 = vunpack.c.l.b16 %v7567
        %v7586 = vunpack.c.l.b16 %v7568
        %v7587 = vunpack.c.l.b16 %v7569
        %v7588 = vunpack.c.l.b16 %v7570
        %v7589 = vunpack.c.l.b16 %v7571
        %v7590 = vunpack.c.l.b16 %v7572
        %v7591 = vunpack.c.l.b16 %v7573
        %v7592 = vpack.c.b16 %v7585, %v7584
        %v7593 = vpack.c.b16 %v7587, %v7586
        %v7594 = vpack.c.b16 %v7589, %v7588
        %v7595 = vpack.c.b16 %v7591, %v7590
        %v7601 = vsel %vm7481, %v7574, 0
        %7603 = vmatprep.subr.bf16.mxu0 0
        %7604 = vmatpush1.bf16.msra.mxu0 %v7592
        %7605 = vmatprep.subr.bf16.mxu0 0
        %7606 = vmatpush1.bf16.msra.mxu0 %v7593
        %7607 = vmatprep.subr.bf16.mxu0 0
        %7608 = vmatpush1.bf16.msra.mxu0 %v7594
        %7609 = vmatprep.subr.bf16.mxu0 0
        %7610 = vmatpush1.bf16.msra.mxu0 %v7595
        %7611 = vmatprep.subr.bf16.mxu0 0
        %7612 = vmatpush1.bf16.msra.mxu0 0
        %7613 = vmatprep.subr.bf16.mxu0 0
        %7614 = vmatpush1.bf16.msra.mxu0 0
        %7615 = vmatprep.subr.bf16.mxu0 0
        %7616 = vmatpush1.bf16.msra.mxu0 0
        %7617 = vmatprep.subr.bf16.mxu0 0
        %7618 = vmatpush1.bf16.msra.mxu0 0
        %7619 = vmatprep.subr.bf16.mxu0 0
        %7620 = vmatpush1.bf16.msra.mxu0 0
        %7621 = vmatprep.subr.bf16.mxu0 0
        %7622 = vmatpush1.bf16.msra.mxu0 0
        %7623 = vmatprep.subr.bf16.mxu0 0
        %7624 = vmatpush1.bf16.msra.mxu0 0
        %7625 = vmatprep.subr.bf16.mxu0 0
        %7626 = vmatpush1.bf16.msra.mxu0 0
        %7627 = vmatprep.subr.bf16.mxu0 0
        %7628 = vmatpush1.bf16.msra.mxu0 0
        %7629 = vmatprep.subr.bf16.mxu0 0
        %7630 = vmatpush1.bf16.msra.mxu0 0
        %7631 = vmatprep.subr.bf16.mxu0 0
        %7632 = vmatpush1.bf16.msra.mxu0 0
        %7633 = vmatprep.subr.bf16.mxu0 0
        %7634 = vmatpush1.bf16.msra.mxu0 0
        %7635 = vmatprep.mubr.bf16.mxu0 0
        %7636 = vmatmul.mubr.bf16.gmra.mrb[0].mxu0 %v7601
        %v7637 = vpop.f32.mrb[0].mxu0
        %v7638 = vadd.f32 %v7575, %v7637
        %v7639 = vpop.f32.mrb[0].mxu0
        %v7640 = vpop.f32.mrb[0].mxu0
        %v7641 = vpop.f32.mrb[0].mxu0
        %7642 = vdwg.mxu0
        %v7643 = vadd.f32 %v7638, 3.0
        %v7644 = vmax.f32 %v7643, 0.0
        %v7645 = vmin.f32 %v7644, 6.0
        %v7646 = vmul.f32 %v7645, 0.16666667
        %v7647 = vmul.f32 %v7638, %v7646
        %v7648 = vld [vmem:[%s73] sm:$0xf]
        %v7649 = vld [vmem:[%s73 + $0x4] sm:$0xf]
        %v7650 = vld [vmem:[%s73 + $0x8] sm:$0xf]
        %v7651 = vld [vmem:[%s73 + $0xc] sm:$0xf]
        %v7652 = vld [vmem:[%s73 + $0x10] sm:$0xf]
        %v7653 = vld [vmem:[%s73 + $0x14] sm:$0xf]
        %v7654 = vld [vmem:[%s73 + $0x18] sm:$0xf]
        %v7655 = vld [vmem:[%s73 + $0x1c] sm:$0xf]
        %v7656 = vld [vmem:[%s73 + $0x20] sm:$0xf]
        %v7657 = vld [vmem:[%s73 + $0x24] sm:$0xf]
        %v7658 = vld [vmem:[%s73 + $0x28] sm:$0xf]
        %v7659 = vld [vmem:[%s73 + $0x2c] sm:$0xf]
        %v7660 = vld [vmem:[%s73 + $0x30] sm:$0xf]
        %v7661 = vld [vmem:[%s73 + $0x34] sm:$0xf]
        %v7662 = vld [vmem:[%s73 + $0x38] sm:$0xf]
        %v7663 = vld [vmem:[%s73 + $0x3c] sm:$0xf]
        %v7664 = vpack.c.bf16 %v7647, %v7647
        %v7665 = vld [vmem:[#allocation32] sm:$0x1]
        %v7682 = vunpack.c.l.b16 %v7648
        %v7683 = vunpack.c.l.b16 %v7649
        %v7684 = vunpack.c.l.b16 %v7650
        %v7685 = vunpack.c.l.b16 %v7651
        %v7686 = vunpack.c.l.b16 %v7652
        %v7687 = vunpack.c.l.b16 %v7653
        %v7688 = vunpack.c.l.b16 %v7654
        %v7689 = vunpack.c.l.b16 %v7655
        %v7690 = vunpack.c.l.b16 %v7656
        %v7691 = vunpack.c.l.b16 %v7657
        %v7692 = vunpack.c.l.b16 %v7658
        %v7693 = vunpack.c.l.b16 %v7659
        %v7694 = vunpack.c.l.b16 %v7660
        %v7695 = vunpack.c.l.b16 %v7661
        %v7696 = vunpack.c.l.b16 %v7662
        %v7697 = vunpack.c.l.b16 %v7663
        %v7698 = vpack.c.b16 %v7683, %v7682
        %v7699 = vpack.c.b16 %v7685, %v7684
        %v7700 = vpack.c.b16 %v7687, %v7686
        %v7701 = vpack.c.b16 %v7689, %v7688
        %v7702 = vpack.c.b16 %v7691, %v7690
        %v7703 = vpack.c.b16 %v7693, %v7692
        %v7704 = vpack.c.b16 %v7695, %v7694
        %v7705 = vpack.c.b16 %v7697, %v7696
        %7714 = vmatprep.subr.bf16.mxu0 0
        %7715 = vmatpush1.bf16.msra.mxu0 %v7698
        %7716 = vmatprep.subr.bf16.mxu0 0
        %7717 = vmatpush1.bf16.msra.mxu0 %v7699
        %7718 = vmatprep.subr.bf16.mxu0 0
        %7719 = vmatpush1.bf16.msra.mxu0 %v7700
        %7720 = vmatprep.subr.bf16.mxu0 0
        %7721 = vmatpush1.bf16.msra.mxu0 %v7701
        %7722 = vmatprep.subr.bf16.mxu0 0
        %7723 = vmatpush1.bf16.msra.mxu0 %v7702
        %7724 = vmatprep.subr.bf16.mxu0 0
        %7725 = vmatpush1.bf16.msra.mxu0 %v7703
        %7726 = vmatprep.subr.bf16.mxu0 0
        %7727 = vmatpush1.bf16.msra.mxu0 %v7704
        %7728 = vmatprep.subr.bf16.mxu0 0
        %7729 = vmatpush1.bf16.msra.mxu0 %v7705
        %7730 = vmatprep.subr.bf16.mxu0 0
        %7731 = vmatpush1.bf16.msra.mxu0 0
        %7732 = vmatprep.subr.bf16.mxu0 0
        %7733 = vmatpush1.bf16.msra.mxu0 0
        %7734 = vmatprep.subr.bf16.mxu0 0
        %7735 = vmatpush1.bf16.msra.mxu0 0
        %7736 = vmatprep.subr.bf16.mxu0 0
        %7737 = vmatpush1.bf16.msra.mxu0 0
        %7738 = vmatprep.subr.bf16.mxu0 0
        %7739 = vmatpush1.bf16.msra.mxu0 0
        %7740 = vmatprep.subr.bf16.mxu0 0
        %7741 = vmatpush1.bf16.msra.mxu0 0
        %7742 = vmatprep.subr.bf16.mxu0 0
        %7743 = vmatpush1.bf16.msra.mxu0 0
        %7744 = vmatprep.subr.bf16.mxu0 0
        %7745 = vmatpush1.bf16.msra.mxu0 0
        %7746 = vmatprep.mubr.bf16.mxu0 0
        %7747 = vmatmul.mubr.bf16.gmra.mrb[0].mxu0 %v7664
        %v7748 = vpop.f32.mrb[0].mxu0
        %v7749 = vadd.f32 %v7665, %v7748
        %v7750 = vpop.f32.mrb[0].mxu0
        %v7751 = vpop.f32.mrb[0].mxu0
        %v7752 = vpop.f32.mrb[0].mxu0
        %7753 = vdwg.mxu0
        %7754 = vst [vmem:[%s1515] sm:$0x1] %v7749
        %s7755 = sand.u32 %s1005, 1
        %s7756 = scalar_lea.sflag [#allocation4], %s7755
        %s7757 = sand.u32 %s1005, 1
        %s7758 = scalar_lea.vmem [#allocation34], %s7757
        // Predicated region
        $region269: #{_lambda_.1} parent=187 // pred_check
          %p7759 = pneg %p1015
        $region270: #{_lambda_.1} parent=187 // pred_check_branch
          %7761 = sbr.rel (%p7759) target = $region272
        $region271: #{_lambda_.1} parent=187 // pred_region
          %s7763 = ssub.s32 16, 16
          %7764 = vsyncadd %s7756, %s7763
          %s7765 = smul.addr %s110, 16
          %s7766 = scalar_lea.hbm %s85, %s7765
          %s7768 = sshll.u32 %s7758, 4
          %s7769 = int_to_ptr.vmem [resolvable:$true] %s7768
          %7771 = dma.vmem_to_hbm [thread:$0]  %s7769, 16, %s7766, %s7756
        $region272: #{_lambda_.1} parent=187 // pred_fallthru
          _
      $region188: #{_lambda_.1} parent=5 // pred_fallthru
        _
      %p7772 = scmp.le.s32.totalorder 2, %s105
      // Predicated region
      $region273: #{_lambda_.1} parent=5 // pred_check
        %p7773 = pneg %p7772
      $region274: #{_lambda_.1} parent=5 // pred_check_branch
        %7775 = sbr.rel (%p7773) target = $region276
      $region275: #{_lambda_.1} parent=5 // pred_region
        %s7776 = ssub.s32 %s105, 2
        // Predicated region
        $region277: #{_lambda_.1} parent=275 // pred_check
          %p7777 = pneg %p1021
        $region278: #{_lambda_.1} parent=275 // pred_check_branch
          %7779 = sbr.rel (%p7777) target = $region280
        $region279: #{_lambda_.1} parent=275 // pred_region
          %s7780 = sand.u32 %s1006, 1
          %s7781 = scalar_lea.sflag [#allocation4], %s7780
          %s7782 = sand.u32 %s1006, 1
          %s7783 = scalar_lea.vmem [#allocation34], %s7782
          %7784 = dma.done %s7781, 16
        $region280: #{_lambda_.1} parent=275 // pred_fallthru
          _
      $region276: #{_lambda_.1} parent=5 // pred_fallthru
        _
    $region6: #{_lambda_.1} parent=1 // loop_footer
      %s109 = sadd.s32 1, %s105
    $region7: #{_lambda_.1} parent=1 // loop_footer_branch
      %104 = sbr.rel target = $region3
    $region8: #{_lambda_.1} parent=1 // loop_exit
      _
    %7785 = vsyncpa [#allocation3], 1
    %s7786 = scalar_lea.sflag [#allocation3], 1
    %7787 = vsyncpa %s7786, 1
    %7788 = vsyncpa [#allocation6], 1
    %7789 = vsyncpa [#allocation9], 1
    %7790 = vsyncpa [#allocation12], 1
    %7791 = vsyncpa [#allocation15], 1
    %7792 = vsyncpa [#allocation18], 1
    %7793 = vsyncpa [#allocation21], 1
    %7794 = vsyncpa [#allocation24], 1
    %7795 = vsyncpa [#allocation27], 1
    %7796 = vsyncpa [#allocation30], 1
    %7797 = vsyncpa [#allocation33], 1
    %7798 = vsyncpa [#allocation4], 1
    %s7799 = scalar_lea.sflag [#allocation4], 1
    %7800 = vsyncpa %s7799, 1

</llo_original>
